<compile_context>
chip_gen: v6e
topology: v6e:2x2x1
jax: 0.10.0
libtpu: 0.0.40
codegen_flags: <defaults>
</compile_context>

<pallas_src>
import jax
import jax.numpy as jnp
from jax.experimental import pallas as pl
from jax.experimental.pallas import tpu as pltpu


def double_conv_kernel(x_ref, w1_ref, b1_ref, w2_ref, b2_ref, o_ref,
                       xp_ref, hp_ref, pt_ref):
    """Fused DoubleConv for one batch element (NHWC, all intermediates in VMEM).

    x_ref : (1, H, W, Cin)          input tile (original dtype)
    w1_ref: (9*Cin, Cout)  bf16     conv1 weights, im2col order (kh,kw,ci), BN folded
    b1_ref: (1, Cout)      f32      conv1 folded BN bias
    w2_ref: (9*Cout, Cout) bf16     conv2 weights, BN folded
    b2_ref: (1, Cout)      f32      conv2 folded BN bias
    o_ref : (1, H, W, Cout)         output tile
    xp_ref: (H+2, W+2, Cin)  bf16   zero-halo padded input scratch
    hp_ref: (H+2, W+2, Cout) bf16   zero-halo padded intermediate scratch
    pt_ref: (H, W, 9*max(Cin,Cout)) bf16  shared flat im2col patch scratch
    """
    H = o_ref.shape[1]
    W = o_ref.shape[2]
    Cout = o_ref.shape[3]
    Cin = x_ref.shape[3]

    def zero_halo_border(ref):
        # Only the 1-px border ring needs to be zero; interior is rewritten below.
        Hp, Wp, c = ref.shape
        ref[0:1, :, :] = jnp.zeros((1, Wp, c), ref.dtype)
        ref[Hp - 1:Hp, :, :] = jnp.zeros((1, Wp, c), ref.dtype)
        ref[:, 0:1, :] = jnp.zeros((Hp, 1, c), ref.dtype)
        ref[:, Wp - 1:Wp, :] = jnp.zeros((Hp, 1, c), ref.dtype)

    def conv3x3_bn_relu(src_ref, w_ref, b_ref, c):
        # im2col: lay the 9 shifted (H, W, c) slabs side-by-side along lanes in the
        # shared patch scratch, then ONE (H*W, 9c) x (9c, Cout) bf16 MXU matmul with
        # f32 accumulation.  No elementwise op interrupts the dot.
        for k in range(9):
            kh, kw = divmod(k, 3)
            pt_ref[:, :, k * c:(k + 1) * c] = src_ref[kh:kh + H, kw:kw + W, :]
        patch = pt_ref[:, :, :9 * c].reshape(H * W, 9 * c)
        acc = jax.lax.dot_general(
            patch, w_ref[...],
            dimension_numbers=(((1,), (0,)), ((), ())),
            preferred_element_type=jnp.float32)
        return jnp.maximum(acc + b_ref[...], 0.0)          # f32 bias + ReLU epilogue

    zero_halo_border(xp_ref)
    zero_halo_border(hp_ref)

    # ---- stage 1: input cast to bf16 at the halo store (MXU operand dtype) ----
    xp_ref[pl.ds(1, H), pl.ds(1, W), :] = x_ref[0].astype(xp_ref.dtype)
    h = conv3x3_bn_relu(xp_ref, w1_ref, b1_ref, Cin)        # (H*W, Cout) f32

    # ---- stage 2: intermediate stays in VMEM as a bf16 matmul operand ----
    hp_ref[pl.ds(1, H), pl.ds(1, W), :] = h.reshape(H, W, Cout).astype(hp_ref.dtype)
    y = conv3x3_bn_relu(hp_ref, w2_ref, b2_ref, Cout)       # (H*W, Cout) f32

    o_ref[...] = y.reshape(1, H, W, Cout).astype(o_ref.dtype)


def double_conv_nhwc(x_nhwc, w1_flat, b1, w2_flat, b2):
    """Single fused pallas_call; grid over batch ("parallel" -> megacore sharding)."""
    N, H, W, Cin = x_nhwc.shape
    Cout = w1_flat.shape[-1]
    Cmax = max(Cin, Cout)
    b1 = b1.reshape(1, Cout).astype(jnp.float32)
    b2 = b2.reshape(1, Cout).astype(jnp.float32)

    return pl.pallas_call(
        double_conv_kernel,
        out_shape=jax.ShapeDtypeStruct((N, H, W, Cout), x_nhwc.dtype),
        grid_spec=pltpu.PrefetchScalarGridSpec(
            num_scalar_prefetch=0,
            grid=(N,),
            in_specs=[
                pl.BlockSpec((1, H, W, Cin), lambda n: (n, 0, 0, 0)),
                pl.BlockSpec((9 * Cin, Cout), lambda n: (0, 0)),    # resident weights
                pl.BlockSpec((1, Cout), lambda n: (0, 0)),          # resident bias
                pl.BlockSpec((9 * Cout, Cout), lambda n: (0, 0)),   # resident weights
                pl.BlockSpec((1, Cout), lambda n: (0, 0)),          # resident bias
            ],
            out_specs=pl.BlockSpec((1, H, W, Cout), lambda n: (n, 0, 0, 0)),
            scratch_shapes=[
                pltpu.VMEM((H + 2, W + 2, Cin), jnp.bfloat16),   # padded input halo
                pltpu.VMEM((H + 2, W + 2, Cout), jnp.bfloat16),  # padded interm. halo
                pltpu.VMEM((H, W, 9 * Cmax), jnp.bfloat16),      # shared im2col buffer
            ],
        ),
        compiler_params=pltpu.CompilerParams(
            dimension_semantics=("parallel",),
            vmem_limit_bytes=48 * 1024 * 1024,
        ),
    )(x_nhwc, w1_flat, b1, w2_flat, b2)


def fold_bn_into_conv(w_flat, gamma, beta, mean, var, eps=1e-5):
    """Fold eval-mode BatchNorm into the conv (f32), then cast weights to bf16."""
    scale = gamma / jnp.sqrt(var + eps)                     # (Cout,)
    bias = beta - mean * scale                              # (Cout,)
    w_folded = (w_flat * scale[None, :]).astype(jnp.bfloat16)   # bf16 MXU operand
    return w_folded, bias.astype(jnp.float32)


@jax.jit
def double_conv(x_nchw, w1_oihw, bn1, w2_oihw, bn2):
    """PyTorch-layout wrapper: NCHW in / NCHW out. Core pipeline is NHWC."""
    N, Cin, H, W = x_nchw.shape
    Cout = w1_oihw.shape[0]
    x = jnp.transpose(x_nchw, (0, 2, 3, 1))                 # NCHW -> NHWC (boundary only)
    # OIHW -> (kh, kw, ci, co) -> flat (9*Cin, Cout): matches the kernel's im2col order.
    w1 = jnp.transpose(w1_oihw, (2, 3, 1, 0)).reshape(9 * Cin, Cout)
    w2 = jnp.transpose(w2_oihw, (2, 3, 1, 0)).reshape(9 * Cout, Cout)
    w1f, b1 = fold_bn_into_conv(w1, *bn1)
    w2f, b2 = fold_bn_into_conv(w2, *bn2)
    y = double_conv_nhwc(x, w1f, b1, w2f, b2)
    return jnp.transpose(y, (0, 3, 1, 2))                   # NHWC -> NCHW


def reference_double_conv(x_nchw, w1_oihw, bn1, w2_oihw, bn2):
    """Pure-JAX (XLA) reference emulating the kernel's bf16 MXU operands."""
    def conv(x, w):
        return jax.lax.conv_general_dilated(
            x, w, window_strides=(1, 1), padding=((1, 1), (1, 1)),
            dimension_numbers=("NCHW", "OIHW", "NCHW"),
            precision=jax.lax.Precision.HIGHEST)

    def bn_fold(gamma, beta, mean, var, eps=1e-5):
        s = gamma / jnp.sqrt(var + eps)
        return s, beta - mean * s

    def q(a):  # round to bf16, compute in f32 (matches bf16 MXU operands + f32 accum)
        return a.astype(jnp.bfloat16).astype(jnp.float32)

    s1, c1 = bn_fold(*bn1)
    s2, c2 = bn_fold(*bn2)
    w1f = q(w1_oihw * s1[:, None, None, None])
    w2f = q(w2_oihw * s2[:, None, None, None])
    h = jnp.maximum(conv(q(x_nchw), w1f) + c1[None, :, None, None], 0.0)
    y = jnp.maximum(conv(q(h), w2f) + c2[None, :, None, None], 0.0)
    return y


if __name__ == "__main__":
    N, Cin, H, W = 2, 4, 16, 16
    Cout = 8

    key = jax.random.PRNGKey(0)
    kx, kw1, kw2 = jax.random.split(key, 3)

    x = jax.random.normal(kx, (N, Cin, H, W), jnp.float32)
    # Conv weights (PyTorch OIHW layout), bias=False as in the module.
    w1 = jax.random.normal(kw1, (Cout, Cin, 3, 3), jnp.float32) * 0.1
    w2 = jax.random.normal(kw2, (Cout, Cout, 3, 3), jnp.float32) * 0.1
    # BatchNorm2d parameters exactly as nn.BatchNorm2d.__init__ leaves them
    # (gamma=1, beta=0, running_mean=0, running_var=1).
    bn1 = (jnp.ones((Cout,), jnp.float32), jnp.zeros((Cout,), jnp.float32),
           jnp.zeros((Cout,), jnp.float32), jnp.ones((Cout,), jnp.float32))
    bn2 = (jnp.ones((Cout,), jnp.float32), jnp.zeros((Cout,), jnp.float32),
           jnp.zeros((Cout,), jnp.float32), jnp.ones((Cout,), jnp.float32))

    out = double_conv(x, w1, bn1, w2, bn2)
    out = jax.block_until_ready(out)

    ref = reference_double_conv(x, w1, bn1, w2, bn2)
    assert out.shape == (N, Cout, H, W)
    max_err = jnp.max(jnp.abs(out - ref))
    assert jnp.allclose(out, ref, atol=1e-2, rtol=1e-2), f"max abs err {max_err}"

    print("KERNEL_OK")
</pallas_src>

<mosaic_0001>
module attributes {stable_mosaic.version = 11 : i64} {
  func.func @double_conv_kernel(%arg0: i32, %arg1: memref<1x16x16x4xf32, #tpu.memory_space<vmem>>, %arg2: memref<36x8xbf16, #tpu.memory_space<vmem>>, %arg3: memref<1x8xf32, #tpu.memory_space<vmem>>, %arg4: memref<72x8xbf16, #tpu.memory_space<vmem>>, %arg5: memref<1x8xf32, #tpu.memory_space<vmem>>, %arg6: memref<1x16x16x8xf32, #tpu.memory_space<vmem>>, %arg7: memref<18x18x4xbf16, #tpu.memory_space<vmem>>, %arg8: memref<18x18x8xbf16, #tpu.memory_space<vmem>>, %arg9: memref<16x16x72xbf16, #tpu.memory_space<vmem>>) attributes {dimension_semantics = [#tpu.dimension_semantics<parallel>], iteration_bounds = array<i64: 2>, scalar_prefetch = 0 : i64, scratch_operands = 3 : i64, tpu.core_type = #tpu.core_type<tc>, window_params = [{transform_indices = @transform_0, window_bounds = array<i64: 1, 16, 16, 4>}, {pipeline_mode = #tpu.pipeline_mode<synchronous>, transform_indices = @transform_1, window_bounds = array<i64: 36, 8>}, {pipeline_mode = #tpu.pipeline_mode<synchronous>, transform_indices = @transform_2, window_bounds = array<i64: 1, 8>}, {pipeline_mode = #tpu.pipeline_mode<synchronous>, transform_indices = @transform_3, window_bounds = array<i64: 72, 8>}, {pipeline_mode = #tpu.pipeline_mode<synchronous>, transform_indices = @transform_4, window_bounds = array<i64: 1, 8>}, {transform_indices = @transform_5, window_bounds = array<i64: 1, 16, 16, 8>}]} {
    %cst = arith.constant 0.000000e+00 : bf16
    %0 = vector.broadcast %cst : bf16 to vector<1x18x4xbf16>
    %c0 = arith.constant 0 : index
    %c0_0 = arith.constant 0 : index
    %c0_1 = arith.constant 0 : index
    %1 = vector.load %arg7[%c0, %c0_0, %c0_1] : memref<18x18x4xbf16, #tpu.memory_space<vmem>>, vector<1x18x4xbf16>
    tpu.vector_store %arg7[%c0, %c0_0, %c0_1], %0 {strides = array<i32>} : memref<18x18x4xbf16, #tpu.memory_space<vmem>>, vector<1x18x4xbf16>,
    %cst_2 = arith.constant 0.000000e+00 : bf16
    %2 = vector.broadcast %cst_2 : bf16 to vector<1x18x4xbf16>
    %c17 = arith.constant 17 : index
    %c0_3 = arith.constant 0 : index
    %c0_4 = arith.constant 0 : index
    %3 = vector.load %arg7[%c17, %c0_3, %c0_4] : memref<18x18x4xbf16, #tpu.memory_space<vmem>>, vector<1x18x4xbf16>
    tpu.vector_store %arg7[%c17, %c0_3, %c0_4], %2 {strides = array<i32>} : memref<18x18x4xbf16, #tpu.memory_space<vmem>>, vector<1x18x4xbf16>,
    %cst_5 = arith.constant 0.000000e+00 : bf16
    %4 = vector.broadcast %cst_5 : bf16 to vector<18x1x4xbf16>
    %c0_6 = arith.constant 0 : index
    %c0_7 = arith.constant 0 : index
    %c0_8 = arith.constant 0 : index
    %5 = vector.load %arg7[%c0_6, %c0_7, %c0_8] : memref<18x18x4xbf16, #tpu.memory_space<vmem>>, vector<18x1x4xbf16>
    tpu.vector_store %arg7[%c0_6, %c0_7, %c0_8], %4 {strides = array<i32>} : memref<18x18x4xbf16, #tpu.memory_space<vmem>>, vector<18x1x4xbf16>,
    %cst_9 = arith.constant 0.000000e+00 : bf16
    %6 = vector.broadcast %cst_9 : bf16 to vector<18x1x4xbf16>
    %c0_10 = arith.constant 0 : index
    %c17_11 = arith.constant 17 : index
    %c0_12 = arith.constant 0 : index
    %7 = vector.load %arg7[%c0_10, %c17_11, %c0_12] : memref<18x18x4xbf16, #tpu.memory_space<vmem>>, vector<18x1x4xbf16>
    tpu.vector_store %arg7[%c0_10, %c17_11, %c0_12], %6 {strides = array<i32>} : memref<18x18x4xbf16, #tpu.memory_space<vmem>>, vector<18x1x4xbf16>,
    %cst_13 = arith.constant 0.000000e+00 : bf16
    %8 = vector.broadcast %cst_13 : bf16 to vector<1x18x8xbf16>
    %c0_14 = arith.constant 0 : index
    %c0_15 = arith.constant 0 : index
    %c0_16 = arith.constant 0 : index
    %9 = vector.load %arg8[%c0_14, %c0_15, %c0_16] : memref<18x18x8xbf16, #tpu.memory_space<vmem>>, vector<1x18x8xbf16>
    tpu.vector_store %arg8[%c0_14, %c0_15, %c0_16], %8 {strides = array<i32>} : memref<18x18x8xbf16, #tpu.memory_space<vmem>>, vector<1x18x8xbf16>,
    %cst_17 = arith.constant 0.000000e+00 : bf16
    %10 = vector.broadcast %cst_17 : bf16 to vector<1x18x8xbf16>
    %c17_18 = arith.constant 17 : index
    %c0_19 = arith.constant 0 : index
    %c0_20 = arith.constant 0 : index
    %11 = vector.load %arg8[%c17_18, %c0_19, %c0_20] : memref<18x18x8xbf16, #tpu.memory_space<vmem>>, vector<1x18x8xbf16>
    tpu.vector_store %arg8[%c17_18, %c0_19, %c0_20], %10 {strides = array<i32>} : memref<18x18x8xbf16, #tpu.memory_space<vmem>>, vector<1x18x8xbf16>,
    %cst_21 = arith.constant 0.000000e+00 : bf16
    %12 = vector.broadcast %cst_21 : bf16 to vector<18x1x8xbf16>
    %c0_22 = arith.constant 0 : index
    %c0_23 = arith.constant 0 : index
    %c0_24 = arith.constant 0 : index
    %13 = vector.load %arg8[%c0_22, %c0_23, %c0_24] : memref<18x18x8xbf16, #tpu.memory_space<vmem>>, vector<18x1x8xbf16>
    tpu.vector_store %arg8[%c0_22, %c0_23, %c0_24], %12 {strides = array<i32>} : memref<18x18x8xbf16, #tpu.memory_space<vmem>>, vector<18x1x8xbf16>,
    %cst_25 = arith.constant 0.000000e+00 : bf16
    %14 = vector.broadcast %cst_25 : bf16 to vector<18x1x8xbf16>
    %c0_26 = arith.constant 0 : index
    %c17_27 = arith.constant 17 : index
    %c0_28 = arith.constant 0 : index
    %15 = vector.load %arg8[%c0_26, %c17_27, %c0_28] : memref<18x18x8xbf16, #tpu.memory_space<vmem>>, vector<18x1x8xbf16>
    tpu.vector_store %arg8[%c0_26, %c17_27, %c0_28], %14 {strides = array<i32>} : memref<18x18x8xbf16, #tpu.memory_space<vmem>>, vector<18x1x8xbf16>,
    %c0_29 = arith.constant 0 : index
    %c0_30 = arith.constant 0 : index
    %c0_31 = arith.constant 0 : index
    %c0_32 = arith.constant 0 : index
    %16 = vector.load %arg1[%c0_29, %c0_30, %c0_31, %c0_32] : memref<1x16x16x4xf32, #tpu.memory_space<vmem>>, vector<1x16x16x4xf32>
    %17 = vector.shape_cast %16 : vector<1x16x16x4xf32> to vector<16x16x4xf32>
    %18 = arith.truncf %17 : vector<16x16x4xf32> to vector<16x16x4xbf16>
    %c1 = arith.constant 1 : index
    %c1_33 = arith.constant 1 : index
    %c0_34 = arith.constant 0 : index
    %19 = vector.load %arg7[%c1, %c1_33, %c0_34] : memref<18x18x4xbf16, #tpu.memory_space<vmem>>, vector<16x16x4xbf16>
    tpu.vector_store %arg7[%c1, %c1_33, %c0_34], %18 {strides = array<i32>} : memref<18x18x4xbf16, #tpu.memory_space<vmem>>, vector<16x16x4xbf16>,
    %c0_35 = arith.constant 0 : index
    %c0_36 = arith.constant 0 : index
    %c0_37 = arith.constant 0 : index
    %20 = vector.load %arg7[%c0_35, %c0_36, %c0_37] : memref<18x18x4xbf16, #tpu.memory_space<vmem>>, vector<16x16x4xbf16>
    %c0_38 = arith.constant 0 : index
    %c0_39 = arith.constant 0 : index
    %c0_40 = arith.constant 0 : index
    %21 = vector.load %arg9[%c0_38, %c0_39, %c0_40] : memref<16x16x72xbf16, #tpu.memory_space<vmem>>, vector<16x16x4xbf16>
    tpu.vector_store %arg9[%c0_38, %c0_39, %c0_40], %20 {strides = array<i32>} : memref<16x16x72xbf16, #tpu.memory_space<vmem>>, vector<16x16x4xbf16>,
    %c0_41 = arith.constant 0 : index
    %c1_42 = arith.constant 1 : index
    %c0_43 = arith.constant 0 : index
    %22 = vector.load %arg7[%c0_41, %c1_42, %c0_43] : memref<18x18x4xbf16, #tpu.memory_space<vmem>>, vector<16x16x4xbf16>
    %c0_44 = arith.constant 0 : index
    %c0_45 = arith.constant 0 : index
    %c4 = arith.constant 4 : index
    %23 = vector.load %arg9[%c0_44, %c0_45, %c4] : memref<16x16x72xbf16, #tpu.memory_space<vmem>>, vector<16x16x4xbf16>
    tpu.vector_store %arg9[%c0_44, %c0_45, %c4], %22 {strides = array<i32>} : memref<16x16x72xbf16, #tpu.memory_space<vmem>>, vector<16x16x4xbf16>,
    %c0_46 = arith.constant 0 : index
    %c2 = arith.constant 2 : index
    %c0_47 = arith.constant 0 : index
    %24 = vector.load %arg7[%c0_46, %c2, %c0_47] : memref<18x18x4xbf16, #tpu.memory_space<vmem>>, vector<16x16x4xbf16>
    %c0_48 = arith.constant 0 : index
    %c0_49 = arith.constant 0 : index
    %c8 = arith.constant 8 : index
    %25 = vector.load %arg9[%c0_48, %c0_49, %c8] : memref<16x16x72xbf16, #tpu.memory_space<vmem>>, vector<16x16x4xbf16>
    tpu.vector_store %arg9[%c0_48, %c0_49, %c8], %24 {strides = array<i32>} : memref<16x16x72xbf16, #tpu.memory_space<vmem>>, vector<16x16x4xbf16>,
    %c1_50 = arith.constant 1 : index
    %c0_51 = arith.constant 0 : index
    %c0_52 = arith.constant 0 : index
    %26 = vector.load %arg7[%c1_50, %c0_51, %c0_52] : memref<18x18x4xbf16, #tpu.memory_space<vmem>>, vector<16x16x4xbf16>
    %c0_53 = arith.constant 0 : index
    %c0_54 = arith.constant 0 : index
    %c12 = arith.constant 12 : index
    %27 = vector.load %arg9[%c0_53, %c0_54, %c12] : memref<16x16x72xbf16, #tpu.memory_space<vmem>>, vector<16x16x4xbf16>
    tpu.vector_store %arg9[%c0_53, %c0_54, %c12], %26 {strides = array<i32>} : memref<16x16x72xbf16, #tpu.memory_space<vmem>>, vector<16x16x4xbf16>,
    %c1_55 = arith.constant 1 : index
    %c1_56 = arith.constant 1 : index
    %c0_57 = arith.constant 0 : index
    %28 = vector.load %arg7[%c1_55, %c1_56, %c0_57] : memref<18x18x4xbf16, #tpu.memory_space<vmem>>, vector<16x16x4xbf16>
    %c0_58 = arith.constant 0 : index
    %c0_59 = arith.constant 0 : index
    %c16 = arith.constant 16 : index
    %29 = vector.load %arg9[%c0_58, %c0_59, %c16] : memref<16x16x72xbf16, #tpu.memory_space<vmem>>, vector<16x16x4xbf16>
    tpu.vector_store %arg9[%c0_58, %c0_59, %c16], %28 {strides = array<i32>} : memref<16x16x72xbf16, #tpu.memory_space<vmem>>, vector<16x16x4xbf16>,
    %c1_60 = arith.constant 1 : index
    %c2_61 = arith.constant 2 : index
    %c0_62 = arith.constant 0 : index
    %30 = vector.load %arg7[%c1_60, %c2_61, %c0_62] : memref<18x18x4xbf16, #tpu.memory_space<vmem>>, vector<16x16x4xbf16>
    %c0_63 = arith.constant 0 : index
    %c0_64 = arith.constant 0 : index
    %c20 = arith.constant 20 : index
    %31 = vector.load %arg9[%c0_63, %c0_64, %c20] : memref<16x16x72xbf16, #tpu.memory_space<vmem>>, vector<16x16x4xbf16>
    tpu.vector_store %arg9[%c0_63, %c0_64, %c20], %30 {strides = array<i32>} : memref<16x16x72xbf16, #tpu.memory_space<vmem>>, vector<16x16x4xbf16>,
    %c2_65 = arith.constant 2 : index
    %c0_66 = arith.constant 0 : index
    %c0_67 = arith.constant 0 : index
    %32 = vector.load %arg7[%c2_65, %c0_66, %c0_67] : memref<18x18x4xbf16, #tpu.memory_space<vmem>>, vector<16x16x4xbf16>
    %c0_68 = arith.constant 0 : index
    %c0_69 = arith.constant 0 : index
    %c24 = arith.constant 24 : index
    %33 = vector.load %arg9[%c0_68, %c0_69, %c24] : memref<16x16x72xbf16, #tpu.memory_space<vmem>>, vector<16x16x4xbf16>
    tpu.vector_store %arg9[%c0_68, %c0_69, %c24], %32 {strides = array<i32>} : memref<16x16x72xbf16, #tpu.memory_space<vmem>>, vector<16x16x4xbf16>,
    %c2_70 = arith.constant 2 : index
    %c1_71 = arith.constant 1 : index
    %c0_72 = arith.constant 0 : index
    %34 = vector.load %arg7[%c2_70, %c1_71, %c0_72] : memref<18x18x4xbf16, #tpu.memory_space<vmem>>, vector<16x16x4xbf16>
    %c0_73 = arith.constant 0 : index
    %c0_74 = arith.constant 0 : index
    %c28 = arith.constant 28 : index
    %35 = vector.load %arg9[%c0_73, %c0_74, %c28] : memref<16x16x72xbf16, #tpu.memory_space<vmem>>, vector<16x16x4xbf16>
    tpu.vector_store %arg9[%c0_73, %c0_74, %c28], %34 {strides = array<i32>} : memref<16x16x72xbf16, #tpu.memory_space<vmem>>, vector<16x16x4xbf16>,
    %c2_75 = arith.constant 2 : index
    %c2_76 = arith.constant 2 : index
    %c0_77 = arith.constant 0 : index
    %36 = vector.load %arg7[%c2_75, %c2_76, %c0_77] : memref<18x18x4xbf16, #tpu.memory_space<vmem>>, vector<16x16x4xbf16>
    %c0_78 = arith.constant 0 : index
    %c0_79 = arith.constant 0 : index
    %c32 = arith.constant 32 : index
    %37 = vector.load %arg9[%c0_78, %c0_79, %c32] : memref<16x16x72xbf16, #tpu.memory_space<vmem>>, vector<16x16x4xbf16>
    tpu.vector_store %arg9[%c0_78, %c0_79, %c32], %36 {strides = array<i32>} : memref<16x16x72xbf16, #tpu.memory_space<vmem>>, vector<16x16x4xbf16>,
    %c0_80 = arith.constant 0 : index
    %c0_81 = arith.constant 0 : index
    %c0_82 = arith.constant 0 : index
    %38 = vector.load %arg9[%c0_80, %c0_81, %c0_82] : memref<16x16x72xbf16, #tpu.memory_space<vmem>>, vector<16x16x36xbf16>
    %39 = vector.shape_cast %38 : vector<16x16x36xbf16> to vector<256x36xbf16>
    %c0_83 = arith.constant 0 : index
    %c0_84 = arith.constant 0 : index
    %40 = vector.load %arg2[%c0_83, %c0_84] : memref<36x8xbf16, #tpu.memory_space<vmem>>, vector<36x8xbf16>
    %cst_85 = arith.constant dense<0.000000e+00> : vector<256x8xf32>
    %41 = tpu.matmul %39, %40, %cst_85 {dimension_numbers = #tpu.dot_dimension_numbers<[1], [0], [0], [1], [0, 0, 1, 1], [], []>} : vector<256x36xbf16>, vector<36x8xbf16>, vector<256x8xf32> -> vector<256x8xf32>
    %c0_86 = arith.constant 0 : index
    %c0_87 = arith.constant 0 : index
    %42 = vector.load %arg3[%c0_86, %c0_87] : memref<1x8xf32, #tpu.memory_space<vmem>>, vector<1x8xf32>
    %43 = vector.broadcast %42 : vector<1x8xf32> to vector<256x8xf32>
    %44 = arith.addf %41, %43 : vector<256x8xf32>
    %cst_88 = arith.constant 0.000000e+00 : f32
    %45 = vector.broadcast %cst_88 : f32 to vector<256x8xf32>
    %46 = arith.maximumf %44, %45 : vector<256x8xf32>
    %47 = vector.shape_cast %46 : vector<256x8xf32> to vector<16x16x8xf32>
    %48 = arith.truncf %47 : vector<16x16x8xf32> to vector<16x16x8xbf16>
    %c1_89 = arith.constant 1 : index
    %c1_90 = arith.constant 1 : index
    %c0_91 = arith.constant 0 : index
    %49 = vector.load %arg8[%c1_89, %c1_90, %c0_91] : memref<18x18x8xbf16, #tpu.memory_space<vmem>>, vector<16x16x8xbf16>
    tpu.vector_store %arg8[%c1_89, %c1_90, %c0_91], %48 {strides = array<i32>} : memref<18x18x8xbf16, #tpu.memory_space<vmem>>, vector<16x16x8xbf16>,
    %c0_92 = arith.constant 0 : index
    %c0_93 = arith.constant 0 : index
    %c0_94 = arith.constant 0 : index
    %50 = vector.load %arg8[%c0_92, %c0_93, %c0_94] : memref<18x18x8xbf16, #tpu.memory_space<vmem>>, vector<16x16x8xbf16>
    %c0_95 = arith.constant 0 : index
    %c0_96 = arith.constant 0 : index
    %c0_97 = arith.constant 0 : index
    %51 = vector.load %arg9[%c0_95, %c0_96, %c0_97] : memref<16x16x72xbf16, #tpu.memory_space<vmem>>, vector<16x16x8xbf16>
    tpu.vector_store %arg9[%c0_95, %c0_96, %c0_97], %50 {strides = array<i32>} : memref<16x16x72xbf16, #tpu.memory_space<vmem>>, vector<16x16x8xbf16>,
    %c0_98 = arith.constant 0 : index
    %c1_99 = arith.constant 1 : index
    %c0_100 = arith.constant 0 : index
    %52 = vector.load %arg8[%c0_98, %c1_99, %c0_100] : memref<18x18x8xbf16, #tpu.memory_space<vmem>>, vector<16x16x8xbf16>
    %c0_101 = arith.constant 0 : index
    %c0_102 = arith.constant 0 : index
    %c8_103 = arith.constant 8 : index
    %53 = vector.load %arg9[%c0_101, %c0_102, %c8_103] : memref<16x16x72xbf16, #tpu.memory_space<vmem>>, vector<16x16x8xbf16>
    tpu.vector_store %arg9[%c0_101, %c0_102, %c8_103], %52 {strides = array<i32>} : memref<16x16x72xbf16, #tpu.memory_space<vmem>>, vector<16x16x8xbf16>,
    %c0_104 = arith.constant 0 : index
    %c2_105 = arith.constant 2 : index
    %c0_106 = arith.constant 0 : index
    %54 = vector.load %arg8[%c0_104, %c2_105, %c0_106] : memref<18x18x8xbf16, #tpu.memory_space<vmem>>, vector<16x16x8xbf16>
    %c0_107 = arith.constant 0 : index
    %c0_108 = arith.constant 0 : index
    %c16_109 = arith.constant 16 : index
    %55 = vector.load %arg9[%c0_107, %c0_108, %c16_109] : memref<16x16x72xbf16, #tpu.memory_space<vmem>>, vector<16x16x8xbf16>
    tpu.vector_store %arg9[%c0_107, %c0_108, %c16_109], %54 {strides = array<i32>} : memref<16x16x72xbf16, #tpu.memory_space<vmem>>, vector<16x16x8xbf16>,
    %c1_110 = arith.constant 1 : index
    %c0_111 = arith.constant 0 : index
    %c0_112 = arith.constant 0 : index
    %56 = vector.load %arg8[%c1_110, %c0_111, %c0_112] : memref<18x18x8xbf16, #tpu.memory_space<vmem>>, vector<16x16x8xbf16>
    %c0_113 = arith.constant 0 : index
    %c0_114 = arith.constant 0 : index
    %c24_115 = arith.constant 24 : index
    %57 = vector.load %arg9[%c0_113, %c0_114, %c24_115] : memref<16x16x72xbf16, #tpu.memory_space<vmem>>, vector<16x16x8xbf16>
    tpu.vector_store %arg9[%c0_113, %c0_114, %c24_115], %56 {strides = array<i32>} : memref<16x16x72xbf16, #tpu.memory_space<vmem>>, vector<16x16x8xbf16>,
    %c1_116 = arith.constant 1 : index
    %c1_117 = arith.constant 1 : index
    %c0_118 = arith.constant 0 : index
    %58 = vector.load %arg8[%c1_116, %c1_117, %c0_118] : memref<18x18x8xbf16, #tpu.memory_space<vmem>>, vector<16x16x8xbf16>
    %c0_119 = arith.constant 0 : index
    %c0_120 = arith.constant 0 : index
    %c32_121 = arith.constant 32 : index
    %59 = vector.load %arg9[%c0_119, %c0_120, %c32_121] : memref<16x16x72xbf16, #tpu.memory_space<vmem>>, vector<16x16x8xbf16>
    tpu.vector_store %arg9[%c0_119, %c0_120, %c32_121], %58 {strides = array<i32>} : memref<16x16x72xbf16, #tpu.memory_space<vmem>>, vector<16x16x8xbf16>,
    %c1_122 = arith.constant 1 : index
    %c2_123 = arith.constant 2 : index
    %c0_124 = arith.constant 0 : index
    %60 = vector.load %arg8[%c1_122, %c2_123, %c0_124] : memref<18x18x8xbf16, #tpu.memory_space<vmem>>, vector<16x16x8xbf16>
    %c0_125 = arith.constant 0 : index
    %c0_126 = arith.constant 0 : index
    %c40 = arith.constant 40 : index
    %61 = vector.load %arg9[%c0_125, %c0_126, %c40] : memref<16x16x72xbf16, #tpu.memory_space<vmem>>, vector<16x16x8xbf16>
    tpu.vector_store %arg9[%c0_125, %c0_126, %c40], %60 {strides = array<i32>} : memref<16x16x72xbf16, #tpu.memory_space<vmem>>, vector<16x16x8xbf16>,
    %c2_127 = arith.constant 2 : index
    %c0_128 = arith.constant 0 : index
    %c0_129 = arith.constant 0 : index
    %62 = vector.load %arg8[%c2_127, %c0_128, %c0_129] : memref<18x18x8xbf16, #tpu.memory_space<vmem>>, vector<16x16x8xbf16>
    %c0_130 = arith.constant 0 : index
    %c0_131 = arith.constant 0 : index
    %c48 = arith.constant 48 : index
    %63 = vector.load %arg9[%c0_130, %c0_131, %c48] : memref<16x16x72xbf16, #tpu.memory_space<vmem>>, vector<16x16x8xbf16>
    tpu.vector_store %arg9[%c0_130, %c0_131, %c48], %62 {strides = array<i32>} : memref<16x16x72xbf16, #tpu.memory_space<vmem>>, vector<16x16x8xbf16>,
    %c2_132 = arith.constant 2 : index
    %c1_133 = arith.constant 1 : index
    %c0_134 = arith.constant 0 : index
    %64 = vector.load %arg8[%c2_132, %c1_133, %c0_134] : memref<18x18x8xbf16, #tpu.memory_space<vmem>>, vector<16x16x8xbf16>
    %c0_135 = arith.constant 0 : index
    %c0_136 = arith.constant 0 : index
    %c56 = arith.constant 56 : index
    %65 = vector.load %arg9[%c0_135, %c0_136, %c56] : memref<16x16x72xbf16, #tpu.memory_space<vmem>>, vector<16x16x8xbf16>
    tpu.vector_store %arg9[%c0_135, %c0_136, %c56], %64 {strides = array<i32>} : memref<16x16x72xbf16, #tpu.memory_space<vmem>>, vector<16x16x8xbf16>,
    %c2_137 = arith.constant 2 : index
    %c2_138 = arith.constant 2 : index
    %c0_139 = arith.constant 0 : index
    %66 = vector.load %arg8[%c2_137, %c2_138, %c0_139] : memref<18x18x8xbf16, #tpu.memory_space<vmem>>, vector<16x16x8xbf16>
    %c0_140 = arith.constant 0 : index
    %c0_141 = arith.constant 0 : index
    %c64 = arith.constant 64 : index
    %67 = vector.load %arg9[%c0_140, %c0_141, %c64] : memref<16x16x72xbf16, #tpu.memory_space<vmem>>, vector<16x16x8xbf16>
    tpu.vector_store %arg9[%c0_140, %c0_141, %c64], %66 {strides = array<i32>} : memref<16x16x72xbf16, #tpu.memory_space<vmem>>, vector<16x16x8xbf16>,
    %c0_142 = arith.constant 0 : index
    %c0_143 = arith.constant 0 : index
    %c0_144 = arith.constant 0 : index
    %68 = vector.load %arg9[%c0_142, %c0_143, %c0_144] : memref<16x16x72xbf16, #tpu.memory_space<vmem>>, vector<16x16x72xbf16>
    %69 = vector.shape_cast %68 : vector<16x16x72xbf16> to vector<256x72xbf16>
    %c0_145 = arith.constant 0 : index
    %c0_146 = arith.constant 0 : index
    %70 = vector.load %arg4[%c0_145, %c0_146] : memref<72x8xbf16, #tpu.memory_space<vmem>>, vector<72x8xbf16>
    %cst_147 = arith.constant dense<0.000000e+00> : vector<256x8xf32>
    %71 = tpu.matmul %69, %70, %cst_147 {dimension_numbers = #tpu.dot_dimension_numbers<[1], [0], [0], [1], [0, 0, 1, 1], [], []>} : vector<256x72xbf16>, vector<72x8xbf16>, vector<256x8xf32> -> vector<256x8xf32>
    %c0_148 = arith.constant 0 : index
    %c0_149 = arith.constant 0 : index
    %72 = vector.load %arg5[%c0_148, %c0_149] : memref<1x8xf32, #tpu.memory_space<vmem>>, vector<1x8xf32>
    %73 = vector.broadcast %72 : vector<1x8xf32> to vector<256x8xf32>
    %74 = arith.addf %71, %73 : vector<256x8xf32>
    %cst_150 = arith.constant 0.000000e+00 : f32
    %75 = vector.broadcast %cst_150 : f32 to vector<256x8xf32>
    %76 = arith.maximumf %74, %75 : vector<256x8xf32>
    %77 = vector.shape_cast %76 : vector<256x8xf32> to vector<1x16x16x8xf32>
    %c0_151 = arith.constant 0 : index
    %c0_152 = arith.constant 0 : index
    %c0_153 = arith.constant 0 : index
    %c0_154 = arith.constant 0 : index
    %78 = vector.load %arg6[%c0_151, %c0_152, %c0_153, %c0_154] : memref<1x16x16x8xf32, #tpu.memory_space<vmem>>, vector<1x16x16x8xf32>
    tpu.vector_store %arg6[%c0_151, %c0_152, %c0_153, %c0_154], %77 {strides = array<i32>} : memref<1x16x16x8xf32, #tpu.memory_space<vmem>>, vector<1x16x16x8xf32>,
    return
  }
  func.func @transform_0(%arg0: i32) -> (i32, i32, i32, i32) {
    %c0_i32 = arith.constant 0 : i32
    %c0_i32_0 = arith.constant 0 : i32
    %c0_i32_1 = arith.constant 0 : i32
    %c0_i32_2 = arith.constant 0 : i32
    return %arg0, %c0_i32, %c0_i32_0, %c0_i32_1 : i32, i32, i32, i32
  }
  func.func @transform_1(%arg0: i32) -> (i32, i32) {
    %c0_i32 = arith.constant 0 : i32
    %c0_i32_0 = arith.constant 0 : i32
    %c0_i32_1 = arith.constant 0 : i32
    return %c0_i32, %c0_i32_0 : i32, i32
  }
  func.func @transform_2(%arg0: i32) -> (i32, i32) {
    %c0_i32 = arith.constant 0 : i32
    %c0_i32_0 = arith.constant 0 : i32
    %c0_i32_1 = arith.constant 0 : i32
    return %c0_i32, %c0_i32_0 : i32, i32
  }
  func.func @transform_3(%arg0: i32) -> (i32, i32) {
    %c0_i32 = arith.constant 0 : i32
    %c0_i32_0 = arith.constant 0 : i32
    %c0_i32_1 = arith.constant 0 : i32
    return %c0_i32, %c0_i32_0 : i32, i32
  }
  func.func @transform_4(%arg0: i32) -> (i32, i32) {
    %c0_i32 = arith.constant 0 : i32
    %c0_i32_0 = arith.constant 0 : i32
    %c0_i32_1 = arith.constant 0 : i32
    return %c0_i32, %c0_i32_0 : i32, i32
  }
  func.func @transform_5(%arg0: i32) -> (i32, i32, i32, i32) {
    %c0_i32 = arith.constant 0 : i32
    %c0_i32_0 = arith.constant 0 : i32
    %c0_i32_1 = arith.constant 0 : i32
    %c0_i32_2 = arith.constant 0 : i32
    return %arg0, %c0_i32, %c0_i32_0, %c0_i32_1 : i32, i32, i32, i32
  }
}

</mosaic_0001>

<llo_original>
// kernel: double_conv.1
$region0: #{double_conv.1}
  #allocation0 [shape = 'u32[]', space=smem, size = 0x4, offset = 0x4, fixed_abs, tag = 'smem constant byte address 0x4 - core index']
  #allocation1 [shape = 'u32[144,128]{1,0:T(1,128)}', space=vmem, size = 0x12000, scoped, tag = 'internal scratch']
  #allocation2 [shape = 'bf16[18,18,4]{2,1,0:T(8,128)(2,1)}', space=vmem, size = 0x1b000, scoped, tag = 'scratch operand']
  #allocation3 [shape = 'bf16[18,18,8]{2,1,0:T(8,128)(2,1)}', space=vmem, size = 0x1b000, scoped, tag = 'scratch operand']
  #allocation4 [shape = 'bf16[16,16,72]{2,1,0:T(8,128)(2,1)}', space=vmem, size = 0x10000, scoped, tag = 'scratch operand']
  %s0 = inlined_call_operand.vmem [shape: f32[2,16,16,4], index: 0, kind: input, shape index: {}]
  %s1 = inlined_call_operand.vmem [shape: bf16[36,8], index: 1, kind: input, shape index: {}]
  %s2 = inlined_call_operand.vmem [shape: f32[1,8], index: 2, kind: input, shape index: {}]
  %s3 = inlined_call_operand.vmem [shape: bf16[72,8], index: 3, kind: input, shape index: {}]
  %s4 = inlined_call_operand.vmem [shape: f32[1,8], index: 4, kind: input, shape index: {}]
  %s5 = inlined_call_operand.vmem [shape: f32[2,16,16,8], index: 5, kind: output, shape index: {}]
  %s6 = sld [smem:[#allocation0]]
  $region53: #{double_conv.1} parent=0
    _
  %s8 = ssub.s32 1, %s6
  %s9 = scalar_select 0, %s8, %s6
  loop: start=0, step=1, limit=4
  $region2: #{double_conv.1} parent=0 // loop_pre_header
    _
  $region3: #{double_conv.1} parent=0 // loop_header
    %s11 = sphi 0, %s15
    %p12 = scmp.ge.s32.totalorder %s11, 4
    %s21 = sphi 0, %s23
    %s24 = sphi 0, %s21
    %s25 = sphi 0, %s24
    %s41 = sphi 0, %s25
    %s45 = sphi 0, %s45
    %s47 = sphi 0, %s45
    %s48 = sphi 0, %s47
    %s62 = sphi 0, %s48
    %s66 = sphi 0, %s66
    %s68 = sphi 0, %s66
    %s69 = sphi 0, %s68
    %s83 = sphi 0, %s69
    %s87 = sphi 0, %s87
    %s89 = sphi 0, %s87
    %s90 = sphi 0, %s89
    %s104 = sphi 0, %s90
    %s108 = sphi 0, %s108
    %s110 = sphi 0, %s108
    %s111 = sphi 0, %s110
    %s125 = sphi 0, %s111
    %s131 = sphi 0, %s133
    %s134 = sphi 0, %s131
    %s135 = sphi 0, %s134
    %s151 = sphi 0, %s135
  $region4: #{double_conv.1} parent=0 // loop_header_branch
    %14 = sbr.rel (%p12) target = $region8
  $region5: #{double_conv.1} parent=0 // loop_body
    %s16 = ssub.s32 %s11, 1
    %s17 = ssub.s32 %s11, 2
    %s18 = sadd.s32 %s11, 1
    %s19 = ssub.s32 %s11, %s18
    %p20 = scmp.eq.s32.totalorder %s19, 0
    %s22 = sadd.s32 %s21, 1
    %s23 = scalar_select %p20, %s21, %s22
    %p26 = pneg %p20
    %p27 = scmp.eq.s32.totalorder %s11, 1
    %p28 = por %p26, %p27
    %p29 = scmp.ne.s32.totalorder %s21, %s24
    %p30 = scmp.eq.s32.totalorder %s11, 0
    %p31 = por %p29, %p30
    %p32 = scmp.ne.s32.totalorder %s21, %s24
    %p33 = scmp.eq.s32.totalorder %s16, 1
    %p34 = por %p32, %p33
    %p35 = scmp.ne.s32.totalorder %s24, %s25
    %p36 = scmp.eq.s32.totalorder %s16, 0
    %p37 = por %p35, %p36
    %p38 = scmp.ne.s32.totalorder %s24, %s25
    %p39 = scmp.eq.s32.totalorder %s17, 1
    %p40 = por %p38, %p39
    %p42 = scmp.ne.s32.totalorder %s25, %s41
    %p43 = scmp.eq.s32.totalorder %s17, 0
    %p44 = por %p42, %p43
    %s46 = sadd.s32 %s45, 1
    %p49 = scmp.eq.s32.totalorder %s11, 1
    %p50 = scmp.ne.s32.totalorder %s45, %s47
    %p51 = scmp.eq.s32.totalorder %s11, 0
    %p52 = por %p50, %p51
    %p53 = scmp.ne.s32.totalorder %s45, %s47
    %p54 = scmp.eq.s32.totalorder %s16, 1
    %p55 = por %p53, %p54
    %p56 = scmp.ne.s32.totalorder %s47, %s48
    %p57 = scmp.eq.s32.totalorder %s16, 0
    %p58 = por %p56, %p57
    %p59 = scmp.ne.s32.totalorder %s47, %s48
    %p60 = scmp.eq.s32.totalorder %s17, 1
    %p61 = por %p59, %p60
    %p63 = scmp.ne.s32.totalorder %s48, %s62
    %p64 = scmp.eq.s32.totalorder %s17, 0
    %p65 = por %p63, %p64
    %s67 = sadd.s32 %s66, 1
    %p70 = scmp.eq.s32.totalorder %s11, 1
    %p71 = scmp.ne.s32.totalorder %s66, %s68
    %p72 = scmp.eq.s32.totalorder %s11, 0
    %p73 = por %p71, %p72
    %p74 = scmp.ne.s32.totalorder %s66, %s68
    %p75 = scmp.eq.s32.totalorder %s16, 1
    %p76 = por %p74, %p75
    %p77 = scmp.ne.s32.totalorder %s68, %s69
    %p78 = scmp.eq.s32.totalorder %s16, 0
    %p79 = por %p77, %p78
    %p80 = scmp.ne.s32.totalorder %s68, %s69
    %p81 = scmp.eq.s32.totalorder %s17, 1
    %p82 = por %p80, %p81
    %p84 = scmp.ne.s32.totalorder %s69, %s83
    %p85 = scmp.eq.s32.totalorder %s17, 0
    %p86 = por %p84, %p85
    %s88 = sadd.s32 %s87, 1
    %p91 = scmp.eq.s32.totalorder %s11, 1
    %p92 = scmp.ne.s32.totalorder %s87, %s89
    %p93 = scmp.eq.s32.totalorder %s11, 0
    %p94 = por %p92, %p93
    %p95 = scmp.ne.s32.totalorder %s87, %s89
    %p96 = scmp.eq.s32.totalorder %s16, 1
    %p97 = por %p95, %p96
    %p98 = scmp.ne.s32.totalorder %s89, %s90
    %p99 = scmp.eq.s32.totalorder %s16, 0
    %p100 = por %p98, %p99
    %p101 = scmp.ne.s32.totalorder %s89, %s90
    %p102 = scmp.eq.s32.totalorder %s17, 1
    %p103 = por %p101, %p102
    %p105 = scmp.ne.s32.totalorder %s90, %s104
    %p106 = scmp.eq.s32.totalorder %s17, 0
    %p107 = por %p105, %p106
    %s109 = sadd.s32 %s108, 1
    %p112 = scmp.eq.s32.totalorder %s11, 1
    %p113 = scmp.ne.s32.totalorder %s108, %s110
    %p114 = scmp.eq.s32.totalorder %s11, 0
    %p115 = por %p113, %p114
    %p116 = scmp.ne.s32.totalorder %s108, %s110
    %p117 = scmp.eq.s32.totalorder %s16, 1
    %p118 = por %p116, %p117
    %p119 = scmp.ne.s32.totalorder %s110, %s111
    %p120 = scmp.eq.s32.totalorder %s16, 0
    %p121 = por %p119, %p120
    %p122 = scmp.ne.s32.totalorder %s110, %s111
    %p123 = scmp.eq.s32.totalorder %s17, 1
    %p124 = por %p122, %p123
    %p126 = scmp.ne.s32.totalorder %s111, %s125
    %p127 = scmp.eq.s32.totalorder %s17, 0
    %p128 = por %p126, %p127
    %s129 = ssub.s32 %s11, %s18
    %p130 = scmp.eq.s32.totalorder %s129, 0
    %s132 = sadd.s32 %s131, 1
    %s133 = scalar_select %p130, %s131, %s132
    %p136 = pneg %p130
    %p137 = scmp.eq.s32.totalorder %s11, 1
    %p138 = por %p136, %p137
    %p139 = scmp.ne.s32.totalorder %s131, %s134
    %p140 = scmp.eq.s32.totalorder %s11, 0
    %p141 = por %p139, %p140
    %p142 = scmp.ne.s32.totalorder %s131, %s134
    %p143 = scmp.eq.s32.totalorder %s16, 1
    %p144 = por %p142, %p143
    %p145 = scmp.ne.s32.totalorder %s134, %s135
    %p146 = scmp.eq.s32.totalorder %s16, 0
    %p147 = por %p145, %p146
    %p148 = scmp.ne.s32.totalorder %s134, %s135
    %p149 = scmp.eq.s32.totalorder %s17, 1
    %p150 = por %p148, %p149
    %p152 = scmp.ne.s32.totalorder %s135, %s151
    %p153 = scmp.eq.s32.totalorder %s17, 0
    %p154 = por %p152, %p153
    %p155 = scmp.le.s32.totalorder 1, %s11
    %p156 = scmp.lt.s32.totalorder %s11, 3
    %p157 = pnand %p155, %p156
    %p158 = pneg %p157
    // Predicated region
    $region9: #{double_conv.1} parent=5 // pred_check
      _
    $region10: #{double_conv.1} parent=5 // pred_check_branch
      %160 = sbr.rel (%p157) target = $region12
    $region11: #{double_conv.1} parent=5 // pred_region
      %s161 = ssub.s32 %s11, 1
      // Predicated region
      $region13: #{double_conv.1} parent=11 // pred_check
        %p162 = pneg %p58
      $region14: #{double_conv.1} parent=11 // pred_check_branch
        %164 = sbr.rel (%p162) target = $region16
      $region15: #{double_conv.1} parent=11 // pred_region
        _
      $region16: #{double_conv.1} parent=11 // pred_fallthru
        _
      // Predicated region
      $region17: #{double_conv.1} parent=11 // pred_check
        %p165 = pneg %p79
      $region18: #{double_conv.1} parent=11 // pred_check_branch
        %167 = sbr.rel (%p165) target = $region20
      $region19: #{double_conv.1} parent=11 // pred_region
        _
      $region20: #{double_conv.1} parent=11 // pred_fallthru
        _
      // Predicated region
      $region21: #{double_conv.1} parent=11 // pred_check
        %p168 = pneg %p100
      $region22: #{double_conv.1} parent=11 // pred_check_branch
        %170 = sbr.rel (%p168) target = $region24
      $region23: #{double_conv.1} parent=11 // pred_region
        _
      $region24: #{double_conv.1} parent=11 // pred_fallthru
        _
      // Predicated region
      $region25: #{double_conv.1} parent=11 // pred_check
        %p171 = pneg %p121
      $region26: #{double_conv.1} parent=11 // pred_check_branch
        %173 = sbr.rel (%p171) target = $region28
      $region27: #{double_conv.1} parent=11 // pred_region
        _
      $region28: #{double_conv.1} parent=11 // pred_fallthru
        _
    $region12: #{double_conv.1} parent=5 // pred_fallthru
      _
    %p174 = scmp.lt.s32.totalorder %s11, 2
    // Predicated region
    $region29: #{double_conv.1} parent=5 // pred_check
      %p175 = pneg %p174
    $region30: #{double_conv.1} parent=5 // pred_check_branch
      %177 = sbr.rel (%p175) target = $region32
    $region31: #{double_conv.1} parent=5 // pred_region
      // Predicated region
      $region33: #{double_conv.1} parent=31 // pred_check
        %p178 = pneg %p31
      $region34: #{double_conv.1} parent=31 // pred_check_branch
        %180 = sbr.rel (%p178) target = $region36
      $region35: #{double_conv.1} parent=31 // pred_region
        %p181 = scmp.lt.s32.totalorder %s11, 1
        %s182 = scalar_select %p181, %s11, 1
        %s183 = smul.addr %s182, 32
        %s184 = smul.addr %s183, 8
        %s185 = scalar_lea.vmem %s0, %s184
      $region36: #{double_conv.1} parent=31 // pred_fallthru
        _
    $region32: #{double_conv.1} parent=5 // pred_fallthru
      _
    %p186 = scmp.le.s32.totalorder 1, %s11
    %p187 = scmp.lt.s32.totalorder %s11, 3
    %p188 = pnand %p186, %p187
    %p189 = pneg %p188
    // Predicated region
    $region37: #{double_conv.1} parent=5 // pred_check
      _
    $region38: #{double_conv.1} parent=5 // pred_check_branch
      %191 = sbr.rel (%p188) target = $region40
    $region39: #{double_conv.1} parent=5 // pred_region
      %s192 = ssub.s32 %s11, 1
      %p193 = scmp.lt.s32.totalorder %s16, 1
      %s194 = scalar_select %p193, %s16, 1
      %s195 = smul.addr %s194, 32
      %s196 = smul.addr %s195, 8
      %s197 = scalar_lea.vmem %s0, %s196
      %p198 = pneg %p37
      %p199 = pneg %p34
      %p200 = pneg %p58
      %p201 = pneg %p55
      %p202 = pneg %p79
      %p203 = pneg %p76
      %p204 = pneg %p100
      %p205 = pneg %p97
      %p206 = pneg %p121
      %p207 = pneg %p118
      %p208 = pneg %p147
      %p209 = pneg %p144
      %p210 = scmp.lt.s32.totalorder %s16, 1
      %s211 = scalar_select %p210, %s16, 1
      %s212 = smul.addr %s211, 32
      %s213 = smul.addr %s212, 8
      %s214 = scalar_lea.vmem %s5, %s213
      %p215 = scmp.lt.s32.totalorder %s16, 1
      %s216 = scalar_select %p215, %s16, 1
      %s217 = smul.addr %s216, 32
      %s218 = smul.addr %s217, 8
      %s219 = scalar_lea.vmem %s0, %s218
      %p220 = scmp.lt.s32.totalorder %s16, 1
      %s221 = scalar_select %p220, %s16, 1
      %s222 = smul.addr %s221, 32
      %s223 = smul.addr %s222, 8
      %s224 = scalar_lea.vmem %s5, %s223
      %vm226 = vcmask 27648
      %227 = vst.msk [vmem:[#allocation2] sm:$0xf] %vm226, 0
      %228 = vst.msk [vmem:[#allocation2 + $0x4] sm:$0xf] %vm226, 0
      %vm229 = vcmask 24576
      %230 = vst.msk [vmem:[#allocation2 + $0x8] sm:$0x1] %vm229, 0
      %s231 = scalar_lea.vmem [#allocation2], 204
      %232 = vst.msk [vmem:[%s231] sm:$0xf] %vm226, 0
      %233 = vst.msk [vmem:[%s231 + $0x4] sm:$0xf] %vm226, 0
      %234 = vst.msk [vmem:[%s231 + $0x8] sm:$0x1] %vm229, 0
      %vm235 = vcmask 24576
      %vm236 = vsmask.f32 256
      %vm237 = vmand %vm235, %vm236
      %v238 = vld [vmem:[#allocation2] sm:$0x1]
      %v239 = vsel %vm237, 0, %v238
      %240 = vst [vmem:[#allocation2] sm:$0x1] %v239
      %v241 = vld [vmem:[#allocation2 + $0xc] sm:$0x1]
      %v242 = vsel %vm237, 0, %v241
      %243 = vst [vmem:[#allocation2 + $0xc] sm:$0x1] %v242
      %v244 = vld [vmem:[#allocation2 + $0x18] sm:$0x1]
      %v245 = vsel %vm237, 0, %v244
      %246 = vst [vmem:[#allocation2 + $0x18] sm:$0x1] %v245
      %v247 = vld [vmem:[#allocation2 + $0x24] sm:$0x1]
      %v248 = vsel %vm237, 0, %v247
      %249 = vst [vmem:[#allocation2 + $0x24] sm:$0x1] %v248
      %v250 = vld [vmem:[#allocation2 + $0x30] sm:$0x1]
      %v251 = vsel %vm237, 0, %v250
      %252 = vst [vmem:[#allocation2 + $0x30] sm:$0x1] %v251
      %v253 = vld [vmem:[#allocation2 + $0x3c] sm:$0x1]
      %v254 = vsel %vm237, 0, %v253
      %255 = vst [vmem:[#allocation2 + $0x3c] sm:$0x1] %v254
      %v256 = vld [vmem:[#allocation2 + $0x48] sm:$0x1]
      %v257 = vsel %vm237, 0, %v256
      %258 = vst [vmem:[#allocation2 + $0x48] sm:$0x1] %v257
      %v259 = vld [vmem:[#allocation2 + $0x54] sm:$0x1]
      %v260 = vsel %vm237, 0, %v259
      %261 = vst [vmem:[#allocation2 + $0x54] sm:$0x1] %v260
      %v262 = vld [vmem:[#allocation2 + $0x60] sm:$0x1]
      %v263 = vsel %vm237, 0, %v262
      %264 = vst [vmem:[#allocation2 + $0x60] sm:$0x1] %v263
      %v265 = vld [vmem:[#allocation2 + $0x6c] sm:$0x1]
      %v266 = vsel %vm237, 0, %v265
      %267 = vst [vmem:[#allocation2 + $0x6c] sm:$0x1] %v266
      %v268 = vld [vmem:[#allocation2 + $0x78] sm:$0x1]
      %v269 = vsel %vm237, 0, %v268
      %270 = vst [vmem:[#allocation2 + $0x78] sm:$0x1] %v269
      %v271 = vld [vmem:[#allocation2 + $0x84] sm:$0x1]
      %v272 = vsel %vm237, 0, %v271
      %273 = vst [vmem:[#allocation2 + $0x84] sm:$0x1] %v272
      %v274 = vld [vmem:[#allocation2 + $0x90] sm:$0x1]
      %v275 = vsel %vm237, 0, %v274
      %276 = vst [vmem:[#allocation2 + $0x90] sm:$0x1] %v275
      %v277 = vld [vmem:[#allocation2 + $0x9c] sm:$0x1]
      %v278 = vsel %vm237, 0, %v277
      %279 = vst [vmem:[#allocation2 + $0x9c] sm:$0x1] %v278
      %v280 = vld [vmem:[#allocation2 + $0xa8] sm:$0x1]
      %v281 = vsel %vm237, 0, %v280
      %282 = vst [vmem:[#allocation2 + $0xa8] sm:$0x1] %v281
      %v283 = vld [vmem:[#allocation2 + $0xb4] sm:$0x1]
      %v284 = vsel %vm237, 0, %v283
      %285 = vst [vmem:[#allocation2 + $0xb4] sm:$0x1] %v284
      %v286 = vld [vmem:[#allocation2 + $0xc0] sm:$0x1]
      %v287 = vsel %vm237, 0, %v286
      %288 = vst [vmem:[#allocation2 + $0xc0] sm:$0x1] %v287
      %v289 = vld [vmem:[#allocation2 + $0xcc] sm:$0x1]
      %v290 = vsel %vm237, 0, %v289
      %291 = vst [vmem:[#allocation2 + $0xcc] sm:$0x1] %v290
      %vm292 = vsmask.f32 7938
      %vm293 = vmand %vm235, %vm292
      %v294 = vld [vmem:[#allocation2 + $0x8] sm:$0x1]
      %v295 = vsel %vm293, 0, %v294
      %296 = vst [vmem:[#allocation2 + $0x8] sm:$0x1] %v295
      %v297 = vld [vmem:[#allocation2 + $0x14] sm:$0x1]
      %v298 = vsel %vm293, 0, %v297
      %299 = vst [vmem:[#allocation2 + $0x14] sm:$0x1] %v298
      %v300 = vld [vmem:[#allocation2 + $0x20] sm:$0x1]
      %v301 = vsel %vm293, 0, %v300
      %302 = vst [vmem:[#allocation2 + $0x20] sm:$0x1] %v301
      %v303 = vld [vmem:[#allocation2 + $0x2c] sm:$0x1]
      %v304 = vsel %vm293, 0, %v303
      %305 = vst [vmem:[#allocation2 + $0x2c] sm:$0x1] %v304
      %v306 = vld [vmem:[#allocation2 + $0x38] sm:$0x1]
      %v307 = vsel %vm293, 0, %v306
      %308 = vst [vmem:[#allocation2 + $0x38] sm:$0x1] %v307
      %v309 = vld [vmem:[#allocation2 + $0x44] sm:$0x1]
      %v310 = vsel %vm293, 0, %v309
      %311 = vst [vmem:[#allocation2 + $0x44] sm:$0x1] %v310
      %v312 = vld [vmem:[#allocation2 + $0x50] sm:$0x1]
      %v313 = vsel %vm293, 0, %v312
      %314 = vst [vmem:[#allocation2 + $0x50] sm:$0x1] %v313
      %v315 = vld [vmem:[#allocation2 + $0x5c] sm:$0x1]
      %v316 = vsel %vm293, 0, %v315
      %317 = vst [vmem:[#allocation2 + $0x5c] sm:$0x1] %v316
      %v318 = vld [vmem:[#allocation2 + $0x68] sm:$0x1]
      %v319 = vsel %vm293, 0, %v318
      %320 = vst [vmem:[#allocation2 + $0x68] sm:$0x1] %v319
      %v321 = vld [vmem:[#allocation2 + $0x74] sm:$0x1]
      %v322 = vsel %vm293, 0, %v321
      %323 = vst [vmem:[#allocation2 + $0x74] sm:$0x1] %v322
      %v324 = vld [vmem:[#allocation2 + $0x80] sm:$0x1]
      %v325 = vsel %vm293, 0, %v324
      %326 = vst [vmem:[#allocation2 + $0x80] sm:$0x1] %v325
      %v327 = vld [vmem:[#allocation2 + $0x8c] sm:$0x1]
      %v328 = vsel %vm293, 0, %v327
      %329 = vst [vmem:[#allocation2 + $0x8c] sm:$0x1] %v328
      %v330 = vld [vmem:[#allocation2 + $0x98] sm:$0x1]
      %v331 = vsel %vm293, 0, %v330
      %332 = vst [vmem:[#allocation2 + $0x98] sm:$0x1] %v331
      %v333 = vld [vmem:[#allocation2 + $0xa4] sm:$0x1]
      %v334 = vsel %vm293, 0, %v333
      %335 = vst [vmem:[#allocation2 + $0xa4] sm:$0x1] %v334
      %v336 = vld [vmem:[#allocation2 + $0xb0] sm:$0x1]
      %v337 = vsel %vm293, 0, %v336
      %338 = vst [vmem:[#allocation2 + $0xb0] sm:$0x1] %v337
      %v339 = vld [vmem:[#allocation2 + $0xbc] sm:$0x1]
      %v340 = vsel %vm293, 0, %v339
      %341 = vst [vmem:[#allocation2 + $0xbc] sm:$0x1] %v340
      %v342 = vld [vmem:[#allocation2 + $0xc8] sm:$0x1]
      %v343 = vsel %vm293, 0, %v342
      %344 = vst [vmem:[#allocation2 + $0xc8] sm:$0x1] %v343
      %v345 = vld [vmem:[#allocation2 + $0xd4] sm:$0x1]
      %v346 = vsel %vm293, 0, %v345
      %347 = vst [vmem:[#allocation2 + $0xd4] sm:$0x1] %v346
      %vm348 = vcmask 60416
      %349 = vst.msk [vmem:[#allocation3] sm:$0xf] %vm348, 0
      %350 = vst.msk [vmem:[#allocation3 + $0x4] sm:$0xf] %vm348, 0
      %vm351 = vcmask 57344
      %352 = vst.msk [vmem:[#allocation3 + $0x8] sm:$0x1] %vm351, 0
      %s353 = scalar_lea.vmem [#allocation3], 204
      %354 = vst.msk [vmem:[%s353] sm:$0xf] %vm348, 0
      %355 = vst.msk [vmem:[%s353 + $0x4] sm:$0xf] %vm348, 0
      %356 = vst.msk [vmem:[%s353 + $0x8] sm:$0x1] %vm351, 0
      %vm357 = vcmask 57344
      %vm358 = vmand %vm357, %vm236
      %v359 = vld [vmem:[#allocation3] sm:$0x1]
      %v360 = vsel %vm358, 0, %v359
      %361 = vst [vmem:[#allocation3] sm:$0x1] %v360
      %v362 = vld [vmem:[#allocation3 + $0xc] sm:$0x1]
      %v363 = vsel %vm358, 0, %v362
      %364 = vst [vmem:[#allocation3 + $0xc] sm:$0x1] %v363
      %v365 = vld [vmem:[#allocation3 + $0x18] sm:$0x1]
      %v366 = vsel %vm358, 0, %v365
      %367 = vst [vmem:[#allocation3 + $0x18] sm:$0x1] %v366
      %v368 = vld [vmem:[#allocation3 + $0x24] sm:$0x1]
      %v369 = vsel %vm358, 0, %v368
      %370 = vst [vmem:[#allocation3 + $0x24] sm:$0x1] %v369
      %v371 = vld [vmem:[#allocation3 + $0x30] sm:$0x1]
      %v372 = vsel %vm358, 0, %v371
      %373 = vst [vmem:[#allocation3 + $0x30] sm:$0x1] %v372
      %v374 = vld [vmem:[#allocation3 + $0x3c] sm:$0x1]
      %v375 = vsel %vm358, 0, %v374
      %376 = vst [vmem:[#allocation3 + $0x3c] sm:$0x1] %v375
      %v377 = vld [vmem:[#allocation3 + $0x48] sm:$0x1]
      %v378 = vsel %vm358, 0, %v377
      %379 = vst [vmem:[#allocation3 + $0x48] sm:$0x1] %v378
      %v380 = vld [vmem:[#allocation3 + $0x54] sm:$0x1]
      %v381 = vsel %vm358, 0, %v380
      %382 = vst [vmem:[#allocation3 + $0x54] sm:$0x1] %v381
      %v383 = vld [vmem:[#allocation3 + $0x60] sm:$0x1]
      %v384 = vsel %vm358, 0, %v383
      %385 = vst [vmem:[#allocation3 + $0x60] sm:$0x1] %v384
      %v386 = vld [vmem:[#allocation3 + $0x6c] sm:$0x1]
      %v387 = vsel %vm358, 0, %v386
      %388 = vst [vmem:[#allocation3 + $0x6c] sm:$0x1] %v387
      %v389 = vld [vmem:[#allocation3 + $0x78] sm:$0x1]
      %v390 = vsel %vm358, 0, %v389
      %391 = vst [vmem:[#allocation3 + $0x78] sm:$0x1] %v390
      %v392 = vld [vmem:[#allocation3 + $0x84] sm:$0x1]
      %v393 = vsel %vm358, 0, %v392
      %394 = vst [vmem:[#allocation3 + $0x84] sm:$0x1] %v393
      %v395 = vld [vmem:[#allocation3 + $0x90] sm:$0x1]
      %v396 = vsel %vm358, 0, %v395
      %397 = vst [vmem:[#allocation3 + $0x90] sm:$0x1] %v396
      %v398 = vld [vmem:[#allocation3 + $0x9c] sm:$0x1]
      %v399 = vsel %vm358, 0, %v398
      %400 = vst [vmem:[#allocation3 + $0x9c] sm:$0x1] %v399
      %v401 = vld [vmem:[#allocation3 + $0xa8] sm:$0x1]
      %v402 = vsel %vm358, 0, %v401
      %403 = vst [vmem:[#allocation3 + $0xa8] sm:$0x1] %v402
      %v404 = vld [vmem:[#allocation3 + $0xb4] sm:$0x1]
      %v405 = vsel %vm358, 0, %v404
      %406 = vst [vmem:[#allocation3 + $0xb4] sm:$0x1] %v405
      %v407 = vld [vmem:[#allocation3 + $0xc0] sm:$0x1]
      %v408 = vsel %vm358, 0, %v407
      %409 = vst [vmem:[#allocation3 + $0xc0] sm:$0x1] %v408
      %v410 = vld [vmem:[#allocation3 + $0xcc] sm:$0x1]
      %v411 = vsel %vm358, 0, %v410
      %412 = vst [vmem:[#allocation3 + $0xcc] sm:$0x1] %v411
      %vm413 = vmand %vm357, %vm292
      %v414 = vld [vmem:[#allocation3 + $0x8] sm:$0x1]
      %v415 = vsel %vm413, 0, %v414
      %416 = vst [vmem:[#allocation3 + $0x8] sm:$0x1] %v415
      %v417 = vld [vmem:[#allocation3 + $0x14] sm:$0x1]
      %v418 = vsel %vm413, 0, %v417
      %419 = vst [vmem:[#allocation3 + $0x14] sm:$0x1] %v418
      %v420 = vld [vmem:[#allocation3 + $0x20] sm:$0x1]
      %v421 = vsel %vm413, 0, %v420
      %422 = vst [vmem:[#allocation3 + $0x20] sm:$0x1] %v421
      %v423 = vld [vmem:[#allocation3 + $0x2c] sm:$0x1]
      %v424 = vsel %vm413, 0, %v423
      %425 = vst [vmem:[#allocation3 + $0x2c] sm:$0x1] %v424
      %v426 = vld [vmem:[#allocation3 + $0x38] sm:$0x1]
      %v427 = vsel %vm413, 0, %v426
      %428 = vst [vmem:[#allocation3 + $0x38] sm:$0x1] %v427
      %v429 = vld [vmem:[#allocation3 + $0x44] sm:$0x1]
      %v430 = vsel %vm413, 0, %v429
      %431 = vst [vmem:[#allocation3 + $0x44] sm:$0x1] %v430
      %v432 = vld [vmem:[#allocation3 + $0x50] sm:$0x1]
      %v433 = vsel %vm413, 0, %v432
      %434 = vst [vmem:[#allocation3 + $0x50] sm:$0x1] %v433
      %v435 = vld [vmem:[#allocation3 + $0x5c] sm:$0x1]
      %v436 = vsel %vm413, 0, %v435
      %437 = vst [vmem:[#allocation3 + $0x5c] sm:$0x1] %v436
      %v438 = vld [vmem:[#allocation3 + $0x68] sm:$0x1]
      %v439 = vsel %vm413, 0, %v438
      %440 = vst [vmem:[#allocation3 + $0x68] sm:$0x1] %v439
      %v441 = vld [vmem:[#allocation3 + $0x74] sm:$0x1]
      %v442 = vsel %vm413, 0, %v441
      %443 = vst [vmem:[#allocation3 + $0x74] sm:$0x1] %v442
      %v444 = vld [vmem:[#allocation3 + $0x80] sm:$0x1]
      %v445 = vsel %vm413, 0, %v444
      %446 = vst [vmem:[#allocation3 + $0x80] sm:$0x1] %v445
      %v447 = vld [vmem:[#allocation3 + $0x8c] sm:$0x1]
      %v448 = vsel %vm413, 0, %v447
      %449 = vst [vmem:[#allocation3 + $0x8c] sm:$0x1] %v448
      %v450 = vld [vmem:[#allocation3 + $0x98] sm:$0x1]
      %v451 = vsel %vm413, 0, %v450
      %452 = vst [vmem:[#allocation3 + $0x98] sm:$0x1] %v451
      %v453 = vld [vmem:[#allocation3 + $0xa4] sm:$0x1]
      %v454 = vsel %vm413, 0, %v453
      %455 = vst [vmem:[#allocation3 + $0xa4] sm:$0x1] %v454
      %v456 = vld [vmem:[#allocation3 + $0xb0] sm:$0x1]
      %v457 = vsel %vm413, 0, %v456
      %458 = vst [vmem:[#allocation3 + $0xb0] sm:$0x1] %v457
      %v459 = vld [vmem:[#allocation3 + $0xbc] sm:$0x1]
      %v460 = vsel %vm413, 0, %v459
      %461 = vst [vmem:[#allocation3 + $0xbc] sm:$0x1] %v460
      %v462 = vld [vmem:[#allocation3 + $0xc8] sm:$0x1]
      %v463 = vsel %vm413, 0, %v462
      %464 = vst [vmem:[#allocation3 + $0xc8] sm:$0x1] %v463
      %v465 = vld [vmem:[#allocation3 + $0xd4] sm:$0x1]
      %v466 = vsel %vm413, 0, %v465
      %467 = vst [vmem:[#allocation3 + $0xd4] sm:$0x1] %v466
      %v468 = vld [vmem:[%s219] sm:$0xff]
      %v469 = vld [vmem:[%s219 + $0x8] sm:$0xff]
      %v470 = vld [vmem:[%s219 + $0x10] sm:$0xff]
      %v471 = vld [vmem:[%s219 + $0x18] sm:$0xff]
      %v472 = vld [vmem:[%s219 + $0x20] sm:$0xff]
      %v473 = vld [vmem:[%s219 + $0x28] sm:$0xff]
      %v474 = vld [vmem:[%s219 + $0x30] sm:$0xff]
      %v475 = vld [vmem:[%s219 + $0x38] sm:$0xff]
      %v476 = vld [vmem:[%s219 + $0x40] sm:$0xff]
      %v477 = vld [vmem:[%s219 + $0x48] sm:$0xff]
      %v478 = vld [vmem:[%s219 + $0x50] sm:$0xff]
      %v479 = vld [vmem:[%s219 + $0x58] sm:$0xff]
      %v480 = vld [vmem:[%s219 + $0x60] sm:$0xff]
      %v481 = vld [vmem:[%s219 + $0x68] sm:$0xff]
      %v482 = vld [vmem:[%s219 + $0x70] sm:$0xff]
      %v483 = vld [vmem:[%s219 + $0x78] sm:$0xff]
      %v484 = vld [vmem:[%s219 + $0x80] sm:$0xff]
      %v485 = vld [vmem:[%s219 + $0x88] sm:$0xff]
      %v486 = vld [vmem:[%s219 + $0x90] sm:$0xff]
      %v487 = vld [vmem:[%s219 + $0x98] sm:$0xff]
      %v488 = vld [vmem:[%s219 + $0xa0] sm:$0xff]
      %v489 = vld [vmem:[%s219 + $0xa8] sm:$0xff]
      %v490 = vld [vmem:[%s219 + $0xb0] sm:$0xff]
      %v491 = vld [vmem:[%s219 + $0xb8] sm:$0xff]
      %v492 = vld [vmem:[%s219 + $0xc0] sm:$0xff]
      %v493 = vld [vmem:[%s219 + $0xc8] sm:$0xff]
      %v494 = vld [vmem:[%s219 + $0xd0] sm:$0xff]
      %v495 = vld [vmem:[%s219 + $0xd8] sm:$0xff]
      %v496 = vld [vmem:[%s219 + $0xe0] sm:$0xff]
      %v497 = vld [vmem:[%s219 + $0xe8] sm:$0xff]
      %v498 = vld [vmem:[%s219 + $0xf0] sm:$0xff]
      %v499 = vld [vmem:[%s219 + $0xf8] sm:$0xff]
      %v500 = vpack.c.bf16 %v469, %v468
      %v501 = vpack.c.bf16 %v471, %v470
      %v502 = vpack.c.bf16 %v473, %v472
      %v503 = vpack.c.bf16 %v475, %v474
      %v504 = vpack.c.bf16 %v477, %v476
      %v505 = vpack.c.bf16 %v479, %v478
      %v506 = vpack.c.bf16 %v481, %v480
      %v507 = vpack.c.bf16 %v483, %v482
      %v508 = vpack.c.bf16 %v485, %v484
      %v509 = vpack.c.bf16 %v487, %v486
      %v510 = vpack.c.bf16 %v489, %v488
      %v511 = vpack.c.bf16 %v491, %v490
      %v512 = vpack.c.bf16 %v493, %v492
      %v513 = vpack.c.bf16 %v495, %v494
      %v514 = vpack.c.bf16 %v497, %v496
      %v515 = vpack.c.bf16 %v499, %v498
      %v532 = vunpack.c.l.b16 %v500
      %v533 = vunpack.c.h.b16 %v500
      %v534 = vunpack.c.l.b16 %v501
      %v535 = vunpack.c.h.b16 %v501
      %v536 = vunpack.c.l.b16 %v502
      %v537 = vunpack.c.h.b16 %v502
      %v538 = vunpack.c.l.b16 %v503
      %v539 = vunpack.c.h.b16 %v503
      %v540 = vunpack.c.l.b16 %v504
      %v541 = vunpack.c.h.b16 %v504
      %v542 = vunpack.c.l.b16 %v505
      %v543 = vunpack.c.h.b16 %v505
      %v544 = vunpack.c.l.b16 %v506
      %v545 = vunpack.c.h.b16 %v506
      %v546 = vunpack.c.l.b16 %v507
      %v547 = vunpack.c.h.b16 %v507
      %v548 = vunpack.c.l.b16 %v508
      %v549 = vunpack.c.h.b16 %v508
      %v550 = vunpack.c.l.b16 %v509
      %v551 = vunpack.c.h.b16 %v509
      %v552 = vunpack.c.l.b16 %v510
      %v553 = vunpack.c.h.b16 %v510
      %v554 = vunpack.c.l.b16 %v511
      %v555 = vunpack.c.h.b16 %v511
      %v556 = vunpack.c.l.b16 %v512
      %v557 = vunpack.c.h.b16 %v512
      %v558 = vunpack.c.l.b16 %v513
      %v559 = vunpack.c.h.b16 %v513
      %v560 = vunpack.c.l.b16 %v514
      %v561 = vunpack.c.h.b16 %v514
      %v562 = vunpack.c.l.b16 %v515
      %v563 = vunpack.c.h.b16 %v515
      %v564 = vpack.c.b16 %v532, %v532
      %v565 = vpack.c.b16 %v533, %v533
      %v566 = vpack.c.b16 %v534, %v534
      %v567 = vpack.c.b16 %v535, %v535
      %v568 = vpack.c.b16 %v536, %v536
      %v569 = vpack.c.b16 %v537, %v537
      %v570 = vpack.c.b16 %v538, %v538
      %v571 = vpack.c.b16 %v539, %v539
      %v572 = vpack.c.b16 %v540, %v540
      %v573 = vpack.c.b16 %v541, %v541
      %v574 = vpack.c.b16 %v542, %v542
      %v575 = vpack.c.b16 %v543, %v543
      %v576 = vpack.c.b16 %v544, %v544
      %v577 = vpack.c.b16 %v545, %v545
      %v578 = vpack.c.b16 %v546, %v546
      %v579 = vpack.c.b16 %v547, %v547
      %v580 = vpack.c.b16 %v548, %v548
      %v581 = vpack.c.b16 %v549, %v549
      %v582 = vpack.c.b16 %v550, %v550
      %v583 = vpack.c.b16 %v551, %v551
      %v584 = vpack.c.b16 %v552, %v552
      %v585 = vpack.c.b16 %v553, %v553
      %v586 = vpack.c.b16 %v554, %v554
      %v587 = vpack.c.b16 %v555, %v555
      %v588 = vpack.c.b16 %v556, %v556
      %v589 = vpack.c.b16 %v557, %v557
      %v590 = vpack.c.b16 %v558, %v558
      %v591 = vpack.c.b16 %v559, %v559
      %v592 = vpack.c.b16 %v560, %v560
      %v593 = vpack.c.b16 %v561, %v561
      %v594 = vpack.c.b16 %v562, %v562
      %v595 = vpack.c.b16 %v563, %v563
      %vm596 = vsmask.f32 4368
      %vm597 = vmor %vm236, %vm596
      %v599 = vshrl.u32 %v564, 16
      %v601 = vrot.slane %v599, 7
      %v602 = vshll.u32 %v564, 16
      %v604 = vor.u32 %v601, %v602
      %v605 = vrot.slane %v601, 4
      %v607 = vshrl.u32 %v565, 16
      %v609 = vrot.slane %v607, 7
      %v610 = vshll.u32 %v565, 16
      %v612 = vor.u32 %v609, %v610
      %v613 = vsel %vm597, %v605, %v612
      %v614 = vrot.slane %v609, 4
      %v616 = vshrl.u32 %v566, 16
      %v618 = vrot.slane %v616, 7
      %v619 = vshll.u32 %v566, 16
      %v621 = vor.u32 %v618, %v619
      %v622 = vrot.slane %v618, 4
      %v624 = vshrl.u32 %v567, 16
      %v626 = vrot.slane %v624, 7
      %v627 = vshll.u32 %v567, 16
      %v629 = vor.u32 %v626, %v627
      %v630 = vsel %vm597, %v622, %v629
      %v631 = vrot.slane %v626, 4
      %v633 = vshrl.u32 %v568, 16
      %v635 = vrot.slane %v633, 7
      %v636 = vshll.u32 %v568, 16
      %v638 = vor.u32 %v635, %v636
      %v639 = vrot.slane %v635, 4
      %v641 = vshrl.u32 %v569, 16
      %v643 = vrot.slane %v641, 7
      %v644 = vshll.u32 %v569, 16
      %v646 = vor.u32 %v643, %v644
      %v647 = vsel %vm597, %v639, %v646
      %v648 = vrot.slane %v643, 4
      %v650 = vshrl.u32 %v570, 16
      %v652 = vrot.slane %v650, 7
      %v653 = vshll.u32 %v570, 16
      %v655 = vor.u32 %v652, %v653
      %v656 = vrot.slane %v652, 4
      %v658 = vshrl.u32 %v571, 16
      %v660 = vrot.slane %v658, 7
      %v661 = vshll.u32 %v571, 16
      %v663 = vor.u32 %v660, %v661
      %v664 = vsel %vm597, %v656, %v663
      %v665 = vrot.slane %v660, 4
      %v667 = vshrl.u32 %v572, 16
      %v669 = vrot.slane %v667, 7
      %v670 = vshll.u32 %v572, 16
      %v672 = vor.u32 %v669, %v670
      %v673 = vrot.slane %v669, 4
      %v675 = vshrl.u32 %v573, 16
      %v677 = vrot.slane %v675, 7
      %v678 = vshll.u32 %v573, 16
      %v680 = vor.u32 %v677, %v678
      %v681 = vsel %vm597, %v673, %v680
      %v682 = vrot.slane %v677, 4
      %v684 = vshrl.u32 %v574, 16
      %v686 = vrot.slane %v684, 7
      %v687 = vshll.u32 %v574, 16
      %v689 = vor.u32 %v686, %v687
      %v690 = vrot.slane %v686, 4
      %v692 = vshrl.u32 %v575, 16
      %v694 = vrot.slane %v692, 7
      %v695 = vshll.u32 %v575, 16
      %v697 = vor.u32 %v694, %v695
      %v698 = vsel %vm597, %v690, %v697
      %v699 = vrot.slane %v694, 4
      %v701 = vshrl.u32 %v576, 16
      %v703 = vrot.slane %v701, 7
      %v704 = vshll.u32 %v576, 16
      %v706 = vor.u32 %v703, %v704
      %v707 = vrot.slane %v703, 4
      %v709 = vshrl.u32 %v577, 16
      %v711 = vrot.slane %v709, 7
      %v712 = vshll.u32 %v577, 16
      %v714 = vor.u32 %v711, %v712
      %v715 = vsel %vm597, %v707, %v714
      %v716 = vrot.slane %v711, 4
      %v718 = vshrl.u32 %v578, 16
      %v720 = vrot.slane %v718, 7
      %v721 = vshll.u32 %v578, 16
      %v723 = vor.u32 %v720, %v721
      %v724 = vrot.slane %v720, 4
      %v726 = vshrl.u32 %v579, 16
      %v728 = vrot.slane %v726, 7
      %v729 = vshll.u32 %v579, 16
      %v731 = vor.u32 %v728, %v729
      %v732 = vsel %vm597, %v724, %v731
      %v733 = vrot.slane %v728, 4
      %v735 = vshrl.u32 %v580, 16
      %v737 = vrot.slane %v735, 7
      %v738 = vshll.u32 %v580, 16
      %v740 = vor.u32 %v737, %v738
      %v741 = vrot.slane %v737, 4
      %v743 = vshrl.u32 %v581, 16
      %v745 = vrot.slane %v743, 7
      %v746 = vshll.u32 %v581, 16
      %v748 = vor.u32 %v745, %v746
      %v749 = vsel %vm597, %v741, %v748
      %v750 = vrot.slane %v745, 4
      %v752 = vshrl.u32 %v582, 16
      %v754 = vrot.slane %v752, 7
      %v755 = vshll.u32 %v582, 16
      %v757 = vor.u32 %v754, %v755
      %v758 = vrot.slane %v754, 4
      %v760 = vshrl.u32 %v583, 16
      %v762 = vrot.slane %v760, 7
      %v763 = vshll.u32 %v583, 16
      %v765 = vor.u32 %v762, %v763
      %v766 = vsel %vm597, %v758, %v765
      %v767 = vrot.slane %v762, 4
      %v769 = vshrl.u32 %v584, 16
      %v771 = vrot.slane %v769, 7
      %v772 = vshll.u32 %v584, 16
      %v774 = vor.u32 %v771, %v772
      %v775 = vrot.slane %v771, 4
      %v777 = vshrl.u32 %v585, 16
      %v779 = vrot.slane %v777, 7
      %v780 = vshll.u32 %v585, 16
      %v782 = vor.u32 %v779, %v780
      %v783 = vsel %vm597, %v775, %v782
      %v784 = vrot.slane %v779, 4
      %v786 = vshrl.u32 %v586, 16
      %v788 = vrot.slane %v786, 7
      %v789 = vshll.u32 %v586, 16
      %v791 = vor.u32 %v788, %v789
      %v792 = vrot.slane %v788, 4
      %v794 = vshrl.u32 %v587, 16
      %v796 = vrot.slane %v794, 7
      %v797 = vshll.u32 %v587, 16
      %v799 = vor.u32 %v796, %v797
      %v800 = vsel %vm597, %v792, %v799
      %v801 = vrot.slane %v796, 4
      %v803 = vshrl.u32 %v588, 16
      %v805 = vrot.slane %v803, 7
      %v806 = vshll.u32 %v588, 16
      %v808 = vor.u32 %v805, %v806
      %v809 = vrot.slane %v805, 4
      %v811 = vshrl.u32 %v589, 16
      %v813 = vrot.slane %v811, 7
      %v814 = vshll.u32 %v589, 16
      %v816 = vor.u32 %v813, %v814
      %v817 = vsel %vm597, %v809, %v816
      %v818 = vrot.slane %v813, 4
      %v820 = vshrl.u32 %v590, 16
      %v822 = vrot.slane %v820, 7
      %v823 = vshll.u32 %v590, 16
      %v825 = vor.u32 %v822, %v823
      %v826 = vrot.slane %v822, 4
      %v828 = vshrl.u32 %v591, 16
      %v830 = vrot.slane %v828, 7
      %v831 = vshll.u32 %v591, 16
      %v833 = vor.u32 %v830, %v831
      %v834 = vsel %vm597, %v826, %v833
      %v835 = vrot.slane %v830, 4
      %v837 = vshrl.u32 %v592, 16
      %v839 = vrot.slane %v837, 7
      %v840 = vshll.u32 %v592, 16
      %v842 = vor.u32 %v839, %v840
      %v843 = vrot.slane %v839, 4
      %v845 = vshrl.u32 %v593, 16
      %v847 = vrot.slane %v845, 7
      %v848 = vshll.u32 %v593, 16
      %v850 = vor.u32 %v847, %v848
      %v851 = vsel %vm597, %v843, %v850
      %v852 = vrot.slane %v847, 4
      %v854 = vshrl.u32 %v594, 16
      %v856 = vrot.slane %v854, 7
      %v857 = vshll.u32 %v594, 16
      %v859 = vor.u32 %v856, %v857
      %v860 = vrot.slane %v856, 4
      %v862 = vshrl.u32 %v595, 16
      %v864 = vrot.slane %v862, 7
      %v865 = vshll.u32 %v595, 16
      %v867 = vor.u32 %v864, %v865
      %v868 = vsel %vm597, %v860, %v867
      %v869 = vrot.slane %v864, 4
      %s918 = scalar_lea.vmem [#allocation2], 12
      %vm919 = vcmask 27648
      %vm920 = vmand %vm919, %vm292
      %v921 = vld [vmem:[%s918] sm:$0xf]
      %v922 = vsel %vm920, %v604, %v921
      %923 = vst [vmem:[%s918] sm:$0xf] %v922
      %924 = vst.msk [vmem:[%s918 + $0x4] sm:$0xf] %vm226, %v613
      %v925 = vld [vmem:[%s918 + $0x8] sm:$0x1]
      %v926 = vsel %vm237, %v614, %v925
      %927 = vst [vmem:[%s918 + $0x8] sm:$0x1] %v926
      %v928 = vld [vmem:[%s918 + $0xc] sm:$0xf]
      %v929 = vsel %vm920, %v621, %v928
      %930 = vst [vmem:[%s918 + $0xc] sm:$0xf] %v929
      %931 = vst.msk [vmem:[%s918 + $0x10] sm:$0xf] %vm226, %v630
      %v932 = vld [vmem:[%s918 + $0x14] sm:$0x1]
      %v933 = vsel %vm237, %v631, %v932
      %934 = vst [vmem:[%s918 + $0x14] sm:$0x1] %v933
      %v935 = vld [vmem:[%s918 + $0x18] sm:$0xf]
      %v936 = vsel %vm920, %v638, %v935
      %937 = vst [vmem:[%s918 + $0x18] sm:$0xf] %v936
      %938 = vst.msk [vmem:[%s918 + $0x1c] sm:$0xf] %vm226, %v647
      %v939 = vld [vmem:[%s918 + $0x20] sm:$0x1]
      %v940 = vsel %vm237, %v648, %v939
      %941 = vst [vmem:[%s918 + $0x20] sm:$0x1] %v940
      %v942 = vld [vmem:[%s918 + $0x24] sm:$0xf]
      %v943 = vsel %vm920, %v655, %v942
      %944 = vst [vmem:[%s918 + $0x24] sm:$0xf] %v943
      %945 = vst.msk [vmem:[%s918 + $0x28] sm:$0xf] %vm226, %v664
      %v946 = vld [vmem:[%s918 + $0x2c] sm:$0x1]
      %v947 = vsel %vm237, %v665, %v946
      %948 = vst [vmem:[%s918 + $0x2c] sm:$0x1] %v947
      %v949 = vld [vmem:[%s918 + $0x30] sm:$0xf]
      %v950 = vsel %vm920, %v672, %v949
      %951 = vst [vmem:[%s918 + $0x30] sm:$0xf] %v950
      %952 = vst.msk [vmem:[%s918 + $0x34] sm:$0xf] %vm226, %v681
      %v953 = vld [vmem:[%s918 + $0x38] sm:$0x1]
      %v954 = vsel %vm237, %v682, %v953
      %955 = vst [vmem:[%s918 + $0x38] sm:$0x1] %v954
      %v956 = vld [vmem:[%s918 + $0x3c] sm:$0xf]
      %v957 = vsel %vm920, %v689, %v956
      %958 = vst [vmem:[%s918 + $0x3c] sm:$0xf] %v957
      %959 = vst.msk [vmem:[%s918 + $0x40] sm:$0xf] %vm226, %v698
      %v960 = vld [vmem:[%s918 + $0x44] sm:$0x1]
      %v961 = vsel %vm237, %v699, %v960
      %962 = vst [vmem:[%s918 + $0x44] sm:$0x1] %v961
      %v963 = vld [vmem:[%s918 + $0x48] sm:$0xf]
      %v964 = vsel %vm920, %v706, %v963
      %965 = vst [vmem:[%s918 + $0x48] sm:$0xf] %v964
      %966 = vst.msk [vmem:[%s918 + $0x4c] sm:$0xf] %vm226, %v715
      %v967 = vld [vmem:[%s918 + $0x50] sm:$0x1]
      %v968 = vsel %vm237, %v716, %v967
      %969 = vst [vmem:[%s918 + $0x50] sm:$0x1] %v968
      %v970 = vld [vmem:[%s918 + $0x54] sm:$0xf]
      %v971 = vsel %vm920, %v723, %v970
      %972 = vst [vmem:[%s918 + $0x54] sm:$0xf] %v971
      %973 = vst.msk [vmem:[%s918 + $0x58] sm:$0xf] %vm226, %v732
      %v974 = vld [vmem:[%s918 + $0x5c] sm:$0x1]
      %v975 = vsel %vm237, %v733, %v974
      %976 = vst [vmem:[%s918 + $0x5c] sm:$0x1] %v975
      %v977 = vld [vmem:[%s918 + $0x60] sm:$0xf]
      %v978 = vsel %vm920, %v740, %v977
      %979 = vst [vmem:[%s918 + $0x60] sm:$0xf] %v978
      %980 = vst.msk [vmem:[%s918 + $0x64] sm:$0xf] %vm226, %v749
      %v981 = vld [vmem:[%s918 + $0x68] sm:$0x1]
      %v982 = vsel %vm237, %v750, %v981
      %983 = vst [vmem:[%s918 + $0x68] sm:$0x1] %v982
      %v984 = vld [vmem:[%s918 + $0x6c] sm:$0xf]
      %v985 = vsel %vm920, %v757, %v984
      %986 = vst [vmem:[%s918 + $0x6c] sm:$0xf] %v985
      %987 = vst.msk [vmem:[%s918 + $0x70] sm:$0xf] %vm226, %v766
      %v988 = vld [vmem:[%s918 + $0x74] sm:$0x1]
      %v989 = vsel %vm237, %v767, %v988
      %990 = vst [vmem:[%s918 + $0x74] sm:$0x1] %v989
      %v991 = vld [vmem:[%s918 + $0x78] sm:$0xf]
      %v992 = vsel %vm920, %v774, %v991
      %993 = vst [vmem:[%s918 + $0x78] sm:$0xf] %v992
      %994 = vst.msk [vmem:[%s918 + $0x7c] sm:$0xf] %vm226, %v783
      %v995 = vld [vmem:[%s918 + $0x80] sm:$0x1]
      %v996 = vsel %vm237, %v784, %v995
      %997 = vst [vmem:[%s918 + $0x80] sm:$0x1] %v996
      %v998 = vld [vmem:[%s918 + $0x84] sm:$0xf]
      %v999 = vsel %vm920, %v791, %v998
      %1000 = vst [vmem:[%s918 + $0x84] sm:$0xf] %v999
      %1001 = vst.msk [vmem:[%s918 + $0x88] sm:$0xf] %vm226, %v800
      %v1002 = vld [vmem:[%s918 + $0x8c] sm:$0x1]
      %v1003 = vsel %vm237, %v801, %v1002
      %1004 = vst [vmem:[%s918 + $0x8c] sm:$0x1] %v1003
      %v1005 = vld [vmem:[%s918 + $0x90] sm:$0xf]
      %v1006 = vsel %vm920, %v808, %v1005
      %1007 = vst [vmem:[%s918 + $0x90] sm:$0xf] %v1006
      %1008 = vst.msk [vmem:[%s918 + $0x94] sm:$0xf] %vm226, %v817
      %v1009 = vld [vmem:[%s918 + $0x98] sm:$0x1]
      %v1010 = vsel %vm237, %v818, %v1009
      %1011 = vst [vmem:[%s918 + $0x98] sm:$0x1] %v1010
      %v1012 = vld [vmem:[%s918 + $0x9c] sm:$0xf]
      %v1013 = vsel %vm920, %v825, %v1012
      %1014 = vst [vmem:[%s918 + $0x9c] sm:$0xf] %v1013
      %1015 = vst.msk [vmem:[%s918 + $0xa0] sm:$0xf] %vm226, %v834
      %v1016 = vld [vmem:[%s918 + $0xa4] sm:$0x1]
      %v1017 = vsel %vm237, %v835, %v1016
      %1018 = vst [vmem:[%s918 + $0xa4] sm:$0x1] %v1017
      %v1019 = vld [vmem:[%s918 + $0xa8] sm:$0xf]
      %v1020 = vsel %vm920, %v842, %v1019
      %1021 = vst [vmem:[%s918 + $0xa8] sm:$0xf] %v1020
      %1022 = vst.msk [vmem:[%s918 + $0xac] sm:$0xf] %vm226, %v851
      %v1023 = vld [vmem:[%s918 + $0xb0] sm:$0x1]
      %v1024 = vsel %vm237, %v852, %v1023
      %1025 = vst [vmem:[%s918 + $0xb0] sm:$0x1] %v1024
      %v1026 = vld [vmem:[%s918 + $0xb4] sm:$0xf]
      %v1027 = vsel %vm920, %v859, %v1026
      %1028 = vst [vmem:[%s918 + $0xb4] sm:$0xf] %v1027
      %1029 = vst.msk [vmem:[%s918 + $0xb8] sm:$0xf] %vm226, %v868
      %v1030 = vld [vmem:[%s918 + $0xbc] sm:$0x1]
      %v1031 = vsel %vm237, %v869, %v1030
      %1032 = vst [vmem:[%s918 + $0xbc] sm:$0x1] %v1031
      %v1033 = vld [vmem:[#allocation2] sm:$0xf]
      %v1034 = vld [vmem:[#allocation2 + $0x4] sm:$0xf]
      %v1035 = vld [vmem:[#allocation2 + $0xc] sm:$0xf]
      %v1036 = vld [vmem:[#allocation2 + $0x10] sm:$0xf]
      %v1037 = vld [vmem:[#allocation2 + $0x18] sm:$0xf]
      %v1038 = vld [vmem:[#allocation2 + $0x1c] sm:$0xf]
      %v1039 = vld [vmem:[#allocation2 + $0x24] sm:$0xf]
      %v1040 = vld [vmem:[#allocation2 + $0x28] sm:$0xf]
      %v1041 = vld [vmem:[#allocation2 + $0x30] sm:$0xf]
      %v1042 = vld [vmem:[#allocation2 + $0x34] sm:$0xf]
      %v1043 = vld [vmem:[#allocation2 + $0x3c] sm:$0xf]
      %v1044 = vld [vmem:[#allocation2 + $0x40] sm:$0xf]
      %v1045 = vld [vmem:[#allocation2 + $0x48] sm:$0xf]
      %v1046 = vld [vmem:[#allocation2 + $0x4c] sm:$0xf]
      %v1047 = vld [vmem:[#allocation2 + $0x54] sm:$0xf]
      %v1048 = vld [vmem:[#allocation2 + $0x58] sm:$0xf]
      %v1049 = vld [vmem:[#allocation2 + $0x60] sm:$0xf]
      %v1050 = vld [vmem:[#allocation2 + $0x64] sm:$0xf]
      %v1051 = vld [vmem:[#allocation2 + $0x6c] sm:$0xf]
      %v1052 = vld [vmem:[#allocation2 + $0x70] sm:$0xf]
      %v1053 = vld [vmem:[#allocation2 + $0x78] sm:$0xf]
      %v1054 = vld [vmem:[#allocation2 + $0x7c] sm:$0xf]
      %v1055 = vld [vmem:[#allocation2 + $0x84] sm:$0xf]
      %v1056 = vld [vmem:[#allocation2 + $0x88] sm:$0xf]
      %v1057 = vld [vmem:[#allocation2 + $0x90] sm:$0xf]
      %v1058 = vld [vmem:[#allocation2 + $0x94] sm:$0xf]
      %v1059 = vld [vmem:[#allocation2 + $0x9c] sm:$0xf]
      %v1060 = vld [vmem:[#allocation2 + $0xa0] sm:$0xf]
      %v1061 = vld [vmem:[#allocation2 + $0xa8] sm:$0xf]
      %v1062 = vld [vmem:[#allocation2 + $0xac] sm:$0xf]
      %v1063 = vld [vmem:[#allocation2 + $0xb4] sm:$0xf]
      %v1064 = vld [vmem:[#allocation2 + $0xb8] sm:$0xf]
      %1065 = vst.msk [vmem:[#allocation4] sm:$0xf] %vm226, %v1033
      %1066 = vst.msk [vmem:[#allocation4 + $0x4] sm:$0xf] %vm226, %v1034
      %1067 = vst.msk [vmem:[#allocation4 + $0x8] sm:$0xf] %vm226, %v1035
      %1068 = vst.msk [vmem:[#allocation4 + $0xc] sm:$0xf] %vm226, %v1036
      %1069 = vst.msk [vmem:[#allocation4 + $0x10] sm:$0xf] %vm226, %v1037
      %1070 = vst.msk [vmem:[#allocation4 + $0x14] sm:$0xf] %vm226, %v1038
      %1071 = vst.msk [vmem:[#allocation4 + $0x18] sm:$0xf] %vm226, %v1039
      %1072 = vst.msk [vmem:[#allocation4 + $0x1c] sm:$0xf] %vm226, %v1040
      %1073 = vst.msk [vmem:[#allocation4 + $0x20] sm:$0xf] %vm226, %v1041
      %1074 = vst.msk [vmem:[#allocation4 + $0x24] sm:$0xf] %vm226, %v1042
      %1075 = vst.msk [vmem:[#allocation4 + $0x28] sm:$0xf] %vm226, %v1043
      %1076 = vst.msk [vmem:[#allocation4 + $0x2c] sm:$0xf] %vm226, %v1044
      %1077 = vst.msk [vmem:[#allocation4 + $0x30] sm:$0xf] %vm226, %v1045
      %1078 = vst.msk [vmem:[#allocation4 + $0x34] sm:$0xf] %vm226, %v1046
      %1079 = vst.msk [vmem:[#allocation4 + $0x38] sm:$0xf] %vm226, %v1047
      %1080 = vst.msk [vmem:[#allocation4 + $0x3c] sm:$0xf] %vm226, %v1048
      %1081 = vst.msk [vmem:[#allocation4 + $0x40] sm:$0xf] %vm226, %v1049
      %1082 = vst.msk [vmem:[#allocation4 + $0x44] sm:$0xf] %vm226, %v1050
      %1083 = vst.msk [vmem:[#allocation4 + $0x48] sm:$0xf] %vm226, %v1051
      %1084 = vst.msk [vmem:[#allocation4 + $0x4c] sm:$0xf] %vm226, %v1052
      %1085 = vst.msk [vmem:[#allocation4 + $0x50] sm:$0xf] %vm226, %v1053
      %1086 = vst.msk [vmem:[#allocation4 + $0x54] sm:$0xf] %vm226, %v1054
      %1087 = vst.msk [vmem:[#allocation4 + $0x58] sm:$0xf] %vm226, %v1055
      %1088 = vst.msk [vmem:[#allocation4 + $0x5c] sm:$0xf] %vm226, %v1056
      %1089 = vst.msk [vmem:[#allocation4 + $0x60] sm:$0xf] %vm226, %v1057
      %1090 = vst.msk [vmem:[#allocation4 + $0x64] sm:$0xf] %vm226, %v1058
      %1091 = vst.msk [vmem:[#allocation4 + $0x68] sm:$0xf] %vm226, %v1059
      %1092 = vst.msk [vmem:[#allocation4 + $0x6c] sm:$0xf] %vm226, %v1060
      %1093 = vst.msk [vmem:[#allocation4 + $0x70] sm:$0xf] %vm226, %v1061
      %1094 = vst.msk [vmem:[#allocation4 + $0x74] sm:$0xf] %vm226, %v1062
      %1095 = vst.msk [vmem:[#allocation4 + $0x78] sm:$0xf] %vm226, %v1063
      %1096 = vst.msk [vmem:[#allocation4 + $0x7c] sm:$0xf] %vm226, %v1064
      %v1097 = vld [vmem:[#allocation2] sm:$0xf]
      %v1098 = vld [vmem:[#allocation2 + $0x4] sm:$0xf]
      %v1099 = vld [vmem:[#allocation2 + $0x8] sm:$0x1]
      %v1100 = vld [vmem:[#allocation2 + $0xc] sm:$0xf]
      %v1101 = vld [vmem:[#allocation2 + $0x10] sm:$0xf]
      %v1102 = vld [vmem:[#allocation2 + $0x14] sm:$0x1]
      %v1103 = vld [vmem:[#allocation2 + $0x18] sm:$0xf]
      %v1104 = vld [vmem:[#allocation2 + $0x1c] sm:$0xf]
      %v1105 = vld [vmem:[#allocation2 + $0x20] sm:$0x1]
      %v1106 = vld [vmem:[#allocation2 + $0x24] sm:$0xf]
      %v1107 = vld [vmem:[#allocation2 + $0x28] sm:$0xf]
      %v1108 = vld [vmem:[#allocation2 + $0x2c] sm:$0x1]
      %v1109 = vld [vmem:[#allocation2 + $0x30] sm:$0xf]
      %v1110 = vld [vmem:[#allocation2 + $0x34] sm:$0xf]
      %v1111 = vld [vmem:[#allocation2 + $0x38] sm:$0x1]
      %v1112 = vld [vmem:[#allocation2 + $0x3c] sm:$0xf]
      %v1113 = vld [vmem:[#allocation2 + $0x40] sm:$0xf]
      %v1114 = vld [vmem:[#allocation2 + $0x44] sm:$0x1]
      %v1115 = vld [vmem:[#allocation2 + $0x48] sm:$0xf]
      %v1116 = vld [vmem:[#allocation2 + $0x4c] sm:$0xf]
      %v1117 = vld [vmem:[#allocation2 + $0x50] sm:$0x1]
      %v1118 = vld [vmem:[#allocation2 + $0x54] sm:$0xf]
      %v1119 = vld [vmem:[#allocation2 + $0x58] sm:$0xf]
      %v1120 = vld [vmem:[#allocation2 + $0x5c] sm:$0x1]
      %v1121 = vld [vmem:[#allocation2 + $0x60] sm:$0xf]
      %v1122 = vld [vmem:[#allocation2 + $0x64] sm:$0xf]
      %v1123 = vld [vmem:[#allocation2 + $0x68] sm:$0x1]
      %v1124 = vld [vmem:[#allocation2 + $0x6c] sm:$0xf]
      %v1125 = vld [vmem:[#allocation2 + $0x70] sm:$0xf]
      %v1126 = vld [vmem:[#allocation2 + $0x74] sm:$0x1]
      %v1127 = vld [vmem:[#allocation2 + $0x78] sm:$0xf]
      %v1128 = vld [vmem:[#allocation2 + $0x7c] sm:$0xf]
      %v1129 = vld [vmem:[#allocation2 + $0x80] sm:$0x1]
      %v1130 = vld [vmem:[#allocation2 + $0x84] sm:$0xf]
      %v1131 = vld [vmem:[#allocation2 + $0x88] sm:$0xf]
      %v1132 = vld [vmem:[#allocation2 + $0x8c] sm:$0x1]
      %v1133 = vld [vmem:[#allocation2 + $0x90] sm:$0xf]
      %v1134 = vld [vmem:[#allocation2 + $0x94] sm:$0xf]
      %v1135 = vld [vmem:[#allocation2 + $0x98] sm:$0x1]
      %v1136 = vld [vmem:[#allocation2 + $0x9c] sm:$0xf]
      %v1137 = vld [vmem:[#allocation2 + $0xa0] sm:$0xf]
      %v1138 = vld [vmem:[#allocation2 + $0xa4] sm:$0x1]
      %v1139 = vld [vmem:[#allocation2 + $0xa8] sm:$0xf]
      %v1140 = vld [vmem:[#allocation2 + $0xac] sm:$0xf]
      %v1141 = vld [vmem:[#allocation2 + $0xb0] sm:$0x1]
      %v1142 = vld [vmem:[#allocation2 + $0xb4] sm:$0xf]
      %v1143 = vld [vmem:[#allocation2 + $0xb8] sm:$0xf]
      %v1144 = vld [vmem:[#allocation2 + $0xbc] sm:$0x1]
      %vm1145 = vsmask.f32 3328
      %vm1146 = vsmask.f32 7440
      %vm1147 = vmor %vm1145, %vm1146
      %v1149 = vshrl.u32 %v1097, 16
      %v1151 = vrot.slane %v1149, 4
      %v1152 = vshll.u32 %v1097, 16
      %v1154 = vrot.slane %v1152, 5
      %v1155 = vor.u32 %v1151, %v1154
      %v1156 = vrot.slane %v1155, 4
      %v1158 = vshll.u32 %v1098, 16
      %v1160 = vrot.slane %v1158, 5
      %v1161 = vsel %vm1147, %v1156, %v1160
      %v1162 = vshrl.u32 %v1098, 16
      %v1164 = vrot.slane %v1162, 4
      %v1165 = vor.u32 %v1164, %v1160
      %v1166 = vrot.slane %v1165, 4
      %v1168 = vshll.u32 %v1099, 16
      %v1170 = vrot.slane %v1168, 5
      %v1171 = vsel %vm1147, %v1166, %v1170
      %v1173 = vshrl.u32 %v1100, 16
      %v1175 = vrot.slane %v1173, 4
      %v1176 = vshll.u32 %v1100, 16
      %v1178 = vrot.slane %v1176, 5
      %v1179 = vor.u32 %v1175, %v1178
      %v1180 = vrot.slane %v1179, 4
      %v1182 = vshll.u32 %v1101, 16
      %v1184 = vrot.slane %v1182, 5
      %v1185 = vsel %vm1147, %v1180, %v1184
      %v1186 = vshrl.u32 %v1101, 16
      %v1188 = vrot.slane %v1186, 4
      %v1189 = vor.u32 %v1188, %v1184
      %v1190 = vrot.slane %v1189, 4
      %v1192 = vshll.u32 %v1102, 16
      %v1194 = vrot.slane %v1192, 5
      %v1195 = vsel %vm1147, %v1190, %v1194
      %v1197 = vshrl.u32 %v1103, 16
      %v1199 = vrot.slane %v1197, 4
      %v1200 = vshll.u32 %v1103, 16
      %v1202 = vrot.slane %v1200, 5
      %v1203 = vor.u32 %v1199, %v1202
      %v1204 = vrot.slane %v1203, 4
      %v1206 = vshll.u32 %v1104, 16
      %v1208 = vrot.slane %v1206, 5
      %v1209 = vsel %vm1147, %v1204, %v1208
      %v1210 = vshrl.u32 %v1104, 16
      %v1212 = vrot.slane %v1210, 4
      %v1213 = vor.u32 %v1212, %v1208
      %v1214 = vrot.slane %v1213, 4
      %v1216 = vshll.u32 %v1105, 16
      %v1218 = vrot.slane %v1216, 5
      %v1219 = vsel %vm1147, %v1214, %v1218
      %v1221 = vshrl.u32 %v1106, 16
      %v1223 = vrot.slane %v1221, 4
      %v1224 = vshll.u32 %v1106, 16
      %v1226 = vrot.slane %v1224, 5
      %v1227 = vor.u32 %v1223, %v1226
      %v1228 = vrot.slane %v1227, 4
      %v1230 = vshll.u32 %v1107, 16
      %v1232 = vrot.slane %v1230, 5
      %v1233 = vsel %vm1147, %v1228, %v1232
      %v1234 = vshrl.u32 %v1107, 16
      %v1236 = vrot.slane %v1234, 4
      %v1237 = vor.u32 %v1236, %v1232
      %v1238 = vrot.slane %v1237, 4
      %v1240 = vshll.u32 %v1108, 16
      %v1242 = vrot.slane %v1240, 5
      %v1243 = vsel %vm1147, %v1238, %v1242
      %v1245 = vshrl.u32 %v1109, 16
      %v1247 = vrot.slane %v1245, 4
      %v1248 = vshll.u32 %v1109, 16
      %v1250 = vrot.slane %v1248, 5
      %v1251 = vor.u32 %v1247, %v1250
      %v1252 = vrot.slane %v1251, 4
      %v1254 = vshll.u32 %v1110, 16
      %v1256 = vrot.slane %v1254, 5
      %v1257 = vsel %vm1147, %v1252, %v1256
      %v1258 = vshrl.u32 %v1110, 16
      %v1260 = vrot.slane %v1258, 4
      %v1261 = vor.u32 %v1260, %v1256
      %v1262 = vrot.slane %v1261, 4
      %v1264 = vshll.u32 %v1111, 16
      %v1266 = vrot.slane %v1264, 5
      %v1267 = vsel %vm1147, %v1262, %v1266
      %v1269 = vshrl.u32 %v1112, 16
      %v1271 = vrot.slane %v1269, 4
      %v1272 = vshll.u32 %v1112, 16
      %v1274 = vrot.slane %v1272, 5
      %v1275 = vor.u32 %v1271, %v1274
      %v1276 = vrot.slane %v1275, 4
      %v1278 = vshll.u32 %v1113, 16
      %v1280 = vrot.slane %v1278, 5
      %v1281 = vsel %vm1147, %v1276, %v1280
      %v1282 = vshrl.u32 %v1113, 16
      %v1284 = vrot.slane %v1282, 4
      %v1285 = vor.u32 %v1284, %v1280
      %v1286 = vrot.slane %v1285, 4
      %v1288 = vshll.u32 %v1114, 16
      %v1290 = vrot.slane %v1288, 5
      %v1291 = vsel %vm1147, %v1286, %v1290
      %v1293 = vshrl.u32 %v1115, 16
      %v1295 = vrot.slane %v1293, 4
      %v1296 = vshll.u32 %v1115, 16
      %v1298 = vrot.slane %v1296, 5
      %v1299 = vor.u32 %v1295, %v1298
      %v1300 = vrot.slane %v1299, 4
      %v1302 = vshll.u32 %v1116, 16
      %v1304 = vrot.slane %v1302, 5
      %v1305 = vsel %vm1147, %v1300, %v1304
      %v1306 = vshrl.u32 %v1116, 16
      %v1308 = vrot.slane %v1306, 4
      %v1309 = vor.u32 %v1308, %v1304
      %v1310 = vrot.slane %v1309, 4
      %v1312 = vshll.u32 %v1117, 16
      %v1314 = vrot.slane %v1312, 5
      %v1315 = vsel %vm1147, %v1310, %v1314
      %v1317 = vshrl.u32 %v1118, 16
      %v1319 = vrot.slane %v1317, 4
      %v1320 = vshll.u32 %v1118, 16
      %v1322 = vrot.slane %v1320, 5
      %v1323 = vor.u32 %v1319, %v1322
      %v1324 = vrot.slane %v1323, 4
      %v1326 = vshll.u32 %v1119, 16
      %v1328 = vrot.slane %v1326, 5
      %v1329 = vsel %vm1147, %v1324, %v1328
      %v1330 = vshrl.u32 %v1119, 16
      %v1332 = vrot.slane %v1330, 4
      %v1333 = vor.u32 %v1332, %v1328
      %v1334 = vrot.slane %v1333, 4
      %v1336 = vshll.u32 %v1120, 16
      %v1338 = vrot.slane %v1336, 5
      %v1339 = vsel %vm1147, %v1334, %v1338
      %v1341 = vshrl.u32 %v1121, 16
      %v1343 = vrot.slane %v1341, 4
      %v1344 = vshll.u32 %v1121, 16
      %v1346 = vrot.slane %v1344, 5
      %v1347 = vor.u32 %v1343, %v1346
      %v1348 = vrot.slane %v1347, 4
      %v1350 = vshll.u32 %v1122, 16
      %v1352 = vrot.slane %v1350, 5
      %v1353 = vsel %vm1147, %v1348, %v1352
      %v1354 = vshrl.u32 %v1122, 16
      %v1356 = vrot.slane %v1354, 4
      %v1357 = vor.u32 %v1356, %v1352
      %v1358 = vrot.slane %v1357, 4
      %v1360 = vshll.u32 %v1123, 16
      %v1362 = vrot.slane %v1360, 5
      %v1363 = vsel %vm1147, %v1358, %v1362
      %v1365 = vshrl.u32 %v1124, 16
      %v1367 = vrot.slane %v1365, 4
      %v1368 = vshll.u32 %v1124, 16
      %v1370 = vrot.slane %v1368, 5
      %v1371 = vor.u32 %v1367, %v1370
      %v1372 = vrot.slane %v1371, 4
      %v1374 = vshll.u32 %v1125, 16
      %v1376 = vrot.slane %v1374, 5
      %v1377 = vsel %vm1147, %v1372, %v1376
      %v1378 = vshrl.u32 %v1125, 16
      %v1380 = vrot.slane %v1378, 4
      %v1381 = vor.u32 %v1380, %v1376
      %v1382 = vrot.slane %v1381, 4
      %v1384 = vshll.u32 %v1126, 16
      %v1386 = vrot.slane %v1384, 5
      %v1387 = vsel %vm1147, %v1382, %v1386
      %v1389 = vshrl.u32 %v1127, 16
      %v1391 = vrot.slane %v1389, 4
      %v1392 = vshll.u32 %v1127, 16
      %v1394 = vrot.slane %v1392, 5
      %v1395 = vor.u32 %v1391, %v1394
      %v1396 = vrot.slane %v1395, 4
      %v1398 = vshll.u32 %v1128, 16
      %v1400 = vrot.slane %v1398, 5
      %v1401 = vsel %vm1147, %v1396, %v1400
      %v1402 = vshrl.u32 %v1128, 16
      %v1404 = vrot.slane %v1402, 4
      %v1405 = vor.u32 %v1404, %v1400
      %v1406 = vrot.slane %v1405, 4
      %v1408 = vshll.u32 %v1129, 16
      %v1410 = vrot.slane %v1408, 5
      %v1411 = vsel %vm1147, %v1406, %v1410
      %v1413 = vshrl.u32 %v1130, 16
      %v1415 = vrot.slane %v1413, 4
      %v1416 = vshll.u32 %v1130, 16
      %v1418 = vrot.slane %v1416, 5
      %v1419 = vor.u32 %v1415, %v1418
      %v1420 = vrot.slane %v1419, 4
      %v1422 = vshll.u32 %v1131, 16
      %v1424 = vrot.slane %v1422, 5
      %v1425 = vsel %vm1147, %v1420, %v1424
      %v1426 = vshrl.u32 %v1131, 16
      %v1428 = vrot.slane %v1426, 4
      %v1429 = vor.u32 %v1428, %v1424
      %v1430 = vrot.slane %v1429, 4
      %v1432 = vshll.u32 %v1132, 16
      %v1434 = vrot.slane %v1432, 5
      %v1435 = vsel %vm1147, %v1430, %v1434
      %v1437 = vshrl.u32 %v1133, 16
      %v1439 = vrot.slane %v1437, 4
      %v1440 = vshll.u32 %v1133, 16
      %v1442 = vrot.slane %v1440, 5
      %v1443 = vor.u32 %v1439, %v1442
      %v1444 = vrot.slane %v1443, 4
      %v1446 = vshll.u32 %v1134, 16
      %v1448 = vrot.slane %v1446, 5
      %v1449 = vsel %vm1147, %v1444, %v1448
      %v1450 = vshrl.u32 %v1134, 16
      %v1452 = vrot.slane %v1450, 4
      %v1453 = vor.u32 %v1452, %v1448
      %v1454 = vrot.slane %v1453, 4
      %v1456 = vshll.u32 %v1135, 16
      %v1458 = vrot.slane %v1456, 5
      %v1459 = vsel %vm1147, %v1454, %v1458
      %v1461 = vshrl.u32 %v1136, 16
      %v1463 = vrot.slane %v1461, 4
      %v1464 = vshll.u32 %v1136, 16
      %v1466 = vrot.slane %v1464, 5
      %v1467 = vor.u32 %v1463, %v1466
      %v1468 = vrot.slane %v1467, 4
      %v1470 = vshll.u32 %v1137, 16
      %v1472 = vrot.slane %v1470, 5
      %v1473 = vsel %vm1147, %v1468, %v1472
      %v1474 = vshrl.u32 %v1137, 16
      %v1476 = vrot.slane %v1474, 4
      %v1477 = vor.u32 %v1476, %v1472
      %v1478 = vrot.slane %v1477, 4
      %v1480 = vshll.u32 %v1138, 16
      %v1482 = vrot.slane %v1480, 5
      %v1483 = vsel %vm1147, %v1478, %v1482
      %v1485 = vshrl.u32 %v1139, 16
      %v1487 = vrot.slane %v1485, 4
      %v1488 = vshll.u32 %v1139, 16
      %v1490 = vrot.slane %v1488, 5
      %v1491 = vor.u32 %v1487, %v1490
      %v1492 = vrot.slane %v1491, 4
      %v1494 = vshll.u32 %v1140, 16
      %v1496 = vrot.slane %v1494, 5
      %v1497 = vsel %vm1147, %v1492, %v1496
      %v1498 = vshrl.u32 %v1140, 16
      %v1500 = vrot.slane %v1498, 4
      %v1501 = vor.u32 %v1500, %v1496
      %v1502 = vrot.slane %v1501, 4
      %v1504 = vshll.u32 %v1141, 16
      %v1506 = vrot.slane %v1504, 5
      %v1507 = vsel %vm1147, %v1502, %v1506
      %v1509 = vshrl.u32 %v1142, 16
      %v1511 = vrot.slane %v1509, 4
      %v1512 = vshll.u32 %v1142, 16
      %v1514 = vrot.slane %v1512, 5
      %v1515 = vor.u32 %v1511, %v1514
      %v1516 = vrot.slane %v1515, 4
      %v1518 = vshll.u32 %v1143, 16
      %v1520 = vrot.slane %v1518, 5
      %v1521 = vsel %vm1147, %v1516, %v1520
      %v1522 = vshrl.u32 %v1143, 16
      %v1524 = vrot.slane %v1522, 4
      %v1525 = vor.u32 %v1524, %v1520
      %v1526 = vrot.slane %v1525, 4
      %v1528 = vshll.u32 %v1144, 16
      %v1530 = vrot.slane %v1528, 5
      %v1531 = vsel %vm1147, %v1526, %v1530
      %1532 = vrot.lane.b32.xlu0 %v1161, 4
      %v1533 = vpop.permute.xlu0 %1532
      %1534 = vrot.lane.b32.xlu0 %v1171, 4
      %v1535 = vpop.permute.xlu0 %1534
      %1536 = vrot.lane.b32.xlu0 %v1185, 4
      %v1537 = vpop.permute.xlu0 %1536
      %1538 = vrot.lane.b32.xlu0 %v1195, 4
      %v1539 = vpop.permute.xlu0 %1538
      %1540 = vrot.lane.b32.xlu0 %v1209, 4
      %v1541 = vpop.permute.xlu0 %1540
      %1542 = vrot.lane.b32.xlu0 %v1219, 4
      %v1543 = vpop.permute.xlu0 %1542
      %1544 = vrot.lane.b32.xlu0 %v1233, 4
      %v1545 = vpop.permute.xlu0 %1544
      %1546 = vrot.lane.b32.xlu0 %v1243, 4
      %v1547 = vpop.permute.xlu0 %1546
      %1548 = vrot.lane.b32.xlu0 %v1257, 4
      %v1549 = vpop.permute.xlu0 %1548
      %1550 = vrot.lane.b32.xlu0 %v1267, 4
      %v1551 = vpop.permute.xlu0 %1550
      %1552 = vrot.lane.b32.xlu0 %v1281, 4
      %v1553 = vpop.permute.xlu0 %1552
      %1554 = vrot.lane.b32.xlu0 %v1291, 4
      %v1555 = vpop.permute.xlu0 %1554
      %1556 = vrot.lane.b32.xlu0 %v1305, 4
      %v1557 = vpop.permute.xlu0 %1556
      %1558 = vrot.lane.b32.xlu0 %v1315, 4
      %v1559 = vpop.permute.xlu0 %1558
      %1560 = vrot.lane.b32.xlu0 %v1329, 4
      %v1561 = vpop.permute.xlu0 %1560
      %1562 = vrot.lane.b32.xlu0 %v1339, 4
      %v1563 = vpop.permute.xlu0 %1562
      %1564 = vrot.lane.b32.xlu0 %v1353, 4
      %v1565 = vpop.permute.xlu0 %1564
      %1566 = vrot.lane.b32.xlu0 %v1363, 4
      %v1567 = vpop.permute.xlu0 %1566
      %1568 = vrot.lane.b32.xlu0 %v1377, 4
      %v1569 = vpop.permute.xlu0 %1568
      %1570 = vrot.lane.b32.xlu0 %v1387, 4
      %v1571 = vpop.permute.xlu0 %1570
      %1572 = vrot.lane.b32.xlu0 %v1401, 4
      %v1573 = vpop.permute.xlu0 %1572
      %1574 = vrot.lane.b32.xlu0 %v1411, 4
      %v1575 = vpop.permute.xlu0 %1574
      %1576 = vrot.lane.b32.xlu0 %v1425, 4
      %v1577 = vpop.permute.xlu0 %1576
      %1578 = vrot.lane.b32.xlu0 %v1435, 4
      %v1579 = vpop.permute.xlu0 %1578
      %1580 = vrot.lane.b32.xlu0 %v1449, 4
      %v1581 = vpop.permute.xlu0 %1580
      %1582 = vrot.lane.b32.xlu0 %v1459, 4
      %v1583 = vpop.permute.xlu0 %1582
      %1584 = vrot.lane.b32.xlu0 %v1473, 4
      %v1585 = vpop.permute.xlu0 %1584
      %1586 = vrot.lane.b32.xlu0 %v1483, 4
      %v1587 = vpop.permute.xlu0 %1586
      %1588 = vrot.lane.b32.xlu0 %v1497, 4
      %v1589 = vpop.permute.xlu0 %1588
      %1590 = vrot.lane.b32.xlu0 %v1507, 4
      %v1591 = vpop.permute.xlu0 %1590
      %1592 = vrot.lane.b32.xlu0 %v1521, 4
      %v1593 = vpop.permute.xlu0 %1592
      %1594 = vrot.lane.b32.xlu0 %v1531, 4
      %v1595 = vpop.permute.xlu0 %1594
      %vm1628 = vcmask 60448
      %1629 = vst.msk [vmem:[#allocation4] sm:$0xf] %vm1628, %v1533
      %1630 = vst.msk [vmem:[#allocation4 + $0x4] sm:$0xf] %vm1628, %v1535
      %1631 = vst.msk [vmem:[#allocation4 + $0x8] sm:$0xf] %vm1628, %v1537
      %1632 = vst.msk [vmem:[#allocation4 + $0xc] sm:$0xf] %vm1628, %v1539
      %1633 = vst.msk [vmem:[#allocation4 + $0x10] sm:$0xf] %vm1628, %v1541
      %1634 = vst.msk [vmem:[#allocation4 + $0x14] sm:$0xf] %vm1628, %v1543
      %1635 = vst.msk [vmem:[#allocation4 + $0x18] sm:$0xf] %vm1628, %v1545
      %1636 = vst.msk [vmem:[#allocation4 + $0x1c] sm:$0xf] %vm1628, %v1547
      %1637 = vst.msk [vmem:[#allocation4 + $0x20] sm:$0xf] %vm1628, %v1549
      %1638 = vst.msk [vmem:[#allocation4 + $0x24] sm:$0xf] %vm1628, %v1551
      %1639 = vst.msk [vmem:[#allocation4 + $0x28] sm:$0xf] %vm1628, %v1553
      %1640 = vst.msk [vmem:[#allocation4 + $0x2c] sm:$0xf] %vm1628, %v1555
      %1641 = vst.msk [vmem:[#allocation4 + $0x30] sm:$0xf] %vm1628, %v1557
      %1642 = vst.msk [vmem:[#allocation4 + $0x34] sm:$0xf] %vm1628, %v1559
      %1643 = vst.msk [vmem:[#allocation4 + $0x38] sm:$0xf] %vm1628, %v1561
      %1644 = vst.msk [vmem:[#allocation4 + $0x3c] sm:$0xf] %vm1628, %v1563
      %1645 = vst.msk [vmem:[#allocation4 + $0x40] sm:$0xf] %vm1628, %v1565
      %1646 = vst.msk [vmem:[#allocation4 + $0x44] sm:$0xf] %vm1628, %v1567
      %1647 = vst.msk [vmem:[#allocation4 + $0x48] sm:$0xf] %vm1628, %v1569
      %1648 = vst.msk [vmem:[#allocation4 + $0x4c] sm:$0xf] %vm1628, %v1571
      %1649 = vst.msk [vmem:[#allocation4 + $0x50] sm:$0xf] %vm1628, %v1573
      %1650 = vst.msk [vmem:[#allocation4 + $0x54] sm:$0xf] %vm1628, %v1575
      %1651 = vst.msk [vmem:[#allocation4 + $0x58] sm:$0xf] %vm1628, %v1577
      %1652 = vst.msk [vmem:[#allocation4 + $0x5c] sm:$0xf] %vm1628, %v1579
      %1653 = vst.msk [vmem:[#allocation4 + $0x60] sm:$0xf] %vm1628, %v1581
      %1654 = vst.msk [vmem:[#allocation4 + $0x64] sm:$0xf] %vm1628, %v1583
      %1655 = vst.msk [vmem:[#allocation4 + $0x68] sm:$0xf] %vm1628, %v1585
      %1656 = vst.msk [vmem:[#allocation4 + $0x6c] sm:$0xf] %vm1628, %v1587
      %1657 = vst.msk [vmem:[#allocation4 + $0x70] sm:$0xf] %vm1628, %v1589
      %1658 = vst.msk [vmem:[#allocation4 + $0x74] sm:$0xf] %vm1628, %v1591
      %1659 = vst.msk [vmem:[#allocation4 + $0x78] sm:$0xf] %vm1628, %v1593
      %1660 = vst.msk [vmem:[#allocation4 + $0x7c] sm:$0xf] %vm1628, %v1595
      %v1661 = vld [vmem:[#allocation2] sm:$0xe]
      %v1662 = vld [vmem:[#allocation2 + $0x4] sm:$0xf]
      %v1663 = vld [vmem:[#allocation2 + $0x8] sm:$0x1]
      %v1664 = vld [vmem:[#allocation2 + $0xc] sm:$0xe]
      %v1665 = vld [vmem:[#allocation2 + $0x10] sm:$0xf]
      %v1666 = vld [vmem:[#allocation2 + $0x14] sm:$0x1]
      %v1667 = vld [vmem:[#allocation2 + $0x18] sm:$0xe]
      %v1668 = vld [vmem:[#allocation2 + $0x1c] sm:$0xf]
      %v1669 = vld [vmem:[#allocation2 + $0x20] sm:$0x1]
      %v1670 = vld [vmem:[#allocation2 + $0x24] sm:$0xe]
      %v1671 = vld [vmem:[#allocation2 + $0x28] sm:$0xf]
      %v1672 = vld [vmem:[#allocation2 + $0x2c] sm:$0x1]
      %v1673 = vld [vmem:[#allocation2 + $0x30] sm:$0xe]
      %v1674 = vld [vmem:[#allocation2 + $0x34] sm:$0xf]
      %v1675 = vld [vmem:[#allocation2 + $0x38] sm:$0x1]
      %v1676 = vld [vmem:[#allocation2 + $0x3c] sm:$0xe]
      %v1677 = vld [vmem:[#allocation2 + $0x40] sm:$0xf]
      %v1678 = vld [vmem:[#allocation2 + $0x44] sm:$0x1]
      %v1679 = vld [vmem:[#allocation2 + $0x48] sm:$0xe]
      %v1680 = vld [vmem:[#allocation2 + $0x4c] sm:$0xf]
      %v1681 = vld [vmem:[#allocation2 + $0x50] sm:$0x1]
      %v1682 = vld [vmem:[#allocation2 + $0x54] sm:$0xe]
      %v1683 = vld [vmem:[#allocation2 + $0x58] sm:$0xf]
      %v1684 = vld [vmem:[#allocation2 + $0x5c] sm:$0x1]
      %v1685 = vld [vmem:[#allocation2 + $0x60] sm:$0xe]
      %v1686 = vld [vmem:[#allocation2 + $0x64] sm:$0xf]
      %v1687 = vld [vmem:[#allocation2 + $0x68] sm:$0x1]
      %v1688 = vld [vmem:[#allocation2 + $0x6c] sm:$0xe]
      %v1689 = vld [vmem:[#allocation2 + $0x70] sm:$0xf]
      %v1690 = vld [vmem:[#allocation2 + $0x74] sm:$0x1]
      %v1691 = vld [vmem:[#allocation2 + $0x78] sm:$0xe]
      %v1692 = vld [vmem:[#allocation2 + $0x7c] sm:$0xf]
      %v1693 = vld [vmem:[#allocation2 + $0x80] sm:$0x1]
      %v1694 = vld [vmem:[#allocation2 + $0x84] sm:$0xe]
      %v1695 = vld [vmem:[#allocation2 + $0x88] sm:$0xf]
      %v1696 = vld [vmem:[#allocation2 + $0x8c] sm:$0x1]
      %v1697 = vld [vmem:[#allocation2 + $0x90] sm:$0xe]
      %v1698 = vld [vmem:[#allocation2 + $0x94] sm:$0xf]
      %v1699 = vld [vmem:[#allocation2 + $0x98] sm:$0x1]
      %v1700 = vld [vmem:[#allocation2 + $0x9c] sm:$0xe]
      %v1701 = vld [vmem:[#allocation2 + $0xa0] sm:$0xf]
      %v1702 = vld [vmem:[#allocation2 + $0xa4] sm:$0x1]
      %v1703 = vld [vmem:[#allocation2 + $0xa8] sm:$0xe]
      %v1704 = vld [vmem:[#allocation2 + $0xac] sm:$0xf]
      %v1705 = vld [vmem:[#allocation2 + $0xb0] sm:$0x1]
      %v1706 = vld [vmem:[#allocation2 + $0xb4] sm:$0xe]
      %v1707 = vld [vmem:[#allocation2 + $0xb8] sm:$0xf]
      %v1708 = vld [vmem:[#allocation2 + $0xbc] sm:$0x1]
      %vm1757 = vcmask 1042432
      %vm1758 = vcmask 1046532
      %vm1759 = vmor %vm1757, %vm1758
      %v1760 = vrot.slane %v1661, 5
      %v1761 = vrot.slane %v1760, 4
      %v1762 = vrot.slane %v1662, 5
      %v1763 = vsel %vm1759, %v1761, %v1762
      %v1764 = vrot.slane %v1762, 4
      %v1765 = vrot.slane %v1663, 5
      %v1766 = vsel %vm1759, %v1764, %v1765
      %v1767 = vrot.slane %v1664, 5
      %v1768 = vrot.slane %v1767, 4
      %v1769 = vrot.slane %v1665, 5
      %v1770 = vsel %vm1759, %v1768, %v1769
      %v1771 = vrot.slane %v1769, 4
      %v1772 = vrot.slane %v1666, 5
      %v1773 = vsel %vm1759, %v1771, %v1772
      %v1774 = vrot.slane %v1667, 5
      %v1775 = vrot.slane %v1774, 4
      %v1776 = vrot.slane %v1668, 5
      %v1777 = vsel %vm1759, %v1775, %v1776
      %v1778 = vrot.slane %v1776, 4
      %v1779 = vrot.slane %v1669, 5
      %v1780 = vsel %vm1759, %v1778, %v1779
      %v1781 = vrot.slane %v1670, 5
      %v1782 = vrot.slane %v1781, 4
      %v1783 = vrot.slane %v1671, 5
      %v1784 = vsel %vm1759, %v1782, %v1783
      %v1785 = vrot.slane %v1783, 4
      %v1786 = vrot.slane %v1672, 5
      %v1787 = vsel %vm1759, %v1785, %v1786
      %v1788 = vrot.slane %v1673, 5
      %v1789 = vrot.slane %v1788, 4
      %v1790 = vrot.slane %v1674, 5
      %v1791 = vsel %vm1759, %v1789, %v1790
      %v1792 = vrot.slane %v1790, 4
      %v1793 = vrot.slane %v1675, 5
      %v1794 = vsel %vm1759, %v1792, %v1793
      %v1795 = vrot.slane %v1676, 5
      %v1796 = vrot.slane %v1795, 4
      %v1797 = vrot.slane %v1677, 5
      %v1798 = vsel %vm1759, %v1796, %v1797
      %v1799 = vrot.slane %v1797, 4
      %v1800 = vrot.slane %v1678, 5
      %v1801 = vsel %vm1759, %v1799, %v1800
      %v1802 = vrot.slane %v1679, 5
      %v1803 = vrot.slane %v1802, 4
      %v1804 = vrot.slane %v1680, 5
      %v1805 = vsel %vm1759, %v1803, %v1804
      %v1806 = vrot.slane %v1804, 4
      %v1807 = vrot.slane %v1681, 5
      %v1808 = vsel %vm1759, %v1806, %v1807
      %v1809 = vrot.slane %v1682, 5
      %v1810 = vrot.slane %v1809, 4
      %v1811 = vrot.slane %v1683, 5
      %v1812 = vsel %vm1759, %v1810, %v1811
      %v1813 = vrot.slane %v1811, 4
      %v1814 = vrot.slane %v1684, 5
      %v1815 = vsel %vm1759, %v1813, %v1814
      %v1816 = vrot.slane %v1685, 5
      %v1817 = vrot.slane %v1816, 4
      %v1818 = vrot.slane %v1686, 5
      %v1819 = vsel %vm1759, %v1817, %v1818
      %v1820 = vrot.slane %v1818, 4
      %v1821 = vrot.slane %v1687, 5
      %v1822 = vsel %vm1759, %v1820, %v1821
      %v1823 = vrot.slane %v1688, 5
      %v1824 = vrot.slane %v1823, 4
      %v1825 = vrot.slane %v1689, 5
      %v1826 = vsel %vm1759, %v1824, %v1825
      %v1827 = vrot.slane %v1825, 4
      %v1828 = vrot.slane %v1690, 5
      %v1829 = vsel %vm1759, %v1827, %v1828
      %v1830 = vrot.slane %v1691, 5
      %v1831 = vrot.slane %v1830, 4
      %v1832 = vrot.slane %v1692, 5
      %v1833 = vsel %vm1759, %v1831, %v1832
      %v1834 = vrot.slane %v1832, 4
      %v1835 = vrot.slane %v1693, 5
      %v1836 = vsel %vm1759, %v1834, %v1835
      %v1837 = vrot.slane %v1694, 5
      %v1838 = vrot.slane %v1837, 4
      %v1839 = vrot.slane %v1695, 5
      %v1840 = vsel %vm1759, %v1838, %v1839
      %v1841 = vrot.slane %v1839, 4
      %v1842 = vrot.slane %v1696, 5
      %v1843 = vsel %vm1759, %v1841, %v1842
      %v1844 = vrot.slane %v1697, 5
      %v1845 = vrot.slane %v1844, 4
      %v1846 = vrot.slane %v1698, 5
      %v1847 = vsel %vm1759, %v1845, %v1846
      %v1848 = vrot.slane %v1846, 4
      %v1849 = vrot.slane %v1699, 5
      %v1850 = vsel %vm1759, %v1848, %v1849
      %v1851 = vrot.slane %v1700, 5
      %v1852 = vrot.slane %v1851, 4
      %v1853 = vrot.slane %v1701, 5
      %v1854 = vsel %vm1759, %v1852, %v1853
      %v1855 = vrot.slane %v1853, 4
      %v1856 = vrot.slane %v1702, 5
      %v1857 = vsel %vm1759, %v1855, %v1856
      %v1858 = vrot.slane %v1703, 5
      %v1859 = vrot.slane %v1858, 4
      %v1860 = vrot.slane %v1704, 5
      %v1861 = vsel %vm1759, %v1859, %v1860
      %v1862 = vrot.slane %v1860, 4
      %v1863 = vrot.slane %v1705, 5
      %v1864 = vsel %vm1759, %v1862, %v1863
      %v1865 = vrot.slane %v1706, 5
      %v1866 = vrot.slane %v1865, 4
      %v1867 = vrot.slane %v1707, 5
      %v1868 = vsel %vm1759, %v1866, %v1867
      %v1869 = vrot.slane %v1867, 4
      %v1870 = vrot.slane %v1708, 5
      %v1871 = vsel %vm1759, %v1869, %v1870
      %1872 = vrot.lane.b32.xlu0 %v1763, 8
      %v1873 = vpop.permute.xlu0 %1872
      %1874 = vrot.lane.b32.xlu0 %v1766, 8
      %v1875 = vpop.permute.xlu0 %1874
      %1876 = vrot.lane.b32.xlu0 %v1770, 8
      %v1877 = vpop.permute.xlu0 %1876
      %1878 = vrot.lane.b32.xlu0 %v1773, 8
      %v1879 = vpop.permute.xlu0 %1878
      %1880 = vrot.lane.b32.xlu0 %v1777, 8
      %v1881 = vpop.permute.xlu0 %1880
      %1882 = vrot.lane.b32.xlu0 %v1780, 8
      %v1883 = vpop.permute.xlu0 %1882
      %1884 = vrot.lane.b32.xlu0 %v1784, 8
      %v1885 = vpop.permute.xlu0 %1884
      %1886 = vrot.lane.b32.xlu0 %v1787, 8
      %v1887 = vpop.permute.xlu0 %1886
      %1888 = vrot.lane.b32.xlu0 %v1791, 8
      %v1889 = vpop.permute.xlu0 %1888
      %1890 = vrot.lane.b32.xlu0 %v1794, 8
      %v1891 = vpop.permute.xlu0 %1890
      %1892 = vrot.lane.b32.xlu0 %v1798, 8
      %v1893 = vpop.permute.xlu0 %1892
      %1894 = vrot.lane.b32.xlu0 %v1801, 8
      %v1895 = vpop.permute.xlu0 %1894
      %1896 = vrot.lane.b32.xlu0 %v1805, 8
      %v1897 = vpop.permute.xlu0 %1896
      %1898 = vrot.lane.b32.xlu0 %v1808, 8
      %v1899 = vpop.permute.xlu0 %1898
      %1900 = vrot.lane.b32.xlu0 %v1812, 8
      %v1901 = vpop.permute.xlu0 %1900
      %1902 = vrot.lane.b32.xlu0 %v1815, 8
      %v1903 = vpop.permute.xlu0 %1902
      %1904 = vrot.lane.b32.xlu0 %v1819, 8
      %v1905 = vpop.permute.xlu0 %1904
      %1906 = vrot.lane.b32.xlu0 %v1822, 8
      %v1907 = vpop.permute.xlu0 %1906
      %1908 = vrot.lane.b32.xlu0 %v1826, 8
      %v1909 = vpop.permute.xlu0 %1908
      %1910 = vrot.lane.b32.xlu0 %v1829, 8
      %v1911 = vpop.permute.xlu0 %1910
      %1912 = vrot.lane.b32.xlu0 %v1833, 8
      %v1913 = vpop.permute.xlu0 %1912
      %1914 = vrot.lane.b32.xlu0 %v1836, 8
      %v1915 = vpop.permute.xlu0 %1914
      %1916 = vrot.lane.b32.xlu0 %v1840, 8
      %v1917 = vpop.permute.xlu0 %1916
      %1918 = vrot.lane.b32.xlu0 %v1843, 8
      %v1919 = vpop.permute.xlu0 %1918
      %1920 = vrot.lane.b32.xlu0 %v1847, 8
      %v1921 = vpop.permute.xlu0 %1920
      %1922 = vrot.lane.b32.xlu0 %v1850, 8
      %v1923 = vpop.permute.xlu0 %1922
      %1924 = vrot.lane.b32.xlu0 %v1854, 8
      %v1925 = vpop.permute.xlu0 %1924
      %1926 = vrot.lane.b32.xlu0 %v1857, 8
      %v1927 = vpop.permute.xlu0 %1926
      %1928 = vrot.lane.b32.xlu0 %v1861, 8
      %v1929 = vpop.permute.xlu0 %1928
      %1930 = vrot.lane.b32.xlu0 %v1864, 8
      %v1931 = vpop.permute.xlu0 %1930
      %1932 = vrot.lane.b32.xlu0 %v1868, 8
      %v1933 = vpop.permute.xlu0 %1932
      %1934 = vrot.lane.b32.xlu0 %v1871, 8
      %v1935 = vpop.permute.xlu0 %1934
      %vm1968 = vcmask 93248
      %1969 = vst.msk [vmem:[#allocation4] sm:$0xf] %vm1968, %v1873
      %1970 = vst.msk [vmem:[#allocation4 + $0x4] sm:$0xf] %vm1968, %v1875
      %1971 = vst.msk [vmem:[#allocation4 + $0x8] sm:$0xf] %vm1968, %v1877
      %1972 = vst.msk [vmem:[#allocation4 + $0xc] sm:$0xf] %vm1968, %v1879
      %1973 = vst.msk [vmem:[#allocation4 + $0x10] sm:$0xf] %vm1968, %v1881
      %1974 = vst.msk [vmem:[#allocation4 + $0x14] sm:$0xf] %vm1968, %v1883
      %1975 = vst.msk [vmem:[#allocation4 + $0x18] sm:$0xf] %vm1968, %v1885
      %1976 = vst.msk [vmem:[#allocation4 + $0x1c] sm:$0xf] %vm1968, %v1887
      %1977 = vst.msk [vmem:[#allocation4 + $0x20] sm:$0xf] %vm1968, %v1889
      %1978 = vst.msk [vmem:[#allocation4 + $0x24] sm:$0xf] %vm1968, %v1891
      %1979 = vst.msk [vmem:[#allocation4 + $0x28] sm:$0xf] %vm1968, %v1893
      %1980 = vst.msk [vmem:[#allocation4 + $0x2c] sm:$0xf] %vm1968, %v1895
      %1981 = vst.msk [vmem:[#allocation4 + $0x30] sm:$0xf] %vm1968, %v1897
      %1982 = vst.msk [vmem:[#allocation4 + $0x34] sm:$0xf] %vm1968, %v1899
      %1983 = vst.msk [vmem:[#allocation4 + $0x38] sm:$0xf] %vm1968, %v1901
      %1984 = vst.msk [vmem:[#allocation4 + $0x3c] sm:$0xf] %vm1968, %v1903
      %1985 = vst.msk [vmem:[#allocation4 + $0x40] sm:$0xf] %vm1968, %v1905
      %1986 = vst.msk [vmem:[#allocation4 + $0x44] sm:$0xf] %vm1968, %v1907
      %1987 = vst.msk [vmem:[#allocation4 + $0x48] sm:$0xf] %vm1968, %v1909
      %1988 = vst.msk [vmem:[#allocation4 + $0x4c] sm:$0xf] %vm1968, %v1911
      %1989 = vst.msk [vmem:[#allocation4 + $0x50] sm:$0xf] %vm1968, %v1913
      %1990 = vst.msk [vmem:[#allocation4 + $0x54] sm:$0xf] %vm1968, %v1915
      %1991 = vst.msk [vmem:[#allocation4 + $0x58] sm:$0xf] %vm1968, %v1917
      %1992 = vst.msk [vmem:[#allocation4 + $0x5c] sm:$0xf] %vm1968, %v1919
      %1993 = vst.msk [vmem:[#allocation4 + $0x60] sm:$0xf] %vm1968, %v1921
      %1994 = vst.msk [vmem:[#allocation4 + $0x64] sm:$0xf] %vm1968, %v1923
      %1995 = vst.msk [vmem:[#allocation4 + $0x68] sm:$0xf] %vm1968, %v1925
      %1996 = vst.msk [vmem:[#allocation4 + $0x6c] sm:$0xf] %vm1968, %v1927
      %1997 = vst.msk [vmem:[#allocation4 + $0x70] sm:$0xf] %vm1968, %v1929
      %1998 = vst.msk [vmem:[#allocation4 + $0x74] sm:$0xf] %vm1968, %v1931
      %1999 = vst.msk [vmem:[#allocation4 + $0x78] sm:$0xf] %vm1968, %v1933
      %2000 = vst.msk [vmem:[#allocation4 + $0x7c] sm:$0xf] %vm1968, %v1935
      %v2001 = vld [vmem:[%s918] sm:$0xf]
      %v2002 = vld [vmem:[%s918 + $0x4] sm:$0xf]
      %v2003 = vld [vmem:[%s918 + $0xc] sm:$0xf]
      %v2004 = vld [vmem:[%s918 + $0x10] sm:$0xf]
      %v2005 = vld [vmem:[%s918 + $0x18] sm:$0xf]
      %v2006 = vld [vmem:[%s918 + $0x1c] sm:$0xf]
      %v2007 = vld [vmem:[%s918 + $0x24] sm:$0xf]
      %v2008 = vld [vmem:[%s918 + $0x28] sm:$0xf]
      %v2009 = vld [vmem:[%s918 + $0x30] sm:$0xf]
      %v2010 = vld [vmem:[%s918 + $0x34] sm:$0xf]
      %v2011 = vld [vmem:[%s918 + $0x3c] sm:$0xf]
      %v2012 = vld [vmem:[%s918 + $0x40] sm:$0xf]
      %v2013 = vld [vmem:[%s918 + $0x48] sm:$0xf]
      %v2014 = vld [vmem:[%s918 + $0x4c] sm:$0xf]
      %v2015 = vld [vmem:[%s918 + $0x54] sm:$0xf]
      %v2016 = vld [vmem:[%s918 + $0x58] sm:$0xf]
      %v2017 = vld [vmem:[%s918 + $0x60] sm:$0xf]
      %v2018 = vld [vmem:[%s918 + $0x64] sm:$0xf]
      %v2019 = vld [vmem:[%s918 + $0x6c] sm:$0xf]
      %v2020 = vld [vmem:[%s918 + $0x70] sm:$0xf]
      %v2021 = vld [vmem:[%s918 + $0x78] sm:$0xf]
      %v2022 = vld [vmem:[%s918 + $0x7c] sm:$0xf]
      %v2023 = vld [vmem:[%s918 + $0x84] sm:$0xf]
      %v2024 = vld [vmem:[%s918 + $0x88] sm:$0xf]
      %v2025 = vld [vmem:[%s918 + $0x90] sm:$0xf]
      %v2026 = vld [vmem:[%s918 + $0x94] sm:$0xf]
      %v2027 = vld [vmem:[%s918 + $0x9c] sm:$0xf]
      %v2028 = vld [vmem:[%s918 + $0xa0] sm:$0xf]
      %v2029 = vld [vmem:[%s918 + $0xa8] sm:$0xf]
      %v2030 = vld [vmem:[%s918 + $0xac] sm:$0xf]
      %v2031 = vld [vmem:[%s918 + $0xb4] sm:$0xf]
      %v2032 = vld [vmem:[%s918 + $0xb8] sm:$0xf]
      %2065 = vrot.lane.b32.xlu0 %v2001, 12
      %v2066 = vpop.permute.xlu0 %2065
      %2067 = vrot.lane.b32.xlu0 %v2002, 12
      %v2068 = vpop.permute.xlu0 %2067
      %2069 = vrot.lane.b32.xlu0 %v2003, 12
      %v2070 = vpop.permute.xlu0 %2069
      %2071 = vrot.lane.b32.xlu0 %v2004, 12
      %v2072 = vpop.permute.xlu0 %2071
      %2073 = vrot.lane.b32.xlu0 %v2005, 12
      %v2074 = vpop.permute.xlu0 %2073
      %2075 = vrot.lane.b32.xlu0 %v2006, 12
      %v2076 = vpop.permute.xlu0 %2075
      %2077 = vrot.lane.b32.xlu0 %v2007, 12
      %v2078 = vpop.permute.xlu0 %2077
      %2079 = vrot.lane.b32.xlu0 %v2008, 12
      %v2080 = vpop.permute.xlu0 %2079
      %2081 = vrot.lane.b32.xlu0 %v2009, 12
      %v2082 = vpop.permute.xlu0 %2081
      %2083 = vrot.lane.b32.xlu0 %v2010, 12
      %v2084 = vpop.permute.xlu0 %2083
      %2085 = vrot.lane.b32.xlu0 %v2011, 12
      %v2086 = vpop.permute.xlu0 %2085
      %2087 = vrot.lane.b32.xlu0 %v2012, 12
      %v2088 = vpop.permute.xlu0 %2087
      %2089 = vrot.lane.b32.xlu0 %v2013, 12
      %v2090 = vpop.permute.xlu0 %2089
      %2091 = vrot.lane.b32.xlu0 %v2014, 12
      %v2092 = vpop.permute.xlu0 %2091
      %2093 = vrot.lane.b32.xlu0 %v2015, 12
      %v2094 = vpop.permute.xlu0 %2093
      %2095 = vrot.lane.b32.xlu0 %v2016, 12
      %v2096 = vpop.permute.xlu0 %2095
      %2097 = vrot.lane.b32.xlu0 %v2017, 12
      %v2098 = vpop.permute.xlu0 %2097
      %2099 = vrot.lane.b32.xlu0 %v2018, 12
      %v2100 = vpop.permute.xlu0 %2099
      %2101 = vrot.lane.b32.xlu0 %v2019, 12
      %v2102 = vpop.permute.xlu0 %2101
      %2103 = vrot.lane.b32.xlu0 %v2020, 12
      %v2104 = vpop.permute.xlu0 %2103
      %2105 = vrot.lane.b32.xlu0 %v2021, 12
      %v2106 = vpop.permute.xlu0 %2105
      %2107 = vrot.lane.b32.xlu0 %v2022, 12
      %v2108 = vpop.permute.xlu0 %2107
      %2109 = vrot.lane.b32.xlu0 %v2023, 12
      %v2110 = vpop.permute.xlu0 %2109
      %2111 = vrot.lane.b32.xlu0 %v2024, 12
      %v2112 = vpop.permute.xlu0 %2111
      %2113 = vrot.lane.b32.xlu0 %v2025, 12
      %v2114 = vpop.permute.xlu0 %2113
      %2115 = vrot.lane.b32.xlu0 %v2026, 12
      %v2116 = vpop.permute.xlu0 %2115
      %2117 = vrot.lane.b32.xlu0 %v2027, 12
      %v2118 = vpop.permute.xlu0 %2117
      %2119 = vrot.lane.b32.xlu0 %v2028, 12
      %v2120 = vpop.permute.xlu0 %2119
      %2121 = vrot.lane.b32.xlu0 %v2029, 12
      %v2122 = vpop.permute.xlu0 %2121
      %2123 = vrot.lane.b32.xlu0 %v2030, 12
      %v2124 = vpop.permute.xlu0 %2123
      %2125 = vrot.lane.b32.xlu0 %v2031, 12
      %v2126 = vpop.permute.xlu0 %2125
      %2127 = vrot.lane.b32.xlu0 %v2032, 12
      %v2128 = vpop.permute.xlu0 %2127
      %vm2161 = vcmask 126048
      %2162 = vst.msk [vmem:[#allocation4] sm:$0xf] %vm2161, %v2066
      %2163 = vst.msk [vmem:[#allocation4 + $0x4] sm:$0xf] %vm2161, %v2068
      %2164 = vst.msk [vmem:[#allocation4 + $0x8] sm:$0xf] %vm2161, %v2070
      %2165 = vst.msk [vmem:[#allocation4 + $0xc] sm:$0xf] %vm2161, %v2072
      %2166 = vst.msk [vmem:[#allocation4 + $0x10] sm:$0xf] %vm2161, %v2074
      %2167 = vst.msk [vmem:[#allocation4 + $0x14] sm:$0xf] %vm2161, %v2076
      %2168 = vst.msk [vmem:[#allocation4 + $0x18] sm:$0xf] %vm2161, %v2078
      %2169 = vst.msk [vmem:[#allocation4 + $0x1c] sm:$0xf] %vm2161, %v2080
      %2170 = vst.msk [vmem:[#allocation4 + $0x20] sm:$0xf] %vm2161, %v2082
      %2171 = vst.msk [vmem:[#allocation4 + $0x24] sm:$0xf] %vm2161, %v2084
      %2172 = vst.msk [vmem:[#allocation4 + $0x28] sm:$0xf] %vm2161, %v2086
      %2173 = vst.msk [vmem:[#allocation4 + $0x2c] sm:$0xf] %vm2161, %v2088
      %2174 = vst.msk [vmem:[#allocation4 + $0x30] sm:$0xf] %vm2161, %v2090
      %2175 = vst.msk [vmem:[#allocation4 + $0x34] sm:$0xf] %vm2161, %v2092
      %2176 = vst.msk [vmem:[#allocation4 + $0x38] sm:$0xf] %vm2161, %v2094
      %2177 = vst.msk [vmem:[#allocation4 + $0x3c] sm:$0xf] %vm2161, %v2096
      %2178 = vst.msk [vmem:[#allocation4 + $0x40] sm:$0xf] %vm2161, %v2098
      %2179 = vst.msk [vmem:[#allocation4 + $0x44] sm:$0xf] %vm2161, %v2100
      %2180 = vst.msk [vmem:[#allocation4 + $0x48] sm:$0xf] %vm2161, %v2102
      %2181 = vst.msk [vmem:[#allocation4 + $0x4c] sm:$0xf] %vm2161, %v2104
      %2182 = vst.msk [vmem:[#allocation4 + $0x50] sm:$0xf] %vm2161, %v2106
      %2183 = vst.msk [vmem:[#allocation4 + $0x54] sm:$0xf] %vm2161, %v2108
      %2184 = vst.msk [vmem:[#allocation4 + $0x58] sm:$0xf] %vm2161, %v2110
      %2185 = vst.msk [vmem:[#allocation4 + $0x5c] sm:$0xf] %vm2161, %v2112
      %2186 = vst.msk [vmem:[#allocation4 + $0x60] sm:$0xf] %vm2161, %v2114
      %2187 = vst.msk [vmem:[#allocation4 + $0x64] sm:$0xf] %vm2161, %v2116
      %2188 = vst.msk [vmem:[#allocation4 + $0x68] sm:$0xf] %vm2161, %v2118
      %2189 = vst.msk [vmem:[#allocation4 + $0x6c] sm:$0xf] %vm2161, %v2120
      %2190 = vst.msk [vmem:[#allocation4 + $0x70] sm:$0xf] %vm2161, %v2122
      %2191 = vst.msk [vmem:[#allocation4 + $0x74] sm:$0xf] %vm2161, %v2124
      %2192 = vst.msk [vmem:[#allocation4 + $0x78] sm:$0xf] %vm2161, %v2126
      %2193 = vst.msk [vmem:[#allocation4 + $0x7c] sm:$0xf] %vm2161, %v2128
      %v2194 = vld [vmem:[%s918] sm:$0xf]
      %v2195 = vld [vmem:[%s918 + $0x4] sm:$0xf]
      %v2196 = vld [vmem:[%s918 + $0x8] sm:$0x1]
      %v2197 = vld [vmem:[%s918 + $0xc] sm:$0xf]
      %v2198 = vld [vmem:[%s918 + $0x10] sm:$0xf]
      %v2199 = vld [vmem:[%s918 + $0x14] sm:$0x1]
      %v2200 = vld [vmem:[%s918 + $0x18] sm:$0xf]
      %v2201 = vld [vmem:[%s918 + $0x1c] sm:$0xf]
      %v2202 = vld [vmem:[%s918 + $0x20] sm:$0x1]
      %v2203 = vld [vmem:[%s918 + $0x24] sm:$0xf]
      %v2204 = vld [vmem:[%s918 + $0x28] sm:$0xf]
      %v2205 = vld [vmem:[%s918 + $0x2c] sm:$0x1]
      %v2206 = vld [vmem:[%s918 + $0x30] sm:$0xf]
      %v2207 = vld [vmem:[%s918 + $0x34] sm:$0xf]
      %v2208 = vld [vmem:[%s918 + $0x38] sm:$0x1]
      %v2209 = vld [vmem:[%s918 + $0x3c] sm:$0xf]
      %v2210 = vld [vmem:[%s918 + $0x40] sm:$0xf]
      %v2211 = vld [vmem:[%s918 + $0x44] sm:$0x1]
      %v2212 = vld [vmem:[%s918 + $0x48] sm:$0xf]
      %v2213 = vld [vmem:[%s918 + $0x4c] sm:$0xf]
      %v2214 = vld [vmem:[%s918 + $0x50] sm:$0x1]
      %v2215 = vld [vmem:[%s918 + $0x54] sm:$0xf]
      %v2216 = vld [vmem:[%s918 + $0x58] sm:$0xf]
      %v2217 = vld [vmem:[%s918 + $0x5c] sm:$0x1]
      %v2218 = vld [vmem:[%s918 + $0x60] sm:$0xf]
      %v2219 = vld [vmem:[%s918 + $0x64] sm:$0xf]
      %v2220 = vld [vmem:[%s918 + $0x68] sm:$0x1]
      %v2221 = vld [vmem:[%s918 + $0x6c] sm:$0xf]
      %v2222 = vld [vmem:[%s918 + $0x70] sm:$0xf]
      %v2223 = vld [vmem:[%s918 + $0x74] sm:$0x1]
      %v2224 = vld [vmem:[%s918 + $0x78] sm:$0xf]
      %v2225 = vld [vmem:[%s918 + $0x7c] sm:$0xf]
      %v2226 = vld [vmem:[%s918 + $0x80] sm:$0x1]
      %v2227 = vld [vmem:[%s918 + $0x84] sm:$0xf]
      %v2228 = vld [vmem:[%s918 + $0x88] sm:$0xf]
      %v2229 = vld [vmem:[%s918 + $0x8c] sm:$0x1]
      %v2230 = vld [vmem:[%s918 + $0x90] sm:$0xf]
      %v2231 = vld [vmem:[%s918 + $0x94] sm:$0xf]
      %v2232 = vld [vmem:[%s918 + $0x98] sm:$0x1]
      %v2233 = vld [vmem:[%s918 + $0x9c] sm:$0xf]
      %v2234 = vld [vmem:[%s918 + $0xa0] sm:$0xf]
      %v2235 = vld [vmem:[%s918 + $0xa4] sm:$0x1]
      %v2236 = vld [vmem:[%s918 + $0xa8] sm:$0xf]
      %v2237 = vld [vmem:[%s918 + $0xac] sm:$0xf]
      %v2238 = vld [vmem:[%s918 + $0xb0] sm:$0x1]
      %v2239 = vld [vmem:[%s918 + $0xb4] sm:$0xf]
      %v2240 = vld [vmem:[%s918 + $0xb8] sm:$0xf]
      %v2241 = vld [vmem:[%s918 + $0xbc] sm:$0x1]
      %v2243 = vshrl.u32 %v2194, 16
      %v2245 = vrot.slane %v2243, 4
      %v2246 = vshll.u32 %v2194, 16
      %v2248 = vrot.slane %v2246, 5
      %v2249 = vor.u32 %v2245, %v2248
      %v2250 = vrot.slane %v2249, 4
      %v2252 = vshll.u32 %v2195, 16
      %v2254 = vrot.slane %v2252, 5
      %v2255 = vsel %vm1147, %v2250, %v2254
      %v2256 = vshrl.u32 %v2195, 16
      %v2258 = vrot.slane %v2256, 4
      %v2259 = vor.u32 %v2258, %v2254
      %v2260 = vrot.slane %v2259, 4
      %v2262 = vshll.u32 %v2196, 16
      %v2264 = vrot.slane %v2262, 5
      %v2265 = vsel %vm1147, %v2260, %v2264
      %v2267 = vshrl.u32 %v2197, 16
      %v2269 = vrot.slane %v2267, 4
      %v2270 = vshll.u32 %v2197, 16
      %v2272 = vrot.slane %v2270, 5
      %v2273 = vor.u32 %v2269, %v2272
      %v2274 = vrot.slane %v2273, 4
      %v2276 = vshll.u32 %v2198, 16
      %v2278 = vrot.slane %v2276, 5
      %v2279 = vsel %vm1147, %v2274, %v2278
      %v2280 = vshrl.u32 %v2198, 16
      %v2282 = vrot.slane %v2280, 4
      %v2283 = vor.u32 %v2282, %v2278
      %v2284 = vrot.slane %v2283, 4
      %v2286 = vshll.u32 %v2199, 16
      %v2288 = vrot.slane %v2286, 5
      %v2289 = vsel %vm1147, %v2284, %v2288
      %v2291 = vshrl.u32 %v2200, 16
      %v2293 = vrot.slane %v2291, 4
      %v2294 = vshll.u32 %v2200, 16
      %v2296 = vrot.slane %v2294, 5
      %v2297 = vor.u32 %v2293, %v2296
      %v2298 = vrot.slane %v2297, 4
      %v2300 = vshll.u32 %v2201, 16
      %v2302 = vrot.slane %v2300, 5
      %v2303 = vsel %vm1147, %v2298, %v2302
      %v2304 = vshrl.u32 %v2201, 16
      %v2306 = vrot.slane %v2304, 4
      %v2307 = vor.u32 %v2306, %v2302
      %v2308 = vrot.slane %v2307, 4
      %v2310 = vshll.u32 %v2202, 16
      %v2312 = vrot.slane %v2310, 5
      %v2313 = vsel %vm1147, %v2308, %v2312
      %v2315 = vshrl.u32 %v2203, 16
      %v2317 = vrot.slane %v2315, 4
      %v2318 = vshll.u32 %v2203, 16
      %v2320 = vrot.slane %v2318, 5
      %v2321 = vor.u32 %v2317, %v2320
      %v2322 = vrot.slane %v2321, 4
      %v2324 = vshll.u32 %v2204, 16
      %v2326 = vrot.slane %v2324, 5
      %v2327 = vsel %vm1147, %v2322, %v2326
      %v2328 = vshrl.u32 %v2204, 16
      %v2330 = vrot.slane %v2328, 4
      %v2331 = vor.u32 %v2330, %v2326
      %v2332 = vrot.slane %v2331, 4
      %v2334 = vshll.u32 %v2205, 16
      %v2336 = vrot.slane %v2334, 5
      %v2337 = vsel %vm1147, %v2332, %v2336
      %v2339 = vshrl.u32 %v2206, 16
      %v2341 = vrot.slane %v2339, 4
      %v2342 = vshll.u32 %v2206, 16
      %v2344 = vrot.slane %v2342, 5
      %v2345 = vor.u32 %v2341, %v2344
      %v2346 = vrot.slane %v2345, 4
      %v2348 = vshll.u32 %v2207, 16
      %v2350 = vrot.slane %v2348, 5
      %v2351 = vsel %vm1147, %v2346, %v2350
      %v2352 = vshrl.u32 %v2207, 16
      %v2354 = vrot.slane %v2352, 4
      %v2355 = vor.u32 %v2354, %v2350
      %v2356 = vrot.slane %v2355, 4
      %v2358 = vshll.u32 %v2208, 16
      %v2360 = vrot.slane %v2358, 5
      %v2361 = vsel %vm1147, %v2356, %v2360
      %v2363 = vshrl.u32 %v2209, 16
      %v2365 = vrot.slane %v2363, 4
      %v2366 = vshll.u32 %v2209, 16
      %v2368 = vrot.slane %v2366, 5
      %v2369 = vor.u32 %v2365, %v2368
      %v2370 = vrot.slane %v2369, 4
      %v2372 = vshll.u32 %v2210, 16
      %v2374 = vrot.slane %v2372, 5
      %v2375 = vsel %vm1147, %v2370, %v2374
      %v2376 = vshrl.u32 %v2210, 16
      %v2378 = vrot.slane %v2376, 4
      %v2379 = vor.u32 %v2378, %v2374
      %v2380 = vrot.slane %v2379, 4
      %v2382 = vshll.u32 %v2211, 16
      %v2384 = vrot.slane %v2382, 5
      %v2385 = vsel %vm1147, %v2380, %v2384
      %v2387 = vshrl.u32 %v2212, 16
      %v2389 = vrot.slane %v2387, 4
      %v2390 = vshll.u32 %v2212, 16
      %v2392 = vrot.slane %v2390, 5
      %v2393 = vor.u32 %v2389, %v2392
      %v2394 = vrot.slane %v2393, 4
      %v2396 = vshll.u32 %v2213, 16
      %v2398 = vrot.slane %v2396, 5
      %v2399 = vsel %vm1147, %v2394, %v2398
      %v2400 = vshrl.u32 %v2213, 16
      %v2402 = vrot.slane %v2400, 4
      %v2403 = vor.u32 %v2402, %v2398
      %v2404 = vrot.slane %v2403, 4
      %v2406 = vshll.u32 %v2214, 16
      %v2408 = vrot.slane %v2406, 5
      %v2409 = vsel %vm1147, %v2404, %v2408
      %v2411 = vshrl.u32 %v2215, 16
      %v2413 = vrot.slane %v2411, 4
      %v2414 = vshll.u32 %v2215, 16
      %v2416 = vrot.slane %v2414, 5
      %v2417 = vor.u32 %v2413, %v2416
      %v2418 = vrot.slane %v2417, 4
      %v2420 = vshll.u32 %v2216, 16
      %v2422 = vrot.slane %v2420, 5
      %v2423 = vsel %vm1147, %v2418, %v2422
      %v2424 = vshrl.u32 %v2216, 16
      %v2426 = vrot.slane %v2424, 4
      %v2427 = vor.u32 %v2426, %v2422
      %v2428 = vrot.slane %v2427, 4
      %v2430 = vshll.u32 %v2217, 16
      %v2432 = vrot.slane %v2430, 5
      %v2433 = vsel %vm1147, %v2428, %v2432
      %v2435 = vshrl.u32 %v2218, 16
      %v2437 = vrot.slane %v2435, 4
      %v2438 = vshll.u32 %v2218, 16
      %v2440 = vrot.slane %v2438, 5
      %v2441 = vor.u32 %v2437, %v2440
      %v2442 = vrot.slane %v2441, 4
      %v2444 = vshll.u32 %v2219, 16
      %v2446 = vrot.slane %v2444, 5
      %v2447 = vsel %vm1147, %v2442, %v2446
      %v2448 = vshrl.u32 %v2219, 16
      %v2450 = vrot.slane %v2448, 4
      %v2451 = vor.u32 %v2450, %v2446
      %v2452 = vrot.slane %v2451, 4
      %v2454 = vshll.u32 %v2220, 16
      %v2456 = vrot.slane %v2454, 5
      %v2457 = vsel %vm1147, %v2452, %v2456
      %v2459 = vshrl.u32 %v2221, 16
      %v2461 = vrot.slane %v2459, 4
      %v2462 = vshll.u32 %v2221, 16
      %v2464 = vrot.slane %v2462, 5
      %v2465 = vor.u32 %v2461, %v2464
      %v2466 = vrot.slane %v2465, 4
      %v2468 = vshll.u32 %v2222, 16
      %v2470 = vrot.slane %v2468, 5
      %v2471 = vsel %vm1147, %v2466, %v2470
      %v2472 = vshrl.u32 %v2222, 16
      %v2474 = vrot.slane %v2472, 4
      %v2475 = vor.u32 %v2474, %v2470
      %v2476 = vrot.slane %v2475, 4
      %v2478 = vshll.u32 %v2223, 16
      %v2480 = vrot.slane %v2478, 5
      %v2481 = vsel %vm1147, %v2476, %v2480
      %v2483 = vshrl.u32 %v2224, 16
      %v2485 = vrot.slane %v2483, 4
      %v2486 = vshll.u32 %v2224, 16
      %v2488 = vrot.slane %v2486, 5
      %v2489 = vor.u32 %v2485, %v2488
      %v2490 = vrot.slane %v2489, 4
      %v2492 = vshll.u32 %v2225, 16
      %v2494 = vrot.slane %v2492, 5
      %v2495 = vsel %vm1147, %v2490, %v2494
      %v2496 = vshrl.u32 %v2225, 16
      %v2498 = vrot.slane %v2496, 4
      %v2499 = vor.u32 %v2498, %v2494
      %v2500 = vrot.slane %v2499, 4
      %v2502 = vshll.u32 %v2226, 16
      %v2504 = vrot.slane %v2502, 5
      %v2505 = vsel %vm1147, %v2500, %v2504
      %v2507 = vshrl.u32 %v2227, 16
      %v2509 = vrot.slane %v2507, 4
      %v2510 = vshll.u32 %v2227, 16
      %v2512 = vrot.slane %v2510, 5
      %v2513 = vor.u32 %v2509, %v2512
      %v2514 = vrot.slane %v2513, 4
      %v2516 = vshll.u32 %v2228, 16
      %v2518 = vrot.slane %v2516, 5
      %v2519 = vsel %vm1147, %v2514, %v2518
      %v2520 = vshrl.u32 %v2228, 16
      %v2522 = vrot.slane %v2520, 4
      %v2523 = vor.u32 %v2522, %v2518
      %v2524 = vrot.slane %v2523, 4
      %v2526 = vshll.u32 %v2229, 16
      %v2528 = vrot.slane %v2526, 5
      %v2529 = vsel %vm1147, %v2524, %v2528
      %v2531 = vshrl.u32 %v2230, 16
      %v2533 = vrot.slane %v2531, 4
      %v2534 = vshll.u32 %v2230, 16
      %v2536 = vrot.slane %v2534, 5
      %v2537 = vor.u32 %v2533, %v2536
      %v2538 = vrot.slane %v2537, 4
      %v2540 = vshll.u32 %v2231, 16
      %v2542 = vrot.slane %v2540, 5
      %v2543 = vsel %vm1147, %v2538, %v2542
      %v2544 = vshrl.u32 %v2231, 16
      %v2546 = vrot.slane %v2544, 4
      %v2547 = vor.u32 %v2546, %v2542
      %v2548 = vrot.slane %v2547, 4
      %v2550 = vshll.u32 %v2232, 16
      %v2552 = vrot.slane %v2550, 5
      %v2553 = vsel %vm1147, %v2548, %v2552
      %v2555 = vshrl.u32 %v2233, 16
      %v2557 = vrot.slane %v2555, 4
      %v2558 = vshll.u32 %v2233, 16
      %v2560 = vrot.slane %v2558, 5
      %v2561 = vor.u32 %v2557, %v2560
      %v2562 = vrot.slane %v2561, 4
      %v2564 = vshll.u32 %v2234, 16
      %v2566 = vrot.slane %v2564, 5
      %v2567 = vsel %vm1147, %v2562, %v2566
      %v2568 = vshrl.u32 %v2234, 16
      %v2570 = vrot.slane %v2568, 4
      %v2571 = vor.u32 %v2570, %v2566
      %v2572 = vrot.slane %v2571, 4
      %v2574 = vshll.u32 %v2235, 16
      %v2576 = vrot.slane %v2574, 5
      %v2577 = vsel %vm1147, %v2572, %v2576
      %v2579 = vshrl.u32 %v2236, 16
      %v2581 = vrot.slane %v2579, 4
      %v2582 = vshll.u32 %v2236, 16
      %v2584 = vrot.slane %v2582, 5
      %v2585 = vor.u32 %v2581, %v2584
      %v2586 = vrot.slane %v2585, 4
      %v2588 = vshll.u32 %v2237, 16
      %v2590 = vrot.slane %v2588, 5
      %v2591 = vsel %vm1147, %v2586, %v2590
      %v2592 = vshrl.u32 %v2237, 16
      %v2594 = vrot.slane %v2592, 4
      %v2595 = vor.u32 %v2594, %v2590
      %v2596 = vrot.slane %v2595, 4
      %v2598 = vshll.u32 %v2238, 16
      %v2600 = vrot.slane %v2598, 5
      %v2601 = vsel %vm1147, %v2596, %v2600
      %v2603 = vshrl.u32 %v2239, 16
      %v2605 = vrot.slane %v2603, 4
      %v2606 = vshll.u32 %v2239, 16
      %v2608 = vrot.slane %v2606, 5
      %v2609 = vor.u32 %v2605, %v2608
      %v2610 = vrot.slane %v2609, 4
      %v2612 = vshll.u32 %v2240, 16
      %v2614 = vrot.slane %v2612, 5
      %v2615 = vsel %vm1147, %v2610, %v2614
      %v2616 = vshrl.u32 %v2240, 16
      %v2618 = vrot.slane %v2616, 4
      %v2619 = vor.u32 %v2618, %v2614
      %v2620 = vrot.slane %v2619, 4
      %v2622 = vshll.u32 %v2241, 16
      %v2624 = vrot.slane %v2622, 5
      %v2625 = vsel %vm1147, %v2620, %v2624
      %2626 = vrot.lane.b32.xlu0 %v2255, 16
      %v2627 = vpop.permute.xlu0 %2626
      %2628 = vrot.lane.b32.xlu0 %v2265, 16
      %v2629 = vpop.permute.xlu0 %2628
      %2630 = vrot.lane.b32.xlu0 %v2279, 16
      %v2631 = vpop.permute.xlu0 %2630
      %2632 = vrot.lane.b32.xlu0 %v2289, 16
      %v2633 = vpop.permute.xlu0 %2632
      %2634 = vrot.lane.b32.xlu0 %v2303, 16
      %v2635 = vpop.permute.xlu0 %2634
      %2636 = vrot.lane.b32.xlu0 %v2313, 16
      %v2637 = vpop.permute.xlu0 %2636
      %2638 = vrot.lane.b32.xlu0 %v2327, 16
      %v2639 = vpop.permute.xlu0 %2638
      %2640 = vrot.lane.b32.xlu0 %v2337, 16
      %v2641 = vpop.permute.xlu0 %2640
      %2642 = vrot.lane.b32.xlu0 %v2351, 16
      %v2643 = vpop.permute.xlu0 %2642
      %2644 = vrot.lane.b32.xlu0 %v2361, 16
      %v2645 = vpop.permute.xlu0 %2644
      %2646 = vrot.lane.b32.xlu0 %v2375, 16
      %v2647 = vpop.permute.xlu0 %2646
      %2648 = vrot.lane.b32.xlu0 %v2385, 16
      %v2649 = vpop.permute.xlu0 %2648
      %2650 = vrot.lane.b32.xlu0 %v2399, 16
      %v2651 = vpop.permute.xlu0 %2650
      %2652 = vrot.lane.b32.xlu0 %v2409, 16
      %v2653 = vpop.permute.xlu0 %2652
      %2654 = vrot.lane.b32.xlu0 %v2423, 16
      %v2655 = vpop.permute.xlu0 %2654
      %2656 = vrot.lane.b32.xlu0 %v2433, 16
      %v2657 = vpop.permute.xlu0 %2656
      %2658 = vrot.lane.b32.xlu0 %v2447, 16
      %v2659 = vpop.permute.xlu0 %2658
      %2660 = vrot.lane.b32.xlu0 %v2457, 16
      %v2661 = vpop.permute.xlu0 %2660
      %2662 = vrot.lane.b32.xlu0 %v2471, 16
      %v2663 = vpop.permute.xlu0 %2662
      %2664 = vrot.lane.b32.xlu0 %v2481, 16
      %v2665 = vpop.permute.xlu0 %2664
      %2666 = vrot.lane.b32.xlu0 %v2495, 16
      %v2667 = vpop.permute.xlu0 %2666
      %2668 = vrot.lane.b32.xlu0 %v2505, 16
      %v2669 = vpop.permute.xlu0 %2668
      %2670 = vrot.lane.b32.xlu0 %v2519, 16
      %v2671 = vpop.permute.xlu0 %2670
      %2672 = vrot.lane.b32.xlu0 %v2529, 16
      %v2673 = vpop.permute.xlu0 %2672
      %2674 = vrot.lane.b32.xlu0 %v2543, 16
      %v2675 = vpop.permute.xlu0 %2674
      %2676 = vrot.lane.b32.xlu0 %v2553, 16
      %v2677 = vpop.permute.xlu0 %2676
      %2678 = vrot.lane.b32.xlu0 %v2567, 16
      %v2679 = vpop.permute.xlu0 %2678
      %2680 = vrot.lane.b32.xlu0 %v2577, 16
      %v2681 = vpop.permute.xlu0 %2680
      %2682 = vrot.lane.b32.xlu0 %v2591, 16
      %v2683 = vpop.permute.xlu0 %2682
      %2684 = vrot.lane.b32.xlu0 %v2601, 16
      %v2685 = vpop.permute.xlu0 %2684
      %2686 = vrot.lane.b32.xlu0 %v2615, 16
      %v2687 = vpop.permute.xlu0 %2686
      %2688 = vrot.lane.b32.xlu0 %v2625, 16
      %v2689 = vpop.permute.xlu0 %2688
      %vm2722 = vcmask 158848
      %2723 = vst.msk [vmem:[#allocation4] sm:$0xf] %vm2722, %v2627
      %2724 = vst.msk [vmem:[#allocation4 + $0x4] sm:$0xf] %vm2722, %v2629
      %2725 = vst.msk [vmem:[#allocation4 + $0x8] sm:$0xf] %vm2722, %v2631
      %2726 = vst.msk [vmem:[#allocation4 + $0xc] sm:$0xf] %vm2722, %v2633
      %2727 = vst.msk [vmem:[#allocation4 + $0x10] sm:$0xf] %vm2722, %v2635
      %2728 = vst.msk [vmem:[#allocation4 + $0x14] sm:$0xf] %vm2722, %v2637
      %2729 = vst.msk [vmem:[#allocation4 + $0x18] sm:$0xf] %vm2722, %v2639
      %2730 = vst.msk [vmem:[#allocation4 + $0x1c] sm:$0xf] %vm2722, %v2641
      %2731 = vst.msk [vmem:[#allocation4 + $0x20] sm:$0xf] %vm2722, %v2643
      %2732 = vst.msk [vmem:[#allocation4 + $0x24] sm:$0xf] %vm2722, %v2645
      %2733 = vst.msk [vmem:[#allocation4 + $0x28] sm:$0xf] %vm2722, %v2647
      %2734 = vst.msk [vmem:[#allocation4 + $0x2c] sm:$0xf] %vm2722, %v2649
      %2735 = vst.msk [vmem:[#allocation4 + $0x30] sm:$0xf] %vm2722, %v2651
      %2736 = vst.msk [vmem:[#allocation4 + $0x34] sm:$0xf] %vm2722, %v2653
      %2737 = vst.msk [vmem:[#allocation4 + $0x38] sm:$0xf] %vm2722, %v2655
      %2738 = vst.msk [vmem:[#allocation4 + $0x3c] sm:$0xf] %vm2722, %v2657
      %2739 = vst.msk [vmem:[#allocation4 + $0x40] sm:$0xf] %vm2722, %v2659
      %2740 = vst.msk [vmem:[#allocation4 + $0x44] sm:$0xf] %vm2722, %v2661
      %2741 = vst.msk [vmem:[#allocation4 + $0x48] sm:$0xf] %vm2722, %v2663
      %2742 = vst.msk [vmem:[#allocation4 + $0x4c] sm:$0xf] %vm2722, %v2665
      %2743 = vst.msk [vmem:[#allocation4 + $0x50] sm:$0xf] %vm2722, %v2667
      %2744 = vst.msk [vmem:[#allocation4 + $0x54] sm:$0xf] %vm2722, %v2669
      %2745 = vst.msk [vmem:[#allocation4 + $0x58] sm:$0xf] %vm2722, %v2671
      %2746 = vst.msk [vmem:[#allocation4 + $0x5c] sm:$0xf] %vm2722, %v2673
      %2747 = vst.msk [vmem:[#allocation4 + $0x60] sm:$0xf] %vm2722, %v2675
      %2748 = vst.msk [vmem:[#allocation4 + $0x64] sm:$0xf] %vm2722, %v2677
      %2749 = vst.msk [vmem:[#allocation4 + $0x68] sm:$0xf] %vm2722, %v2679
      %2750 = vst.msk [vmem:[#allocation4 + $0x6c] sm:$0xf] %vm2722, %v2681
      %2751 = vst.msk [vmem:[#allocation4 + $0x70] sm:$0xf] %vm2722, %v2683
      %2752 = vst.msk [vmem:[#allocation4 + $0x74] sm:$0xf] %vm2722, %v2685
      %2753 = vst.msk [vmem:[#allocation4 + $0x78] sm:$0xf] %vm2722, %v2687
      %2754 = vst.msk [vmem:[#allocation4 + $0x7c] sm:$0xf] %vm2722, %v2689
      %v2755 = vld [vmem:[%s918] sm:$0xe]
      %v2756 = vld [vmem:[%s918 + $0x4] sm:$0xf]
      %v2757 = vld [vmem:[%s918 + $0x8] sm:$0x1]
      %v2758 = vld [vmem:[%s918 + $0xc] sm:$0xe]
      %v2759 = vld [vmem:[%s918 + $0x10] sm:$0xf]
      %v2760 = vld [vmem:[%s918 + $0x14] sm:$0x1]
      %v2761 = vld [vmem:[%s918 + $0x18] sm:$0xe]
      %v2762 = vld [vmem:[%s918 + $0x1c] sm:$0xf]
      %v2763 = vld [vmem:[%s918 + $0x20] sm:$0x1]
      %v2764 = vld [vmem:[%s918 + $0x24] sm:$0xe]
      %v2765 = vld [vmem:[%s918 + $0x28] sm:$0xf]
      %v2766 = vld [vmem:[%s918 + $0x2c] sm:$0x1]
      %v2767 = vld [vmem:[%s918 + $0x30] sm:$0xe]
      %v2768 = vld [vmem:[%s918 + $0x34] sm:$0xf]
      %v2769 = vld [vmem:[%s918 + $0x38] sm:$0x1]
      %v2770 = vld [vmem:[%s918 + $0x3c] sm:$0xe]
      %v2771 = vld [vmem:[%s918 + $0x40] sm:$0xf]
      %v2772 = vld [vmem:[%s918 + $0x44] sm:$0x1]
      %v2773 = vld [vmem:[%s918 + $0x48] sm:$0xe]
      %v2774 = vld [vmem:[%s918 + $0x4c] sm:$0xf]
      %v2775 = vld [vmem:[%s918 + $0x50] sm:$0x1]
      %v2776 = vld [vmem:[%s918 + $0x54] sm:$0xe]
      %v2777 = vld [vmem:[%s918 + $0x58] sm:$0xf]
      %v2778 = vld [vmem:[%s918 + $0x5c] sm:$0x1]
      %v2779 = vld [vmem:[%s918 + $0x60] sm:$0xe]
      %v2780 = vld [vmem:[%s918 + $0x64] sm:$0xf]
      %v2781 = vld [vmem:[%s918 + $0x68] sm:$0x1]
      %v2782 = vld [vmem:[%s918 + $0x6c] sm:$0xe]
      %v2783 = vld [vmem:[%s918 + $0x70] sm:$0xf]
      %v2784 = vld [vmem:[%s918 + $0x74] sm:$0x1]
      %v2785 = vld [vmem:[%s918 + $0x78] sm:$0xe]
      %v2786 = vld [vmem:[%s918 + $0x7c] sm:$0xf]
      %v2787 = vld [vmem:[%s918 + $0x80] sm:$0x1]
      %v2788 = vld [vmem:[%s918 + $0x84] sm:$0xe]
      %v2789 = vld [vmem:[%s918 + $0x88] sm:$0xf]
      %v2790 = vld [vmem:[%s918 + $0x8c] sm:$0x1]
      %v2791 = vld [vmem:[%s918 + $0x90] sm:$0xe]
      %v2792 = vld [vmem:[%s918 + $0x94] sm:$0xf]
      %v2793 = vld [vmem:[%s918 + $0x98] sm:$0x1]
      %v2794 = vld [vmem:[%s918 + $0x9c] sm:$0xe]
      %v2795 = vld [vmem:[%s918 + $0xa0] sm:$0xf]
      %v2796 = vld [vmem:[%s918 + $0xa4] sm:$0x1]
      %v2797 = vld [vmem:[%s918 + $0xa8] sm:$0xe]
      %v2798 = vld [vmem:[%s918 + $0xac] sm:$0xf]
      %v2799 = vld [vmem:[%s918 + $0xb0] sm:$0x1]
      %v2800 = vld [vmem:[%s918 + $0xb4] sm:$0xe]
      %v2801 = vld [vmem:[%s918 + $0xb8] sm:$0xf]
      %v2802 = vld [vmem:[%s918 + $0xbc] sm:$0x1]
      %v2851 = vrot.slane %v2755, 5
      %v2852 = vrot.slane %v2851, 4
      %v2853 = vrot.slane %v2756, 5
      %v2854 = vsel %vm1759, %v2852, %v2853
      %v2855 = vrot.slane %v2853, 4
      %v2856 = vrot.slane %v2757, 5
      %v2857 = vsel %vm1759, %v2855, %v2856
      %v2858 = vrot.slane %v2758, 5
      %v2859 = vrot.slane %v2858, 4
      %v2860 = vrot.slane %v2759, 5
      %v2861 = vsel %vm1759, %v2859, %v2860
      %v2862 = vrot.slane %v2860, 4
      %v2863 = vrot.slane %v2760, 5
      %v2864 = vsel %vm1759, %v2862, %v2863
      %v2865 = vrot.slane %v2761, 5
      %v2866 = vrot.slane %v2865, 4
      %v2867 = vrot.slane %v2762, 5
      %v2868 = vsel %vm1759, %v2866, %v2867
      %v2869 = vrot.slane %v2867, 4
      %v2870 = vrot.slane %v2763, 5
      %v2871 = vsel %vm1759, %v2869, %v2870
      %v2872 = vrot.slane %v2764, 5
      %v2873 = vrot.slane %v2872, 4
      %v2874 = vrot.slane %v2765, 5
      %v2875 = vsel %vm1759, %v2873, %v2874
      %v2876 = vrot.slane %v2874, 4
      %v2877 = vrot.slane %v2766, 5
      %v2878 = vsel %vm1759, %v2876, %v2877
      %v2879 = vrot.slane %v2767, 5
      %v2880 = vrot.slane %v2879, 4
      %v2881 = vrot.slane %v2768, 5
      %v2882 = vsel %vm1759, %v2880, %v2881
      %v2883 = vrot.slane %v2881, 4
      %v2884 = vrot.slane %v2769, 5
      %v2885 = vsel %vm1759, %v2883, %v2884
      %v2886 = vrot.slane %v2770, 5
      %v2887 = vrot.slane %v2886, 4
      %v2888 = vrot.slane %v2771, 5
      %v2889 = vsel %vm1759, %v2887, %v2888
      %v2890 = vrot.slane %v2888, 4
      %v2891 = vrot.slane %v2772, 5
      %v2892 = vsel %vm1759, %v2890, %v2891
      %v2893 = vrot.slane %v2773, 5
      %v2894 = vrot.slane %v2893, 4
      %v2895 = vrot.slane %v2774, 5
      %v2896 = vsel %vm1759, %v2894, %v2895
      %v2897 = vrot.slane %v2895, 4
      %v2898 = vrot.slane %v2775, 5
      %v2899 = vsel %vm1759, %v2897, %v2898
      %v2900 = vrot.slane %v2776, 5
      %v2901 = vrot.slane %v2900, 4
      %v2902 = vrot.slane %v2777, 5
      %v2903 = vsel %vm1759, %v2901, %v2902
      %v2904 = vrot.slane %v2902, 4
      %v2905 = vrot.slane %v2778, 5
      %v2906 = vsel %vm1759, %v2904, %v2905
      %v2907 = vrot.slane %v2779, 5
      %v2908 = vrot.slane %v2907, 4
      %v2909 = vrot.slane %v2780, 5
      %v2910 = vsel %vm1759, %v2908, %v2909
      %v2911 = vrot.slane %v2909, 4
      %v2912 = vrot.slane %v2781, 5
      %v2913 = vsel %vm1759, %v2911, %v2912
      %v2914 = vrot.slane %v2782, 5
      %v2915 = vrot.slane %v2914, 4
      %v2916 = vrot.slane %v2783, 5
      %v2917 = vsel %vm1759, %v2915, %v2916
      %v2918 = vrot.slane %v2916, 4
      %v2919 = vrot.slane %v2784, 5
      %v2920 = vsel %vm1759, %v2918, %v2919
      %v2921 = vrot.slane %v2785, 5
      %v2922 = vrot.slane %v2921, 4
      %v2923 = vrot.slane %v2786, 5
      %v2924 = vsel %vm1759, %v2922, %v2923
      %v2925 = vrot.slane %v2923, 4
      %v2926 = vrot.slane %v2787, 5
      %v2927 = vsel %vm1759, %v2925, %v2926
      %v2928 = vrot.slane %v2788, 5
      %v2929 = vrot.slane %v2928, 4
      %v2930 = vrot.slane %v2789, 5
      %v2931 = vsel %vm1759, %v2929, %v2930
      %v2932 = vrot.slane %v2930, 4
      %v2933 = vrot.slane %v2790, 5
      %v2934 = vsel %vm1759, %v2932, %v2933
      %v2935 = vrot.slane %v2791, 5
      %v2936 = vrot.slane %v2935, 4
      %v2937 = vrot.slane %v2792, 5
      %v2938 = vsel %vm1759, %v2936, %v2937
      %v2939 = vrot.slane %v2937, 4
      %v2940 = vrot.slane %v2793, 5
      %v2941 = vsel %vm1759, %v2939, %v2940
      %v2942 = vrot.slane %v2794, 5
      %v2943 = vrot.slane %v2942, 4
      %v2944 = vrot.slane %v2795, 5
      %v2945 = vsel %vm1759, %v2943, %v2944
      %v2946 = vrot.slane %v2944, 4
      %v2947 = vrot.slane %v2796, 5
      %v2948 = vsel %vm1759, %v2946, %v2947
      %v2949 = vrot.slane %v2797, 5
      %v2950 = vrot.slane %v2949, 4
      %v2951 = vrot.slane %v2798, 5
      %v2952 = vsel %vm1759, %v2950, %v2951
      %v2953 = vrot.slane %v2951, 4
      %v2954 = vrot.slane %v2799, 5
      %v2955 = vsel %vm1759, %v2953, %v2954
      %v2956 = vrot.slane %v2800, 5
      %v2957 = vrot.slane %v2956, 4
      %v2958 = vrot.slane %v2801, 5
      %v2959 = vsel %vm1759, %v2957, %v2958
      %v2960 = vrot.slane %v2958, 4
      %v2961 = vrot.slane %v2802, 5
      %v2962 = vsel %vm1759, %v2960, %v2961
      %2963 = vrot.lane.b32.xlu0 %v2854, 20
      %v2964 = vpop.permute.xlu0 %2963
      %2965 = vrot.lane.b32.xlu0 %v2857, 20
      %v2966 = vpop.permute.xlu0 %2965
      %2967 = vrot.lane.b32.xlu0 %v2861, 20
      %v2968 = vpop.permute.xlu0 %2967
      %2969 = vrot.lane.b32.xlu0 %v2864, 20
      %v2970 = vpop.permute.xlu0 %2969
      %2971 = vrot.lane.b32.xlu0 %v2868, 20
      %v2972 = vpop.permute.xlu0 %2971
      %2973 = vrot.lane.b32.xlu0 %v2871, 20
      %v2974 = vpop.permute.xlu0 %2973
      %2975 = vrot.lane.b32.xlu0 %v2875, 20
      %v2976 = vpop.permute.xlu0 %2975
      %2977 = vrot.lane.b32.xlu0 %v2878, 20
      %v2978 = vpop.permute.xlu0 %2977
      %2979 = vrot.lane.b32.xlu0 %v2882, 20
      %v2980 = vpop.permute.xlu0 %2979
      %2981 = vrot.lane.b32.xlu0 %v2885, 20
      %v2982 = vpop.permute.xlu0 %2981
      %2983 = vrot.lane.b32.xlu0 %v2889, 20
      %v2984 = vpop.permute.xlu0 %2983
      %2985 = vrot.lane.b32.xlu0 %v2892, 20
      %v2986 = vpop.permute.xlu0 %2985
      %2987 = vrot.lane.b32.xlu0 %v2896, 20
      %v2988 = vpop.permute.xlu0 %2987
      %2989 = vrot.lane.b32.xlu0 %v2899, 20
      %v2990 = vpop.permute.xlu0 %2989
      %2991 = vrot.lane.b32.xlu0 %v2903, 20
      %v2992 = vpop.permute.xlu0 %2991
      %2993 = vrot.lane.b32.xlu0 %v2906, 20
      %v2994 = vpop.permute.xlu0 %2993
      %2995 = vrot.lane.b32.xlu0 %v2910, 20
      %v2996 = vpop.permute.xlu0 %2995
      %2997 = vrot.lane.b32.xlu0 %v2913, 20
      %v2998 = vpop.permute.xlu0 %2997
      %2999 = vrot.lane.b32.xlu0 %v2917, 20
      %v3000 = vpop.permute.xlu0 %2999
      %3001 = vrot.lane.b32.xlu0 %v2920, 20
      %v3002 = vpop.permute.xlu0 %3001
      %3003 = vrot.lane.b32.xlu0 %v2924, 20
      %v3004 = vpop.permute.xlu0 %3003
      %3005 = vrot.lane.b32.xlu0 %v2927, 20
      %v3006 = vpop.permute.xlu0 %3005
      %3007 = vrot.lane.b32.xlu0 %v2931, 20
      %v3008 = vpop.permute.xlu0 %3007
      %3009 = vrot.lane.b32.xlu0 %v2934, 20
      %v3010 = vpop.permute.xlu0 %3009
      %3011 = vrot.lane.b32.xlu0 %v2938, 20
      %v3012 = vpop.permute.xlu0 %3011
      %3013 = vrot.lane.b32.xlu0 %v2941, 20
      %v3014 = vpop.permute.xlu0 %3013
      %3015 = vrot.lane.b32.xlu0 %v2945, 20
      %v3016 = vpop.permute.xlu0 %3015
      %3017 = vrot.lane.b32.xlu0 %v2948, 20
      %v3018 = vpop.permute.xlu0 %3017
      %3019 = vrot.lane.b32.xlu0 %v2952, 20
      %v3020 = vpop.permute.xlu0 %3019
      %3021 = vrot.lane.b32.xlu0 %v2955, 20
      %v3022 = vpop.permute.xlu0 %3021
      %3023 = vrot.lane.b32.xlu0 %v2959, 20
      %v3024 = vpop.permute.xlu0 %3023
      %3025 = vrot.lane.b32.xlu0 %v2962, 20
      %v3026 = vpop.permute.xlu0 %3025
      %vm3059 = vcmask 191648
      %3060 = vst.msk [vmem:[#allocation4] sm:$0xf] %vm3059, %v2964
      %3061 = vst.msk [vmem:[#allocation4 + $0x4] sm:$0xf] %vm3059, %v2966
      %3062 = vst.msk [vmem:[#allocation4 + $0x8] sm:$0xf] %vm3059, %v2968
      %3063 = vst.msk [vmem:[#allocation4 + $0xc] sm:$0xf] %vm3059, %v2970
      %3064 = vst.msk [vmem:[#allocation4 + $0x10] sm:$0xf] %vm3059, %v2972
      %3065 = vst.msk [vmem:[#allocation4 + $0x14] sm:$0xf] %vm3059, %v2974
      %3066 = vst.msk [vmem:[#allocation4 + $0x18] sm:$0xf] %vm3059, %v2976
      %3067 = vst.msk [vmem:[#allocation4 + $0x1c] sm:$0xf] %vm3059, %v2978
      %3068 = vst.msk [vmem:[#allocation4 + $0x20] sm:$0xf] %vm3059, %v2980
      %3069 = vst.msk [vmem:[#allocation4 + $0x24] sm:$0xf] %vm3059, %v2982
      %3070 = vst.msk [vmem:[#allocation4 + $0x28] sm:$0xf] %vm3059, %v2984
      %3071 = vst.msk [vmem:[#allocation4 + $0x2c] sm:$0xf] %vm3059, %v2986
      %3072 = vst.msk [vmem:[#allocation4 + $0x30] sm:$0xf] %vm3059, %v2988
      %3073 = vst.msk [vmem:[#allocation4 + $0x34] sm:$0xf] %vm3059, %v2990
      %3074 = vst.msk [vmem:[#allocation4 + $0x38] sm:$0xf] %vm3059, %v2992
      %3075 = vst.msk [vmem:[#allocation4 + $0x3c] sm:$0xf] %vm3059, %v2994
      %3076 = vst.msk [vmem:[#allocation4 + $0x40] sm:$0xf] %vm3059, %v2996
      %3077 = vst.msk [vmem:[#allocation4 + $0x44] sm:$0xf] %vm3059, %v2998
      %3078 = vst.msk [vmem:[#allocation4 + $0x48] sm:$0xf] %vm3059, %v3000
      %3079 = vst.msk [vmem:[#allocation4 + $0x4c] sm:$0xf] %vm3059, %v3002
      %3080 = vst.msk [vmem:[#allocation4 + $0x50] sm:$0xf] %vm3059, %v3004
      %3081 = vst.msk [vmem:[#allocation4 + $0x54] sm:$0xf] %vm3059, %v3006
      %3082 = vst.msk [vmem:[#allocation4 + $0x58] sm:$0xf] %vm3059, %v3008
      %3083 = vst.msk [vmem:[#allocation4 + $0x5c] sm:$0xf] %vm3059, %v3010
      %3084 = vst.msk [vmem:[#allocation4 + $0x60] sm:$0xf] %vm3059, %v3012
      %3085 = vst.msk [vmem:[#allocation4 + $0x64] sm:$0xf] %vm3059, %v3014
      %3086 = vst.msk [vmem:[#allocation4 + $0x68] sm:$0xf] %vm3059, %v3016
      %3087 = vst.msk [vmem:[#allocation4 + $0x6c] sm:$0xf] %vm3059, %v3018
      %3088 = vst.msk [vmem:[#allocation4 + $0x70] sm:$0xf] %vm3059, %v3020
      %3089 = vst.msk [vmem:[#allocation4 + $0x74] sm:$0xf] %vm3059, %v3022
      %3090 = vst.msk [vmem:[#allocation4 + $0x78] sm:$0xf] %vm3059, %v3024
      %3091 = vst.msk [vmem:[#allocation4 + $0x7c] sm:$0xf] %vm3059, %v3026
      %s3092 = scalar_lea.vmem [#allocation2], 24
      %v3093 = vld [vmem:[%s3092] sm:$0xf]
      %v3094 = vld [vmem:[%s3092 + $0x4] sm:$0xf]
      %v3095 = vld [vmem:[%s3092 + $0xc] sm:$0xf]
      %v3096 = vld [vmem:[%s3092 + $0x10] sm:$0xf]
      %v3097 = vld [vmem:[%s3092 + $0x18] sm:$0xf]
      %v3098 = vld [vmem:[%s3092 + $0x1c] sm:$0xf]
      %v3099 = vld [vmem:[%s3092 + $0x24] sm:$0xf]
      %v3100 = vld [vmem:[%s3092 + $0x28] sm:$0xf]
      %v3101 = vld [vmem:[%s3092 + $0x30] sm:$0xf]
      %v3102 = vld [vmem:[%s3092 + $0x34] sm:$0xf]
      %v3103 = vld [vmem:[%s3092 + $0x3c] sm:$0xf]
      %v3104 = vld [vmem:[%s3092 + $0x40] sm:$0xf]
      %v3105 = vld [vmem:[%s3092 + $0x48] sm:$0xf]
      %v3106 = vld [vmem:[%s3092 + $0x4c] sm:$0xf]
      %v3107 = vld [vmem:[%s3092 + $0x54] sm:$0xf]
      %v3108 = vld [vmem:[%s3092 + $0x58] sm:$0xf]
      %v3109 = vld [vmem:[%s3092 + $0x60] sm:$0xf]
      %v3110 = vld [vmem:[%s3092 + $0x64] sm:$0xf]
      %v3111 = vld [vmem:[%s3092 + $0x6c] sm:$0xf]
      %v3112 = vld [vmem:[%s3092 + $0x70] sm:$0xf]
      %v3113 = vld [vmem:[%s3092 + $0x78] sm:$0xf]
      %v3114 = vld [vmem:[%s3092 + $0x7c] sm:$0xf]
      %v3115 = vld [vmem:[%s3092 + $0x84] sm:$0xf]
      %v3116 = vld [vmem:[%s3092 + $0x88] sm:$0xf]
      %v3117 = vld [vmem:[%s3092 + $0x90] sm:$0xf]
      %v3118 = vld [vmem:[%s3092 + $0x94] sm:$0xf]
      %v3119 = vld [vmem:[%s3092 + $0x9c] sm:$0xf]
      %v3120 = vld [vmem:[%s3092 + $0xa0] sm:$0xf]
      %v3121 = vld [vmem:[%s3092 + $0xa8] sm:$0xf]
      %v3122 = vld [vmem:[%s3092 + $0xac] sm:$0xf]
      %v3123 = vld [vmem:[%s3092 + $0xb4] sm:$0xf]
      %v3124 = vld [vmem:[%s3092 + $0xb8] sm:$0xf]
      %3157 = vrot.lane.b32.xlu0 %v3093, 24
      %v3158 = vpop.permute.xlu0 %3157
      %3159 = vrot.lane.b32.xlu0 %v3094, 24
      %v3160 = vpop.permute.xlu0 %3159
      %3161 = vrot.lane.b32.xlu0 %v3095, 24
      %v3162 = vpop.permute.xlu0 %3161
      %3163 = vrot.lane.b32.xlu0 %v3096, 24
      %v3164 = vpop.permute.xlu0 %3163
      %3165 = vrot.lane.b32.xlu0 %v3097, 24
      %v3166 = vpop.permute.xlu0 %3165
      %3167 = vrot.lane.b32.xlu0 %v3098, 24
      %v3168 = vpop.permute.xlu0 %3167
      %3169 = vrot.lane.b32.xlu0 %v3099, 24
      %v3170 = vpop.permute.xlu0 %3169
      %3171 = vrot.lane.b32.xlu0 %v3100, 24
      %v3172 = vpop.permute.xlu0 %3171
      %3173 = vrot.lane.b32.xlu0 %v3101, 24
      %v3174 = vpop.permute.xlu0 %3173
      %3175 = vrot.lane.b32.xlu0 %v3102, 24
      %v3176 = vpop.permute.xlu0 %3175
      %3177 = vrot.lane.b32.xlu0 %v3103, 24
      %v3178 = vpop.permute.xlu0 %3177
      %3179 = vrot.lane.b32.xlu0 %v3104, 24
      %v3180 = vpop.permute.xlu0 %3179
      %3181 = vrot.lane.b32.xlu0 %v3105, 24
      %v3182 = vpop.permute.xlu0 %3181
      %3183 = vrot.lane.b32.xlu0 %v3106, 24
      %v3184 = vpop.permute.xlu0 %3183
      %3185 = vrot.lane.b32.xlu0 %v3107, 24
      %v3186 = vpop.permute.xlu0 %3185
      %3187 = vrot.lane.b32.xlu0 %v3108, 24
      %v3188 = vpop.permute.xlu0 %3187
      %3189 = vrot.lane.b32.xlu0 %v3109, 24
      %v3190 = vpop.permute.xlu0 %3189
      %3191 = vrot.lane.b32.xlu0 %v3110, 24
      %v3192 = vpop.permute.xlu0 %3191
      %3193 = vrot.lane.b32.xlu0 %v3111, 24
      %v3194 = vpop.permute.xlu0 %3193
      %3195 = vrot.lane.b32.xlu0 %v3112, 24
      %v3196 = vpop.permute.xlu0 %3195
      %3197 = vrot.lane.b32.xlu0 %v3113, 24
      %v3198 = vpop.permute.xlu0 %3197
      %3199 = vrot.lane.b32.xlu0 %v3114, 24
      %v3200 = vpop.permute.xlu0 %3199
      %3201 = vrot.lane.b32.xlu0 %v3115, 24
      %v3202 = vpop.permute.xlu0 %3201
      %3203 = vrot.lane.b32.xlu0 %v3116, 24
      %v3204 = vpop.permute.xlu0 %3203
      %3205 = vrot.lane.b32.xlu0 %v3117, 24
      %v3206 = vpop.permute.xlu0 %3205
      %3207 = vrot.lane.b32.xlu0 %v3118, 24
      %v3208 = vpop.permute.xlu0 %3207
      %3209 = vrot.lane.b32.xlu0 %v3119, 24
      %v3210 = vpop.permute.xlu0 %3209
      %3211 = vrot.lane.b32.xlu0 %v3120, 24
      %v3212 = vpop.permute.xlu0 %3211
      %3213 = vrot.lane.b32.xlu0 %v3121, 24
      %v3214 = vpop.permute.xlu0 %3213
      %3215 = vrot.lane.b32.xlu0 %v3122, 24
      %v3216 = vpop.permute.xlu0 %3215
      %3217 = vrot.lane.b32.xlu0 %v3123, 24
      %v3218 = vpop.permute.xlu0 %3217
      %3219 = vrot.lane.b32.xlu0 %v3124, 24
      %v3220 = vpop.permute.xlu0 %3219
      %vm3253 = vcmask 224448
      %3254 = vst.msk [vmem:[#allocation4] sm:$0xf] %vm3253, %v3158
      %3255 = vst.msk [vmem:[#allocation4 + $0x4] sm:$0xf] %vm3253, %v3160
      %3256 = vst.msk [vmem:[#allocation4 + $0x8] sm:$0xf] %vm3253, %v3162
      %3257 = vst.msk [vmem:[#allocation4 + $0xc] sm:$0xf] %vm3253, %v3164
      %3258 = vst.msk [vmem:[#allocation4 + $0x10] sm:$0xf] %vm3253, %v3166
      %3259 = vst.msk [vmem:[#allocation4 + $0x14] sm:$0xf] %vm3253, %v3168
      %3260 = vst.msk [vmem:[#allocation4 + $0x18] sm:$0xf] %vm3253, %v3170
      %3261 = vst.msk [vmem:[#allocation4 + $0x1c] sm:$0xf] %vm3253, %v3172
      %3262 = vst.msk [vmem:[#allocation4 + $0x20] sm:$0xf] %vm3253, %v3174
      %3263 = vst.msk [vmem:[#allocation4 + $0x24] sm:$0xf] %vm3253, %v3176
      %3264 = vst.msk [vmem:[#allocation4 + $0x28] sm:$0xf] %vm3253, %v3178
      %3265 = vst.msk [vmem:[#allocation4 + $0x2c] sm:$0xf] %vm3253, %v3180
      %3266 = vst.msk [vmem:[#allocation4 + $0x30] sm:$0xf] %vm3253, %v3182
      %3267 = vst.msk [vmem:[#allocation4 + $0x34] sm:$0xf] %vm3253, %v3184
      %3268 = vst.msk [vmem:[#allocation4 + $0x38] sm:$0xf] %vm3253, %v3186
      %3269 = vst.msk [vmem:[#allocation4 + $0x3c] sm:$0xf] %vm3253, %v3188
      %3270 = vst.msk [vmem:[#allocation4 + $0x40] sm:$0xf] %vm3253, %v3190
      %3271 = vst.msk [vmem:[#allocation4 + $0x44] sm:$0xf] %vm3253, %v3192
      %3272 = vst.msk [vmem:[#allocation4 + $0x48] sm:$0xf] %vm3253, %v3194
      %3273 = vst.msk [vmem:[#allocation4 + $0x4c] sm:$0xf] %vm3253, %v3196
      %3274 = vst.msk [vmem:[#allocation4 + $0x50] sm:$0xf] %vm3253, %v3198
      %3275 = vst.msk [vmem:[#allocation4 + $0x54] sm:$0xf] %vm3253, %v3200
      %3276 = vst.msk [vmem:[#allocation4 + $0x58] sm:$0xf] %vm3253, %v3202
      %3277 = vst.msk [vmem:[#allocation4 + $0x5c] sm:$0xf] %vm3253, %v3204
      %3278 = vst.msk [vmem:[#allocation4 + $0x60] sm:$0xf] %vm3253, %v3206
      %3279 = vst.msk [vmem:[#allocation4 + $0x64] sm:$0xf] %vm3253, %v3208
      %3280 = vst.msk [vmem:[#allocation4 + $0x68] sm:$0xf] %vm3253, %v3210
      %3281 = vst.msk [vmem:[#allocation4 + $0x6c] sm:$0xf] %vm3253, %v3212
      %3282 = vst.msk [vmem:[#allocation4 + $0x70] sm:$0xf] %vm3253, %v3214
      %3283 = vst.msk [vmem:[#allocation4 + $0x74] sm:$0xf] %vm3253, %v3216
      %3284 = vst.msk [vmem:[#allocation4 + $0x78] sm:$0xf] %vm3253, %v3218
      %3285 = vst.msk [vmem:[#allocation4 + $0x7c] sm:$0xf] %vm3253, %v3220
      %v3286 = vld [vmem:[%s3092] sm:$0xf]
      %v3287 = vld [vmem:[%s3092 + $0x4] sm:$0xf]
      %v3288 = vld [vmem:[%s3092 + $0x8] sm:$0x1]
      %v3289 = vld [vmem:[%s3092 + $0xc] sm:$0xf]
      %v3290 = vld [vmem:[%s3092 + $0x10] sm:$0xf]
      %v3291 = vld [vmem:[%s3092 + $0x14] sm:$0x1]
      %v3292 = vld [vmem:[%s3092 + $0x18] sm:$0xf]
      %v3293 = vld [vmem:[%s3092 + $0x1c] sm:$0xf]
      %v3294 = vld [vmem:[%s3092 + $0x20] sm:$0x1]
      %v3295 = vld [vmem:[%s3092 + $0x24] sm:$0xf]
      %v3296 = vld [vmem:[%s3092 + $0x28] sm:$0xf]
      %v3297 = vld [vmem:[%s3092 + $0x2c] sm:$0x1]
      %v3298 = vld [vmem:[%s3092 + $0x30] sm:$0xf]
      %v3299 = vld [vmem:[%s3092 + $0x34] sm:$0xf]
      %v3300 = vld [vmem:[%s3092 + $0x38] sm:$0x1]
      %v3301 = vld [vmem:[%s3092 + $0x3c] sm:$0xf]
      %v3302 = vld [vmem:[%s3092 + $0x40] sm:$0xf]
      %v3303 = vld [vmem:[%s3092 + $0x44] sm:$0x1]
      %v3304 = vld [vmem:[%s3092 + $0x48] sm:$0xf]
      %v3305 = vld [vmem:[%s3092 + $0x4c] sm:$0xf]
      %v3306 = vld [vmem:[%s3092 + $0x50] sm:$0x1]
      %v3307 = vld [vmem:[%s3092 + $0x54] sm:$0xf]
      %v3308 = vld [vmem:[%s3092 + $0x58] sm:$0xf]
      %v3309 = vld [vmem:[%s3092 + $0x5c] sm:$0x1]
      %v3310 = vld [vmem:[%s3092 + $0x60] sm:$0xf]
      %v3311 = vld [vmem:[%s3092 + $0x64] sm:$0xf]
      %v3312 = vld [vmem:[%s3092 + $0x68] sm:$0x1]
      %v3313 = vld [vmem:[%s3092 + $0x6c] sm:$0xf]
      %v3314 = vld [vmem:[%s3092 + $0x70] sm:$0xf]
      %v3315 = vld [vmem:[%s3092 + $0x74] sm:$0x1]
      %v3316 = vld [vmem:[%s3092 + $0x78] sm:$0xf]
      %v3317 = vld [vmem:[%s3092 + $0x7c] sm:$0xf]
      %v3318 = vld [vmem:[%s3092 + $0x80] sm:$0x1]
      %v3319 = vld [vmem:[%s3092 + $0x84] sm:$0xf]
      %v3320 = vld [vmem:[%s3092 + $0x88] sm:$0xf]
      %v3321 = vld [vmem:[%s3092 + $0x8c] sm:$0x1]
      %v3322 = vld [vmem:[%s3092 + $0x90] sm:$0xf]
      %v3323 = vld [vmem:[%s3092 + $0x94] sm:$0xf]
      %v3324 = vld [vmem:[%s3092 + $0x98] sm:$0x1]
      %v3325 = vld [vmem:[%s3092 + $0x9c] sm:$0xf]
      %v3326 = vld [vmem:[%s3092 + $0xa0] sm:$0xf]
      %v3327 = vld [vmem:[%s3092 + $0xa4] sm:$0x1]
      %v3328 = vld [vmem:[%s3092 + $0xa8] sm:$0xf]
      %v3329 = vld [vmem:[%s3092 + $0xac] sm:$0xf]
      %v3330 = vld [vmem:[%s3092 + $0xb0] sm:$0x1]
      %v3331 = vld [vmem:[%s3092 + $0xb4] sm:$0xf]
      %v3332 = vld [vmem:[%s3092 + $0xb8] sm:$0xf]
      %v3333 = vld [vmem:[%s3092 + $0xbc] sm:$0x1]
      %v3335 = vshrl.u32 %v3286, 16
      %v3337 = vrot.slane %v3335, 4
      %v3338 = vshll.u32 %v3286, 16
      %v3340 = vrot.slane %v3338, 5
      %v3341 = vor.u32 %v3337, %v3340
      %v3342 = vrot.slane %v3341, 4
      %v3344 = vshll.u32 %v3287, 16
      %v3346 = vrot.slane %v3344, 5
      %v3347 = vsel %vm1147, %v3342, %v3346
      %v3348 = vshrl.u32 %v3287, 16
      %v3350 = vrot.slane %v3348, 4
      %v3351 = vor.u32 %v3350, %v3346
      %v3352 = vrot.slane %v3351, 4
      %v3354 = vshll.u32 %v3288, 16
      %v3356 = vrot.slane %v3354, 5
      %v3357 = vsel %vm1147, %v3352, %v3356
      %v3359 = vshrl.u32 %v3289, 16
      %v3361 = vrot.slane %v3359, 4
      %v3362 = vshll.u32 %v3289, 16
      %v3364 = vrot.slane %v3362, 5
      %v3365 = vor.u32 %v3361, %v3364
      %v3366 = vrot.slane %v3365, 4
      %v3368 = vshll.u32 %v3290, 16
      %v3370 = vrot.slane %v3368, 5
      %v3371 = vsel %vm1147, %v3366, %v3370
      %v3372 = vshrl.u32 %v3290, 16
      %v3374 = vrot.slane %v3372, 4
      %v3375 = vor.u32 %v3374, %v3370
      %v3376 = vrot.slane %v3375, 4
      %v3378 = vshll.u32 %v3291, 16
      %v3380 = vrot.slane %v3378, 5
      %v3381 = vsel %vm1147, %v3376, %v3380
      %v3383 = vshrl.u32 %v3292, 16
      %v3385 = vrot.slane %v3383, 4
      %v3386 = vshll.u32 %v3292, 16
      %v3388 = vrot.slane %v3386, 5
      %v3389 = vor.u32 %v3385, %v3388
      %v3390 = vrot.slane %v3389, 4
      %v3392 = vshll.u32 %v3293, 16
      %v3394 = vrot.slane %v3392, 5
      %v3395 = vsel %vm1147, %v3390, %v3394
      %v3396 = vshrl.u32 %v3293, 16
      %v3398 = vrot.slane %v3396, 4
      %v3399 = vor.u32 %v3398, %v3394
      %v3400 = vrot.slane %v3399, 4
      %v3402 = vshll.u32 %v3294, 16
      %v3404 = vrot.slane %v3402, 5
      %v3405 = vsel %vm1147, %v3400, %v3404
      %v3407 = vshrl.u32 %v3295, 16
      %v3409 = vrot.slane %v3407, 4
      %v3410 = vshll.u32 %v3295, 16
      %v3412 = vrot.slane %v3410, 5
      %v3413 = vor.u32 %v3409, %v3412
      %v3414 = vrot.slane %v3413, 4
      %v3416 = vshll.u32 %v3296, 16
      %v3418 = vrot.slane %v3416, 5
      %v3419 = vsel %vm1147, %v3414, %v3418
      %v3420 = vshrl.u32 %v3296, 16
      %v3422 = vrot.slane %v3420, 4
      %v3423 = vor.u32 %v3422, %v3418
      %v3424 = vrot.slane %v3423, 4
      %v3426 = vshll.u32 %v3297, 16
      %v3428 = vrot.slane %v3426, 5
      %v3429 = vsel %vm1147, %v3424, %v3428
      %v3431 = vshrl.u32 %v3298, 16
      %v3433 = vrot.slane %v3431, 4
      %v3434 = vshll.u32 %v3298, 16
      %v3436 = vrot.slane %v3434, 5
      %v3437 = vor.u32 %v3433, %v3436
      %v3438 = vrot.slane %v3437, 4
      %v3440 = vshll.u32 %v3299, 16
      %v3442 = vrot.slane %v3440, 5
      %v3443 = vsel %vm1147, %v3438, %v3442
      %v3444 = vshrl.u32 %v3299, 16
      %v3446 = vrot.slane %v3444, 4
      %v3447 = vor.u32 %v3446, %v3442
      %v3448 = vrot.slane %v3447, 4
      %v3450 = vshll.u32 %v3300, 16
      %v3452 = vrot.slane %v3450, 5
      %v3453 = vsel %vm1147, %v3448, %v3452
      %v3455 = vshrl.u32 %v3301, 16
      %v3457 = vrot.slane %v3455, 4
      %v3458 = vshll.u32 %v3301, 16
      %v3460 = vrot.slane %v3458, 5
      %v3461 = vor.u32 %v3457, %v3460
      %v3462 = vrot.slane %v3461, 4
      %v3464 = vshll.u32 %v3302, 16
      %v3466 = vrot.slane %v3464, 5
      %v3467 = vsel %vm1147, %v3462, %v3466
      %v3468 = vshrl.u32 %v3302, 16
      %v3470 = vrot.slane %v3468, 4
      %v3471 = vor.u32 %v3470, %v3466
      %v3472 = vrot.slane %v3471, 4
      %v3474 = vshll.u32 %v3303, 16
      %v3476 = vrot.slane %v3474, 5
      %v3477 = vsel %vm1147, %v3472, %v3476
      %v3479 = vshrl.u32 %v3304, 16
      %v3481 = vrot.slane %v3479, 4
      %v3482 = vshll.u32 %v3304, 16
      %v3484 = vrot.slane %v3482, 5
      %v3485 = vor.u32 %v3481, %v3484
      %v3486 = vrot.slane %v3485, 4
      %v3488 = vshll.u32 %v3305, 16
      %v3490 = vrot.slane %v3488, 5
      %v3491 = vsel %vm1147, %v3486, %v3490
      %v3492 = vshrl.u32 %v3305, 16
      %v3494 = vrot.slane %v3492, 4
      %v3495 = vor.u32 %v3494, %v3490
      %v3496 = vrot.slane %v3495, 4
      %v3498 = vshll.u32 %v3306, 16
      %v3500 = vrot.slane %v3498, 5
      %v3501 = vsel %vm1147, %v3496, %v3500
      %v3503 = vshrl.u32 %v3307, 16
      %v3505 = vrot.slane %v3503, 4
      %v3506 = vshll.u32 %v3307, 16
      %v3508 = vrot.slane %v3506, 5
      %v3509 = vor.u32 %v3505, %v3508
      %v3510 = vrot.slane %v3509, 4
      %v3512 = vshll.u32 %v3308, 16
      %v3514 = vrot.slane %v3512, 5
      %v3515 = vsel %vm1147, %v3510, %v3514
      %v3516 = vshrl.u32 %v3308, 16
      %v3518 = vrot.slane %v3516, 4
      %v3519 = vor.u32 %v3518, %v3514
      %v3520 = vrot.slane %v3519, 4
      %v3522 = vshll.u32 %v3309, 16
      %v3524 = vrot.slane %v3522, 5
      %v3525 = vsel %vm1147, %v3520, %v3524
      %v3527 = vshrl.u32 %v3310, 16
      %v3529 = vrot.slane %v3527, 4
      %v3530 = vshll.u32 %v3310, 16
      %v3532 = vrot.slane %v3530, 5
      %v3533 = vor.u32 %v3529, %v3532
      %v3534 = vrot.slane %v3533, 4
      %v3536 = vshll.u32 %v3311, 16
      %v3538 = vrot.slane %v3536, 5
      %v3539 = vsel %vm1147, %v3534, %v3538
      %v3540 = vshrl.u32 %v3311, 16
      %v3542 = vrot.slane %v3540, 4
      %v3543 = vor.u32 %v3542, %v3538
      %v3544 = vrot.slane %v3543, 4
      %v3546 = vshll.u32 %v3312, 16
      %v3548 = vrot.slane %v3546, 5
      %v3549 = vsel %vm1147, %v3544, %v3548
      %v3551 = vshrl.u32 %v3313, 16
      %v3553 = vrot.slane %v3551, 4
      %v3554 = vshll.u32 %v3313, 16
      %v3556 = vrot.slane %v3554, 5
      %v3557 = vor.u32 %v3553, %v3556
      %v3558 = vrot.slane %v3557, 4
      %v3560 = vshll.u32 %v3314, 16
      %v3562 = vrot.slane %v3560, 5
      %v3563 = vsel %vm1147, %v3558, %v3562
      %v3564 = vshrl.u32 %v3314, 16
      %v3566 = vrot.slane %v3564, 4
      %v3567 = vor.u32 %v3566, %v3562
      %v3568 = vrot.slane %v3567, 4
      %v3570 = vshll.u32 %v3315, 16
      %v3572 = vrot.slane %v3570, 5
      %v3573 = vsel %vm1147, %v3568, %v3572
      %v3575 = vshrl.u32 %v3316, 16
      %v3577 = vrot.slane %v3575, 4
      %v3578 = vshll.u32 %v3316, 16
      %v3580 = vrot.slane %v3578, 5
      %v3581 = vor.u32 %v3577, %v3580
      %v3582 = vrot.slane %v3581, 4
      %v3584 = vshll.u32 %v3317, 16
      %v3586 = vrot.slane %v3584, 5
      %v3587 = vsel %vm1147, %v3582, %v3586
      %v3588 = vshrl.u32 %v3317, 16
      %v3590 = vrot.slane %v3588, 4
      %v3591 = vor.u32 %v3590, %v3586
      %v3592 = vrot.slane %v3591, 4
      %v3594 = vshll.u32 %v3318, 16
      %v3596 = vrot.slane %v3594, 5
      %v3597 = vsel %vm1147, %v3592, %v3596
      %v3599 = vshrl.u32 %v3319, 16
      %v3601 = vrot.slane %v3599, 4
      %v3602 = vshll.u32 %v3319, 16
      %v3604 = vrot.slane %v3602, 5
      %v3605 = vor.u32 %v3601, %v3604
      %v3606 = vrot.slane %v3605, 4
      %v3608 = vshll.u32 %v3320, 16
      %v3610 = vrot.slane %v3608, 5
      %v3611 = vsel %vm1147, %v3606, %v3610
      %v3612 = vshrl.u32 %v3320, 16
      %v3614 = vrot.slane %v3612, 4
      %v3615 = vor.u32 %v3614, %v3610
      %v3616 = vrot.slane %v3615, 4
      %v3618 = vshll.u32 %v3321, 16
      %v3620 = vrot.slane %v3618, 5
      %v3621 = vsel %vm1147, %v3616, %v3620
      %v3623 = vshrl.u32 %v3322, 16
      %v3625 = vrot.slane %v3623, 4
      %v3626 = vshll.u32 %v3322, 16
      %v3628 = vrot.slane %v3626, 5
      %v3629 = vor.u32 %v3625, %v3628
      %v3630 = vrot.slane %v3629, 4
      %v3632 = vshll.u32 %v3323, 16
      %v3634 = vrot.slane %v3632, 5
      %v3635 = vsel %vm1147, %v3630, %v3634
      %v3636 = vshrl.u32 %v3323, 16
      %v3638 = vrot.slane %v3636, 4
      %v3639 = vor.u32 %v3638, %v3634
      %v3640 = vrot.slane %v3639, 4
      %v3642 = vshll.u32 %v3324, 16
      %v3644 = vrot.slane %v3642, 5
      %v3645 = vsel %vm1147, %v3640, %v3644
      %v3647 = vshrl.u32 %v3325, 16
      %v3649 = vrot.slane %v3647, 4
      %v3650 = vshll.u32 %v3325, 16
      %v3652 = vrot.slane %v3650, 5
      %v3653 = vor.u32 %v3649, %v3652
      %v3654 = vrot.slane %v3653, 4
      %v3656 = vshll.u32 %v3326, 16
      %v3658 = vrot.slane %v3656, 5
      %v3659 = vsel %vm1147, %v3654, %v3658
      %v3660 = vshrl.u32 %v3326, 16
      %v3662 = vrot.slane %v3660, 4
      %v3663 = vor.u32 %v3662, %v3658
      %v3664 = vrot.slane %v3663, 4
      %v3666 = vshll.u32 %v3327, 16
      %v3668 = vrot.slane %v3666, 5
      %v3669 = vsel %vm1147, %v3664, %v3668
      %v3671 = vshrl.u32 %v3328, 16
      %v3673 = vrot.slane %v3671, 4
      %v3674 = vshll.u32 %v3328, 16
      %v3676 = vrot.slane %v3674, 5
      %v3677 = vor.u32 %v3673, %v3676
      %v3678 = vrot.slane %v3677, 4
      %v3680 = vshll.u32 %v3329, 16
      %v3682 = vrot.slane %v3680, 5
      %v3683 = vsel %vm1147, %v3678, %v3682
      %v3684 = vshrl.u32 %v3329, 16
      %v3686 = vrot.slane %v3684, 4
      %v3687 = vor.u32 %v3686, %v3682
      %v3688 = vrot.slane %v3687, 4
      %v3690 = vshll.u32 %v3330, 16
      %v3692 = vrot.slane %v3690, 5
      %v3693 = vsel %vm1147, %v3688, %v3692
      %v3695 = vshrl.u32 %v3331, 16
      %v3697 = vrot.slane %v3695, 4
      %v3698 = vshll.u32 %v3331, 16
      %v3700 = vrot.slane %v3698, 5
      %v3701 = vor.u32 %v3697, %v3700
      %v3702 = vrot.slane %v3701, 4
      %v3704 = vshll.u32 %v3332, 16
      %v3706 = vrot.slane %v3704, 5
      %v3707 = vsel %vm1147, %v3702, %v3706
      %v3708 = vshrl.u32 %v3332, 16
      %v3710 = vrot.slane %v3708, 4
      %v3711 = vor.u32 %v3710, %v3706
      %v3712 = vrot.slane %v3711, 4
      %v3714 = vshll.u32 %v3333, 16
      %v3716 = vrot.slane %v3714, 5
      %v3717 = vsel %vm1147, %v3712, %v3716
      %3718 = vrot.lane.b32.xlu0 %v3347, 28
      %v3719 = vpop.permute.xlu0 %3718
      %3720 = vrot.lane.b32.xlu0 %v3357, 28
      %v3721 = vpop.permute.xlu0 %3720
      %3722 = vrot.lane.b32.xlu0 %v3371, 28
      %v3723 = vpop.permute.xlu0 %3722
      %3724 = vrot.lane.b32.xlu0 %v3381, 28
      %v3725 = vpop.permute.xlu0 %3724
      %3726 = vrot.lane.b32.xlu0 %v3395, 28
      %v3727 = vpop.permute.xlu0 %3726
      %3728 = vrot.lane.b32.xlu0 %v3405, 28
      %v3729 = vpop.permute.xlu0 %3728
      %3730 = vrot.lane.b32.xlu0 %v3419, 28
      %v3731 = vpop.permute.xlu0 %3730
      %3732 = vrot.lane.b32.xlu0 %v3429, 28
      %v3733 = vpop.permute.xlu0 %3732
      %3734 = vrot.lane.b32.xlu0 %v3443, 28
      %v3735 = vpop.permute.xlu0 %3734
      %3736 = vrot.lane.b32.xlu0 %v3453, 28
      %v3737 = vpop.permute.xlu0 %3736
      %3738 = vrot.lane.b32.xlu0 %v3467, 28
      %v3739 = vpop.permute.xlu0 %3738
      %3740 = vrot.lane.b32.xlu0 %v3477, 28
      %v3741 = vpop.permute.xlu0 %3740
      %3742 = vrot.lane.b32.xlu0 %v3491, 28
      %v3743 = vpop.permute.xlu0 %3742
      %3744 = vrot.lane.b32.xlu0 %v3501, 28
      %v3745 = vpop.permute.xlu0 %3744
      %3746 = vrot.lane.b32.xlu0 %v3515, 28
      %v3747 = vpop.permute.xlu0 %3746
      %3748 = vrot.lane.b32.xlu0 %v3525, 28
      %v3749 = vpop.permute.xlu0 %3748
      %3750 = vrot.lane.b32.xlu0 %v3539, 28
      %v3751 = vpop.permute.xlu0 %3750
      %3752 = vrot.lane.b32.xlu0 %v3549, 28
      %v3753 = vpop.permute.xlu0 %3752
      %3754 = vrot.lane.b32.xlu0 %v3563, 28
      %v3755 = vpop.permute.xlu0 %3754
      %3756 = vrot.lane.b32.xlu0 %v3573, 28
      %v3757 = vpop.permute.xlu0 %3756
      %3758 = vrot.lane.b32.xlu0 %v3587, 28
      %v3759 = vpop.permute.xlu0 %3758
      %3760 = vrot.lane.b32.xlu0 %v3597, 28
      %v3761 = vpop.permute.xlu0 %3760
      %3762 = vrot.lane.b32.xlu0 %v3611, 28
      %v3763 = vpop.permute.xlu0 %3762
      %3764 = vrot.lane.b32.xlu0 %v3621, 28
      %v3765 = vpop.permute.xlu0 %3764
      %3766 = vrot.lane.b32.xlu0 %v3635, 28
      %v3767 = vpop.permute.xlu0 %3766
      %3768 = vrot.lane.b32.xlu0 %v3645, 28
      %v3769 = vpop.permute.xlu0 %3768
      %3770 = vrot.lane.b32.xlu0 %v3659, 28
      %v3771 = vpop.permute.xlu0 %3770
      %3772 = vrot.lane.b32.xlu0 %v3669, 28
      %v3773 = vpop.permute.xlu0 %3772
      %3774 = vrot.lane.b32.xlu0 %v3683, 28
      %v3775 = vpop.permute.xlu0 %3774
      %3776 = vrot.lane.b32.xlu0 %v3693, 28
      %v3777 = vpop.permute.xlu0 %3776
      %3778 = vrot.lane.b32.xlu0 %v3707, 28
      %v3779 = vpop.permute.xlu0 %3778
      %3780 = vrot.lane.b32.xlu0 %v3717, 28
      %v3781 = vpop.permute.xlu0 %3780
      %vm3814 = vcmask 257248
      %3815 = vst.msk [vmem:[#allocation4] sm:$0xf] %vm3814, %v3719
      %3816 = vst.msk [vmem:[#allocation4 + $0x4] sm:$0xf] %vm3814, %v3721
      %3817 = vst.msk [vmem:[#allocation4 + $0x8] sm:$0xf] %vm3814, %v3723
      %3818 = vst.msk [vmem:[#allocation4 + $0xc] sm:$0xf] %vm3814, %v3725
      %3819 = vst.msk [vmem:[#allocation4 + $0x10] sm:$0xf] %vm3814, %v3727
      %3820 = vst.msk [vmem:[#allocation4 + $0x14] sm:$0xf] %vm3814, %v3729
      %3821 = vst.msk [vmem:[#allocation4 + $0x18] sm:$0xf] %vm3814, %v3731
      %3822 = vst.msk [vmem:[#allocation4 + $0x1c] sm:$0xf] %vm3814, %v3733
      %3823 = vst.msk [vmem:[#allocation4 + $0x20] sm:$0xf] %vm3814, %v3735
      %3824 = vst.msk [vmem:[#allocation4 + $0x24] sm:$0xf] %vm3814, %v3737
      %3825 = vst.msk [vmem:[#allocation4 + $0x28] sm:$0xf] %vm3814, %v3739
      %3826 = vst.msk [vmem:[#allocation4 + $0x2c] sm:$0xf] %vm3814, %v3741
      %3827 = vst.msk [vmem:[#allocation4 + $0x30] sm:$0xf] %vm3814, %v3743
      %3828 = vst.msk [vmem:[#allocation4 + $0x34] sm:$0xf] %vm3814, %v3745
      %3829 = vst.msk [vmem:[#allocation4 + $0x38] sm:$0xf] %vm3814, %v3747
      %3830 = vst.msk [vmem:[#allocation4 + $0x3c] sm:$0xf] %vm3814, %v3749
      %3831 = vst.msk [vmem:[#allocation4 + $0x40] sm:$0xf] %vm3814, %v3751
      %3832 = vst.msk [vmem:[#allocation4 + $0x44] sm:$0xf] %vm3814, %v3753
      %3833 = vst.msk [vmem:[#allocation4 + $0x48] sm:$0xf] %vm3814, %v3755
      %3834 = vst.msk [vmem:[#allocation4 + $0x4c] sm:$0xf] %vm3814, %v3757
      %3835 = vst.msk [vmem:[#allocation4 + $0x50] sm:$0xf] %vm3814, %v3759
      %3836 = vst.msk [vmem:[#allocation4 + $0x54] sm:$0xf] %vm3814, %v3761
      %3837 = vst.msk [vmem:[#allocation4 + $0x58] sm:$0xf] %vm3814, %v3763
      %3838 = vst.msk [vmem:[#allocation4 + $0x5c] sm:$0xf] %vm3814, %v3765
      %3839 = vst.msk [vmem:[#allocation4 + $0x60] sm:$0xf] %vm3814, %v3767
      %3840 = vst.msk [vmem:[#allocation4 + $0x64] sm:$0xf] %vm3814, %v3769
      %3841 = vst.msk [vmem:[#allocation4 + $0x68] sm:$0xf] %vm3814, %v3771
      %3842 = vst.msk [vmem:[#allocation4 + $0x6c] sm:$0xf] %vm3814, %v3773
      %3843 = vst.msk [vmem:[#allocation4 + $0x70] sm:$0xf] %vm3814, %v3775
      %3844 = vst.msk [vmem:[#allocation4 + $0x74] sm:$0xf] %vm3814, %v3777
      %3845 = vst.msk [vmem:[#allocation4 + $0x78] sm:$0xf] %vm3814, %v3779
      %3846 = vst.msk [vmem:[#allocation4 + $0x7c] sm:$0xf] %vm3814, %v3781
      %v3847 = vld [vmem:[%s3092] sm:$0xe]
      %v3848 = vld [vmem:[%s3092 + $0x4] sm:$0xf]
      %v3849 = vld [vmem:[%s3092 + $0x8] sm:$0x1]
      %v3850 = vld [vmem:[%s3092 + $0xc] sm:$0xe]
      %v3851 = vld [vmem:[%s3092 + $0x10] sm:$0xf]
      %v3852 = vld [vmem:[%s3092 + $0x14] sm:$0x1]
      %v3853 = vld [vmem:[%s3092 + $0x18] sm:$0xe]
      %v3854 = vld [vmem:[%s3092 + $0x1c] sm:$0xf]
      %v3855 = vld [vmem:[%s3092 + $0x20] sm:$0x1]
      %v3856 = vld [vmem:[%s3092 + $0x24] sm:$0xe]
      %v3857 = vld [vmem:[%s3092 + $0x28] sm:$0xf]
      %v3858 = vld [vmem:[%s3092 + $0x2c] sm:$0x1]
      %v3859 = vld [vmem:[%s3092 + $0x30] sm:$0xe]
      %v3860 = vld [vmem:[%s3092 + $0x34] sm:$0xf]
      %v3861 = vld [vmem:[%s3092 + $0x38] sm:$0x1]
      %v3862 = vld [vmem:[%s3092 + $0x3c] sm:$0xe]
      %v3863 = vld [vmem:[%s3092 + $0x40] sm:$0xf]
      %v3864 = vld [vmem:[%s3092 + $0x44] sm:$0x1]
      %v3865 = vld [vmem:[%s3092 + $0x48] sm:$0xe]
      %v3866 = vld [vmem:[%s3092 + $0x4c] sm:$0xf]
      %v3867 = vld [vmem:[%s3092 + $0x50] sm:$0x1]
      %v3868 = vld [vmem:[%s3092 + $0x54] sm:$0xe]
      %v3869 = vld [vmem:[%s3092 + $0x58] sm:$0xf]
      %v3870 = vld [vmem:[%s3092 + $0x5c] sm:$0x1]
      %v3871 = vld [vmem:[%s3092 + $0x60] sm:$0xe]
      %v3872 = vld [vmem:[%s3092 + $0x64] sm:$0xf]
      %v3873 = vld [vmem:[%s3092 + $0x68] sm:$0x1]
      %v3874 = vld [vmem:[%s3092 + $0x6c] sm:$0xe]
      %v3875 = vld [vmem:[%s3092 + $0x70] sm:$0xf]
      %v3876 = vld [vmem:[%s3092 + $0x74] sm:$0x1]
      %v3877 = vld [vmem:[%s3092 + $0x78] sm:$0xe]
      %v3878 = vld [vmem:[%s3092 + $0x7c] sm:$0xf]
      %v3879 = vld [vmem:[%s3092 + $0x80] sm:$0x1]
      %v3880 = vld [vmem:[%s3092 + $0x84] sm:$0xe]
      %v3881 = vld [vmem:[%s3092 + $0x88] sm:$0xf]
      %v3882 = vld [vmem:[%s3092 + $0x8c] sm:$0x1]
      %v3883 = vld [vmem:[%s3092 + $0x90] sm:$0xe]
      %v3884 = vld [vmem:[%s3092 + $0x94] sm:$0xf]
      %v3885 = vld [vmem:[%s3092 + $0x98] sm:$0x1]
      %v3886 = vld [vmem:[%s3092 + $0x9c] sm:$0xe]
      %v3887 = vld [vmem:[%s3092 + $0xa0] sm:$0xf]
      %v3888 = vld [vmem:[%s3092 + $0xa4] sm:$0x1]
      %v3889 = vld [vmem:[%s3092 + $0xa8] sm:$0xe]
      %v3890 = vld [vmem:[%s3092 + $0xac] sm:$0xf]
      %v3891 = vld [vmem:[%s3092 + $0xb0] sm:$0x1]
      %v3892 = vld [vmem:[%s3092 + $0xb4] sm:$0xe]
      %v3893 = vld [vmem:[%s3092 + $0xb8] sm:$0xf]
      %v3894 = vld [vmem:[%s3092 + $0xbc] sm:$0x1]
      %v3943 = vrot.slane %v3847, 5
      %v3944 = vrot.slane %v3943, 4
      %v3945 = vrot.slane %v3848, 5
      %v3946 = vsel %vm1759, %v3944, %v3945
      %v3947 = vrot.slane %v3945, 4
      %v3948 = vrot.slane %v3849, 5
      %v3949 = vsel %vm1759, %v3947, %v3948
      %v3950 = vrot.slane %v3850, 5
      %v3951 = vrot.slane %v3950, 4
      %v3952 = vrot.slane %v3851, 5
      %v3953 = vsel %vm1759, %v3951, %v3952
      %v3954 = vrot.slane %v3952, 4
      %v3955 = vrot.slane %v3852, 5
      %v3956 = vsel %vm1759, %v3954, %v3955
      %v3957 = vrot.slane %v3853, 5
      %v3958 = vrot.slane %v3957, 4
      %v3959 = vrot.slane %v3854, 5
      %v3960 = vsel %vm1759, %v3958, %v3959
      %v3961 = vrot.slane %v3959, 4
      %v3962 = vrot.slane %v3855, 5
      %v3963 = vsel %vm1759, %v3961, %v3962
      %v3964 = vrot.slane %v3856, 5
      %v3965 = vrot.slane %v3964, 4
      %v3966 = vrot.slane %v3857, 5
      %v3967 = vsel %vm1759, %v3965, %v3966
      %v3968 = vrot.slane %v3966, 4
      %v3969 = vrot.slane %v3858, 5
      %v3970 = vsel %vm1759, %v3968, %v3969
      %v3971 = vrot.slane %v3859, 5
      %v3972 = vrot.slane %v3971, 4
      %v3973 = vrot.slane %v3860, 5
      %v3974 = vsel %vm1759, %v3972, %v3973
      %v3975 = vrot.slane %v3973, 4
      %v3976 = vrot.slane %v3861, 5
      %v3977 = vsel %vm1759, %v3975, %v3976
      %v3978 = vrot.slane %v3862, 5
      %v3979 = vrot.slane %v3978, 4
      %v3980 = vrot.slane %v3863, 5
      %v3981 = vsel %vm1759, %v3979, %v3980
      %v3982 = vrot.slane %v3980, 4
      %v3983 = vrot.slane %v3864, 5
      %v3984 = vsel %vm1759, %v3982, %v3983
      %v3985 = vrot.slane %v3865, 5
      %v3986 = vrot.slane %v3985, 4
      %v3987 = vrot.slane %v3866, 5
      %v3988 = vsel %vm1759, %v3986, %v3987
      %v3989 = vrot.slane %v3987, 4
      %v3990 = vrot.slane %v3867, 5
      %v3991 = vsel %vm1759, %v3989, %v3990
      %v3992 = vrot.slane %v3868, 5
      %v3993 = vrot.slane %v3992, 4
      %v3994 = vrot.slane %v3869, 5
      %v3995 = vsel %vm1759, %v3993, %v3994
      %v3996 = vrot.slane %v3994, 4
      %v3997 = vrot.slane %v3870, 5
      %v3998 = vsel %vm1759, %v3996, %v3997
      %v3999 = vrot.slane %v3871, 5
      %v4000 = vrot.slane %v3999, 4
      %v4001 = vrot.slane %v3872, 5
      %v4002 = vsel %vm1759, %v4000, %v4001
      %v4003 = vrot.slane %v4001, 4
      %v4004 = vrot.slane %v3873, 5
      %v4005 = vsel %vm1759, %v4003, %v4004
      %v4006 = vrot.slane %v3874, 5
      %v4007 = vrot.slane %v4006, 4
      %v4008 = vrot.slane %v3875, 5
      %v4009 = vsel %vm1759, %v4007, %v4008
      %v4010 = vrot.slane %v4008, 4
      %v4011 = vrot.slane %v3876, 5
      %v4012 = vsel %vm1759, %v4010, %v4011
      %v4013 = vrot.slane %v3877, 5
      %v4014 = vrot.slane %v4013, 4
      %v4015 = vrot.slane %v3878, 5
      %v4016 = vsel %vm1759, %v4014, %v4015
      %v4017 = vrot.slane %v4015, 4
      %v4018 = vrot.slane %v3879, 5
      %v4019 = vsel %vm1759, %v4017, %v4018
      %v4020 = vrot.slane %v3880, 5
      %v4021 = vrot.slane %v4020, 4
      %v4022 = vrot.slane %v3881, 5
      %v4023 = vsel %vm1759, %v4021, %v4022
      %v4024 = vrot.slane %v4022, 4
      %v4025 = vrot.slane %v3882, 5
      %v4026 = vsel %vm1759, %v4024, %v4025
      %v4027 = vrot.slane %v3883, 5
      %v4028 = vrot.slane %v4027, 4
      %v4029 = vrot.slane %v3884, 5
      %v4030 = vsel %vm1759, %v4028, %v4029
      %v4031 = vrot.slane %v4029, 4
      %v4032 = vrot.slane %v3885, 5
      %v4033 = vsel %vm1759, %v4031, %v4032
      %v4034 = vrot.slane %v3886, 5
      %v4035 = vrot.slane %v4034, 4
      %v4036 = vrot.slane %v3887, 5
      %v4037 = vsel %vm1759, %v4035, %v4036
      %v4038 = vrot.slane %v4036, 4
      %v4039 = vrot.slane %v3888, 5
      %v4040 = vsel %vm1759, %v4038, %v4039
      %v4041 = vrot.slane %v3889, 5
      %v4042 = vrot.slane %v4041, 4
      %v4043 = vrot.slane %v3890, 5
      %v4044 = vsel %vm1759, %v4042, %v4043
      %v4045 = vrot.slane %v4043, 4
      %v4046 = vrot.slane %v3891, 5
      %v4047 = vsel %vm1759, %v4045, %v4046
      %v4048 = vrot.slane %v3892, 5
      %v4049 = vrot.slane %v4048, 4
      %v4050 = vrot.slane %v3893, 5
      %v4051 = vsel %vm1759, %v4049, %v4050
      %v4052 = vrot.slane %v4050, 4
      %v4053 = vrot.slane %v3894, 5
      %v4054 = vsel %vm1759, %v4052, %v4053
      %4055 = vrot.lane.b32.xlu0 %v3946, 32
      %v4056 = vpop.permute.xlu0 %4055
      %4057 = vrot.lane.b32.xlu0 %v3949, 32
      %v4058 = vpop.permute.xlu0 %4057
      %4059 = vrot.lane.b32.xlu0 %v3953, 32
      %v4060 = vpop.permute.xlu0 %4059
      %4061 = vrot.lane.b32.xlu0 %v3956, 32
      %v4062 = vpop.permute.xlu0 %4061
      %4063 = vrot.lane.b32.xlu0 %v3960, 32
      %v4064 = vpop.permute.xlu0 %4063
      %4065 = vrot.lane.b32.xlu0 %v3963, 32
      %v4066 = vpop.permute.xlu0 %4065
      %4067 = vrot.lane.b32.xlu0 %v3967, 32
      %v4068 = vpop.permute.xlu0 %4067
      %4069 = vrot.lane.b32.xlu0 %v3970, 32
      %v4070 = vpop.permute.xlu0 %4069
      %4071 = vrot.lane.b32.xlu0 %v3974, 32
      %v4072 = vpop.permute.xlu0 %4071
      %4073 = vrot.lane.b32.xlu0 %v3977, 32
      %v4074 = vpop.permute.xlu0 %4073
      %4075 = vrot.lane.b32.xlu0 %v3981, 32
      %v4076 = vpop.permute.xlu0 %4075
      %4077 = vrot.lane.b32.xlu0 %v3984, 32
      %v4078 = vpop.permute.xlu0 %4077
      %4079 = vrot.lane.b32.xlu0 %v3988, 32
      %v4080 = vpop.permute.xlu0 %4079
      %4081 = vrot.lane.b32.xlu0 %v3991, 32
      %v4082 = vpop.permute.xlu0 %4081
      %4083 = vrot.lane.b32.xlu0 %v3995, 32
      %v4084 = vpop.permute.xlu0 %4083
      %4085 = vrot.lane.b32.xlu0 %v3998, 32
      %v4086 = vpop.permute.xlu0 %4085
      %4087 = vrot.lane.b32.xlu0 %v4002, 32
      %v4088 = vpop.permute.xlu0 %4087
      %4089 = vrot.lane.b32.xlu0 %v4005, 32
      %v4090 = vpop.permute.xlu0 %4089
      %4091 = vrot.lane.b32.xlu0 %v4009, 32
      %v4092 = vpop.permute.xlu0 %4091
      %4093 = vrot.lane.b32.xlu0 %v4012, 32
      %v4094 = vpop.permute.xlu0 %4093
      %4095 = vrot.lane.b32.xlu0 %v4016, 32
      %v4096 = vpop.permute.xlu0 %4095
      %4097 = vrot.lane.b32.xlu0 %v4019, 32
      %v4098 = vpop.permute.xlu0 %4097
      %4099 = vrot.lane.b32.xlu0 %v4023, 32
      %v4100 = vpop.permute.xlu0 %4099
      %4101 = vrot.lane.b32.xlu0 %v4026, 32
      %v4102 = vpop.permute.xlu0 %4101
      %4103 = vrot.lane.b32.xlu0 %v4030, 32
      %v4104 = vpop.permute.xlu0 %4103
      %4105 = vrot.lane.b32.xlu0 %v4033, 32
      %v4106 = vpop.permute.xlu0 %4105
      %4107 = vrot.lane.b32.xlu0 %v4037, 32
      %v4108 = vpop.permute.xlu0 %4107
      %4109 = vrot.lane.b32.xlu0 %v4040, 32
      %v4110 = vpop.permute.xlu0 %4109
      %4111 = vrot.lane.b32.xlu0 %v4044, 32
      %v4112 = vpop.permute.xlu0 %4111
      %4113 = vrot.lane.b32.xlu0 %v4047, 32
      %v4114 = vpop.permute.xlu0 %4113
      %4115 = vrot.lane.b32.xlu0 %v4051, 32
      %v4116 = vpop.permute.xlu0 %4115
      %4117 = vrot.lane.b32.xlu0 %v4054, 32
      %v4118 = vpop.permute.xlu0 %4117
      %vm4151 = vcmask 290048
      %4152 = vst.msk [vmem:[#allocation4] sm:$0xf] %vm4151, %v4056
      %4153 = vst.msk [vmem:[#allocation4 + $0x4] sm:$0xf] %vm4151, %v4058
      %4154 = vst.msk [vmem:[#allocation4 + $0x8] sm:$0xf] %vm4151, %v4060
      %4155 = vst.msk [vmem:[#allocation4 + $0xc] sm:$0xf] %vm4151, %v4062
      %4156 = vst.msk [vmem:[#allocation4 + $0x10] sm:$0xf] %vm4151, %v4064
      %4157 = vst.msk [vmem:[#allocation4 + $0x14] sm:$0xf] %vm4151, %v4066
      %4158 = vst.msk [vmem:[#allocation4 + $0x18] sm:$0xf] %vm4151, %v4068
      %4159 = vst.msk [vmem:[#allocation4 + $0x1c] sm:$0xf] %vm4151, %v4070
      %4160 = vst.msk [vmem:[#allocation4 + $0x20] sm:$0xf] %vm4151, %v4072
      %4161 = vst.msk [vmem:[#allocation4 + $0x24] sm:$0xf] %vm4151, %v4074
      %4162 = vst.msk [vmem:[#allocation4 + $0x28] sm:$0xf] %vm4151, %v4076
      %4163 = vst.msk [vmem:[#allocation4 + $0x2c] sm:$0xf] %vm4151, %v4078
      %4164 = vst.msk [vmem:[#allocation4 + $0x30] sm:$0xf] %vm4151, %v4080
      %4165 = vst.msk [vmem:[#allocation4 + $0x34] sm:$0xf] %vm4151, %v4082
      %4166 = vst.msk [vmem:[#allocation4 + $0x38] sm:$0xf] %vm4151, %v4084
      %4167 = vst.msk [vmem:[#allocation4 + $0x3c] sm:$0xf] %vm4151, %v4086
      %4168 = vst.msk [vmem:[#allocation4 + $0x40] sm:$0xf] %vm4151, %v4088
      %4169 = vst.msk [vmem:[#allocation4 + $0x44] sm:$0xf] %vm4151, %v4090
      %4170 = vst.msk [vmem:[#allocation4 + $0x48] sm:$0xf] %vm4151, %v4092
      %4171 = vst.msk [vmem:[#allocation4 + $0x4c] sm:$0xf] %vm4151, %v4094
      %4172 = vst.msk [vmem:[#allocation4 + $0x50] sm:$0xf] %vm4151, %v4096
      %4173 = vst.msk [vmem:[#allocation4 + $0x54] sm:$0xf] %vm4151, %v4098
      %4174 = vst.msk [vmem:[#allocation4 + $0x58] sm:$0xf] %vm4151, %v4100
      %4175 = vst.msk [vmem:[#allocation4 + $0x5c] sm:$0xf] %vm4151, %v4102
      %4176 = vst.msk [vmem:[#allocation4 + $0x60] sm:$0xf] %vm4151, %v4104
      %4177 = vst.msk [vmem:[#allocation4 + $0x64] sm:$0xf] %vm4151, %v4106
      %4178 = vst.msk [vmem:[#allocation4 + $0x68] sm:$0xf] %vm4151, %v4108
      %4179 = vst.msk [vmem:[#allocation4 + $0x6c] sm:$0xf] %vm4151, %v4110
      %4180 = vst.msk [vmem:[#allocation4 + $0x70] sm:$0xf] %vm4151, %v4112
      %4181 = vst.msk [vmem:[#allocation4 + $0x74] sm:$0xf] %vm4151, %v4114
      %4182 = vst.msk [vmem:[#allocation4 + $0x78] sm:$0xf] %vm4151, %v4116
      %4183 = vst.msk [vmem:[#allocation4 + $0x7c] sm:$0xf] %vm4151, %v4118
      %v4184 = vld [vmem:[#allocation4] sm:$0xf]
      %v4185 = vld [vmem:[#allocation4 + $0x4] sm:$0xf]
      %v4186 = vld [vmem:[#allocation4 + $0x8] sm:$0xf]
      %v4187 = vld [vmem:[#allocation4 + $0xc] sm:$0xf]
      %v4188 = vld [vmem:[#allocation4 + $0x10] sm:$0xf]
      %v4189 = vld [vmem:[#allocation4 + $0x14] sm:$0xf]
      %v4190 = vld [vmem:[#allocation4 + $0x18] sm:$0xf]
      %v4191 = vld [vmem:[#allocation4 + $0x1c] sm:$0xf]
      %v4192 = vld [vmem:[#allocation4 + $0x20] sm:$0xf]
      %v4193 = vld [vmem:[#allocation4 + $0x24] sm:$0xf]
      %v4194 = vld [vmem:[#allocation4 + $0x28] sm:$0xf]
      %v4195 = vld [vmem:[#allocation4 + $0x2c] sm:$0xf]
      %v4196 = vld [vmem:[#allocation4 + $0x30] sm:$0xf]
      %v4197 = vld [vmem:[#allocation4 + $0x34] sm:$0xf]
      %v4198 = vld [vmem:[#allocation4 + $0x38] sm:$0xf]
      %v4199 = vld [vmem:[#allocation4 + $0x3c] sm:$0xf]
      %v4200 = vld [vmem:[#allocation4 + $0x40] sm:$0xf]
      %v4201 = vld [vmem:[#allocation4 + $0x44] sm:$0xf]
      %v4202 = vld [vmem:[#allocation4 + $0x48] sm:$0xf]
      %v4203 = vld [vmem:[#allocation4 + $0x4c] sm:$0xf]
      %v4204 = vld [vmem:[#allocation4 + $0x50] sm:$0xf]
      %v4205 = vld [vmem:[#allocation4 + $0x54] sm:$0xf]
      %v4206 = vld [vmem:[#allocation4 + $0x58] sm:$0xf]
      %v4207 = vld [vmem:[#allocation4 + $0x5c] sm:$0xf]
      %v4208 = vld [vmem:[#allocation4 + $0x60] sm:$0xf]
      %v4209 = vld [vmem:[#allocation4 + $0x64] sm:$0xf]
      %v4210 = vld [vmem:[#allocation4 + $0x68] sm:$0xf]
      %v4211 = vld [vmem:[#allocation4 + $0x6c] sm:$0xf]
      %v4212 = vld [vmem:[#allocation4 + $0x70] sm:$0xf]
      %v4213 = vld [vmem:[#allocation4 + $0x74] sm:$0xf]
      %v4214 = vld [vmem:[#allocation4 + $0x78] sm:$0xf]
      %v4215 = vld [vmem:[#allocation4 + $0x7c] sm:$0xf]
      %v4216 = vld [vmem:[%s1] sm:$0xf]
      %v4217 = vld [vmem:[%s1 + $0x4] sm:$0xf]
      %v4218 = vld [vmem:[%s1 + $0x8] sm:$0xf]
      %v4219 = vld [vmem:[%s1 + $0xc] sm:$0xf]
      %v4220 = vld [vmem:[%s1 + $0x10] sm:$0x3]
      %v4221 = vld [vmem:[%s2] sm:$0x1]
      %v4223 = vlaneseq
      %v4224 = vshrl.u32 %v4223, 7
      %v4225 = vsub.s32 0, %v4224
      %v4226 = vrot.slane %v4221, %v4225
      %v4260 = vunpack.c.l.b16 %v4184
      %v4261 = vunpack.c.l.b16 %v4185
      %v4262 = vunpack.c.l.b16 %v4186
      %v4263 = vunpack.c.l.b16 %v4187
      %v4264 = vunpack.c.l.b16 %v4188
      %v4265 = vunpack.c.l.b16 %v4189
      %v4266 = vunpack.c.l.b16 %v4190
      %v4267 = vunpack.c.l.b16 %v4191
      %v4268 = vunpack.c.l.b16 %v4192
      %v4269 = vunpack.c.l.b16 %v4193
      %v4270 = vunpack.c.l.b16 %v4194
      %v4271 = vunpack.c.l.b16 %v4195
      %v4272 = vunpack.c.l.b16 %v4196
      %v4273 = vunpack.c.l.b16 %v4197
      %v4274 = vunpack.c.l.b16 %v4198
      %v4275 = vunpack.c.l.b16 %v4199
      %v4276 = vunpack.c.l.b16 %v4200
      %v4277 = vunpack.c.l.b16 %v4201
      %v4278 = vunpack.c.l.b16 %v4202
      %v4279 = vunpack.c.l.b16 %v4203
      %v4280 = vunpack.c.l.b16 %v4204
      %v4281 = vunpack.c.l.b16 %v4205
      %v4282 = vunpack.c.l.b16 %v4206
      %v4283 = vunpack.c.l.b16 %v4207
      %v4284 = vunpack.c.l.b16 %v4208
      %v4285 = vunpack.c.l.b16 %v4209
      %v4286 = vunpack.c.l.b16 %v4210
      %v4287 = vunpack.c.l.b16 %v4211
      %v4288 = vunpack.c.l.b16 %v4212
      %v4289 = vunpack.c.l.b16 %v4213
      %v4290 = vunpack.c.l.b16 %v4214
      %v4291 = vunpack.c.l.b16 %v4215
      %v4292 = vpack.c.b16 %v4261, %v4260
      %v4293 = vpack.c.b16 %v4263, %v4262
      %v4294 = vpack.c.b16 %v4265, %v4264
      %v4295 = vpack.c.b16 %v4267, %v4266
      %v4296 = vpack.c.b16 %v4269, %v4268
      %v4297 = vpack.c.b16 %v4271, %v4270
      %v4298 = vpack.c.b16 %v4273, %v4272
      %v4299 = vpack.c.b16 %v4275, %v4274
      %v4300 = vpack.c.b16 %v4277, %v4276
      %v4301 = vpack.c.b16 %v4279, %v4278
      %v4302 = vpack.c.b16 %v4281, %v4280
      %v4303 = vpack.c.b16 %v4283, %v4282
      %v4304 = vpack.c.b16 %v4285, %v4284
      %v4305 = vpack.c.b16 %v4287, %v4286
      %v4306 = vpack.c.b16 %v4289, %v4288
      %v4307 = vpack.c.b16 %v4291, %v4290
      %v4313 = vunpack.c.l.b16 %v4216
      %v4314 = vunpack.c.l.b16 %v4217
      %v4315 = vunpack.c.l.b16 %v4218
      %v4316 = vunpack.c.l.b16 %v4219
      %v4317 = vunpack.c.l.b16 %v4220
      %v4318 = vpack.c.b16 %v4314, %v4313
      %v4319 = vpack.c.b16 %v4316, %v4315
      %v4320 = vpack.c.b16 %v4317, %v4317
      %vm4323 = vcmask 293888
      %v4325 = vsel %vm4323, %v4292, 0
      %v4328 = vsel %vm4323, %v4293, 0
      %v4331 = vsel %vm4323, %v4294, 0
      %v4334 = vsel %vm4323, %v4295, 0
      %v4337 = vsel %vm4323, %v4296, 0
      %v4340 = vsel %vm4323, %v4297, 0
      %v4343 = vsel %vm4323, %v4298, 0
      %v4346 = vsel %vm4323, %v4299, 0
      %v4349 = vsel %vm4323, %v4300, 0
      %v4352 = vsel %vm4323, %v4301, 0
      %v4355 = vsel %vm4323, %v4302, 0
      %v4358 = vsel %vm4323, %v4303, 0
      %v4361 = vsel %vm4323, %v4304, 0
      %v4364 = vsel %vm4323, %v4305, 0
      %v4367 = vsel %vm4323, %v4306, 0
      %v4370 = vsel %vm4323, %v4307, 0
      %vm4372 = vcmask 1041408
      %v4374 = vsel %vm4372, %v4320, 0
      %4376 = vmatprep.subr.bf16.mxu0 0
      %4377 = vmatpush1.bf16.msra.mxu0 0
      %4378 = vmatprep.subr.bf16.mxu0 0
      %4379 = vmatpush1.bf16.msra.mxu0 0
      %4380 = vmatprep.subr.bf16.mxu0 0
      %4381 = vmatpush1.bf16.msra.mxu0 0
      %4382 = vmatprep.subr.bf16.mxu0 0
      %4383 = vmatpush1.bf16.msra.mxu0 0
      %4384 = vmatprep.subr.bf16.mxu0 0
      %4385 = vmatpush1.bf16.msra.mxu0 0
      %4386 = vmatprep.subr.bf16.mxu0 0
      %4387 = vmatpush1.bf16.msra.mxu0 %v4374
      %4388 = vmatprep.subr.bf16.mxu0 0
      %4389 = vmatpush1.bf16.msra.mxu0 %v4319
      %4390 = vmatprep.subr.bf16.mxu0 0
      %4391 = vmatpush1.bf16.msra.mxu0 %v4318
      %4392 = vmatprep.subr.bf16.mxu0 0
      %4393 = vmatpush2.bf16.msra.mxu0 0
      %4394 = vmatprep.subr.bf16.mxu0 0
      %4395 = vmatpush2.bf16.msra.mxu0 0
      %4396 = vmatprep.subr.bf16.mxu0 0
      %4397 = vmatpush2.bf16.msra.mxu0 0
      %4398 = vmatprep.subr.bf16.mxu0 0
      %4399 = vmatpush2.bf16.msra.mxu0 0
      %4400 = vmatprep.subr.bf16.mxu0 0
      %4401 = vmatpush2.bf16.msra.mxu0 0
      %4402 = vmatprep.subr.bf16.mxu0 0
      %4403 = vmatpush2.bf16.msra.mxu0 0
      %4404 = vmatprep.subr.bf16.mxu0 0
      %4405 = vmatpush2.bf16.msra.mxu0 0
      %4406 = vmatprep.subr.bf16.mxu0 0
      %4407 = vmatpush2.bf16.msra.mxu0 0
      %4408 = vmatprep.mubr.bf16.mxu0 0
      %4409 = vmatmul.mubr.bf16.gmra.mxu0 %v4325
      %v4410 = vpop.f32.mrf.mxu0
      %v4411 = vadd.f32 %v4226, %v4410
      %v4412 = vpop.f32.mrf.mxu0
      %v4413 = vpop.f32.mrf.mxu0
      %v4414 = vadd.f32 %v4226, %v4413
      %v4415 = vpop.f32.mrf.mxu0
      %4416 = vmatprep.mubr.bf16.mxu0 0
      %4417 = vmatmul.mubr.bf16.gmra.mxu0 %v4328
      %v4418 = vpop.f32.mrf.mxu0
      %v4419 = vadd.f32 %v4226, %v4418
      %v4420 = vpop.f32.mrf.mxu0
      %v4421 = vpop.f32.mrf.mxu0
      %v4422 = vadd.f32 %v4226, %v4421
      %v4423 = vpop.f32.mrf.mxu0
      %4424 = vmatprep.mubr.bf16.mxu0 0
      %4425 = vmatmul.mubr.bf16.gmra.mxu0 %v4331
      %v4426 = vpop.f32.mrf.mxu0
      %v4427 = vadd.f32 %v4226, %v4426
      %v4428 = vpop.f32.mrf.mxu0
      %v4429 = vpop.f32.mrf.mxu0
      %v4430 = vadd.f32 %v4226, %v4429
      %v4431 = vpop.f32.mrf.mxu0
      %4432 = vmatprep.mubr.bf16.mxu0 0
      %4433 = vmatmul.mubr.bf16.gmra.mxu0 %v4334
      %v4434 = vpop.f32.mrf.mxu0
      %v4435 = vadd.f32 %v4226, %v4434
      %v4436 = vpop.f32.mrf.mxu0
      %v4437 = vpop.f32.mrf.mxu0
      %v4438 = vadd.f32 %v4226, %v4437
      %v4439 = vpop.f32.mrf.mxu0
      %4440 = vmatprep.mubr.bf16.mxu0 0
      %4441 = vmatmul.mubr.bf16.gmra.mxu0 %v4337
      %v4442 = vpop.f32.mrf.mxu0
      %v4443 = vadd.f32 %v4226, %v4442
      %v4444 = vpop.f32.mrf.mxu0
      %v4445 = vpop.f32.mrf.mxu0
      %v4446 = vadd.f32 %v4226, %v4445
      %v4447 = vpop.f32.mrf.mxu0
      %4448 = vmatprep.mubr.bf16.mxu0 0
      %4449 = vmatmul.mubr.bf16.gmra.mxu0 %v4340
      %v4450 = vpop.f32.mrf.mxu0
      %v4451 = vadd.f32 %v4226, %v4450
      %v4452 = vpop.f32.mrf.mxu0
      %v4453 = vpop.f32.mrf.mxu0
      %v4454 = vadd.f32 %v4226, %v4453
      %v4455 = vpop.f32.mrf.mxu0
      %4456 = vmatprep.mubr.bf16.mxu0 0
      %4457 = vmatmul.mubr.bf16.gmra.mxu0 %v4343
      %v4458 = vpop.f32.mrf.mxu0
      %v4459 = vadd.f32 %v4226, %v4458
      %v4460 = vpop.f32.mrf.mxu0
      %v4461 = vpop.f32.mrf.mxu0
      %v4462 = vadd.f32 %v4226, %v4461
      %v4463 = vpop.f32.mrf.mxu0
      %4464 = vmatprep.mubr.bf16.mxu0 0
      %4465 = vmatmul.mubr.bf16.gmra.mxu0 %v4346
      %v4466 = vpop.f32.mrf.mxu0
      %v4467 = vadd.f32 %v4226, %v4466
      %v4468 = vpop.f32.mrf.mxu0
      %v4469 = vpop.f32.mrf.mxu0
      %v4470 = vadd.f32 %v4226, %v4469
      %v4471 = vpop.f32.mrf.mxu0
      %4472 = vmatprep.mubr.bf16.mxu0 0
      %4473 = vmatmul.mubr.bf16.gmra.mxu0 %v4349
      %v4474 = vpop.f32.mrf.mxu0
      %v4475 = vadd.f32 %v4226, %v4474
      %v4476 = vpop.f32.mrf.mxu0
      %v4477 = vpop.f32.mrf.mxu0
      %v4478 = vadd.f32 %v4226, %v4477
      %v4479 = vpop.f32.mrf.mxu0
      %4480 = vmatprep.mubr.bf16.mxu0 0
      %4481 = vmatmul.mubr.bf16.gmra.mxu0 %v4352
      %v4482 = vpop.f32.mrf.mxu0
      %v4483 = vadd.f32 %v4226, %v4482
      %v4484 = vpop.f32.mrf.mxu0
      %v4485 = vpop.f32.mrf.mxu0
      %v4486 = vadd.f32 %v4226, %v4485
      %v4487 = vpop.f32.mrf.mxu0
      %4488 = vmatprep.mubr.bf16.mxu0 0
      %4489 = vmatmul.mubr.bf16.gmra.mxu0 %v4355
      %v4490 = vpop.f32.mrf.mxu0
      %v4491 = vadd.f32 %v4226, %v4490
      %v4492 = vpop.f32.mrf.mxu0
      %v4493 = vpop.f32.mrf.mxu0
      %v4494 = vadd.f32 %v4226, %v4493
      %v4495 = vpop.f32.mrf.mxu0
      %4496 = vmatprep.mubr.bf16.mxu0 0
      %4497 = vmatmul.mubr.bf16.gmra.mxu0 %v4358
      %v4498 = vpop.f32.mrf.mxu0
      %v4499 = vadd.f32 %v4226, %v4498
      %v4500 = vpop.f32.mrf.mxu0
      %v4501 = vpop.f32.mrf.mxu0
      %v4502 = vadd.f32 %v4226, %v4501
      %v4503 = vpop.f32.mrf.mxu0
      %4504 = vmatprep.mubr.bf16.mxu0 0
      %4505 = vmatmul.mubr.bf16.gmra.mxu0 %v4361
      %v4506 = vpop.f32.mrf.mxu0
      %v4507 = vadd.f32 %v4226, %v4506
      %v4508 = vpop.f32.mrf.mxu0
      %v4509 = vpop.f32.mrf.mxu0
      %v4510 = vadd.f32 %v4226, %v4509
      %v4511 = vpop.f32.mrf.mxu0
      %4512 = vmatprep.mubr.bf16.mxu0 0
      %4513 = vmatmul.mubr.bf16.gmra.mxu0 %v4364
      %v4514 = vpop.f32.mrf.mxu0
      %v4515 = vadd.f32 %v4226, %v4514
      %v4516 = vpop.f32.mrf.mxu0
      %v4517 = vpop.f32.mrf.mxu0
      %v4518 = vadd.f32 %v4226, %v4517
      %v4519 = vpop.f32.mrf.mxu0
      %4520 = vmatprep.mubr.bf16.mxu0 0
      %4521 = vmatmul.mubr.bf16.gmra.mxu0 %v4367
      %v4522 = vpop.f32.mrf.mxu0
      %v4523 = vadd.f32 %v4226, %v4522
      %v4524 = vpop.f32.mrf.mxu0
      %v4525 = vpop.f32.mrf.mxu0
      %v4526 = vadd.f32 %v4226, %v4525
      %v4527 = vpop.f32.mrf.mxu0
      %4528 = vmatprep.mubr.bf16.mxu0 0
      %4529 = vmatmul.mubr.bf16.gmra.mxu0 %v4370
      %v4530 = vpop.f32.mrf.mxu0
      %v4531 = vadd.f32 %v4226, %v4530
      %v4532 = vpop.f32.mrf.mxu0
      %v4533 = vpop.f32.mrf.mxu0
      %v4534 = vadd.f32 %v4226, %v4533
      %v4535 = vpop.f32.mrf.mxu0
      %4536 = vdwg.mxu0
      %v4537 = vmax.f32 %v4411, 0.0
      %v4538 = vmax.f32 %v4414, 0.0
      %v4539 = vmax.f32 %v4419, 0.0
      %v4540 = vmax.f32 %v4422, 0.0
      %v4541 = vmax.f32 %v4427, 0.0
      %v4542 = vmax.f32 %v4430, 0.0
      %v4543 = vmax.f32 %v4435, 0.0
      %v4544 = vmax.f32 %v4438, 0.0
      %v4545 = vmax.f32 %v4443, 0.0
      %v4546 = vmax.f32 %v4446, 0.0
      %v4547 = vmax.f32 %v4451, 0.0
      %v4548 = vmax.f32 %v4454, 0.0
      %v4549 = vmax.f32 %v4459, 0.0
      %v4550 = vmax.f32 %v4462, 0.0
      %v4551 = vmax.f32 %v4467, 0.0
      %v4552 = vmax.f32 %v4470, 0.0
      %v4553 = vmax.f32 %v4475, 0.0
      %v4554 = vmax.f32 %v4478, 0.0
      %v4555 = vmax.f32 %v4483, 0.0
      %v4556 = vmax.f32 %v4486, 0.0
      %v4557 = vmax.f32 %v4491, 0.0
      %v4558 = vmax.f32 %v4494, 0.0
      %v4559 = vmax.f32 %v4499, 0.0
      %v4560 = vmax.f32 %v4502, 0.0
      %v4561 = vmax.f32 %v4507, 0.0
      %v4562 = vmax.f32 %v4510, 0.0
      %v4563 = vmax.f32 %v4515, 0.0
      %v4564 = vmax.f32 %v4518, 0.0
      %v4565 = vmax.f32 %v4523, 0.0
      %v4566 = vmax.f32 %v4526, 0.0
      %v4567 = vmax.f32 %v4531, 0.0
      %v4568 = vmax.f32 %v4534, 0.0
      %v4569 = vpack.c.bf16 %v4538, %v4537
      %v4570 = vpack.c.bf16 %v4540, %v4539
      %v4571 = vpack.c.bf16 %v4542, %v4541
      %v4572 = vpack.c.bf16 %v4544, %v4543
      %v4573 = vpack.c.bf16 %v4546, %v4545
      %v4574 = vpack.c.bf16 %v4548, %v4547
      %v4575 = vpack.c.bf16 %v4550, %v4549
      %v4576 = vpack.c.bf16 %v4552, %v4551
      %v4577 = vpack.c.bf16 %v4554, %v4553
      %v4578 = vpack.c.bf16 %v4556, %v4555
      %v4579 = vpack.c.bf16 %v4558, %v4557
      %v4580 = vpack.c.bf16 %v4560, %v4559
      %v4581 = vpack.c.bf16 %v4562, %v4561
      %v4582 = vpack.c.bf16 %v4564, %v4563
      %v4583 = vpack.c.bf16 %v4566, %v4565
      %v4584 = vpack.c.bf16 %v4568, %v4567
      %v4601 = vunpack.c.l.b16 %v4569
      %v4602 = vunpack.c.h.b16 %v4569
      %v4603 = vunpack.c.l.b16 %v4570
      %v4604 = vunpack.c.h.b16 %v4570
      %v4605 = vunpack.c.l.b16 %v4571
      %v4606 = vunpack.c.h.b16 %v4571
      %v4607 = vunpack.c.l.b16 %v4572
      %v4608 = vunpack.c.h.b16 %v4572
      %v4609 = vunpack.c.l.b16 %v4573
      %v4610 = vunpack.c.h.b16 %v4573
      %v4611 = vunpack.c.l.b16 %v4574
      %v4612 = vunpack.c.h.b16 %v4574
      %v4613 = vunpack.c.l.b16 %v4575
      %v4614 = vunpack.c.h.b16 %v4575
      %v4615 = vunpack.c.l.b16 %v4576
      %v4616 = vunpack.c.h.b16 %v4576
      %v4617 = vunpack.c.l.b16 %v4577
      %v4618 = vunpack.c.h.b16 %v4577
      %v4619 = vunpack.c.l.b16 %v4578
      %v4620 = vunpack.c.h.b16 %v4578
      %v4621 = vunpack.c.l.b16 %v4579
      %v4622 = vunpack.c.h.b16 %v4579
      %v4623 = vunpack.c.l.b16 %v4580
      %v4624 = vunpack.c.h.b16 %v4580
      %v4625 = vunpack.c.l.b16 %v4581
      %v4626 = vunpack.c.h.b16 %v4581
      %v4627 = vunpack.c.l.b16 %v4582
      %v4628 = vunpack.c.h.b16 %v4582
      %v4629 = vunpack.c.l.b16 %v4583
      %v4630 = vunpack.c.h.b16 %v4583
      %v4631 = vunpack.c.l.b16 %v4584
      %v4632 = vunpack.c.h.b16 %v4584
      %v4633 = vpack.c.b16 %v4601, %v4601
      %v4634 = vpack.c.b16 %v4602, %v4602
      %v4635 = vpack.c.b16 %v4603, %v4603
      %v4636 = vpack.c.b16 %v4604, %v4604
      %v4637 = vpack.c.b16 %v4605, %v4605
      %v4638 = vpack.c.b16 %v4606, %v4606
      %v4639 = vpack.c.b16 %v4607, %v4607
      %v4640 = vpack.c.b16 %v4608, %v4608
      %v4641 = vpack.c.b16 %v4609, %v4609
      %v4642 = vpack.c.b16 %v4610, %v4610
      %v4643 = vpack.c.b16 %v4611, %v4611
      %v4644 = vpack.c.b16 %v4612, %v4612
      %v4645 = vpack.c.b16 %v4613, %v4613
      %v4646 = vpack.c.b16 %v4614, %v4614
      %v4647 = vpack.c.b16 %v4615, %v4615
      %v4648 = vpack.c.b16 %v4616, %v4616
      %v4649 = vpack.c.b16 %v4617, %v4617
      %v4650 = vpack.c.b16 %v4618, %v4618
      %v4651 = vpack.c.b16 %v4619, %v4619
      %v4652 = vpack.c.b16 %v4620, %v4620
      %v4653 = vpack.c.b16 %v4621, %v4621
      %v4654 = vpack.c.b16 %v4622, %v4622
      %v4655 = vpack.c.b16 %v4623, %v4623
      %v4656 = vpack.c.b16 %v4624, %v4624
      %v4657 = vpack.c.b16 %v4625, %v4625
      %v4658 = vpack.c.b16 %v4626, %v4626
      %v4659 = vpack.c.b16 %v4627, %v4627
      %v4660 = vpack.c.b16 %v4628, %v4628
      %v4661 = vpack.c.b16 %v4629, %v4629
      %v4662 = vpack.c.b16 %v4630, %v4630
      %v4663 = vpack.c.b16 %v4631, %v4631
      %v4664 = vpack.c.b16 %v4632, %v4632
      %v4666 = vshrl.u32 %v4633, 16
      %v4668 = vrot.slane %v4666, 7
      %v4669 = vshll.u32 %v4633, 16
      %v4671 = vor.u32 %v4668, %v4669
      %v4672 = vrot.slane %v4668, 4
      %v4674 = vshrl.u32 %v4634, 16
      %v4676 = vrot.slane %v4674, 7
      %v4677 = vshll.u32 %v4634, 16
      %v4679 = vor.u32 %v4676, %v4677
      %v4680 = vsel %vm597, %v4672, %v4679
      %v4681 = vrot.slane %v4676, 4
      %v4683 = vshrl.u32 %v4635, 16
      %v4685 = vrot.slane %v4683, 7
      %v4686 = vshll.u32 %v4635, 16
      %v4688 = vor.u32 %v4685, %v4686
      %v4689 = vrot.slane %v4685, 4
      %v4691 = vshrl.u32 %v4636, 16
      %v4693 = vrot.slane %v4691, 7
      %v4694 = vshll.u32 %v4636, 16
      %v4696 = vor.u32 %v4693, %v4694
      %v4697 = vsel %vm597, %v4689, %v4696
      %v4698 = vrot.slane %v4693, 4
      %v4700 = vshrl.u32 %v4637, 16
      %v4702 = vrot.slane %v4700, 7
      %v4703 = vshll.u32 %v4637, 16
      %v4705 = vor.u32 %v4702, %v4703
      %v4706 = vrot.slane %v4702, 4
      %v4708 = vshrl.u32 %v4638, 16
      %v4710 = vrot.slane %v4708, 7
      %v4711 = vshll.u32 %v4638, 16
      %v4713 = vor.u32 %v4710, %v4711
      %v4714 = vsel %vm597, %v4706, %v4713
      %v4715 = vrot.slane %v4710, 4
      %v4717 = vshrl.u32 %v4639, 16
      %v4719 = vrot.slane %v4717, 7
      %v4720 = vshll.u32 %v4639, 16
      %v4722 = vor.u32 %v4719, %v4720
      %v4723 = vrot.slane %v4719, 4
      %v4725 = vshrl.u32 %v4640, 16
      %v4727 = vrot.slane %v4725, 7
      %v4728 = vshll.u32 %v4640, 16
      %v4730 = vor.u32 %v4727, %v4728
      %v4731 = vsel %vm597, %v4723, %v4730
      %v4732 = vrot.slane %v4727, 4
      %v4734 = vshrl.u32 %v4641, 16
      %v4736 = vrot.slane %v4734, 7
      %v4737 = vshll.u32 %v4641, 16
      %v4739 = vor.u32 %v4736, %v4737
      %v4740 = vrot.slane %v4736, 4
      %v4742 = vshrl.u32 %v4642, 16
      %v4744 = vrot.slane %v4742, 7
      %v4745 = vshll.u32 %v4642, 16
      %v4747 = vor.u32 %v4744, %v4745
      %v4748 = vsel %vm597, %v4740, %v4747
      %v4749 = vrot.slane %v4744, 4
      %v4751 = vshrl.u32 %v4643, 16
      %v4753 = vrot.slane %v4751, 7
      %v4754 = vshll.u32 %v4643, 16
      %v4756 = vor.u32 %v4753, %v4754
      %v4757 = vrot.slane %v4753, 4
      %v4759 = vshrl.u32 %v4644, 16
      %v4761 = vrot.slane %v4759, 7
      %v4762 = vshll.u32 %v4644, 16
      %v4764 = vor.u32 %v4761, %v4762
      %v4765 = vsel %vm597, %v4757, %v4764
      %v4766 = vrot.slane %v4761, 4
      %v4768 = vshrl.u32 %v4645, 16
      %v4770 = vrot.slane %v4768, 7
      %v4771 = vshll.u32 %v4645, 16
      %v4773 = vor.u32 %v4770, %v4771
      %v4774 = vrot.slane %v4770, 4
      %v4776 = vshrl.u32 %v4646, 16
      %v4778 = vrot.slane %v4776, 7
      %v4779 = vshll.u32 %v4646, 16
      %v4781 = vor.u32 %v4778, %v4779
      %v4782 = vsel %vm597, %v4774, %v4781
      %v4783 = vrot.slane %v4778, 4
      %v4785 = vshrl.u32 %v4647, 16
      %v4787 = vrot.slane %v4785, 7
      %v4788 = vshll.u32 %v4647, 16
      %v4790 = vor.u32 %v4787, %v4788
      %v4791 = vrot.slane %v4787, 4
      %v4793 = vshrl.u32 %v4648, 16
      %v4795 = vrot.slane %v4793, 7
      %v4796 = vshll.u32 %v4648, 16
      %v4798 = vor.u32 %v4795, %v4796
      %v4799 = vsel %vm597, %v4791, %v4798
      %v4800 = vrot.slane %v4795, 4
      %v4802 = vshrl.u32 %v4649, 16
      %v4804 = vrot.slane %v4802, 7
      %v4805 = vshll.u32 %v4649, 16
      %v4807 = vor.u32 %v4804, %v4805
      %v4808 = vrot.slane %v4804, 4
      %v4810 = vshrl.u32 %v4650, 16
      %v4812 = vrot.slane %v4810, 7
      %v4813 = vshll.u32 %v4650, 16
      %v4815 = vor.u32 %v4812, %v4813
      %v4816 = vsel %vm597, %v4808, %v4815
      %v4817 = vrot.slane %v4812, 4
      %v4819 = vshrl.u32 %v4651, 16
      %v4821 = vrot.slane %v4819, 7
      %v4822 = vshll.u32 %v4651, 16
      %v4824 = vor.u32 %v4821, %v4822
      %v4825 = vrot.slane %v4821, 4
      %v4827 = vshrl.u32 %v4652, 16
      %v4829 = vrot.slane %v4827, 7
      %v4830 = vshll.u32 %v4652, 16
      %v4832 = vor.u32 %v4829, %v4830
      %v4833 = vsel %vm597, %v4825, %v4832
      %v4834 = vrot.slane %v4829, 4
      %v4836 = vshrl.u32 %v4653, 16
      %v4838 = vrot.slane %v4836, 7
      %v4839 = vshll.u32 %v4653, 16
      %v4841 = vor.u32 %v4838, %v4839
      %v4842 = vrot.slane %v4838, 4
      %v4844 = vshrl.u32 %v4654, 16
      %v4846 = vrot.slane %v4844, 7
      %v4847 = vshll.u32 %v4654, 16
      %v4849 = vor.u32 %v4846, %v4847
      %v4850 = vsel %vm597, %v4842, %v4849
      %v4851 = vrot.slane %v4846, 4
      %v4853 = vshrl.u32 %v4655, 16
      %v4855 = vrot.slane %v4853, 7
      %v4856 = vshll.u32 %v4655, 16
      %v4858 = vor.u32 %v4855, %v4856
      %v4859 = vrot.slane %v4855, 4
      %v4861 = vshrl.u32 %v4656, 16
      %v4863 = vrot.slane %v4861, 7
      %v4864 = vshll.u32 %v4656, 16
      %v4866 = vor.u32 %v4863, %v4864
      %v4867 = vsel %vm597, %v4859, %v4866
      %v4868 = vrot.slane %v4863, 4
      %v4870 = vshrl.u32 %v4657, 16
      %v4872 = vrot.slane %v4870, 7
      %v4873 = vshll.u32 %v4657, 16
      %v4875 = vor.u32 %v4872, %v4873
      %v4876 = vrot.slane %v4872, 4
      %v4878 = vshrl.u32 %v4658, 16
      %v4880 = vrot.slane %v4878, 7
      %v4881 = vshll.u32 %v4658, 16
      %v4883 = vor.u32 %v4880, %v4881
      %v4884 = vsel %vm597, %v4876, %v4883
      %v4885 = vrot.slane %v4880, 4
      %v4887 = vshrl.u32 %v4659, 16
      %v4889 = vrot.slane %v4887, 7
      %v4890 = vshll.u32 %v4659, 16
      %v4892 = vor.u32 %v4889, %v4890
      %v4893 = vrot.slane %v4889, 4
      %v4895 = vshrl.u32 %v4660, 16
      %v4897 = vrot.slane %v4895, 7
      %v4898 = vshll.u32 %v4660, 16
      %v4900 = vor.u32 %v4897, %v4898
      %v4901 = vsel %vm597, %v4893, %v4900
      %v4902 = vrot.slane %v4897, 4
      %v4904 = vshrl.u32 %v4661, 16
      %v4906 = vrot.slane %v4904, 7
      %v4907 = vshll.u32 %v4661, 16
      %v4909 = vor.u32 %v4906, %v4907
      %v4910 = vrot.slane %v4906, 4
      %v4912 = vshrl.u32 %v4662, 16
      %v4914 = vrot.slane %v4912, 7
      %v4915 = vshll.u32 %v4662, 16
      %v4917 = vor.u32 %v4914, %v4915
      %v4918 = vsel %vm597, %v4910, %v4917
      %v4919 = vrot.slane %v4914, 4
      %v4921 = vshrl.u32 %v4663, 16
      %v4923 = vrot.slane %v4921, 7
      %v4924 = vshll.u32 %v4663, 16
      %v4926 = vor.u32 %v4923, %v4924
      %v4927 = vrot.slane %v4923, 4
      %v4929 = vshrl.u32 %v4664, 16
      %v4931 = vrot.slane %v4929, 7
      %v4932 = vshll.u32 %v4664, 16
      %v4934 = vor.u32 %v4931, %v4932
      %v4935 = vsel %vm597, %v4927, %v4934
      %v4936 = vrot.slane %v4931, 4
      %s4985 = scalar_lea.vmem [#allocation3], 12
      %vm4986 = vcmask 60416
      %vm4987 = vmand %vm4986, %vm292
      %v4988 = vld [vmem:[%s4985] sm:$0xf]
      %v4989 = vsel %vm4987, %v4671, %v4988
      %4990 = vst [vmem:[%s4985] sm:$0xf] %v4989
      %4991 = vst.msk [vmem:[%s4985 + $0x4] sm:$0xf] %vm348, %v4680
      %v4992 = vld [vmem:[%s4985 + $0x8] sm:$0x1]
      %v4993 = vsel %vm358, %v4681, %v4992
      %4994 = vst [vmem:[%s4985 + $0x8] sm:$0x1] %v4993
      %v4995 = vld [vmem:[%s4985 + $0xc] sm:$0xf]
      %v4996 = vsel %vm4987, %v4688, %v4995
      %4997 = vst [vmem:[%s4985 + $0xc] sm:$0xf] %v4996
      %4998 = vst.msk [vmem:[%s4985 + $0x10] sm:$0xf] %vm348, %v4697
      %v4999 = vld [vmem:[%s4985 + $0x14] sm:$0x1]
      %v5000 = vsel %vm358, %v4698, %v4999
      %5001 = vst [vmem:[%s4985 + $0x14] sm:$0x1] %v5000
      %v5002 = vld [vmem:[%s4985 + $0x18] sm:$0xf]
      %v5003 = vsel %vm4987, %v4705, %v5002
      %5004 = vst [vmem:[%s4985 + $0x18] sm:$0xf] %v5003
      %5005 = vst.msk [vmem:[%s4985 + $0x1c] sm:$0xf] %vm348, %v4714
      %v5006 = vld [vmem:[%s4985 + $0x20] sm:$0x1]
      %v5007 = vsel %vm358, %v4715, %v5006
      %5008 = vst [vmem:[%s4985 + $0x20] sm:$0x1] %v5007
      %v5009 = vld [vmem:[%s4985 + $0x24] sm:$0xf]
      %v5010 = vsel %vm4987, %v4722, %v5009
      %5011 = vst [vmem:[%s4985 + $0x24] sm:$0xf] %v5010
      %5012 = vst.msk [vmem:[%s4985 + $0x28] sm:$0xf] %vm348, %v4731
      %v5013 = vld [vmem:[%s4985 + $0x2c] sm:$0x1]
      %v5014 = vsel %vm358, %v4732, %v5013
      %5015 = vst [vmem:[%s4985 + $0x2c] sm:$0x1] %v5014
      %v5016 = vld [vmem:[%s4985 + $0x30] sm:$0xf]
      %v5017 = vsel %vm4987, %v4739, %v5016
      %5018 = vst [vmem:[%s4985 + $0x30] sm:$0xf] %v5017
      %5019 = vst.msk [vmem:[%s4985 + $0x34] sm:$0xf] %vm348, %v4748
      %v5020 = vld [vmem:[%s4985 + $0x38] sm:$0x1]
      %v5021 = vsel %vm358, %v4749, %v5020
      %5022 = vst [vmem:[%s4985 + $0x38] sm:$0x1] %v5021
      %v5023 = vld [vmem:[%s4985 + $0x3c] sm:$0xf]
      %v5024 = vsel %vm4987, %v4756, %v5023
      %5025 = vst [vmem:[%s4985 + $0x3c] sm:$0xf] %v5024
      %5026 = vst.msk [vmem:[%s4985 + $0x40] sm:$0xf] %vm348, %v4765
      %v5027 = vld [vmem:[%s4985 + $0x44] sm:$0x1]
      %v5028 = vsel %vm358, %v4766, %v5027
      %5029 = vst [vmem:[%s4985 + $0x44] sm:$0x1] %v5028
      %v5030 = vld [vmem:[%s4985 + $0x48] sm:$0xf]
      %v5031 = vsel %vm4987, %v4773, %v5030
      %5032 = vst [vmem:[%s4985 + $0x48] sm:$0xf] %v5031
      %5033 = vst.msk [vmem:[%s4985 + $0x4c] sm:$0xf] %vm348, %v4782
      %v5034 = vld [vmem:[%s4985 + $0x50] sm:$0x1]
      %v5035 = vsel %vm358, %v4783, %v5034
      %5036 = vst [vmem:[%s4985 + $0x50] sm:$0x1] %v5035
      %v5037 = vld [vmem:[%s4985 + $0x54] sm:$0xf]
      %v5038 = vsel %vm4987, %v4790, %v5037
      %5039 = vst [vmem:[%s4985 + $0x54] sm:$0xf] %v5038
      %5040 = vst.msk [vmem:[%s4985 + $0x58] sm:$0xf] %vm348, %v4799
      %v5041 = vld [vmem:[%s4985 + $0x5c] sm:$0x1]
      %v5042 = vsel %vm358, %v4800, %v5041
      %5043 = vst [vmem:[%s4985 + $0x5c] sm:$0x1] %v5042
      %v5044 = vld [vmem:[%s4985 + $0x60] sm:$0xf]
      %v5045 = vsel %vm4987, %v4807, %v5044
      %5046 = vst [vmem:[%s4985 + $0x60] sm:$0xf] %v5045
      %5047 = vst.msk [vmem:[%s4985 + $0x64] sm:$0xf] %vm348, %v4816
      %v5048 = vld [vmem:[%s4985 + $0x68] sm:$0x1]
      %v5049 = vsel %vm358, %v4817, %v5048
      %5050 = vst [vmem:[%s4985 + $0x68] sm:$0x1] %v5049
      %v5051 = vld [vmem:[%s4985 + $0x6c] sm:$0xf]
      %v5052 = vsel %vm4987, %v4824, %v5051
      %5053 = vst [vmem:[%s4985 + $0x6c] sm:$0xf] %v5052
      %5054 = vst.msk [vmem:[%s4985 + $0x70] sm:$0xf] %vm348, %v4833
      %v5055 = vld [vmem:[%s4985 + $0x74] sm:$0x1]
      %v5056 = vsel %vm358, %v4834, %v5055
      %5057 = vst [vmem:[%s4985 + $0x74] sm:$0x1] %v5056
      %v5058 = vld [vmem:[%s4985 + $0x78] sm:$0xf]
      %v5059 = vsel %vm4987, %v4841, %v5058
      %5060 = vst [vmem:[%s4985 + $0x78] sm:$0xf] %v5059
      %5061 = vst.msk [vmem:[%s4985 + $0x7c] sm:$0xf] %vm348, %v4850
      %v5062 = vld [vmem:[%s4985 + $0x80] sm:$0x1]
      %v5063 = vsel %vm358, %v4851, %v5062
      %5064 = vst [vmem:[%s4985 + $0x80] sm:$0x1] %v5063
      %v5065 = vld [vmem:[%s4985 + $0x84] sm:$0xf]
      %v5066 = vsel %vm4987, %v4858, %v5065
      %5067 = vst [vmem:[%s4985 + $0x84] sm:$0xf] %v5066
      %5068 = vst.msk [vmem:[%s4985 + $0x88] sm:$0xf] %vm348, %v4867
      %v5069 = vld [vmem:[%s4985 + $0x8c] sm:$0x1]
      %v5070 = vsel %vm358, %v4868, %v5069
      %5071 = vst [vmem:[%s4985 + $0x8c] sm:$0x1] %v5070
      %v5072 = vld [vmem:[%s4985 + $0x90] sm:$0xf]
      %v5073 = vsel %vm4987, %v4875, %v5072
      %5074 = vst [vmem:[%s4985 + $0x90] sm:$0xf] %v5073
      %5075 = vst.msk [vmem:[%s4985 + $0x94] sm:$0xf] %vm348, %v4884
      %v5076 = vld [vmem:[%s4985 + $0x98] sm:$0x1]
      %v5077 = vsel %vm358, %v4885, %v5076
      %5078 = vst [vmem:[%s4985 + $0x98] sm:$0x1] %v5077
      %v5079 = vld [vmem:[%s4985 + $0x9c] sm:$0xf]
      %v5080 = vsel %vm4987, %v4892, %v5079
      %5081 = vst [vmem:[%s4985 + $0x9c] sm:$0xf] %v5080
      %5082 = vst.msk [vmem:[%s4985 + $0xa0] sm:$0xf] %vm348, %v4901
      %v5083 = vld [vmem:[%s4985 + $0xa4] sm:$0x1]
      %v5084 = vsel %vm358, %v4902, %v5083
      %5085 = vst [vmem:[%s4985 + $0xa4] sm:$0x1] %v5084
      %v5086 = vld [vmem:[%s4985 + $0xa8] sm:$0xf]
      %v5087 = vsel %vm4987, %v4909, %v5086
      %5088 = vst [vmem:[%s4985 + $0xa8] sm:$0xf] %v5087
      %5089 = vst.msk [vmem:[%s4985 + $0xac] sm:$0xf] %vm348, %v4918
      %v5090 = vld [vmem:[%s4985 + $0xb0] sm:$0x1]
      %v5091 = vsel %vm358, %v4919, %v5090
      %5092 = vst [vmem:[%s4985 + $0xb0] sm:$0x1] %v5091
      %v5093 = vld [vmem:[%s4985 + $0xb4] sm:$0xf]
      %v5094 = vsel %vm4987, %v4926, %v5093
      %5095 = vst [vmem:[%s4985 + $0xb4] sm:$0xf] %v5094
      %5096 = vst.msk [vmem:[%s4985 + $0xb8] sm:$0xf] %vm348, %v4935
      %v5097 = vld [vmem:[%s4985 + $0xbc] sm:$0x1]
      %v5098 = vsel %vm358, %v4936, %v5097
      %5099 = vst [vmem:[%s4985 + $0xbc] sm:$0x1] %v5098
      %v5100 = vld [vmem:[#allocation3] sm:$0xf]
      %v5101 = vld [vmem:[#allocation3 + $0x4] sm:$0xf]
      %v5102 = vld [vmem:[#allocation3 + $0xc] sm:$0xf]
      %v5103 = vld [vmem:[#allocation3 + $0x10] sm:$0xf]
      %v5104 = vld [vmem:[#allocation3 + $0x18] sm:$0xf]
      %v5105 = vld [vmem:[#allocation3 + $0x1c] sm:$0xf]
      %v5106 = vld [vmem:[#allocation3 + $0x24] sm:$0xf]
      %v5107 = vld [vmem:[#allocation3 + $0x28] sm:$0xf]
      %v5108 = vld [vmem:[#allocation3 + $0x30] sm:$0xf]
      %v5109 = vld [vmem:[#allocation3 + $0x34] sm:$0xf]
      %v5110 = vld [vmem:[#allocation3 + $0x3c] sm:$0xf]
      %v5111 = vld [vmem:[#allocation3 + $0x40] sm:$0xf]
      %v5112 = vld [vmem:[#allocation3 + $0x48] sm:$0xf]
      %v5113 = vld [vmem:[#allocation3 + $0x4c] sm:$0xf]
      %v5114 = vld [vmem:[#allocation3 + $0x54] sm:$0xf]
      %v5115 = vld [vmem:[#allocation3 + $0x58] sm:$0xf]
      %v5116 = vld [vmem:[#allocation3 + $0x60] sm:$0xf]
      %v5117 = vld [vmem:[#allocation3 + $0x64] sm:$0xf]
      %v5118 = vld [vmem:[#allocation3 + $0x6c] sm:$0xf]
      %v5119 = vld [vmem:[#allocation3 + $0x70] sm:$0xf]
      %v5120 = vld [vmem:[#allocation3 + $0x78] sm:$0xf]
      %v5121 = vld [vmem:[#allocation3 + $0x7c] sm:$0xf]
      %v5122 = vld [vmem:[#allocation3 + $0x84] sm:$0xf]
      %v5123 = vld [vmem:[#allocation3 + $0x88] sm:$0xf]
      %v5124 = vld [vmem:[#allocation3 + $0x90] sm:$0xf]
      %v5125 = vld [vmem:[#allocation3 + $0x94] sm:$0xf]
      %v5126 = vld [vmem:[#allocation3 + $0x9c] sm:$0xf]
      %v5127 = vld [vmem:[#allocation3 + $0xa0] sm:$0xf]
      %v5128 = vld [vmem:[#allocation3 + $0xa8] sm:$0xf]
      %v5129 = vld [vmem:[#allocation3 + $0xac] sm:$0xf]
      %v5130 = vld [vmem:[#allocation3 + $0xb4] sm:$0xf]
      %v5131 = vld [vmem:[#allocation3 + $0xb8] sm:$0xf]
      %5132 = vst.msk [vmem:[#allocation4] sm:$0xf] %vm348, %v5100
      %5133 = vst.msk [vmem:[#allocation4 + $0x4] sm:$0xf] %vm348, %v5101
      %5134 = vst.msk [vmem:[#allocation4 + $0x8] sm:$0xf] %vm348, %v5102
      %5135 = vst.msk [vmem:[#allocation4 + $0xc] sm:$0xf] %vm348, %v5103
      %5136 = vst.msk [vmem:[#allocation4 + $0x10] sm:$0xf] %vm348, %v5104
      %5137 = vst.msk [vmem:[#allocation4 + $0x14] sm:$0xf] %vm348, %v5105
      %5138 = vst.msk [vmem:[#allocation4 + $0x18] sm:$0xf] %vm348, %v5106
      %5139 = vst.msk [vmem:[#allocation4 + $0x1c] sm:$0xf] %vm348, %v5107
      %5140 = vst.msk [vmem:[#allocation4 + $0x20] sm:$0xf] %vm348, %v5108
      %5141 = vst.msk [vmem:[#allocation4 + $0x24] sm:$0xf] %vm348, %v5109
      %5142 = vst.msk [vmem:[#allocation4 + $0x28] sm:$0xf] %vm348, %v5110
      %5143 = vst.msk [vmem:[#allocation4 + $0x2c] sm:$0xf] %vm348, %v5111
      %5144 = vst.msk [vmem:[#allocation4 + $0x30] sm:$0xf] %vm348, %v5112
      %5145 = vst.msk [vmem:[#allocation4 + $0x34] sm:$0xf] %vm348, %v5113
      %5146 = vst.msk [vmem:[#allocation4 + $0x38] sm:$0xf] %vm348, %v5114
      %5147 = vst.msk [vmem:[#allocation4 + $0x3c] sm:$0xf] %vm348, %v5115
      %5148 = vst.msk [vmem:[#allocation4 + $0x40] sm:$0xf] %vm348, %v5116
      %5149 = vst.msk [vmem:[#allocation4 + $0x44] sm:$0xf] %vm348, %v5117
      %5150 = vst.msk [vmem:[#allocation4 + $0x48] sm:$0xf] %vm348, %v5118
      %5151 = vst.msk [vmem:[#allocation4 + $0x4c] sm:$0xf] %vm348, %v5119
      %5152 = vst.msk [vmem:[#allocation4 + $0x50] sm:$0xf] %vm348, %v5120
      %5153 = vst.msk [vmem:[#allocation4 + $0x54] sm:$0xf] %vm348, %v5121
      %5154 = vst.msk [vmem:[#allocation4 + $0x58] sm:$0xf] %vm348, %v5122
      %5155 = vst.msk [vmem:[#allocation4 + $0x5c] sm:$0xf] %vm348, %v5123
      %5156 = vst.msk [vmem:[#allocation4 + $0x60] sm:$0xf] %vm348, %v5124
      %5157 = vst.msk [vmem:[#allocation4 + $0x64] sm:$0xf] %vm348, %v5125
      %5158 = vst.msk [vmem:[#allocation4 + $0x68] sm:$0xf] %vm348, %v5126
      %5159 = vst.msk [vmem:[#allocation4 + $0x6c] sm:$0xf] %vm348, %v5127
      %5160 = vst.msk [vmem:[#allocation4 + $0x70] sm:$0xf] %vm348, %v5128
      %5161 = vst.msk [vmem:[#allocation4 + $0x74] sm:$0xf] %vm348, %v5129
      %5162 = vst.msk [vmem:[#allocation4 + $0x78] sm:$0xf] %vm348, %v5130
      %5163 = vst.msk [vmem:[#allocation4 + $0x7c] sm:$0xf] %vm348, %v5131
      %v5164 = vld [vmem:[#allocation3] sm:$0xf]
      %v5165 = vld [vmem:[#allocation3 + $0x4] sm:$0xf]
      %v5166 = vld [vmem:[#allocation3 + $0x8] sm:$0x1]
      %v5167 = vld [vmem:[#allocation3 + $0xc] sm:$0xf]
      %v5168 = vld [vmem:[#allocation3 + $0x10] sm:$0xf]
      %v5169 = vld [vmem:[#allocation3 + $0x14] sm:$0x1]
      %v5170 = vld [vmem:[#allocation3 + $0x18] sm:$0xf]
      %v5171 = vld [vmem:[#allocation3 + $0x1c] sm:$0xf]
      %v5172 = vld [vmem:[#allocation3 + $0x20] sm:$0x1]
      %v5173 = vld [vmem:[#allocation3 + $0x24] sm:$0xf]
      %v5174 = vld [vmem:[#allocation3 + $0x28] sm:$0xf]
      %v5175 = vld [vmem:[#allocation3 + $0x2c] sm:$0x1]
      %v5176 = vld [vmem:[#allocation3 + $0x30] sm:$0xf]
      %v5177 = vld [vmem:[#allocation3 + $0x34] sm:$0xf]
      %v5178 = vld [vmem:[#allocation3 + $0x38] sm:$0x1]
      %v5179 = vld [vmem:[#allocation3 + $0x3c] sm:$0xf]
      %v5180 = vld [vmem:[#allocation3 + $0x40] sm:$0xf]
      %v5181 = vld [vmem:[#allocation3 + $0x44] sm:$0x1]
      %v5182 = vld [vmem:[#allocation3 + $0x48] sm:$0xf]
      %v5183 = vld [vmem:[#allocation3 + $0x4c] sm:$0xf]
      %v5184 = vld [vmem:[#allocation3 + $0x50] sm:$0x1]
      %v5185 = vld [vmem:[#allocation3 + $0x54] sm:$0xf]
      %v5186 = vld [vmem:[#allocation3 + $0x58] sm:$0xf]
      %v5187 = vld [vmem:[#allocation3 + $0x5c] sm:$0x1]
      %v5188 = vld [vmem:[#allocation3 + $0x60] sm:$0xf]
      %v5189 = vld [vmem:[#allocation3 + $0x64] sm:$0xf]
      %v5190 = vld [vmem:[#allocation3 + $0x68] sm:$0x1]
      %v5191 = vld [vmem:[#allocation3 + $0x6c] sm:$0xf]
      %v5192 = vld [vmem:[#allocation3 + $0x70] sm:$0xf]
      %v5193 = vld [vmem:[#allocation3 + $0x74] sm:$0x1]
      %v5194 = vld [vmem:[#allocation3 + $0x78] sm:$0xf]
      %v5195 = vld [vmem:[#allocation3 + $0x7c] sm:$0xf]
      %v5196 = vld [vmem:[#allocation3 + $0x80] sm:$0x1]
      %v5197 = vld [vmem:[#allocation3 + $0x84] sm:$0xf]
      %v5198 = vld [vmem:[#allocation3 + $0x88] sm:$0xf]
      %v5199 = vld [vmem:[#allocation3 + $0x8c] sm:$0x1]
      %v5200 = vld [vmem:[#allocation3 + $0x90] sm:$0xf]
      %v5201 = vld [vmem:[#allocation3 + $0x94] sm:$0xf]
      %v5202 = vld [vmem:[#allocation3 + $0x98] sm:$0x1]
      %v5203 = vld [vmem:[#allocation3 + $0x9c] sm:$0xf]
      %v5204 = vld [vmem:[#allocation3 + $0xa0] sm:$0xf]
      %v5205 = vld [vmem:[#allocation3 + $0xa4] sm:$0x1]
      %v5206 = vld [vmem:[#allocation3 + $0xa8] sm:$0xf]
      %v5207 = vld [vmem:[#allocation3 + $0xac] sm:$0xf]
      %v5208 = vld [vmem:[#allocation3 + $0xb0] sm:$0x1]
      %v5209 = vld [vmem:[#allocation3 + $0xb4] sm:$0xf]
      %v5210 = vld [vmem:[#allocation3 + $0xb8] sm:$0xf]
      %v5211 = vld [vmem:[#allocation3 + $0xbc] sm:$0x1]
      %v5213 = vshrl.u32 %v5164, 16
      %v5215 = vrot.slane %v5213, 4
      %v5216 = vshll.u32 %v5164, 16
      %v5218 = vrot.slane %v5216, 5
      %v5219 = vor.u32 %v5215, %v5218
      %v5220 = vrot.slane %v5219, 4
      %v5222 = vshll.u32 %v5165, 16
      %v5224 = vrot.slane %v5222, 5
      %v5225 = vsel %vm1147, %v5220, %v5224
      %v5226 = vshrl.u32 %v5165, 16
      %v5228 = vrot.slane %v5226, 4
      %v5229 = vor.u32 %v5228, %v5224
      %v5230 = vrot.slane %v5229, 4
      %v5232 = vshll.u32 %v5166, 16
      %v5234 = vrot.slane %v5232, 5
      %v5235 = vsel %vm1147, %v5230, %v5234
      %v5237 = vshrl.u32 %v5167, 16
      %v5239 = vrot.slane %v5237, 4
      %v5240 = vshll.u32 %v5167, 16
      %v5242 = vrot.slane %v5240, 5
      %v5243 = vor.u32 %v5239, %v5242
      %v5244 = vrot.slane %v5243, 4
      %v5246 = vshll.u32 %v5168, 16
      %v5248 = vrot.slane %v5246, 5
      %v5249 = vsel %vm1147, %v5244, %v5248
      %v5250 = vshrl.u32 %v5168, 16
      %v5252 = vrot.slane %v5250, 4
      %v5253 = vor.u32 %v5252, %v5248
      %v5254 = vrot.slane %v5253, 4
      %v5256 = vshll.u32 %v5169, 16
      %v5258 = vrot.slane %v5256, 5
      %v5259 = vsel %vm1147, %v5254, %v5258
      %v5261 = vshrl.u32 %v5170, 16
      %v5263 = vrot.slane %v5261, 4
      %v5264 = vshll.u32 %v5170, 16
      %v5266 = vrot.slane %v5264, 5
      %v5267 = vor.u32 %v5263, %v5266
      %v5268 = vrot.slane %v5267, 4
      %v5270 = vshll.u32 %v5171, 16
      %v5272 = vrot.slane %v5270, 5
      %v5273 = vsel %vm1147, %v5268, %v5272
      %v5274 = vshrl.u32 %v5171, 16
      %v5276 = vrot.slane %v5274, 4
      %v5277 = vor.u32 %v5276, %v5272
      %v5278 = vrot.slane %v5277, 4
      %v5280 = vshll.u32 %v5172, 16
      %v5282 = vrot.slane %v5280, 5
      %v5283 = vsel %vm1147, %v5278, %v5282
      %v5285 = vshrl.u32 %v5173, 16
      %v5287 = vrot.slane %v5285, 4
      %v5288 = vshll.u32 %v5173, 16
      %v5290 = vrot.slane %v5288, 5
      %v5291 = vor.u32 %v5287, %v5290
      %v5292 = vrot.slane %v5291, 4
      %v5294 = vshll.u32 %v5174, 16
      %v5296 = vrot.slane %v5294, 5
      %v5297 = vsel %vm1147, %v5292, %v5296
      %v5298 = vshrl.u32 %v5174, 16
      %v5300 = vrot.slane %v5298, 4
      %v5301 = vor.u32 %v5300, %v5296
      %v5302 = vrot.slane %v5301, 4
      %v5304 = vshll.u32 %v5175, 16
      %v5306 = vrot.slane %v5304, 5
      %v5307 = vsel %vm1147, %v5302, %v5306
      %v5309 = vshrl.u32 %v5176, 16
      %v5311 = vrot.slane %v5309, 4
      %v5312 = vshll.u32 %v5176, 16
      %v5314 = vrot.slane %v5312, 5
      %v5315 = vor.u32 %v5311, %v5314
      %v5316 = vrot.slane %v5315, 4
      %v5318 = vshll.u32 %v5177, 16
      %v5320 = vrot.slane %v5318, 5
      %v5321 = vsel %vm1147, %v5316, %v5320
      %v5322 = vshrl.u32 %v5177, 16
      %v5324 = vrot.slane %v5322, 4
      %v5325 = vor.u32 %v5324, %v5320
      %v5326 = vrot.slane %v5325, 4
      %v5328 = vshll.u32 %v5178, 16
      %v5330 = vrot.slane %v5328, 5
      %v5331 = vsel %vm1147, %v5326, %v5330
      %v5333 = vshrl.u32 %v5179, 16
      %v5335 = vrot.slane %v5333, 4
      %v5336 = vshll.u32 %v5179, 16
      %v5338 = vrot.slane %v5336, 5
      %v5339 = vor.u32 %v5335, %v5338
      %v5340 = vrot.slane %v5339, 4
      %v5342 = vshll.u32 %v5180, 16
      %v5344 = vrot.slane %v5342, 5
      %v5345 = vsel %vm1147, %v5340, %v5344
      %v5346 = vshrl.u32 %v5180, 16
      %v5348 = vrot.slane %v5346, 4
      %v5349 = vor.u32 %v5348, %v5344
      %v5350 = vrot.slane %v5349, 4
      %v5352 = vshll.u32 %v5181, 16
      %v5354 = vrot.slane %v5352, 5
      %v5355 = vsel %vm1147, %v5350, %v5354
      %v5357 = vshrl.u32 %v5182, 16
      %v5359 = vrot.slane %v5357, 4
      %v5360 = vshll.u32 %v5182, 16
      %v5362 = vrot.slane %v5360, 5
      %v5363 = vor.u32 %v5359, %v5362
      %v5364 = vrot.slane %v5363, 4
      %v5366 = vshll.u32 %v5183, 16
      %v5368 = vrot.slane %v5366, 5
      %v5369 = vsel %vm1147, %v5364, %v5368
      %v5370 = vshrl.u32 %v5183, 16
      %v5372 = vrot.slane %v5370, 4
      %v5373 = vor.u32 %v5372, %v5368
      %v5374 = vrot.slane %v5373, 4
      %v5376 = vshll.u32 %v5184, 16
      %v5378 = vrot.slane %v5376, 5
      %v5379 = vsel %vm1147, %v5374, %v5378
      %v5381 = vshrl.u32 %v5185, 16
      %v5383 = vrot.slane %v5381, 4
      %v5384 = vshll.u32 %v5185, 16
      %v5386 = vrot.slane %v5384, 5
      %v5387 = vor.u32 %v5383, %v5386
      %v5388 = vrot.slane %v5387, 4
      %v5390 = vshll.u32 %v5186, 16
      %v5392 = vrot.slane %v5390, 5
      %v5393 = vsel %vm1147, %v5388, %v5392
      %v5394 = vshrl.u32 %v5186, 16
      %v5396 = vrot.slane %v5394, 4
      %v5397 = vor.u32 %v5396, %v5392
      %v5398 = vrot.slane %v5397, 4
      %v5400 = vshll.u32 %v5187, 16
      %v5402 = vrot.slane %v5400, 5
      %v5403 = vsel %vm1147, %v5398, %v5402
      %v5405 = vshrl.u32 %v5188, 16
      %v5407 = vrot.slane %v5405, 4
      %v5408 = vshll.u32 %v5188, 16
      %v5410 = vrot.slane %v5408, 5
      %v5411 = vor.u32 %v5407, %v5410
      %v5412 = vrot.slane %v5411, 4
      %v5414 = vshll.u32 %v5189, 16
      %v5416 = vrot.slane %v5414, 5
      %v5417 = vsel %vm1147, %v5412, %v5416
      %v5418 = vshrl.u32 %v5189, 16
      %v5420 = vrot.slane %v5418, 4
      %v5421 = vor.u32 %v5420, %v5416
      %v5422 = vrot.slane %v5421, 4
      %v5424 = vshll.u32 %v5190, 16
      %v5426 = vrot.slane %v5424, 5
      %v5427 = vsel %vm1147, %v5422, %v5426
      %v5429 = vshrl.u32 %v5191, 16
      %v5431 = vrot.slane %v5429, 4
      %v5432 = vshll.u32 %v5191, 16
      %v5434 = vrot.slane %v5432, 5
      %v5435 = vor.u32 %v5431, %v5434
      %v5436 = vrot.slane %v5435, 4
      %v5438 = vshll.u32 %v5192, 16
      %v5440 = vrot.slane %v5438, 5
      %v5441 = vsel %vm1147, %v5436, %v5440
      %v5442 = vshrl.u32 %v5192, 16
      %v5444 = vrot.slane %v5442, 4
      %v5445 = vor.u32 %v5444, %v5440
      %v5446 = vrot.slane %v5445, 4
      %v5448 = vshll.u32 %v5193, 16
      %v5450 = vrot.slane %v5448, 5
      %v5451 = vsel %vm1147, %v5446, %v5450
      %v5453 = vshrl.u32 %v5194, 16
      %v5455 = vrot.slane %v5453, 4
      %v5456 = vshll.u32 %v5194, 16
      %v5458 = vrot.slane %v5456, 5
      %v5459 = vor.u32 %v5455, %v5458
      %v5460 = vrot.slane %v5459, 4
      %v5462 = vshll.u32 %v5195, 16
      %v5464 = vrot.slane %v5462, 5
      %v5465 = vsel %vm1147, %v5460, %v5464
      %v5466 = vshrl.u32 %v5195, 16
      %v5468 = vrot.slane %v5466, 4
      %v5469 = vor.u32 %v5468, %v5464
      %v5470 = vrot.slane %v5469, 4
      %v5472 = vshll.u32 %v5196, 16
      %v5474 = vrot.slane %v5472, 5
      %v5475 = vsel %vm1147, %v5470, %v5474
      %v5477 = vshrl.u32 %v5197, 16
      %v5479 = vrot.slane %v5477, 4
      %v5480 = vshll.u32 %v5197, 16
      %v5482 = vrot.slane %v5480, 5
      %v5483 = vor.u32 %v5479, %v5482
      %v5484 = vrot.slane %v5483, 4
      %v5486 = vshll.u32 %v5198, 16
      %v5488 = vrot.slane %v5486, 5
      %v5489 = vsel %vm1147, %v5484, %v5488
      %v5490 = vshrl.u32 %v5198, 16
      %v5492 = vrot.slane %v5490, 4
      %v5493 = vor.u32 %v5492, %v5488
      %v5494 = vrot.slane %v5493, 4
      %v5496 = vshll.u32 %v5199, 16
      %v5498 = vrot.slane %v5496, 5
      %v5499 = vsel %vm1147, %v5494, %v5498
      %v5501 = vshrl.u32 %v5200, 16
      %v5503 = vrot.slane %v5501, 4
      %v5504 = vshll.u32 %v5200, 16
      %v5506 = vrot.slane %v5504, 5
      %v5507 = vor.u32 %v5503, %v5506
      %v5508 = vrot.slane %v5507, 4
      %v5510 = vshll.u32 %v5201, 16
      %v5512 = vrot.slane %v5510, 5
      %v5513 = vsel %vm1147, %v5508, %v5512
      %v5514 = vshrl.u32 %v5201, 16
      %v5516 = vrot.slane %v5514, 4
      %v5517 = vor.u32 %v5516, %v5512
      %v5518 = vrot.slane %v5517, 4
      %v5520 = vshll.u32 %v5202, 16
      %v5522 = vrot.slane %v5520, 5
      %v5523 = vsel %vm1147, %v5518, %v5522
      %v5525 = vshrl.u32 %v5203, 16
      %v5527 = vrot.slane %v5525, 4
      %v5528 = vshll.u32 %v5203, 16
      %v5530 = vrot.slane %v5528, 5
      %v5531 = vor.u32 %v5527, %v5530
      %v5532 = vrot.slane %v5531, 4
      %v5534 = vshll.u32 %v5204, 16
      %v5536 = vrot.slane %v5534, 5
      %v5537 = vsel %vm1147, %v5532, %v5536
      %v5538 = vshrl.u32 %v5204, 16
      %v5540 = vrot.slane %v5538, 4
      %v5541 = vor.u32 %v5540, %v5536
      %v5542 = vrot.slane %v5541, 4
      %v5544 = vshll.u32 %v5205, 16
      %v5546 = vrot.slane %v5544, 5
      %v5547 = vsel %vm1147, %v5542, %v5546
      %v5549 = vshrl.u32 %v5206, 16
      %v5551 = vrot.slane %v5549, 4
      %v5552 = vshll.u32 %v5206, 16
      %v5554 = vrot.slane %v5552, 5
      %v5555 = vor.u32 %v5551, %v5554
      %v5556 = vrot.slane %v5555, 4
      %v5558 = vshll.u32 %v5207, 16
      %v5560 = vrot.slane %v5558, 5
      %v5561 = vsel %vm1147, %v5556, %v5560
      %v5562 = vshrl.u32 %v5207, 16
      %v5564 = vrot.slane %v5562, 4
      %v5565 = vor.u32 %v5564, %v5560
      %v5566 = vrot.slane %v5565, 4
      %v5568 = vshll.u32 %v5208, 16
      %v5570 = vrot.slane %v5568, 5
      %v5571 = vsel %vm1147, %v5566, %v5570
      %v5573 = vshrl.u32 %v5209, 16
      %v5575 = vrot.slane %v5573, 4
      %v5576 = vshll.u32 %v5209, 16
      %v5578 = vrot.slane %v5576, 5
      %v5579 = vor.u32 %v5575, %v5578
      %v5580 = vrot.slane %v5579, 4
      %v5582 = vshll.u32 %v5210, 16
      %v5584 = vrot.slane %v5582, 5
      %v5585 = vsel %vm1147, %v5580, %v5584
      %v5586 = vshrl.u32 %v5210, 16
      %v5588 = vrot.slane %v5586, 4
      %v5589 = vor.u32 %v5588, %v5584
      %v5590 = vrot.slane %v5589, 4
      %v5592 = vshll.u32 %v5211, 16
      %v5594 = vrot.slane %v5592, 5
      %v5595 = vsel %vm1147, %v5590, %v5594
      %5596 = vrot.lane.b32.xlu0 %v5225, 8
      %v5597 = vpop.permute.xlu0 %5596
      %5598 = vrot.lane.b32.xlu0 %v5235, 8
      %v5599 = vpop.permute.xlu0 %5598
      %5600 = vrot.lane.b32.xlu0 %v5249, 8
      %v5601 = vpop.permute.xlu0 %5600
      %5602 = vrot.lane.b32.xlu0 %v5259, 8
      %v5603 = vpop.permute.xlu0 %5602
      %5604 = vrot.lane.b32.xlu0 %v5273, 8
      %v5605 = vpop.permute.xlu0 %5604
      %5606 = vrot.lane.b32.xlu0 %v5283, 8
      %v5607 = vpop.permute.xlu0 %5606
      %5608 = vrot.lane.b32.xlu0 %v5297, 8
      %v5609 = vpop.permute.xlu0 %5608
      %5610 = vrot.lane.b32.xlu0 %v5307, 8
      %v5611 = vpop.permute.xlu0 %5610
      %5612 = vrot.lane.b32.xlu0 %v5321, 8
      %v5613 = vpop.permute.xlu0 %5612
      %5614 = vrot.lane.b32.xlu0 %v5331, 8
      %v5615 = vpop.permute.xlu0 %5614
      %5616 = vrot.lane.b32.xlu0 %v5345, 8
      %v5617 = vpop.permute.xlu0 %5616
      %5618 = vrot.lane.b32.xlu0 %v5355, 8
      %v5619 = vpop.permute.xlu0 %5618
      %5620 = vrot.lane.b32.xlu0 %v5369, 8
      %v5621 = vpop.permute.xlu0 %5620
      %5622 = vrot.lane.b32.xlu0 %v5379, 8
      %v5623 = vpop.permute.xlu0 %5622
      %5624 = vrot.lane.b32.xlu0 %v5393, 8
      %v5625 = vpop.permute.xlu0 %5624
      %5626 = vrot.lane.b32.xlu0 %v5403, 8
      %v5627 = vpop.permute.xlu0 %5626
      %5628 = vrot.lane.b32.xlu0 %v5417, 8
      %v5629 = vpop.permute.xlu0 %5628
      %5630 = vrot.lane.b32.xlu0 %v5427, 8
      %v5631 = vpop.permute.xlu0 %5630
      %5632 = vrot.lane.b32.xlu0 %v5441, 8
      %v5633 = vpop.permute.xlu0 %5632
      %5634 = vrot.lane.b32.xlu0 %v5451, 8
      %v5635 = vpop.permute.xlu0 %5634
      %5636 = vrot.lane.b32.xlu0 %v5465, 8
      %v5637 = vpop.permute.xlu0 %5636
      %5638 = vrot.lane.b32.xlu0 %v5475, 8
      %v5639 = vpop.permute.xlu0 %5638
      %5640 = vrot.lane.b32.xlu0 %v5489, 8
      %v5641 = vpop.permute.xlu0 %5640
      %5642 = vrot.lane.b32.xlu0 %v5499, 8
      %v5643 = vpop.permute.xlu0 %5642
      %5644 = vrot.lane.b32.xlu0 %v5513, 8
      %v5645 = vpop.permute.xlu0 %5644
      %5646 = vrot.lane.b32.xlu0 %v5523, 8
      %v5647 = vpop.permute.xlu0 %5646
      %5648 = vrot.lane.b32.xlu0 %v5537, 8
      %v5649 = vpop.permute.xlu0 %5648
      %5650 = vrot.lane.b32.xlu0 %v5547, 8
      %v5651 = vpop.permute.xlu0 %5650
      %5652 = vrot.lane.b32.xlu0 %v5561, 8
      %v5653 = vpop.permute.xlu0 %5652
      %5654 = vrot.lane.b32.xlu0 %v5571, 8
      %v5655 = vpop.permute.xlu0 %5654
      %5656 = vrot.lane.b32.xlu0 %v5585, 8
      %v5657 = vpop.permute.xlu0 %5656
      %5658 = vrot.lane.b32.xlu0 %v5595, 8
      %v5659 = vpop.permute.xlu0 %5658
      %vm5692 = vcmask 126016
      %5693 = vst.msk [vmem:[#allocation4] sm:$0xf] %vm5692, %v5597
      %5694 = vst.msk [vmem:[#allocation4 + $0x4] sm:$0xf] %vm5692, %v5599
      %5695 = vst.msk [vmem:[#allocation4 + $0x8] sm:$0xf] %vm5692, %v5601
      %5696 = vst.msk [vmem:[#allocation4 + $0xc] sm:$0xf] %vm5692, %v5603
      %5697 = vst.msk [vmem:[#allocation4 + $0x10] sm:$0xf] %vm5692, %v5605
      %5698 = vst.msk [vmem:[#allocation4 + $0x14] sm:$0xf] %vm5692, %v5607
      %5699 = vst.msk [vmem:[#allocation4 + $0x18] sm:$0xf] %vm5692, %v5609
      %5700 = vst.msk [vmem:[#allocation4 + $0x1c] sm:$0xf] %vm5692, %v5611
      %5701 = vst.msk [vmem:[#allocation4 + $0x20] sm:$0xf] %vm5692, %v5613
      %5702 = vst.msk [vmem:[#allocation4 + $0x24] sm:$0xf] %vm5692, %v5615
      %5703 = vst.msk [vmem:[#allocation4 + $0x28] sm:$0xf] %vm5692, %v5617
      %5704 = vst.msk [vmem:[#allocation4 + $0x2c] sm:$0xf] %vm5692, %v5619
      %5705 = vst.msk [vmem:[#allocation4 + $0x30] sm:$0xf] %vm5692, %v5621
      %5706 = vst.msk [vmem:[#allocation4 + $0x34] sm:$0xf] %vm5692, %v5623
      %5707 = vst.msk [vmem:[#allocation4 + $0x38] sm:$0xf] %vm5692, %v5625
      %5708 = vst.msk [vmem:[#allocation4 + $0x3c] sm:$0xf] %vm5692, %v5627
      %5709 = vst.msk [vmem:[#allocation4 + $0x40] sm:$0xf] %vm5692, %v5629
      %5710 = vst.msk [vmem:[#allocation4 + $0x44] sm:$0xf] %vm5692, %v5631
      %5711 = vst.msk [vmem:[#allocation4 + $0x48] sm:$0xf] %vm5692, %v5633
      %5712 = vst.msk [vmem:[#allocation4 + $0x4c] sm:$0xf] %vm5692, %v5635
      %5713 = vst.msk [vmem:[#allocation4 + $0x50] sm:$0xf] %vm5692, %v5637
      %5714 = vst.msk [vmem:[#allocation4 + $0x54] sm:$0xf] %vm5692, %v5639
      %5715 = vst.msk [vmem:[#allocation4 + $0x58] sm:$0xf] %vm5692, %v5641
      %5716 = vst.msk [vmem:[#allocation4 + $0x5c] sm:$0xf] %vm5692, %v5643
      %5717 = vst.msk [vmem:[#allocation4 + $0x60] sm:$0xf] %vm5692, %v5645
      %5718 = vst.msk [vmem:[#allocation4 + $0x64] sm:$0xf] %vm5692, %v5647
      %5719 = vst.msk [vmem:[#allocation4 + $0x68] sm:$0xf] %vm5692, %v5649
      %5720 = vst.msk [vmem:[#allocation4 + $0x6c] sm:$0xf] %vm5692, %v5651
      %5721 = vst.msk [vmem:[#allocation4 + $0x70] sm:$0xf] %vm5692, %v5653
      %5722 = vst.msk [vmem:[#allocation4 + $0x74] sm:$0xf] %vm5692, %v5655
      %5723 = vst.msk [vmem:[#allocation4 + $0x78] sm:$0xf] %vm5692, %v5657
      %5724 = vst.msk [vmem:[#allocation4 + $0x7c] sm:$0xf] %vm5692, %v5659
      %v5725 = vld [vmem:[#allocation3] sm:$0xe]
      %v5726 = vld [vmem:[#allocation3 + $0x4] sm:$0xf]
      %v5727 = vld [vmem:[#allocation3 + $0x8] sm:$0x1]
      %v5728 = vld [vmem:[#allocation3 + $0xc] sm:$0xe]
      %v5729 = vld [vmem:[#allocation3 + $0x10] sm:$0xf]
      %v5730 = vld [vmem:[#allocation3 + $0x14] sm:$0x1]
      %v5731 = vld [vmem:[#allocation3 + $0x18] sm:$0xe]
      %v5732 = vld [vmem:[#allocation3 + $0x1c] sm:$0xf]
      %v5733 = vld [vmem:[#allocation3 + $0x20] sm:$0x1]
      %v5734 = vld [vmem:[#allocation3 + $0x24] sm:$0xe]
      %v5735 = vld [vmem:[#allocation3 + $0x28] sm:$0xf]
      %v5736 = vld [vmem:[#allocation3 + $0x2c] sm:$0x1]
      %v5737 = vld [vmem:[#allocation3 + $0x30] sm:$0xe]
      %v5738 = vld [vmem:[#allocation3 + $0x34] sm:$0xf]
      %v5739 = vld [vmem:[#allocation3 + $0x38] sm:$0x1]
      %v5740 = vld [vmem:[#allocation3 + $0x3c] sm:$0xe]
      %v5741 = vld [vmem:[#allocation3 + $0x40] sm:$0xf]
      %v5742 = vld [vmem:[#allocation3 + $0x44] sm:$0x1]
      %v5743 = vld [vmem:[#allocation3 + $0x48] sm:$0xe]
      %v5744 = vld [vmem:[#allocation3 + $0x4c] sm:$0xf]
      %v5745 = vld [vmem:[#allocation3 + $0x50] sm:$0x1]
      %v5746 = vld [vmem:[#allocation3 + $0x54] sm:$0xe]
      %v5747 = vld [vmem:[#allocation3 + $0x58] sm:$0xf]
      %v5748 = vld [vmem:[#allocation3 + $0x5c] sm:$0x1]
      %v5749 = vld [vmem:[#allocation3 + $0x60] sm:$0xe]
      %v5750 = vld [vmem:[#allocation3 + $0x64] sm:$0xf]
      %v5751 = vld [vmem:[#allocation3 + $0x68] sm:$0x1]
      %v5752 = vld [vmem:[#allocation3 + $0x6c] sm:$0xe]
      %v5753 = vld [vmem:[#allocation3 + $0x70] sm:$0xf]
      %v5754 = vld [vmem:[#allocation3 + $0x74] sm:$0x1]
      %v5755 = vld [vmem:[#allocation3 + $0x78] sm:$0xe]
      %v5756 = vld [vmem:[#allocation3 + $0x7c] sm:$0xf]
      %v5757 = vld [vmem:[#allocation3 + $0x80] sm:$0x1]
      %v5758 = vld [vmem:[#allocation3 + $0x84] sm:$0xe]
      %v5759 = vld [vmem:[#allocation3 + $0x88] sm:$0xf]
      %v5760 = vld [vmem:[#allocation3 + $0x8c] sm:$0x1]
      %v5761 = vld [vmem:[#allocation3 + $0x90] sm:$0xe]
      %v5762 = vld [vmem:[#allocation3 + $0x94] sm:$0xf]
      %v5763 = vld [vmem:[#allocation3 + $0x98] sm:$0x1]
      %v5764 = vld [vmem:[#allocation3 + $0x9c] sm:$0xe]
      %v5765 = vld [vmem:[#allocation3 + $0xa0] sm:$0xf]
      %v5766 = vld [vmem:[#allocation3 + $0xa4] sm:$0x1]
      %v5767 = vld [vmem:[#allocation3 + $0xa8] sm:$0xe]
      %v5768 = vld [vmem:[#allocation3 + $0xac] sm:$0xf]
      %v5769 = vld [vmem:[#allocation3 + $0xb0] sm:$0x1]
      %v5770 = vld [vmem:[#allocation3 + $0xb4] sm:$0xe]
      %v5771 = vld [vmem:[#allocation3 + $0xb8] sm:$0xf]
      %v5772 = vld [vmem:[#allocation3 + $0xbc] sm:$0x1]
      %v5821 = vrot.slane %v5725, 5
      %v5822 = vrot.slane %v5821, 4
      %v5823 = vrot.slane %v5726, 5
      %v5824 = vsel %vm1759, %v5822, %v5823
      %v5825 = vrot.slane %v5823, 4
      %v5826 = vrot.slane %v5727, 5
      %v5827 = vsel %vm1759, %v5825, %v5826
      %v5828 = vrot.slane %v5728, 5
      %v5829 = vrot.slane %v5828, 4
      %v5830 = vrot.slane %v5729, 5
      %v5831 = vsel %vm1759, %v5829, %v5830
      %v5832 = vrot.slane %v5830, 4
      %v5833 = vrot.slane %v5730, 5
      %v5834 = vsel %vm1759, %v5832, %v5833
      %v5835 = vrot.slane %v5731, 5
      %v5836 = vrot.slane %v5835, 4
      %v5837 = vrot.slane %v5732, 5
      %v5838 = vsel %vm1759, %v5836, %v5837
      %v5839 = vrot.slane %v5837, 4
      %v5840 = vrot.slane %v5733, 5
      %v5841 = vsel %vm1759, %v5839, %v5840
      %v5842 = vrot.slane %v5734, 5
      %v5843 = vrot.slane %v5842, 4
      %v5844 = vrot.slane %v5735, 5
      %v5845 = vsel %vm1759, %v5843, %v5844
      %v5846 = vrot.slane %v5844, 4
      %v5847 = vrot.slane %v5736, 5
      %v5848 = vsel %vm1759, %v5846, %v5847
      %v5849 = vrot.slane %v5737, 5
      %v5850 = vrot.slane %v5849, 4
      %v5851 = vrot.slane %v5738, 5
      %v5852 = vsel %vm1759, %v5850, %v5851
      %v5853 = vrot.slane %v5851, 4
      %v5854 = vrot.slane %v5739, 5
      %v5855 = vsel %vm1759, %v5853, %v5854
      %v5856 = vrot.slane %v5740, 5
      %v5857 = vrot.slane %v5856, 4
      %v5858 = vrot.slane %v5741, 5
      %v5859 = vsel %vm1759, %v5857, %v5858
      %v5860 = vrot.slane %v5858, 4
      %v5861 = vrot.slane %v5742, 5
      %v5862 = vsel %vm1759, %v5860, %v5861
      %v5863 = vrot.slane %v5743, 5
      %v5864 = vrot.slane %v5863, 4
      %v5865 = vrot.slane %v5744, 5
      %v5866 = vsel %vm1759, %v5864, %v5865
      %v5867 = vrot.slane %v5865, 4
      %v5868 = vrot.slane %v5745, 5
      %v5869 = vsel %vm1759, %v5867, %v5868
      %v5870 = vrot.slane %v5746, 5
      %v5871 = vrot.slane %v5870, 4
      %v5872 = vrot.slane %v5747, 5
      %v5873 = vsel %vm1759, %v5871, %v5872
      %v5874 = vrot.slane %v5872, 4
      %v5875 = vrot.slane %v5748, 5
      %v5876 = vsel %vm1759, %v5874, %v5875
      %v5877 = vrot.slane %v5749, 5
      %v5878 = vrot.slane %v5877, 4
      %v5879 = vrot.slane %v5750, 5
      %v5880 = vsel %vm1759, %v5878, %v5879
      %v5881 = vrot.slane %v5879, 4
      %v5882 = vrot.slane %v5751, 5
      %v5883 = vsel %vm1759, %v5881, %v5882
      %v5884 = vrot.slane %v5752, 5
      %v5885 = vrot.slane %v5884, 4
      %v5886 = vrot.slane %v5753, 5
      %v5887 = vsel %vm1759, %v5885, %v5886
      %v5888 = vrot.slane %v5886, 4
      %v5889 = vrot.slane %v5754, 5
      %v5890 = vsel %vm1759, %v5888, %v5889
      %v5891 = vrot.slane %v5755, 5
      %v5892 = vrot.slane %v5891, 4
      %v5893 = vrot.slane %v5756, 5
      %v5894 = vsel %vm1759, %v5892, %v5893
      %v5895 = vrot.slane %v5893, 4
      %v5896 = vrot.slane %v5757, 5
      %v5897 = vsel %vm1759, %v5895, %v5896
      %v5898 = vrot.slane %v5758, 5
      %v5899 = vrot.slane %v5898, 4
      %v5900 = vrot.slane %v5759, 5
      %v5901 = vsel %vm1759, %v5899, %v5900
      %v5902 = vrot.slane %v5900, 4
      %v5903 = vrot.slane %v5760, 5
      %v5904 = vsel %vm1759, %v5902, %v5903
      %v5905 = vrot.slane %v5761, 5
      %v5906 = vrot.slane %v5905, 4
      %v5907 = vrot.slane %v5762, 5
      %v5908 = vsel %vm1759, %v5906, %v5907
      %v5909 = vrot.slane %v5907, 4
      %v5910 = vrot.slane %v5763, 5
      %v5911 = vsel %vm1759, %v5909, %v5910
      %v5912 = vrot.slane %v5764, 5
      %v5913 = vrot.slane %v5912, 4
      %v5914 = vrot.slane %v5765, 5
      %v5915 = vsel %vm1759, %v5913, %v5914
      %v5916 = vrot.slane %v5914, 4
      %v5917 = vrot.slane %v5766, 5
      %v5918 = vsel %vm1759, %v5916, %v5917
      %v5919 = vrot.slane %v5767, 5
      %v5920 = vrot.slane %v5919, 4
      %v5921 = vrot.slane %v5768, 5
      %v5922 = vsel %vm1759, %v5920, %v5921
      %v5923 = vrot.slane %v5921, 4
      %v5924 = vrot.slane %v5769, 5
      %v5925 = vsel %vm1759, %v5923, %v5924
      %v5926 = vrot.slane %v5770, 5
      %v5927 = vrot.slane %v5926, 4
      %v5928 = vrot.slane %v5771, 5
      %v5929 = vsel %vm1759, %v5927, %v5928
      %v5930 = vrot.slane %v5928, 4
      %v5931 = vrot.slane %v5772, 5
      %v5932 = vsel %vm1759, %v5930, %v5931
      %5933 = vrot.lane.b32.xlu0 %v5824, 16
      %v5934 = vpop.permute.xlu0 %5933
      %5935 = vrot.lane.b32.xlu0 %v5827, 16
      %v5936 = vpop.permute.xlu0 %5935
      %5937 = vrot.lane.b32.xlu0 %v5831, 16
      %v5938 = vpop.permute.xlu0 %5937
      %5939 = vrot.lane.b32.xlu0 %v5834, 16
      %v5940 = vpop.permute.xlu0 %5939
      %5941 = vrot.lane.b32.xlu0 %v5838, 16
      %v5942 = vpop.permute.xlu0 %5941
      %5943 = vrot.lane.b32.xlu0 %v5841, 16
      %v5944 = vpop.permute.xlu0 %5943
      %5945 = vrot.lane.b32.xlu0 %v5845, 16
      %v5946 = vpop.permute.xlu0 %5945
      %5947 = vrot.lane.b32.xlu0 %v5848, 16
      %v5948 = vpop.permute.xlu0 %5947
      %5949 = vrot.lane.b32.xlu0 %v5852, 16
      %v5950 = vpop.permute.xlu0 %5949
      %5951 = vrot.lane.b32.xlu0 %v5855, 16
      %v5952 = vpop.permute.xlu0 %5951
      %5953 = vrot.lane.b32.xlu0 %v5859, 16
      %v5954 = vpop.permute.xlu0 %5953
      %5955 = vrot.lane.b32.xlu0 %v5862, 16
      %v5956 = vpop.permute.xlu0 %5955
      %5957 = vrot.lane.b32.xlu0 %v5866, 16
      %v5958 = vpop.permute.xlu0 %5957
      %5959 = vrot.lane.b32.xlu0 %v5869, 16
      %v5960 = vpop.permute.xlu0 %5959
      %5961 = vrot.lane.b32.xlu0 %v5873, 16
      %v5962 = vpop.permute.xlu0 %5961
      %5963 = vrot.lane.b32.xlu0 %v5876, 16
      %v5964 = vpop.permute.xlu0 %5963
      %5965 = vrot.lane.b32.xlu0 %v5880, 16
      %v5966 = vpop.permute.xlu0 %5965
      %5967 = vrot.lane.b32.xlu0 %v5883, 16
      %v5968 = vpop.permute.xlu0 %5967
      %5969 = vrot.lane.b32.xlu0 %v5887, 16
      %v5970 = vpop.permute.xlu0 %5969
      %5971 = vrot.lane.b32.xlu0 %v5890, 16
      %v5972 = vpop.permute.xlu0 %5971
      %5973 = vrot.lane.b32.xlu0 %v5894, 16
      %v5974 = vpop.permute.xlu0 %5973
      %5975 = vrot.lane.b32.xlu0 %v5897, 16
      %v5976 = vpop.permute.xlu0 %5975
      %5977 = vrot.lane.b32.xlu0 %v5901, 16
      %v5978 = vpop.permute.xlu0 %5977
      %5979 = vrot.lane.b32.xlu0 %v5904, 16
      %v5980 = vpop.permute.xlu0 %5979
      %5981 = vrot.lane.b32.xlu0 %v5908, 16
      %v5982 = vpop.permute.xlu0 %5981
      %5983 = vrot.lane.b32.xlu0 %v5911, 16
      %v5984 = vpop.permute.xlu0 %5983
      %5985 = vrot.lane.b32.xlu0 %v5915, 16
      %v5986 = vpop.permute.xlu0 %5985
      %5987 = vrot.lane.b32.xlu0 %v5918, 16
      %v5988 = vpop.permute.xlu0 %5987
      %5989 = vrot.lane.b32.xlu0 %v5922, 16
      %v5990 = vpop.permute.xlu0 %5989
      %5991 = vrot.lane.b32.xlu0 %v5925, 16
      %v5992 = vpop.permute.xlu0 %5991
      %5993 = vrot.lane.b32.xlu0 %v5929, 16
      %v5994 = vpop.permute.xlu0 %5993
      %5995 = vrot.lane.b32.xlu0 %v5932, 16
      %v5996 = vpop.permute.xlu0 %5995
      %vm6029 = vcmask 191616
      %6030 = vst.msk [vmem:[#allocation4] sm:$0xf] %vm6029, %v5934
      %6031 = vst.msk [vmem:[#allocation4 + $0x4] sm:$0xf] %vm6029, %v5936
      %6032 = vst.msk [vmem:[#allocation4 + $0x8] sm:$0xf] %vm6029, %v5938
      %6033 = vst.msk [vmem:[#allocation4 + $0xc] sm:$0xf] %vm6029, %v5940
      %6034 = vst.msk [vmem:[#allocation4 + $0x10] sm:$0xf] %vm6029, %v5942
      %6035 = vst.msk [vmem:[#allocation4 + $0x14] sm:$0xf] %vm6029, %v5944
      %6036 = vst.msk [vmem:[#allocation4 + $0x18] sm:$0xf] %vm6029, %v5946
      %6037 = vst.msk [vmem:[#allocation4 + $0x1c] sm:$0xf] %vm6029, %v5948
      %6038 = vst.msk [vmem:[#allocation4 + $0x20] sm:$0xf] %vm6029, %v5950
      %6039 = vst.msk [vmem:[#allocation4 + $0x24] sm:$0xf] %vm6029, %v5952
      %6040 = vst.msk [vmem:[#allocation4 + $0x28] sm:$0xf] %vm6029, %v5954
      %6041 = vst.msk [vmem:[#allocation4 + $0x2c] sm:$0xf] %vm6029, %v5956
      %6042 = vst.msk [vmem:[#allocation4 + $0x30] sm:$0xf] %vm6029, %v5958
      %6043 = vst.msk [vmem:[#allocation4 + $0x34] sm:$0xf] %vm6029, %v5960
      %6044 = vst.msk [vmem:[#allocation4 + $0x38] sm:$0xf] %vm6029, %v5962
      %6045 = vst.msk [vmem:[#allocation4 + $0x3c] sm:$0xf] %vm6029, %v5964
      %6046 = vst.msk [vmem:[#allocation4 + $0x40] sm:$0xf] %vm6029, %v5966
      %6047 = vst.msk [vmem:[#allocation4 + $0x44] sm:$0xf] %vm6029, %v5968
      %6048 = vst.msk [vmem:[#allocation4 + $0x48] sm:$0xf] %vm6029, %v5970
      %6049 = vst.msk [vmem:[#allocation4 + $0x4c] sm:$0xf] %vm6029, %v5972
      %6050 = vst.msk [vmem:[#allocation4 + $0x50] sm:$0xf] %vm6029, %v5974
      %6051 = vst.msk [vmem:[#allocation4 + $0x54] sm:$0xf] %vm6029, %v5976
      %6052 = vst.msk [vmem:[#allocation4 + $0x58] sm:$0xf] %vm6029, %v5978
      %6053 = vst.msk [vmem:[#allocation4 + $0x5c] sm:$0xf] %vm6029, %v5980
      %6054 = vst.msk [vmem:[#allocation4 + $0x60] sm:$0xf] %vm6029, %v5982
      %6055 = vst.msk [vmem:[#allocation4 + $0x64] sm:$0xf] %vm6029, %v5984
      %6056 = vst.msk [vmem:[#allocation4 + $0x68] sm:$0xf] %vm6029, %v5986
      %6057 = vst.msk [vmem:[#allocation4 + $0x6c] sm:$0xf] %vm6029, %v5988
      %6058 = vst.msk [vmem:[#allocation4 + $0x70] sm:$0xf] %vm6029, %v5990
      %6059 = vst.msk [vmem:[#allocation4 + $0x74] sm:$0xf] %vm6029, %v5992
      %6060 = vst.msk [vmem:[#allocation4 + $0x78] sm:$0xf] %vm6029, %v5994
      %6061 = vst.msk [vmem:[#allocation4 + $0x7c] sm:$0xf] %vm6029, %v5996
      %v6062 = vld [vmem:[%s4985] sm:$0xf]
      %v6063 = vld [vmem:[%s4985 + $0x4] sm:$0xf]
      %v6064 = vld [vmem:[%s4985 + $0xc] sm:$0xf]
      %v6065 = vld [vmem:[%s4985 + $0x10] sm:$0xf]
      %v6066 = vld [vmem:[%s4985 + $0x18] sm:$0xf]
      %v6067 = vld [vmem:[%s4985 + $0x1c] sm:$0xf]
      %v6068 = vld [vmem:[%s4985 + $0x24] sm:$0xf]
      %v6069 = vld [vmem:[%s4985 + $0x28] sm:$0xf]
      %v6070 = vld [vmem:[%s4985 + $0x30] sm:$0xf]
      %v6071 = vld [vmem:[%s4985 + $0x34] sm:$0xf]
      %v6072 = vld [vmem:[%s4985 + $0x3c] sm:$0xf]
      %v6073 = vld [vmem:[%s4985 + $0x40] sm:$0xf]
      %v6074 = vld [vmem:[%s4985 + $0x48] sm:$0xf]
      %v6075 = vld [vmem:[%s4985 + $0x4c] sm:$0xf]
      %v6076 = vld [vmem:[%s4985 + $0x54] sm:$0xf]
      %v6077 = vld [vmem:[%s4985 + $0x58] sm:$0xf]
      %v6078 = vld [vmem:[%s4985 + $0x60] sm:$0xf]
      %v6079 = vld [vmem:[%s4985 + $0x64] sm:$0xf]
      %v6080 = vld [vmem:[%s4985 + $0x6c] sm:$0xf]
      %v6081 = vld [vmem:[%s4985 + $0x70] sm:$0xf]
      %v6082 = vld [vmem:[%s4985 + $0x78] sm:$0xf]
      %v6083 = vld [vmem:[%s4985 + $0x7c] sm:$0xf]
      %v6084 = vld [vmem:[%s4985 + $0x84] sm:$0xf]
      %v6085 = vld [vmem:[%s4985 + $0x88] sm:$0xf]
      %v6086 = vld [vmem:[%s4985 + $0x90] sm:$0xf]
      %v6087 = vld [vmem:[%s4985 + $0x94] sm:$0xf]
      %v6088 = vld [vmem:[%s4985 + $0x9c] sm:$0xf]
      %v6089 = vld [vmem:[%s4985 + $0xa0] sm:$0xf]
      %v6090 = vld [vmem:[%s4985 + $0xa8] sm:$0xf]
      %v6091 = vld [vmem:[%s4985 + $0xac] sm:$0xf]
      %v6092 = vld [vmem:[%s4985 + $0xb4] sm:$0xf]
      %v6093 = vld [vmem:[%s4985 + $0xb8] sm:$0xf]
      %6126 = vrot.lane.b32.xlu0 %v6062, 24
      %v6127 = vpop.permute.xlu0 %6126
      %6128 = vrot.lane.b32.xlu0 %v6063, 24
      %v6129 = vpop.permute.xlu0 %6128
      %6130 = vrot.lane.b32.xlu0 %v6064, 24
      %v6131 = vpop.permute.xlu0 %6130
      %6132 = vrot.lane.b32.xlu0 %v6065, 24
      %v6133 = vpop.permute.xlu0 %6132
      %6134 = vrot.lane.b32.xlu0 %v6066, 24
      %v6135 = vpop.permute.xlu0 %6134
      %6136 = vrot.lane.b32.xlu0 %v6067, 24
      %v6137 = vpop.permute.xlu0 %6136
      %6138 = vrot.lane.b32.xlu0 %v6068, 24
      %v6139 = vpop.permute.xlu0 %6138
      %6140 = vrot.lane.b32.xlu0 %v6069, 24
      %v6141 = vpop.permute.xlu0 %6140
      %6142 = vrot.lane.b32.xlu0 %v6070, 24
      %v6143 = vpop.permute.xlu0 %6142
      %6144 = vrot.lane.b32.xlu0 %v6071, 24
      %v6145 = vpop.permute.xlu0 %6144
      %6146 = vrot.lane.b32.xlu0 %v6072, 24
      %v6147 = vpop.permute.xlu0 %6146
      %6148 = vrot.lane.b32.xlu0 %v6073, 24
      %v6149 = vpop.permute.xlu0 %6148
      %6150 = vrot.lane.b32.xlu0 %v6074, 24
      %v6151 = vpop.permute.xlu0 %6150
      %6152 = vrot.lane.b32.xlu0 %v6075, 24
      %v6153 = vpop.permute.xlu0 %6152
      %6154 = vrot.lane.b32.xlu0 %v6076, 24
      %v6155 = vpop.permute.xlu0 %6154
      %6156 = vrot.lane.b32.xlu0 %v6077, 24
      %v6157 = vpop.permute.xlu0 %6156
      %6158 = vrot.lane.b32.xlu0 %v6078, 24
      %v6159 = vpop.permute.xlu0 %6158
      %6160 = vrot.lane.b32.xlu0 %v6079, 24
      %v6161 = vpop.permute.xlu0 %6160
      %6162 = vrot.lane.b32.xlu0 %v6080, 24
      %v6163 = vpop.permute.xlu0 %6162
      %6164 = vrot.lane.b32.xlu0 %v6081, 24
      %v6165 = vpop.permute.xlu0 %6164
      %6166 = vrot.lane.b32.xlu0 %v6082, 24
      %v6167 = vpop.permute.xlu0 %6166
      %6168 = vrot.lane.b32.xlu0 %v6083, 24
      %v6169 = vpop.permute.xlu0 %6168
      %6170 = vrot.lane.b32.xlu0 %v6084, 24
      %v6171 = vpop.permute.xlu0 %6170
      %6172 = vrot.lane.b32.xlu0 %v6085, 24
      %v6173 = vpop.permute.xlu0 %6172
      %6174 = vrot.lane.b32.xlu0 %v6086, 24
      %v6175 = vpop.permute.xlu0 %6174
      %6176 = vrot.lane.b32.xlu0 %v6087, 24
      %v6177 = vpop.permute.xlu0 %6176
      %6178 = vrot.lane.b32.xlu0 %v6088, 24
      %v6179 = vpop.permute.xlu0 %6178
      %6180 = vrot.lane.b32.xlu0 %v6089, 24
      %v6181 = vpop.permute.xlu0 %6180
      %6182 = vrot.lane.b32.xlu0 %v6090, 24
      %v6183 = vpop.permute.xlu0 %6182
      %6184 = vrot.lane.b32.xlu0 %v6091, 24
      %v6185 = vpop.permute.xlu0 %6184
      %6186 = vrot.lane.b32.xlu0 %v6092, 24
      %v6187 = vpop.permute.xlu0 %6186
      %6188 = vrot.lane.b32.xlu0 %v6093, 24
      %v6189 = vpop.permute.xlu0 %6188
      %vm6222 = vcmask 257216
      %6223 = vst.msk [vmem:[#allocation4] sm:$0xf] %vm6222, %v6127
      %6224 = vst.msk [vmem:[#allocation4 + $0x4] sm:$0xf] %vm6222, %v6129
      %6225 = vst.msk [vmem:[#allocation4 + $0x8] sm:$0xf] %vm6222, %v6131
      %6226 = vst.msk [vmem:[#allocation4 + $0xc] sm:$0xf] %vm6222, %v6133
      %6227 = vst.msk [vmem:[#allocation4 + $0x10] sm:$0xf] %vm6222, %v6135
      %6228 = vst.msk [vmem:[#allocation4 + $0x14] sm:$0xf] %vm6222, %v6137
      %6229 = vst.msk [vmem:[#allocation4 + $0x18] sm:$0xf] %vm6222, %v6139
      %6230 = vst.msk [vmem:[#allocation4 + $0x1c] sm:$0xf] %vm6222, %v6141
      %6231 = vst.msk [vmem:[#allocation4 + $0x20] sm:$0xf] %vm6222, %v6143
      %6232 = vst.msk [vmem:[#allocation4 + $0x24] sm:$0xf] %vm6222, %v6145
      %6233 = vst.msk [vmem:[#allocation4 + $0x28] sm:$0xf] %vm6222, %v6147
      %6234 = vst.msk [vmem:[#allocation4 + $0x2c] sm:$0xf] %vm6222, %v6149
      %6235 = vst.msk [vmem:[#allocation4 + $0x30] sm:$0xf] %vm6222, %v6151
      %6236 = vst.msk [vmem:[#allocation4 + $0x34] sm:$0xf] %vm6222, %v6153
      %6237 = vst.msk [vmem:[#allocation4 + $0x38] sm:$0xf] %vm6222, %v6155
      %6238 = vst.msk [vmem:[#allocation4 + $0x3c] sm:$0xf] %vm6222, %v6157
      %6239 = vst.msk [vmem:[#allocation4 + $0x40] sm:$0xf] %vm6222, %v6159
      %6240 = vst.msk [vmem:[#allocation4 + $0x44] sm:$0xf] %vm6222, %v6161
      %6241 = vst.msk [vmem:[#allocation4 + $0x48] sm:$0xf] %vm6222, %v6163
      %6242 = vst.msk [vmem:[#allocation4 + $0x4c] sm:$0xf] %vm6222, %v6165
      %6243 = vst.msk [vmem:[#allocation4 + $0x50] sm:$0xf] %vm6222, %v6167
      %6244 = vst.msk [vmem:[#allocation4 + $0x54] sm:$0xf] %vm6222, %v6169
      %6245 = vst.msk [vmem:[#allocation4 + $0x58] sm:$0xf] %vm6222, %v6171
      %6246 = vst.msk [vmem:[#allocation4 + $0x5c] sm:$0xf] %vm6222, %v6173
      %6247 = vst.msk [vmem:[#allocation4 + $0x60] sm:$0xf] %vm6222, %v6175
      %6248 = vst.msk [vmem:[#allocation4 + $0x64] sm:$0xf] %vm6222, %v6177
      %6249 = vst.msk [vmem:[#allocation4 + $0x68] sm:$0xf] %vm6222, %v6179
      %6250 = vst.msk [vmem:[#allocation4 + $0x6c] sm:$0xf] %vm6222, %v6181
      %6251 = vst.msk [vmem:[#allocation4 + $0x70] sm:$0xf] %vm6222, %v6183
      %6252 = vst.msk [vmem:[#allocation4 + $0x74] sm:$0xf] %vm6222, %v6185
      %6253 = vst.msk [vmem:[#allocation4 + $0x78] sm:$0xf] %vm6222, %v6187
      %6254 = vst.msk [vmem:[#allocation4 + $0x7c] sm:$0xf] %vm6222, %v6189
      %v6255 = vld [vmem:[%s4985] sm:$0xf]
      %v6256 = vld [vmem:[%s4985 + $0x4] sm:$0xf]
      %v6257 = vld [vmem:[%s4985 + $0x8] sm:$0x1]
      %v6258 = vld [vmem:[%s4985 + $0xc] sm:$0xf]
      %v6259 = vld [vmem:[%s4985 + $0x10] sm:$0xf]
      %v6260 = vld [vmem:[%s4985 + $0x14] sm:$0x1]
      %v6261 = vld [vmem:[%s4985 + $0x18] sm:$0xf]
      %v6262 = vld [vmem:[%s4985 + $0x1c] sm:$0xf]
      %v6263 = vld [vmem:[%s4985 + $0x20] sm:$0x1]
      %v6264 = vld [vmem:[%s4985 + $0x24] sm:$0xf]
      %v6265 = vld [vmem:[%s4985 + $0x28] sm:$0xf]
      %v6266 = vld [vmem:[%s4985 + $0x2c] sm:$0x1]
      %v6267 = vld [vmem:[%s4985 + $0x30] sm:$0xf]
      %v6268 = vld [vmem:[%s4985 + $0x34] sm:$0xf]
      %v6269 = vld [vmem:[%s4985 + $0x38] sm:$0x1]
      %v6270 = vld [vmem:[%s4985 + $0x3c] sm:$0xf]
      %v6271 = vld [vmem:[%s4985 + $0x40] sm:$0xf]
      %v6272 = vld [vmem:[%s4985 + $0x44] sm:$0x1]
      %v6273 = vld [vmem:[%s4985 + $0x48] sm:$0xf]
      %v6274 = vld [vmem:[%s4985 + $0x4c] sm:$0xf]
      %v6275 = vld [vmem:[%s4985 + $0x50] sm:$0x1]
      %v6276 = vld [vmem:[%s4985 + $0x54] sm:$0xf]
      %v6277 = vld [vmem:[%s4985 + $0x58] sm:$0xf]
      %v6278 = vld [vmem:[%s4985 + $0x5c] sm:$0x1]
      %v6279 = vld [vmem:[%s4985 + $0x60] sm:$0xf]
      %v6280 = vld [vmem:[%s4985 + $0x64] sm:$0xf]
      %v6281 = vld [vmem:[%s4985 + $0x68] sm:$0x1]
      %v6282 = vld [vmem:[%s4985 + $0x6c] sm:$0xf]
      %v6283 = vld [vmem:[%s4985 + $0x70] sm:$0xf]
      %v6284 = vld [vmem:[%s4985 + $0x74] sm:$0x1]
      %v6285 = vld [vmem:[%s4985 + $0x78] sm:$0xf]
      %v6286 = vld [vmem:[%s4985 + $0x7c] sm:$0xf]
      %v6287 = vld [vmem:[%s4985 + $0x80] sm:$0x1]
      %v6288 = vld [vmem:[%s4985 + $0x84] sm:$0xf]
      %v6289 = vld [vmem:[%s4985 + $0x88] sm:$0xf]
      %v6290 = vld [vmem:[%s4985 + $0x8c] sm:$0x1]
      %v6291 = vld [vmem:[%s4985 + $0x90] sm:$0xf]
      %v6292 = vld [vmem:[%s4985 + $0x94] sm:$0xf]
      %v6293 = vld [vmem:[%s4985 + $0x98] sm:$0x1]
      %v6294 = vld [vmem:[%s4985 + $0x9c] sm:$0xf]
      %v6295 = vld [vmem:[%s4985 + $0xa0] sm:$0xf]
      %v6296 = vld [vmem:[%s4985 + $0xa4] sm:$0x1]
      %v6297 = vld [vmem:[%s4985 + $0xa8] sm:$0xf]
      %v6298 = vld [vmem:[%s4985 + $0xac] sm:$0xf]
      %v6299 = vld [vmem:[%s4985 + $0xb0] sm:$0x1]
      %v6300 = vld [vmem:[%s4985 + $0xb4] sm:$0xf]
      %v6301 = vld [vmem:[%s4985 + $0xb8] sm:$0xf]
      %v6302 = vld [vmem:[%s4985 + $0xbc] sm:$0x1]
      %v6304 = vshrl.u32 %v6255, 16
      %v6306 = vrot.slane %v6304, 4
      %v6307 = vshll.u32 %v6255, 16
      %v6309 = vrot.slane %v6307, 5
      %v6310 = vor.u32 %v6306, %v6309
      %v6311 = vrot.slane %v6310, 4
      %v6313 = vshll.u32 %v6256, 16
      %v6315 = vrot.slane %v6313, 5
      %v6316 = vsel %vm1147, %v6311, %v6315
      %v6317 = vshrl.u32 %v6256, 16
      %v6319 = vrot.slane %v6317, 4
      %v6320 = vor.u32 %v6319, %v6315
      %v6321 = vrot.slane %v6320, 4
      %v6323 = vshll.u32 %v6257, 16
      %v6325 = vrot.slane %v6323, 5
      %v6326 = vsel %vm1147, %v6321, %v6325
      %v6328 = vshrl.u32 %v6258, 16
      %v6330 = vrot.slane %v6328, 4
      %v6331 = vshll.u32 %v6258, 16
      %v6333 = vrot.slane %v6331, 5
      %v6334 = vor.u32 %v6330, %v6333
      %v6335 = vrot.slane %v6334, 4
      %v6337 = vshll.u32 %v6259, 16
      %v6339 = vrot.slane %v6337, 5
      %v6340 = vsel %vm1147, %v6335, %v6339
      %v6341 = vshrl.u32 %v6259, 16
      %v6343 = vrot.slane %v6341, 4
      %v6344 = vor.u32 %v6343, %v6339
      %v6345 = vrot.slane %v6344, 4
      %v6347 = vshll.u32 %v6260, 16
      %v6349 = vrot.slane %v6347, 5
      %v6350 = vsel %vm1147, %v6345, %v6349
      %v6352 = vshrl.u32 %v6261, 16
      %v6354 = vrot.slane %v6352, 4
      %v6355 = vshll.u32 %v6261, 16
      %v6357 = vrot.slane %v6355, 5
      %v6358 = vor.u32 %v6354, %v6357
      %v6359 = vrot.slane %v6358, 4
      %v6361 = vshll.u32 %v6262, 16
      %v6363 = vrot.slane %v6361, 5
      %v6364 = vsel %vm1147, %v6359, %v6363
      %v6365 = vshrl.u32 %v6262, 16
      %v6367 = vrot.slane %v6365, 4
      %v6368 = vor.u32 %v6367, %v6363
      %v6369 = vrot.slane %v6368, 4
      %v6371 = vshll.u32 %v6263, 16
      %v6373 = vrot.slane %v6371, 5
      %v6374 = vsel %vm1147, %v6369, %v6373
      %v6376 = vshrl.u32 %v6264, 16
      %v6378 = vrot.slane %v6376, 4
      %v6379 = vshll.u32 %v6264, 16
      %v6381 = vrot.slane %v6379, 5
      %v6382 = vor.u32 %v6378, %v6381
      %v6383 = vrot.slane %v6382, 4
      %v6385 = vshll.u32 %v6265, 16
      %v6387 = vrot.slane %v6385, 5
      %v6388 = vsel %vm1147, %v6383, %v6387
      %v6389 = vshrl.u32 %v6265, 16
      %v6391 = vrot.slane %v6389, 4
      %v6392 = vor.u32 %v6391, %v6387
      %v6393 = vrot.slane %v6392, 4
      %v6395 = vshll.u32 %v6266, 16
      %v6397 = vrot.slane %v6395, 5
      %v6398 = vsel %vm1147, %v6393, %v6397
      %v6400 = vshrl.u32 %v6267, 16
      %v6402 = vrot.slane %v6400, 4
      %v6403 = vshll.u32 %v6267, 16
      %v6405 = vrot.slane %v6403, 5
      %v6406 = vor.u32 %v6402, %v6405
      %v6407 = vrot.slane %v6406, 4
      %v6409 = vshll.u32 %v6268, 16
      %v6411 = vrot.slane %v6409, 5
      %v6412 = vsel %vm1147, %v6407, %v6411
      %v6413 = vshrl.u32 %v6268, 16
      %v6415 = vrot.slane %v6413, 4
      %v6416 = vor.u32 %v6415, %v6411
      %v6417 = vrot.slane %v6416, 4
      %v6419 = vshll.u32 %v6269, 16
      %v6421 = vrot.slane %v6419, 5
      %v6422 = vsel %vm1147, %v6417, %v6421
      %v6424 = vshrl.u32 %v6270, 16
      %v6426 = vrot.slane %v6424, 4
      %v6427 = vshll.u32 %v6270, 16
      %v6429 = vrot.slane %v6427, 5
      %v6430 = vor.u32 %v6426, %v6429
      %v6431 = vrot.slane %v6430, 4
      %v6433 = vshll.u32 %v6271, 16
      %v6435 = vrot.slane %v6433, 5
      %v6436 = vsel %vm1147, %v6431, %v6435
      %v6437 = vshrl.u32 %v6271, 16
      %v6439 = vrot.slane %v6437, 4
      %v6440 = vor.u32 %v6439, %v6435
      %v6441 = vrot.slane %v6440, 4
      %v6443 = vshll.u32 %v6272, 16
      %v6445 = vrot.slane %v6443, 5
      %v6446 = vsel %vm1147, %v6441, %v6445
      %v6448 = vshrl.u32 %v6273, 16
      %v6450 = vrot.slane %v6448, 4
      %v6451 = vshll.u32 %v6273, 16
      %v6453 = vrot.slane %v6451, 5
      %v6454 = vor.u32 %v6450, %v6453
      %v6455 = vrot.slane %v6454, 4
      %v6457 = vshll.u32 %v6274, 16
      %v6459 = vrot.slane %v6457, 5
      %v6460 = vsel %vm1147, %v6455, %v6459
      %v6461 = vshrl.u32 %v6274, 16
      %v6463 = vrot.slane %v6461, 4
      %v6464 = vor.u32 %v6463, %v6459
      %v6465 = vrot.slane %v6464, 4
      %v6467 = vshll.u32 %v6275, 16
      %v6469 = vrot.slane %v6467, 5
      %v6470 = vsel %vm1147, %v6465, %v6469
      %v6472 = vshrl.u32 %v6276, 16
      %v6474 = vrot.slane %v6472, 4
      %v6475 = vshll.u32 %v6276, 16
      %v6477 = vrot.slane %v6475, 5
      %v6478 = vor.u32 %v6474, %v6477
      %v6479 = vrot.slane %v6478, 4
      %v6481 = vshll.u32 %v6277, 16
      %v6483 = vrot.slane %v6481, 5
      %v6484 = vsel %vm1147, %v6479, %v6483
      %v6485 = vshrl.u32 %v6277, 16
      %v6487 = vrot.slane %v6485, 4
      %v6488 = vor.u32 %v6487, %v6483
      %v6489 = vrot.slane %v6488, 4
      %v6491 = vshll.u32 %v6278, 16
      %v6493 = vrot.slane %v6491, 5
      %v6494 = vsel %vm1147, %v6489, %v6493
      %v6496 = vshrl.u32 %v6279, 16
      %v6498 = vrot.slane %v6496, 4
      %v6499 = vshll.u32 %v6279, 16
      %v6501 = vrot.slane %v6499, 5
      %v6502 = vor.u32 %v6498, %v6501
      %v6503 = vrot.slane %v6502, 4
      %v6505 = vshll.u32 %v6280, 16
      %v6507 = vrot.slane %v6505, 5
      %v6508 = vsel %vm1147, %v6503, %v6507
      %v6509 = vshrl.u32 %v6280, 16
      %v6511 = vrot.slane %v6509, 4
      %v6512 = vor.u32 %v6511, %v6507
      %v6513 = vrot.slane %v6512, 4
      %v6515 = vshll.u32 %v6281, 16
      %v6517 = vrot.slane %v6515, 5
      %v6518 = vsel %vm1147, %v6513, %v6517
      %v6520 = vshrl.u32 %v6282, 16
      %v6522 = vrot.slane %v6520, 4
      %v6523 = vshll.u32 %v6282, 16
      %v6525 = vrot.slane %v6523, 5
      %v6526 = vor.u32 %v6522, %v6525
      %v6527 = vrot.slane %v6526, 4
      %v6529 = vshll.u32 %v6283, 16
      %v6531 = vrot.slane %v6529, 5
      %v6532 = vsel %vm1147, %v6527, %v6531
      %v6533 = vshrl.u32 %v6283, 16
      %v6535 = vrot.slane %v6533, 4
      %v6536 = vor.u32 %v6535, %v6531
      %v6537 = vrot.slane %v6536, 4
      %v6539 = vshll.u32 %v6284, 16
      %v6541 = vrot.slane %v6539, 5
      %v6542 = vsel %vm1147, %v6537, %v6541
      %v6544 = vshrl.u32 %v6285, 16
      %v6546 = vrot.slane %v6544, 4
      %v6547 = vshll.u32 %v6285, 16
      %v6549 = vrot.slane %v6547, 5
      %v6550 = vor.u32 %v6546, %v6549
      %v6551 = vrot.slane %v6550, 4
      %v6553 = vshll.u32 %v6286, 16
      %v6555 = vrot.slane %v6553, 5
      %v6556 = vsel %vm1147, %v6551, %v6555
      %v6557 = vshrl.u32 %v6286, 16
      %v6559 = vrot.slane %v6557, 4
      %v6560 = vor.u32 %v6559, %v6555
      %v6561 = vrot.slane %v6560, 4
      %v6563 = vshll.u32 %v6287, 16
      %v6565 = vrot.slane %v6563, 5
      %v6566 = vsel %vm1147, %v6561, %v6565
      %v6568 = vshrl.u32 %v6288, 16
      %v6570 = vrot.slane %v6568, 4
      %v6571 = vshll.u32 %v6288, 16
      %v6573 = vrot.slane %v6571, 5
      %v6574 = vor.u32 %v6570, %v6573
      %v6575 = vrot.slane %v6574, 4
      %v6577 = vshll.u32 %v6289, 16
      %v6579 = vrot.slane %v6577, 5
      %v6580 = vsel %vm1147, %v6575, %v6579
      %v6581 = vshrl.u32 %v6289, 16
      %v6583 = vrot.slane %v6581, 4
      %v6584 = vor.u32 %v6583, %v6579
      %v6585 = vrot.slane %v6584, 4
      %v6587 = vshll.u32 %v6290, 16
      %v6589 = vrot.slane %v6587, 5
      %v6590 = vsel %vm1147, %v6585, %v6589
      %v6592 = vshrl.u32 %v6291, 16
      %v6594 = vrot.slane %v6592, 4
      %v6595 = vshll.u32 %v6291, 16
      %v6597 = vrot.slane %v6595, 5
      %v6598 = vor.u32 %v6594, %v6597
      %v6599 = vrot.slane %v6598, 4
      %v6601 = vshll.u32 %v6292, 16
      %v6603 = vrot.slane %v6601, 5
      %v6604 = vsel %vm1147, %v6599, %v6603
      %v6605 = vshrl.u32 %v6292, 16
      %v6607 = vrot.slane %v6605, 4
      %v6608 = vor.u32 %v6607, %v6603
      %v6609 = vrot.slane %v6608, 4
      %v6611 = vshll.u32 %v6293, 16
      %v6613 = vrot.slane %v6611, 5
      %v6614 = vsel %vm1147, %v6609, %v6613
      %v6616 = vshrl.u32 %v6294, 16
      %v6618 = vrot.slane %v6616, 4
      %v6619 = vshll.u32 %v6294, 16
      %v6621 = vrot.slane %v6619, 5
      %v6622 = vor.u32 %v6618, %v6621
      %v6623 = vrot.slane %v6622, 4
      %v6625 = vshll.u32 %v6295, 16
      %v6627 = vrot.slane %v6625, 5
      %v6628 = vsel %vm1147, %v6623, %v6627
      %v6629 = vshrl.u32 %v6295, 16
      %v6631 = vrot.slane %v6629, 4
      %v6632 = vor.u32 %v6631, %v6627
      %v6633 = vrot.slane %v6632, 4
      %v6635 = vshll.u32 %v6296, 16
      %v6637 = vrot.slane %v6635, 5
      %v6638 = vsel %vm1147, %v6633, %v6637
      %v6640 = vshrl.u32 %v6297, 16
      %v6642 = vrot.slane %v6640, 4
      %v6643 = vshll.u32 %v6297, 16
      %v6645 = vrot.slane %v6643, 5
      %v6646 = vor.u32 %v6642, %v6645
      %v6647 = vrot.slane %v6646, 4
      %v6649 = vshll.u32 %v6298, 16
      %v6651 = vrot.slane %v6649, 5
      %v6652 = vsel %vm1147, %v6647, %v6651
      %v6653 = vshrl.u32 %v6298, 16
      %v6655 = vrot.slane %v6653, 4
      %v6656 = vor.u32 %v6655, %v6651
      %v6657 = vrot.slane %v6656, 4
      %v6659 = vshll.u32 %v6299, 16
      %v6661 = vrot.slane %v6659, 5
      %v6662 = vsel %vm1147, %v6657, %v6661
      %v6664 = vshrl.u32 %v6300, 16
      %v6666 = vrot.slane %v6664, 4
      %v6667 = vshll.u32 %v6300, 16
      %v6669 = vrot.slane %v6667, 5
      %v6670 = vor.u32 %v6666, %v6669
      %v6671 = vrot.slane %v6670, 4
      %v6673 = vshll.u32 %v6301, 16
      %v6675 = vrot.slane %v6673, 5
      %v6676 = vsel %vm1147, %v6671, %v6675
      %v6677 = vshrl.u32 %v6301, 16
      %v6679 = vrot.slane %v6677, 4
      %v6680 = vor.u32 %v6679, %v6675
      %v6681 = vrot.slane %v6680, 4
      %v6683 = vshll.u32 %v6302, 16
      %v6685 = vrot.slane %v6683, 5
      %v6686 = vsel %vm1147, %v6681, %v6685
      %6687 = vrot.lane.b32.xlu0 %v6316, 32
      %v6688 = vpop.permute.xlu0 %6687
      %6689 = vrot.lane.b32.xlu0 %v6326, 32
      %v6690 = vpop.permute.xlu0 %6689
      %6691 = vrot.lane.b32.xlu0 %v6340, 32
      %v6692 = vpop.permute.xlu0 %6691
      %6693 = vrot.lane.b32.xlu0 %v6350, 32
      %v6694 = vpop.permute.xlu0 %6693
      %6695 = vrot.lane.b32.xlu0 %v6364, 32
      %v6696 = vpop.permute.xlu0 %6695
      %6697 = vrot.lane.b32.xlu0 %v6374, 32
      %v6698 = vpop.permute.xlu0 %6697
      %6699 = vrot.lane.b32.xlu0 %v6388, 32
      %v6700 = vpop.permute.xlu0 %6699
      %6701 = vrot.lane.b32.xlu0 %v6398, 32
      %v6702 = vpop.permute.xlu0 %6701
      %6703 = vrot.lane.b32.xlu0 %v6412, 32
      %v6704 = vpop.permute.xlu0 %6703
      %6705 = vrot.lane.b32.xlu0 %v6422, 32
      %v6706 = vpop.permute.xlu0 %6705
      %6707 = vrot.lane.b32.xlu0 %v6436, 32
      %v6708 = vpop.permute.xlu0 %6707
      %6709 = vrot.lane.b32.xlu0 %v6446, 32
      %v6710 = vpop.permute.xlu0 %6709
      %6711 = vrot.lane.b32.xlu0 %v6460, 32
      %v6712 = vpop.permute.xlu0 %6711
      %6713 = vrot.lane.b32.xlu0 %v6470, 32
      %v6714 = vpop.permute.xlu0 %6713
      %6715 = vrot.lane.b32.xlu0 %v6484, 32
      %v6716 = vpop.permute.xlu0 %6715
      %6717 = vrot.lane.b32.xlu0 %v6494, 32
      %v6718 = vpop.permute.xlu0 %6717
      %6719 = vrot.lane.b32.xlu0 %v6508, 32
      %v6720 = vpop.permute.xlu0 %6719
      %6721 = vrot.lane.b32.xlu0 %v6518, 32
      %v6722 = vpop.permute.xlu0 %6721
      %6723 = vrot.lane.b32.xlu0 %v6532, 32
      %v6724 = vpop.permute.xlu0 %6723
      %6725 = vrot.lane.b32.xlu0 %v6542, 32
      %v6726 = vpop.permute.xlu0 %6725
      %6727 = vrot.lane.b32.xlu0 %v6556, 32
      %v6728 = vpop.permute.xlu0 %6727
      %6729 = vrot.lane.b32.xlu0 %v6566, 32
      %v6730 = vpop.permute.xlu0 %6729
      %6731 = vrot.lane.b32.xlu0 %v6580, 32
      %v6732 = vpop.permute.xlu0 %6731
      %6733 = vrot.lane.b32.xlu0 %v6590, 32
      %v6734 = vpop.permute.xlu0 %6733
      %6735 = vrot.lane.b32.xlu0 %v6604, 32
      %v6736 = vpop.permute.xlu0 %6735
      %6737 = vrot.lane.b32.xlu0 %v6614, 32
      %v6738 = vpop.permute.xlu0 %6737
      %6739 = vrot.lane.b32.xlu0 %v6628, 32
      %v6740 = vpop.permute.xlu0 %6739
      %6741 = vrot.lane.b32.xlu0 %v6638, 32
      %v6742 = vpop.permute.xlu0 %6741
      %6743 = vrot.lane.b32.xlu0 %v6652, 32
      %v6744 = vpop.permute.xlu0 %6743
      %6745 = vrot.lane.b32.xlu0 %v6662, 32
      %v6746 = vpop.permute.xlu0 %6745
      %6747 = vrot.lane.b32.xlu0 %v6676, 32
      %v6748 = vpop.permute.xlu0 %6747
      %6749 = vrot.lane.b32.xlu0 %v6686, 32
      %v6750 = vpop.permute.xlu0 %6749
      %vm6783 = vcmask 322816
      %6784 = vst.msk [vmem:[#allocation4] sm:$0xf] %vm6783, %v6688
      %6785 = vst.msk [vmem:[#allocation4 + $0x4] sm:$0xf] %vm6783, %v6690
      %6786 = vst.msk [vmem:[#allocation4 + $0x8] sm:$0xf] %vm6783, %v6692
      %6787 = vst.msk [vmem:[#allocation4 + $0xc] sm:$0xf] %vm6783, %v6694
      %6788 = vst.msk [vmem:[#allocation4 + $0x10] sm:$0xf] %vm6783, %v6696
      %6789 = vst.msk [vmem:[#allocation4 + $0x14] sm:$0xf] %vm6783, %v6698
      %6790 = vst.msk [vmem:[#allocation4 + $0x18] sm:$0xf] %vm6783, %v6700
      %6791 = vst.msk [vmem:[#allocation4 + $0x1c] sm:$0xf] %vm6783, %v6702
      %6792 = vst.msk [vmem:[#allocation4 + $0x20] sm:$0xf] %vm6783, %v6704
      %6793 = vst.msk [vmem:[#allocation4 + $0x24] sm:$0xf] %vm6783, %v6706
      %6794 = vst.msk [vmem:[#allocation4 + $0x28] sm:$0xf] %vm6783, %v6708
      %6795 = vst.msk [vmem:[#allocation4 + $0x2c] sm:$0xf] %vm6783, %v6710
      %6796 = vst.msk [vmem:[#allocation4 + $0x30] sm:$0xf] %vm6783, %v6712
      %6797 = vst.msk [vmem:[#allocation4 + $0x34] sm:$0xf] %vm6783, %v6714
      %6798 = vst.msk [vmem:[#allocation4 + $0x38] sm:$0xf] %vm6783, %v6716
      %6799 = vst.msk [vmem:[#allocation4 + $0x3c] sm:$0xf] %vm6783, %v6718
      %6800 = vst.msk [vmem:[#allocation4 + $0x40] sm:$0xf] %vm6783, %v6720
      %6801 = vst.msk [vmem:[#allocation4 + $0x44] sm:$0xf] %vm6783, %v6722
      %6802 = vst.msk [vmem:[#allocation4 + $0x48] sm:$0xf] %vm6783, %v6724
      %6803 = vst.msk [vmem:[#allocation4 + $0x4c] sm:$0xf] %vm6783, %v6726
      %6804 = vst.msk [vmem:[#allocation4 + $0x50] sm:$0xf] %vm6783, %v6728
      %6805 = vst.msk [vmem:[#allocation4 + $0x54] sm:$0xf] %vm6783, %v6730
      %6806 = vst.msk [vmem:[#allocation4 + $0x58] sm:$0xf] %vm6783, %v6732
      %6807 = vst.msk [vmem:[#allocation4 + $0x5c] sm:$0xf] %vm6783, %v6734
      %6808 = vst.msk [vmem:[#allocation4 + $0x60] sm:$0xf] %vm6783, %v6736
      %6809 = vst.msk [vmem:[#allocation4 + $0x64] sm:$0xf] %vm6783, %v6738
      %6810 = vst.msk [vmem:[#allocation4 + $0x68] sm:$0xf] %vm6783, %v6740
      %6811 = vst.msk [vmem:[#allocation4 + $0x6c] sm:$0xf] %vm6783, %v6742
      %6812 = vst.msk [vmem:[#allocation4 + $0x70] sm:$0xf] %vm6783, %v6744
      %6813 = vst.msk [vmem:[#allocation4 + $0x74] sm:$0xf] %vm6783, %v6746
      %6814 = vst.msk [vmem:[#allocation4 + $0x78] sm:$0xf] %vm6783, %v6748
      %6815 = vst.msk [vmem:[#allocation4 + $0x7c] sm:$0xf] %vm6783, %v6750
      %v6816 = vld [vmem:[%s4985] sm:$0xe]
      %v6817 = vld [vmem:[%s4985 + $0x4] sm:$0xf]
      %v6818 = vld [vmem:[%s4985 + $0x8] sm:$0x1]
      %v6819 = vld [vmem:[%s4985 + $0xc] sm:$0xe]
      %v6820 = vld [vmem:[%s4985 + $0x10] sm:$0xf]
      %v6821 = vld [vmem:[%s4985 + $0x14] sm:$0x1]
      %v6822 = vld [vmem:[%s4985 + $0x18] sm:$0xe]
      %v6823 = vld [vmem:[%s4985 + $0x1c] sm:$0xf]
      %v6824 = vld [vmem:[%s4985 + $0x20] sm:$0x1]
      %v6825 = vld [vmem:[%s4985 + $0x24] sm:$0xe]
      %v6826 = vld [vmem:[%s4985 + $0x28] sm:$0xf]
      %v6827 = vld [vmem:[%s4985 + $0x2c] sm:$0x1]
      %v6828 = vld [vmem:[%s4985 + $0x30] sm:$0xe]
      %v6829 = vld [vmem:[%s4985 + $0x34] sm:$0xf]
      %v6830 = vld [vmem:[%s4985 + $0x38] sm:$0x1]
      %v6831 = vld [vmem:[%s4985 + $0x3c] sm:$0xe]
      %v6832 = vld [vmem:[%s4985 + $0x40] sm:$0xf]
      %v6833 = vld [vmem:[%s4985 + $0x44] sm:$0x1]
      %v6834 = vld [vmem:[%s4985 + $0x48] sm:$0xe]
      %v6835 = vld [vmem:[%s4985 + $0x4c] sm:$0xf]
      %v6836 = vld [vmem:[%s4985 + $0x50] sm:$0x1]
      %v6837 = vld [vmem:[%s4985 + $0x54] sm:$0xe]
      %v6838 = vld [vmem:[%s4985 + $0x58] sm:$0xf]
      %v6839 = vld [vmem:[%s4985 + $0x5c] sm:$0x1]
      %v6840 = vld [vmem:[%s4985 + $0x60] sm:$0xe]
      %v6841 = vld [vmem:[%s4985 + $0x64] sm:$0xf]
      %v6842 = vld [vmem:[%s4985 + $0x68] sm:$0x1]
      %v6843 = vld [vmem:[%s4985 + $0x6c] sm:$0xe]
      %v6844 = vld [vmem:[%s4985 + $0x70] sm:$0xf]
      %v6845 = vld [vmem:[%s4985 + $0x74] sm:$0x1]
      %v6846 = vld [vmem:[%s4985 + $0x78] sm:$0xe]
      %v6847 = vld [vmem:[%s4985 + $0x7c] sm:$0xf]
      %v6848 = vld [vmem:[%s4985 + $0x80] sm:$0x1]
      %v6849 = vld [vmem:[%s4985 + $0x84] sm:$0xe]
      %v6850 = vld [vmem:[%s4985 + $0x88] sm:$0xf]
      %v6851 = vld [vmem:[%s4985 + $0x8c] sm:$0x1]
      %v6852 = vld [vmem:[%s4985 + $0x90] sm:$0xe]
      %v6853 = vld [vmem:[%s4985 + $0x94] sm:$0xf]
      %v6854 = vld [vmem:[%s4985 + $0x98] sm:$0x1]
      %v6855 = vld [vmem:[%s4985 + $0x9c] sm:$0xe]
      %v6856 = vld [vmem:[%s4985 + $0xa0] sm:$0xf]
      %v6857 = vld [vmem:[%s4985 + $0xa4] sm:$0x1]
      %v6858 = vld [vmem:[%s4985 + $0xa8] sm:$0xe]
      %v6859 = vld [vmem:[%s4985 + $0xac] sm:$0xf]
      %v6860 = vld [vmem:[%s4985 + $0xb0] sm:$0x1]
      %v6861 = vld [vmem:[%s4985 + $0xb4] sm:$0xe]
      %v6862 = vld [vmem:[%s4985 + $0xb8] sm:$0xf]
      %v6863 = vld [vmem:[%s4985 + $0xbc] sm:$0x1]
      %v6912 = vrot.slane %v6816, 5
      %v6913 = vrot.slane %v6912, 4
      %v6914 = vrot.slane %v6817, 5
      %v6915 = vsel %vm1759, %v6913, %v6914
      %v6916 = vrot.slane %v6914, 4
      %v6917 = vrot.slane %v6818, 5
      %v6918 = vsel %vm1759, %v6916, %v6917
      %v6919 = vrot.slane %v6819, 5
      %v6920 = vrot.slane %v6919, 4
      %v6921 = vrot.slane %v6820, 5
      %v6922 = vsel %vm1759, %v6920, %v6921
      %v6923 = vrot.slane %v6921, 4
      %v6924 = vrot.slane %v6821, 5
      %v6925 = vsel %vm1759, %v6923, %v6924
      %v6926 = vrot.slane %v6822, 5
      %v6927 = vrot.slane %v6926, 4
      %v6928 = vrot.slane %v6823, 5
      %v6929 = vsel %vm1759, %v6927, %v6928
      %v6930 = vrot.slane %v6928, 4
      %v6931 = vrot.slane %v6824, 5
      %v6932 = vsel %vm1759, %v6930, %v6931
      %v6933 = vrot.slane %v6825, 5
      %v6934 = vrot.slane %v6933, 4
      %v6935 = vrot.slane %v6826, 5
      %v6936 = vsel %vm1759, %v6934, %v6935
      %v6937 = vrot.slane %v6935, 4
      %v6938 = vrot.slane %v6827, 5
      %v6939 = vsel %vm1759, %v6937, %v6938
      %v6940 = vrot.slane %v6828, 5
      %v6941 = vrot.slane %v6940, 4
      %v6942 = vrot.slane %v6829, 5
      %v6943 = vsel %vm1759, %v6941, %v6942
      %v6944 = vrot.slane %v6942, 4
      %v6945 = vrot.slane %v6830, 5
      %v6946 = vsel %vm1759, %v6944, %v6945
      %v6947 = vrot.slane %v6831, 5
      %v6948 = vrot.slane %v6947, 4
      %v6949 = vrot.slane %v6832, 5
      %v6950 = vsel %vm1759, %v6948, %v6949
      %v6951 = vrot.slane %v6949, 4
      %v6952 = vrot.slane %v6833, 5
      %v6953 = vsel %vm1759, %v6951, %v6952
      %v6954 = vrot.slane %v6834, 5
      %v6955 = vrot.slane %v6954, 4
      %v6956 = vrot.slane %v6835, 5
      %v6957 = vsel %vm1759, %v6955, %v6956
      %v6958 = vrot.slane %v6956, 4
      %v6959 = vrot.slane %v6836, 5
      %v6960 = vsel %vm1759, %v6958, %v6959
      %v6961 = vrot.slane %v6837, 5
      %v6962 = vrot.slane %v6961, 4
      %v6963 = vrot.slane %v6838, 5
      %v6964 = vsel %vm1759, %v6962, %v6963
      %v6965 = vrot.slane %v6963, 4
      %v6966 = vrot.slane %v6839, 5
      %v6967 = vsel %vm1759, %v6965, %v6966
      %v6968 = vrot.slane %v6840, 5
      %v6969 = vrot.slane %v6968, 4
      %v6970 = vrot.slane %v6841, 5
      %v6971 = vsel %vm1759, %v6969, %v6970
      %v6972 = vrot.slane %v6970, 4
      %v6973 = vrot.slane %v6842, 5
      %v6974 = vsel %vm1759, %v6972, %v6973
      %v6975 = vrot.slane %v6843, 5
      %v6976 = vrot.slane %v6975, 4
      %v6977 = vrot.slane %v6844, 5
      %v6978 = vsel %vm1759, %v6976, %v6977
      %v6979 = vrot.slane %v6977, 4
      %v6980 = vrot.slane %v6845, 5
      %v6981 = vsel %vm1759, %v6979, %v6980
      %v6982 = vrot.slane %v6846, 5
      %v6983 = vrot.slane %v6982, 4
      %v6984 = vrot.slane %v6847, 5
      %v6985 = vsel %vm1759, %v6983, %v6984
      %v6986 = vrot.slane %v6984, 4
      %v6987 = vrot.slane %v6848, 5
      %v6988 = vsel %vm1759, %v6986, %v6987
      %v6989 = vrot.slane %v6849, 5
      %v6990 = vrot.slane %v6989, 4
      %v6991 = vrot.slane %v6850, 5
      %v6992 = vsel %vm1759, %v6990, %v6991
      %v6993 = vrot.slane %v6991, 4
      %v6994 = vrot.slane %v6851, 5
      %v6995 = vsel %vm1759, %v6993, %v6994
      %v6996 = vrot.slane %v6852, 5
      %v6997 = vrot.slane %v6996, 4
      %v6998 = vrot.slane %v6853, 5
      %v6999 = vsel %vm1759, %v6997, %v6998
      %v7000 = vrot.slane %v6998, 4
      %v7001 = vrot.slane %v6854, 5
      %v7002 = vsel %vm1759, %v7000, %v7001
      %v7003 = vrot.slane %v6855, 5
      %v7004 = vrot.slane %v7003, 4
      %v7005 = vrot.slane %v6856, 5
      %v7006 = vsel %vm1759, %v7004, %v7005
      %v7007 = vrot.slane %v7005, 4
      %v7008 = vrot.slane %v6857, 5
      %v7009 = vsel %vm1759, %v7007, %v7008
      %v7010 = vrot.slane %v6858, 5
      %v7011 = vrot.slane %v7010, 4
      %v7012 = vrot.slane %v6859, 5
      %v7013 = vsel %vm1759, %v7011, %v7012
      %v7014 = vrot.slane %v7012, 4
      %v7015 = vrot.slane %v6860, 5
      %v7016 = vsel %vm1759, %v7014, %v7015
      %v7017 = vrot.slane %v6861, 5
      %v7018 = vrot.slane %v7017, 4
      %v7019 = vrot.slane %v6862, 5
      %v7020 = vsel %vm1759, %v7018, %v7019
      %v7021 = vrot.slane %v7019, 4
      %v7022 = vrot.slane %v6863, 5
      %v7023 = vsel %vm1759, %v7021, %v7022
      %7024 = vrot.lane.b32.xlu0 %v6915, 40
      %v7025 = vpop.permute.xlu0 %7024
      %7026 = vrot.lane.b32.xlu0 %v6918, 40
      %v7027 = vpop.permute.xlu0 %7026
      %7028 = vrot.lane.b32.xlu0 %v6922, 40
      %v7029 = vpop.permute.xlu0 %7028
      %7030 = vrot.lane.b32.xlu0 %v6925, 40
      %v7031 = vpop.permute.xlu0 %7030
      %7032 = vrot.lane.b32.xlu0 %v6929, 40
      %v7033 = vpop.permute.xlu0 %7032
      %7034 = vrot.lane.b32.xlu0 %v6932, 40
      %v7035 = vpop.permute.xlu0 %7034
      %7036 = vrot.lane.b32.xlu0 %v6936, 40
      %v7037 = vpop.permute.xlu0 %7036
      %7038 = vrot.lane.b32.xlu0 %v6939, 40
      %v7039 = vpop.permute.xlu0 %7038
      %7040 = vrot.lane.b32.xlu0 %v6943, 40
      %v7041 = vpop.permute.xlu0 %7040
      %7042 = vrot.lane.b32.xlu0 %v6946, 40
      %v7043 = vpop.permute.xlu0 %7042
      %7044 = vrot.lane.b32.xlu0 %v6950, 40
      %v7045 = vpop.permute.xlu0 %7044
      %7046 = vrot.lane.b32.xlu0 %v6953, 40
      %v7047 = vpop.permute.xlu0 %7046
      %7048 = vrot.lane.b32.xlu0 %v6957, 40
      %v7049 = vpop.permute.xlu0 %7048
      %7050 = vrot.lane.b32.xlu0 %v6960, 40
      %v7051 = vpop.permute.xlu0 %7050
      %7052 = vrot.lane.b32.xlu0 %v6964, 40
      %v7053 = vpop.permute.xlu0 %7052
      %7054 = vrot.lane.b32.xlu0 %v6967, 40
      %v7055 = vpop.permute.xlu0 %7054
      %7056 = vrot.lane.b32.xlu0 %v6971, 40
      %v7057 = vpop.permute.xlu0 %7056
      %7058 = vrot.lane.b32.xlu0 %v6974, 40
      %v7059 = vpop.permute.xlu0 %7058
      %7060 = vrot.lane.b32.xlu0 %v6978, 40
      %v7061 = vpop.permute.xlu0 %7060
      %7062 = vrot.lane.b32.xlu0 %v6981, 40
      %v7063 = vpop.permute.xlu0 %7062
      %7064 = vrot.lane.b32.xlu0 %v6985, 40
      %v7065 = vpop.permute.xlu0 %7064
      %7066 = vrot.lane.b32.xlu0 %v6988, 40
      %v7067 = vpop.permute.xlu0 %7066
      %7068 = vrot.lane.b32.xlu0 %v6992, 40
      %v7069 = vpop.permute.xlu0 %7068
      %7070 = vrot.lane.b32.xlu0 %v6995, 40
      %v7071 = vpop.permute.xlu0 %7070
      %7072 = vrot.lane.b32.xlu0 %v6999, 40
      %v7073 = vpop.permute.xlu0 %7072
      %7074 = vrot.lane.b32.xlu0 %v7002, 40
      %v7075 = vpop.permute.xlu0 %7074
      %7076 = vrot.lane.b32.xlu0 %v7006, 40
      %v7077 = vpop.permute.xlu0 %7076
      %7078 = vrot.lane.b32.xlu0 %v7009, 40
      %v7079 = vpop.permute.xlu0 %7078
      %7080 = vrot.lane.b32.xlu0 %v7013, 40
      %v7081 = vpop.permute.xlu0 %7080
      %7082 = vrot.lane.b32.xlu0 %v7016, 40
      %v7083 = vpop.permute.xlu0 %7082
      %7084 = vrot.lane.b32.xlu0 %v7020, 40
      %v7085 = vpop.permute.xlu0 %7084
      %7086 = vrot.lane.b32.xlu0 %v7023, 40
      %v7087 = vpop.permute.xlu0 %7086
      %vm7120 = vcmask 388416
      %7121 = vst.msk [vmem:[#allocation4] sm:$0xf] %vm7120, %v7025
      %7122 = vst.msk [vmem:[#allocation4 + $0x4] sm:$0xf] %vm7120, %v7027
      %7123 = vst.msk [vmem:[#allocation4 + $0x8] sm:$0xf] %vm7120, %v7029
      %7124 = vst.msk [vmem:[#allocation4 + $0xc] sm:$0xf] %vm7120, %v7031
      %7125 = vst.msk [vmem:[#allocation4 + $0x10] sm:$0xf] %vm7120, %v7033
      %7126 = vst.msk [vmem:[#allocation4 + $0x14] sm:$0xf] %vm7120, %v7035
      %7127 = vst.msk [vmem:[#allocation4 + $0x18] sm:$0xf] %vm7120, %v7037
      %7128 = vst.msk [vmem:[#allocation4 + $0x1c] sm:$0xf] %vm7120, %v7039
      %7129 = vst.msk [vmem:[#allocation4 + $0x20] sm:$0xf] %vm7120, %v7041
      %7130 = vst.msk [vmem:[#allocation4 + $0x24] sm:$0xf] %vm7120, %v7043
      %7131 = vst.msk [vmem:[#allocation4 + $0x28] sm:$0xf] %vm7120, %v7045
      %7132 = vst.msk [vmem:[#allocation4 + $0x2c] sm:$0xf] %vm7120, %v7047
      %7133 = vst.msk [vmem:[#allocation4 + $0x30] sm:$0xf] %vm7120, %v7049
      %7134 = vst.msk [vmem:[#allocation4 + $0x34] sm:$0xf] %vm7120, %v7051
      %7135 = vst.msk [vmem:[#allocation4 + $0x38] sm:$0xf] %vm7120, %v7053
      %7136 = vst.msk [vmem:[#allocation4 + $0x3c] sm:$0xf] %vm7120, %v7055
      %7137 = vst.msk [vmem:[#allocation4 + $0x40] sm:$0xf] %vm7120, %v7057
      %7138 = vst.msk [vmem:[#allocation4 + $0x44] sm:$0xf] %vm7120, %v7059
      %7139 = vst.msk [vmem:[#allocation4 + $0x48] sm:$0xf] %vm7120, %v7061
      %7140 = vst.msk [vmem:[#allocation4 + $0x4c] sm:$0xf] %vm7120, %v7063
      %7141 = vst.msk [vmem:[#allocation4 + $0x50] sm:$0xf] %vm7120, %v7065
      %7142 = vst.msk [vmem:[#allocation4 + $0x54] sm:$0xf] %vm7120, %v7067
      %7143 = vst.msk [vmem:[#allocation4 + $0x58] sm:$0xf] %vm7120, %v7069
      %7144 = vst.msk [vmem:[#allocation4 + $0x5c] sm:$0xf] %vm7120, %v7071
      %7145 = vst.msk [vmem:[#allocation4 + $0x60] sm:$0xf] %vm7120, %v7073
      %7146 = vst.msk [vmem:[#allocation4 + $0x64] sm:$0xf] %vm7120, %v7075
      %7147 = vst.msk [vmem:[#allocation4 + $0x68] sm:$0xf] %vm7120, %v7077
      %7148 = vst.msk [vmem:[#allocation4 + $0x6c] sm:$0xf] %vm7120, %v7079
      %7149 = vst.msk [vmem:[#allocation4 + $0x70] sm:$0xf] %vm7120, %v7081
      %7150 = vst.msk [vmem:[#allocation4 + $0x74] sm:$0xf] %vm7120, %v7083
      %7151 = vst.msk [vmem:[#allocation4 + $0x78] sm:$0xf] %vm7120, %v7085
      %7152 = vst.msk [vmem:[#allocation4 + $0x7c] sm:$0xf] %vm7120, %v7087
      %s7153 = scalar_lea.vmem [#allocation3], 24
      %v7154 = vld [vmem:[%s7153] sm:$0xf]
      %v7155 = vld [vmem:[%s7153 + $0x4] sm:$0xf]
      %v7156 = vld [vmem:[%s7153 + $0xc] sm:$0xf]
      %v7157 = vld [vmem:[%s7153 + $0x10] sm:$0xf]
      %v7158 = vld [vmem:[%s7153 + $0x18] sm:$0xf]
      %v7159 = vld [vmem:[%s7153 + $0x1c] sm:$0xf]
      %v7160 = vld [vmem:[%s7153 + $0x24] sm:$0xf]
      %v7161 = vld [vmem:[%s7153 + $0x28] sm:$0xf]
      %v7162 = vld [vmem:[%s7153 + $0x30] sm:$0xf]
      %v7163 = vld [vmem:[%s7153 + $0x34] sm:$0xf]
      %v7164 = vld [vmem:[%s7153 + $0x3c] sm:$0xf]
      %v7165 = vld [vmem:[%s7153 + $0x40] sm:$0xf]
      %v7166 = vld [vmem:[%s7153 + $0x48] sm:$0xf]
      %v7167 = vld [vmem:[%s7153 + $0x4c] sm:$0xf]
      %v7168 = vld [vmem:[%s7153 + $0x54] sm:$0xf]
      %v7169 = vld [vmem:[%s7153 + $0x58] sm:$0xf]
      %v7170 = vld [vmem:[%s7153 + $0x60] sm:$0xf]
      %v7171 = vld [vmem:[%s7153 + $0x64] sm:$0xf]
      %v7172 = vld [vmem:[%s7153 + $0x6c] sm:$0xf]
      %v7173 = vld [vmem:[%s7153 + $0x70] sm:$0xf]
      %v7174 = vld [vmem:[%s7153 + $0x78] sm:$0xf]
      %v7175 = vld [vmem:[%s7153 + $0x7c] sm:$0xf]
      %v7176 = vld [vmem:[%s7153 + $0x84] sm:$0xf]
      %v7177 = vld [vmem:[%s7153 + $0x88] sm:$0xf]
      %v7178 = vld [vmem:[%s7153 + $0x90] sm:$0xf]
      %v7179 = vld [vmem:[%s7153 + $0x94] sm:$0xf]
      %v7180 = vld [vmem:[%s7153 + $0x9c] sm:$0xf]
      %v7181 = vld [vmem:[%s7153 + $0xa0] sm:$0xf]
      %v7182 = vld [vmem:[%s7153 + $0xa8] sm:$0xf]
      %v7183 = vld [vmem:[%s7153 + $0xac] sm:$0xf]
      %v7184 = vld [vmem:[%s7153 + $0xb4] sm:$0xf]
      %v7185 = vld [vmem:[%s7153 + $0xb8] sm:$0xf]
      %7218 = vrot.lane.b32.xlu0 %v7154, 48
      %v7219 = vpop.permute.xlu0 %7218
      %7220 = vrot.lane.b32.xlu0 %v7155, 48
      %v7221 = vpop.permute.xlu0 %7220
      %7222 = vrot.lane.b32.xlu0 %v7156, 48
      %v7223 = vpop.permute.xlu0 %7222
      %7224 = vrot.lane.b32.xlu0 %v7157, 48
      %v7225 = vpop.permute.xlu0 %7224
      %7226 = vrot.lane.b32.xlu0 %v7158, 48
      %v7227 = vpop.permute.xlu0 %7226
      %7228 = vrot.lane.b32.xlu0 %v7159, 48
      %v7229 = vpop.permute.xlu0 %7228
      %7230 = vrot.lane.b32.xlu0 %v7160, 48
      %v7231 = vpop.permute.xlu0 %7230
      %7232 = vrot.lane.b32.xlu0 %v7161, 48
      %v7233 = vpop.permute.xlu0 %7232
      %7234 = vrot.lane.b32.xlu0 %v7162, 48
      %v7235 = vpop.permute.xlu0 %7234
      %7236 = vrot.lane.b32.xlu0 %v7163, 48
      %v7237 = vpop.permute.xlu0 %7236
      %7238 = vrot.lane.b32.xlu0 %v7164, 48
      %v7239 = vpop.permute.xlu0 %7238
      %7240 = vrot.lane.b32.xlu0 %v7165, 48
      %v7241 = vpop.permute.xlu0 %7240
      %7242 = vrot.lane.b32.xlu0 %v7166, 48
      %v7243 = vpop.permute.xlu0 %7242
      %7244 = vrot.lane.b32.xlu0 %v7167, 48
      %v7245 = vpop.permute.xlu0 %7244
      %7246 = vrot.lane.b32.xlu0 %v7168, 48
      %v7247 = vpop.permute.xlu0 %7246
      %7248 = vrot.lane.b32.xlu0 %v7169, 48
      %v7249 = vpop.permute.xlu0 %7248
      %7250 = vrot.lane.b32.xlu0 %v7170, 48
      %v7251 = vpop.permute.xlu0 %7250
      %7252 = vrot.lane.b32.xlu0 %v7171, 48
      %v7253 = vpop.permute.xlu0 %7252
      %7254 = vrot.lane.b32.xlu0 %v7172, 48
      %v7255 = vpop.permute.xlu0 %7254
      %7256 = vrot.lane.b32.xlu0 %v7173, 48
      %v7257 = vpop.permute.xlu0 %7256
      %7258 = vrot.lane.b32.xlu0 %v7174, 48
      %v7259 = vpop.permute.xlu0 %7258
      %7260 = vrot.lane.b32.xlu0 %v7175, 48
      %v7261 = vpop.permute.xlu0 %7260
      %7262 = vrot.lane.b32.xlu0 %v7176, 48
      %v7263 = vpop.permute.xlu0 %7262
      %7264 = vrot.lane.b32.xlu0 %v7177, 48
      %v7265 = vpop.permute.xlu0 %7264
      %7266 = vrot.lane.b32.xlu0 %v7178, 48
      %v7267 = vpop.permute.xlu0 %7266
      %7268 = vrot.lane.b32.xlu0 %v7179, 48
      %v7269 = vpop.permute.xlu0 %7268
      %7270 = vrot.lane.b32.xlu0 %v7180, 48
      %v7271 = vpop.permute.xlu0 %7270
      %7272 = vrot.lane.b32.xlu0 %v7181, 48
      %v7273 = vpop.permute.xlu0 %7272
      %7274 = vrot.lane.b32.xlu0 %v7182, 48
      %v7275 = vpop.permute.xlu0 %7274
      %7276 = vrot.lane.b32.xlu0 %v7183, 48
      %v7277 = vpop.permute.xlu0 %7276
      %7278 = vrot.lane.b32.xlu0 %v7184, 48
      %v7279 = vpop.permute.xlu0 %7278
      %7280 = vrot.lane.b32.xlu0 %v7185, 48
      %v7281 = vpop.permute.xlu0 %7280
      %vm7314 = vcmask 454016
      %7315 = vst.msk [vmem:[#allocation4] sm:$0xf] %vm7314, %v7219
      %7316 = vst.msk [vmem:[#allocation4 + $0x4] sm:$0xf] %vm7314, %v7221
      %7317 = vst.msk [vmem:[#allocation4 + $0x8] sm:$0xf] %vm7314, %v7223
      %7318 = vst.msk [vmem:[#allocation4 + $0xc] sm:$0xf] %vm7314, %v7225
      %7319 = vst.msk [vmem:[#allocation4 + $0x10] sm:$0xf] %vm7314, %v7227
      %7320 = vst.msk [vmem:[#allocation4 + $0x14] sm:$0xf] %vm7314, %v7229
      %7321 = vst.msk [vmem:[#allocation4 + $0x18] sm:$0xf] %vm7314, %v7231
      %7322 = vst.msk [vmem:[#allocation4 + $0x1c] sm:$0xf] %vm7314, %v7233
      %7323 = vst.msk [vmem:[#allocation4 + $0x20] sm:$0xf] %vm7314, %v7235
      %7324 = vst.msk [vmem:[#allocation4 + $0x24] sm:$0xf] %vm7314, %v7237
      %7325 = vst.msk [vmem:[#allocation4 + $0x28] sm:$0xf] %vm7314, %v7239
      %7326 = vst.msk [vmem:[#allocation4 + $0x2c] sm:$0xf] %vm7314, %v7241
      %7327 = vst.msk [vmem:[#allocation4 + $0x30] sm:$0xf] %vm7314, %v7243
      %7328 = vst.msk [vmem:[#allocation4 + $0x34] sm:$0xf] %vm7314, %v7245
      %7329 = vst.msk [vmem:[#allocation4 + $0x38] sm:$0xf] %vm7314, %v7247
      %7330 = vst.msk [vmem:[#allocation4 + $0x3c] sm:$0xf] %vm7314, %v7249
      %7331 = vst.msk [vmem:[#allocation4 + $0x40] sm:$0xf] %vm7314, %v7251
      %7332 = vst.msk [vmem:[#allocation4 + $0x44] sm:$0xf] %vm7314, %v7253
      %7333 = vst.msk [vmem:[#allocation4 + $0x48] sm:$0xf] %vm7314, %v7255
      %7334 = vst.msk [vmem:[#allocation4 + $0x4c] sm:$0xf] %vm7314, %v7257
      %7335 = vst.msk [vmem:[#allocation4 + $0x50] sm:$0xf] %vm7314, %v7259
      %7336 = vst.msk [vmem:[#allocation4 + $0x54] sm:$0xf] %vm7314, %v7261
      %7337 = vst.msk [vmem:[#allocation4 + $0x58] sm:$0xf] %vm7314, %v7263
      %7338 = vst.msk [vmem:[#allocation4 + $0x5c] sm:$0xf] %vm7314, %v7265
      %7339 = vst.msk [vmem:[#allocation4 + $0x60] sm:$0xf] %vm7314, %v7267
      %7340 = vst.msk [vmem:[#allocation4 + $0x64] sm:$0xf] %vm7314, %v7269
      %7341 = vst.msk [vmem:[#allocation4 + $0x68] sm:$0xf] %vm7314, %v7271
      %7342 = vst.msk [vmem:[#allocation4 + $0x6c] sm:$0xf] %vm7314, %v7273
      %7343 = vst.msk [vmem:[#allocation4 + $0x70] sm:$0xf] %vm7314, %v7275
      %7344 = vst.msk [vmem:[#allocation4 + $0x74] sm:$0xf] %vm7314, %v7277
      %7345 = vst.msk [vmem:[#allocation4 + $0x78] sm:$0xf] %vm7314, %v7279
      %7346 = vst.msk [vmem:[#allocation4 + $0x7c] sm:$0xf] %vm7314, %v7281
      %v7347 = vld [vmem:[%s7153] sm:$0xf]
      %v7348 = vld [vmem:[%s7153 + $0x4] sm:$0xf]
      %v7349 = vld [vmem:[%s7153 + $0x8] sm:$0x1]
      %v7350 = vld [vmem:[%s7153 + $0xc] sm:$0xf]
      %v7351 = vld [vmem:[%s7153 + $0x10] sm:$0xf]
      %v7352 = vld [vmem:[%s7153 + $0x14] sm:$0x1]
      %v7353 = vld [vmem:[%s7153 + $0x18] sm:$0xf]
      %v7354 = vld [vmem:[%s7153 + $0x1c] sm:$0xf]
      %v7355 = vld [vmem:[%s7153 + $0x20] sm:$0x1]
      %v7356 = vld [vmem:[%s7153 + $0x24] sm:$0xf]
      %v7357 = vld [vmem:[%s7153 + $0x28] sm:$0xf]
      %v7358 = vld [vmem:[%s7153 + $0x2c] sm:$0x1]
      %v7359 = vld [vmem:[%s7153 + $0x30] sm:$0xf]
      %v7360 = vld [vmem:[%s7153 + $0x34] sm:$0xf]
      %v7361 = vld [vmem:[%s7153 + $0x38] sm:$0x1]
      %v7362 = vld [vmem:[%s7153 + $0x3c] sm:$0xf]
      %v7363 = vld [vmem:[%s7153 + $0x40] sm:$0xf]
      %v7364 = vld [vmem:[%s7153 + $0x44] sm:$0x1]
      %v7365 = vld [vmem:[%s7153 + $0x48] sm:$0xf]
      %v7366 = vld [vmem:[%s7153 + $0x4c] sm:$0xf]
      %v7367 = vld [vmem:[%s7153 + $0x50] sm:$0x1]
      %v7368 = vld [vmem:[%s7153 + $0x54] sm:$0xf]
      %v7369 = vld [vmem:[%s7153 + $0x58] sm:$0xf]
      %v7370 = vld [vmem:[%s7153 + $0x5c] sm:$0x1]
      %v7371 = vld [vmem:[%s7153 + $0x60] sm:$0xf]
      %v7372 = vld [vmem:[%s7153 + $0x64] sm:$0xf]
      %v7373 = vld [vmem:[%s7153 + $0x68] sm:$0x1]
      %v7374 = vld [vmem:[%s7153 + $0x6c] sm:$0xf]
      %v7375 = vld [vmem:[%s7153 + $0x70] sm:$0xf]
      %v7376 = vld [vmem:[%s7153 + $0x74] sm:$0x1]
      %v7377 = vld [vmem:[%s7153 + $0x78] sm:$0xf]
      %v7378 = vld [vmem:[%s7153 + $0x7c] sm:$0xf]
      %v7379 = vld [vmem:[%s7153 + $0x80] sm:$0x1]
      %v7380 = vld [vmem:[%s7153 + $0x84] sm:$0xf]
      %v7381 = vld [vmem:[%s7153 + $0x88] sm:$0xf]
      %v7382 = vld [vmem:[%s7153 + $0x8c] sm:$0x1]
      %v7383 = vld [vmem:[%s7153 + $0x90] sm:$0xf]
      %v7384 = vld [vmem:[%s7153 + $0x94] sm:$0xf]
      %v7385 = vld [vmem:[%s7153 + $0x98] sm:$0x1]
      %v7386 = vld [vmem:[%s7153 + $0x9c] sm:$0xf]
      %v7387 = vld [vmem:[%s7153 + $0xa0] sm:$0xf]
      %v7388 = vld [vmem:[%s7153 + $0xa4] sm:$0x1]
      %v7389 = vld [vmem:[%s7153 + $0xa8] sm:$0xf]
      %v7390 = vld [vmem:[%s7153 + $0xac] sm:$0xf]
      %v7391 = vld [vmem:[%s7153 + $0xb0] sm:$0x1]
      %v7392 = vld [vmem:[%s7153 + $0xb4] sm:$0xf]
      %v7393 = vld [vmem:[%s7153 + $0xb8] sm:$0xf]
      %v7394 = vld [vmem:[%s7153 + $0xbc] sm:$0x1]
      %v7396 = vshrl.u32 %v7347, 16
      %v7398 = vrot.slane %v7396, 4
      %v7399 = vshll.u32 %v7347, 16
      %v7401 = vrot.slane %v7399, 5
      %v7402 = vor.u32 %v7398, %v7401
      %v7403 = vrot.slane %v7402, 4
      %v7405 = vshll.u32 %v7348, 16
      %v7407 = vrot.slane %v7405, 5
      %v7408 = vsel %vm1147, %v7403, %v7407
      %v7409 = vshrl.u32 %v7348, 16
      %v7411 = vrot.slane %v7409, 4
      %v7412 = vor.u32 %v7411, %v7407
      %v7413 = vrot.slane %v7412, 4
      %v7415 = vshll.u32 %v7349, 16
      %v7417 = vrot.slane %v7415, 5
      %v7418 = vsel %vm1147, %v7413, %v7417
      %v7420 = vshrl.u32 %v7350, 16
      %v7422 = vrot.slane %v7420, 4
      %v7423 = vshll.u32 %v7350, 16
      %v7425 = vrot.slane %v7423, 5
      %v7426 = vor.u32 %v7422, %v7425
      %v7427 = vrot.slane %v7426, 4
      %v7429 = vshll.u32 %v7351, 16
      %v7431 = vrot.slane %v7429, 5
      %v7432 = vsel %vm1147, %v7427, %v7431
      %v7433 = vshrl.u32 %v7351, 16
      %v7435 = vrot.slane %v7433, 4
      %v7436 = vor.u32 %v7435, %v7431
      %v7437 = vrot.slane %v7436, 4
      %v7439 = vshll.u32 %v7352, 16
      %v7441 = vrot.slane %v7439, 5
      %v7442 = vsel %vm1147, %v7437, %v7441
      %v7444 = vshrl.u32 %v7353, 16
      %v7446 = vrot.slane %v7444, 4
      %v7447 = vshll.u32 %v7353, 16
      %v7449 = vrot.slane %v7447, 5
      %v7450 = vor.u32 %v7446, %v7449
      %v7451 = vrot.slane %v7450, 4
      %v7453 = vshll.u32 %v7354, 16
      %v7455 = vrot.slane %v7453, 5
      %v7456 = vsel %vm1147, %v7451, %v7455
      %v7457 = vshrl.u32 %v7354, 16
      %v7459 = vrot.slane %v7457, 4
      %v7460 = vor.u32 %v7459, %v7455
      %v7461 = vrot.slane %v7460, 4
      %v7463 = vshll.u32 %v7355, 16
      %v7465 = vrot.slane %v7463, 5
      %v7466 = vsel %vm1147, %v7461, %v7465
      %v7468 = vshrl.u32 %v7356, 16
      %v7470 = vrot.slane %v7468, 4
      %v7471 = vshll.u32 %v7356, 16
      %v7473 = vrot.slane %v7471, 5
      %v7474 = vor.u32 %v7470, %v7473
      %v7475 = vrot.slane %v7474, 4
      %v7477 = vshll.u32 %v7357, 16
      %v7479 = vrot.slane %v7477, 5
      %v7480 = vsel %vm1147, %v7475, %v7479
      %v7481 = vshrl.u32 %v7357, 16
      %v7483 = vrot.slane %v7481, 4
      %v7484 = vor.u32 %v7483, %v7479
      %v7485 = vrot.slane %v7484, 4
      %v7487 = vshll.u32 %v7358, 16
      %v7489 = vrot.slane %v7487, 5
      %v7490 = vsel %vm1147, %v7485, %v7489
      %v7492 = vshrl.u32 %v7359, 16
      %v7494 = vrot.slane %v7492, 4
      %v7495 = vshll.u32 %v7359, 16
      %v7497 = vrot.slane %v7495, 5
      %v7498 = vor.u32 %v7494, %v7497
      %v7499 = vrot.slane %v7498, 4
      %v7501 = vshll.u32 %v7360, 16
      %v7503 = vrot.slane %v7501, 5
      %v7504 = vsel %vm1147, %v7499, %v7503
      %v7505 = vshrl.u32 %v7360, 16
      %v7507 = vrot.slane %v7505, 4
      %v7508 = vor.u32 %v7507, %v7503
      %v7509 = vrot.slane %v7508, 4
      %v7511 = vshll.u32 %v7361, 16
      %v7513 = vrot.slane %v7511, 5
      %v7514 = vsel %vm1147, %v7509, %v7513
      %v7516 = vshrl.u32 %v7362, 16
      %v7518 = vrot.slane %v7516, 4
      %v7519 = vshll.u32 %v7362, 16
      %v7521 = vrot.slane %v7519, 5
      %v7522 = vor.u32 %v7518, %v7521
      %v7523 = vrot.slane %v7522, 4
      %v7525 = vshll.u32 %v7363, 16
      %v7527 = vrot.slane %v7525, 5
      %v7528 = vsel %vm1147, %v7523, %v7527
      %v7529 = vshrl.u32 %v7363, 16
      %v7531 = vrot.slane %v7529, 4
      %v7532 = vor.u32 %v7531, %v7527
      %v7533 = vrot.slane %v7532, 4
      %v7535 = vshll.u32 %v7364, 16
      %v7537 = vrot.slane %v7535, 5
      %v7538 = vsel %vm1147, %v7533, %v7537
      %v7540 = vshrl.u32 %v7365, 16
      %v7542 = vrot.slane %v7540, 4
      %v7543 = vshll.u32 %v7365, 16
      %v7545 = vrot.slane %v7543, 5
      %v7546 = vor.u32 %v7542, %v7545
      %v7547 = vrot.slane %v7546, 4
      %v7549 = vshll.u32 %v7366, 16
      %v7551 = vrot.slane %v7549, 5
      %v7552 = vsel %vm1147, %v7547, %v7551
      %v7553 = vshrl.u32 %v7366, 16
      %v7555 = vrot.slane %v7553, 4
      %v7556 = vor.u32 %v7555, %v7551
      %v7557 = vrot.slane %v7556, 4
      %v7559 = vshll.u32 %v7367, 16
      %v7561 = vrot.slane %v7559, 5
      %v7562 = vsel %vm1147, %v7557, %v7561
      %v7564 = vshrl.u32 %v7368, 16
      %v7566 = vrot.slane %v7564, 4
      %v7567 = vshll.u32 %v7368, 16
      %v7569 = vrot.slane %v7567, 5
      %v7570 = vor.u32 %v7566, %v7569
      %v7571 = vrot.slane %v7570, 4
      %v7573 = vshll.u32 %v7369, 16
      %v7575 = vrot.slane %v7573, 5
      %v7576 = vsel %vm1147, %v7571, %v7575
      %v7577 = vshrl.u32 %v7369, 16
      %v7579 = vrot.slane %v7577, 4
      %v7580 = vor.u32 %v7579, %v7575
      %v7581 = vrot.slane %v7580, 4
      %v7583 = vshll.u32 %v7370, 16
      %v7585 = vrot.slane %v7583, 5
      %v7586 = vsel %vm1147, %v7581, %v7585
      %v7588 = vshrl.u32 %v7371, 16
      %v7590 = vrot.slane %v7588, 4
      %v7591 = vshll.u32 %v7371, 16
      %v7593 = vrot.slane %v7591, 5
      %v7594 = vor.u32 %v7590, %v7593
      %v7595 = vrot.slane %v7594, 4
      %v7597 = vshll.u32 %v7372, 16
      %v7599 = vrot.slane %v7597, 5
      %v7600 = vsel %vm1147, %v7595, %v7599
      %v7601 = vshrl.u32 %v7372, 16
      %v7603 = vrot.slane %v7601, 4
      %v7604 = vor.u32 %v7603, %v7599
      %v7605 = vrot.slane %v7604, 4
      %v7607 = vshll.u32 %v7373, 16
      %v7609 = vrot.slane %v7607, 5
      %v7610 = vsel %vm1147, %v7605, %v7609
      %v7612 = vshrl.u32 %v7374, 16
      %v7614 = vrot.slane %v7612, 4
      %v7615 = vshll.u32 %v7374, 16
      %v7617 = vrot.slane %v7615, 5
      %v7618 = vor.u32 %v7614, %v7617
      %v7619 = vrot.slane %v7618, 4
      %v7621 = vshll.u32 %v7375, 16
      %v7623 = vrot.slane %v7621, 5
      %v7624 = vsel %vm1147, %v7619, %v7623
      %v7625 = vshrl.u32 %v7375, 16
      %v7627 = vrot.slane %v7625, 4
      %v7628 = vor.u32 %v7627, %v7623
      %v7629 = vrot.slane %v7628, 4
      %v7631 = vshll.u32 %v7376, 16
      %v7633 = vrot.slane %v7631, 5
      %v7634 = vsel %vm1147, %v7629, %v7633
      %v7636 = vshrl.u32 %v7377, 16
      %v7638 = vrot.slane %v7636, 4
      %v7639 = vshll.u32 %v7377, 16
      %v7641 = vrot.slane %v7639, 5
      %v7642 = vor.u32 %v7638, %v7641
      %v7643 = vrot.slane %v7642, 4
      %v7645 = vshll.u32 %v7378, 16
      %v7647 = vrot.slane %v7645, 5
      %v7648 = vsel %vm1147, %v7643, %v7647
      %v7649 = vshrl.u32 %v7378, 16
      %v7651 = vrot.slane %v7649, 4
      %v7652 = vor.u32 %v7651, %v7647
      %v7653 = vrot.slane %v7652, 4
      %v7655 = vshll.u32 %v7379, 16
      %v7657 = vrot.slane %v7655, 5
      %v7658 = vsel %vm1147, %v7653, %v7657
      %v7660 = vshrl.u32 %v7380, 16
      %v7662 = vrot.slane %v7660, 4
      %v7663 = vshll.u32 %v7380, 16
      %v7665 = vrot.slane %v7663, 5
      %v7666 = vor.u32 %v7662, %v7665
      %v7667 = vrot.slane %v7666, 4
      %v7669 = vshll.u32 %v7381, 16
      %v7671 = vrot.slane %v7669, 5
      %v7672 = vsel %vm1147, %v7667, %v7671
      %v7673 = vshrl.u32 %v7381, 16
      %v7675 = vrot.slane %v7673, 4
      %v7676 = vor.u32 %v7675, %v7671
      %v7677 = vrot.slane %v7676, 4
      %v7679 = vshll.u32 %v7382, 16
      %v7681 = vrot.slane %v7679, 5
      %v7682 = vsel %vm1147, %v7677, %v7681
      %v7684 = vshrl.u32 %v7383, 16
      %v7686 = vrot.slane %v7684, 4
      %v7687 = vshll.u32 %v7383, 16
      %v7689 = vrot.slane %v7687, 5
      %v7690 = vor.u32 %v7686, %v7689
      %v7691 = vrot.slane %v7690, 4
      %v7693 = vshll.u32 %v7384, 16
      %v7695 = vrot.slane %v7693, 5
      %v7696 = vsel %vm1147, %v7691, %v7695
      %v7697 = vshrl.u32 %v7384, 16
      %v7699 = vrot.slane %v7697, 4
      %v7700 = vor.u32 %v7699, %v7695
      %v7701 = vrot.slane %v7700, 4
      %v7703 = vshll.u32 %v7385, 16
      %v7705 = vrot.slane %v7703, 5
      %v7706 = vsel %vm1147, %v7701, %v7705
      %v7708 = vshrl.u32 %v7386, 16
      %v7710 = vrot.slane %v7708, 4
      %v7711 = vshll.u32 %v7386, 16
      %v7713 = vrot.slane %v7711, 5
      %v7714 = vor.u32 %v7710, %v7713
      %v7715 = vrot.slane %v7714, 4
      %v7717 = vshll.u32 %v7387, 16
      %v7719 = vrot.slane %v7717, 5
      %v7720 = vsel %vm1147, %v7715, %v7719
      %v7721 = vshrl.u32 %v7387, 16
      %v7723 = vrot.slane %v7721, 4
      %v7724 = vor.u32 %v7723, %v7719
      %v7725 = vrot.slane %v7724, 4
      %v7727 = vshll.u32 %v7388, 16
      %v7729 = vrot.slane %v7727, 5
      %v7730 = vsel %vm1147, %v7725, %v7729
      %v7732 = vshrl.u32 %v7389, 16
      %v7734 = vrot.slane %v7732, 4
      %v7735 = vshll.u32 %v7389, 16
      %v7737 = vrot.slane %v7735, 5
      %v7738 = vor.u32 %v7734, %v7737
      %v7739 = vrot.slane %v7738, 4
      %v7741 = vshll.u32 %v7390, 16
      %v7743 = vrot.slane %v7741, 5
      %v7744 = vsel %vm1147, %v7739, %v7743
      %v7745 = vshrl.u32 %v7390, 16
      %v7747 = vrot.slane %v7745, 4
      %v7748 = vor.u32 %v7747, %v7743
      %v7749 = vrot.slane %v7748, 4
      %v7751 = vshll.u32 %v7391, 16
      %v7753 = vrot.slane %v7751, 5
      %v7754 = vsel %vm1147, %v7749, %v7753
      %v7756 = vshrl.u32 %v7392, 16
      %v7758 = vrot.slane %v7756, 4
      %v7759 = vshll.u32 %v7392, 16
      %v7761 = vrot.slane %v7759, 5
      %v7762 = vor.u32 %v7758, %v7761
      %v7763 = vrot.slane %v7762, 4
      %v7765 = vshll.u32 %v7393, 16
      %v7767 = vrot.slane %v7765, 5
      %v7768 = vsel %vm1147, %v7763, %v7767
      %v7769 = vshrl.u32 %v7393, 16
      %v7771 = vrot.slane %v7769, 4
      %v7772 = vor.u32 %v7771, %v7767
      %v7773 = vrot.slane %v7772, 4
      %v7775 = vshll.u32 %v7394, 16
      %v7777 = vrot.slane %v7775, 5
      %v7778 = vsel %vm1147, %v7773, %v7777
      %7779 = vrot.lane.b32.xlu0 %v7408, 56
      %v7780 = vpop.permute.xlu0 %7779
      %7781 = vrot.lane.b32.xlu0 %v7418, 56
      %v7782 = vpop.permute.xlu0 %7781
      %7783 = vrot.lane.b32.xlu0 %v7432, 56
      %v7784 = vpop.permute.xlu0 %7783
      %7785 = vrot.lane.b32.xlu0 %v7442, 56
      %v7786 = vpop.permute.xlu0 %7785
      %7787 = vrot.lane.b32.xlu0 %v7456, 56
      %v7788 = vpop.permute.xlu0 %7787
      %7789 = vrot.lane.b32.xlu0 %v7466, 56
      %v7790 = vpop.permute.xlu0 %7789
      %7791 = vrot.lane.b32.xlu0 %v7480, 56
      %v7792 = vpop.permute.xlu0 %7791
      %7793 = vrot.lane.b32.xlu0 %v7490, 56
      %v7794 = vpop.permute.xlu0 %7793
      %7795 = vrot.lane.b32.xlu0 %v7504, 56
      %v7796 = vpop.permute.xlu0 %7795
      %7797 = vrot.lane.b32.xlu0 %v7514, 56
      %v7798 = vpop.permute.xlu0 %7797
      %7799 = vrot.lane.b32.xlu0 %v7528, 56
      %v7800 = vpop.permute.xlu0 %7799
      %7801 = vrot.lane.b32.xlu0 %v7538, 56
      %v7802 = vpop.permute.xlu0 %7801
      %7803 = vrot.lane.b32.xlu0 %v7552, 56
      %v7804 = vpop.permute.xlu0 %7803
      %7805 = vrot.lane.b32.xlu0 %v7562, 56
      %v7806 = vpop.permute.xlu0 %7805
      %7807 = vrot.lane.b32.xlu0 %v7576, 56
      %v7808 = vpop.permute.xlu0 %7807
      %7809 = vrot.lane.b32.xlu0 %v7586, 56
      %v7810 = vpop.permute.xlu0 %7809
      %7811 = vrot.lane.b32.xlu0 %v7600, 56
      %v7812 = vpop.permute.xlu0 %7811
      %7813 = vrot.lane.b32.xlu0 %v7610, 56
      %v7814 = vpop.permute.xlu0 %7813
      %7815 = vrot.lane.b32.xlu0 %v7624, 56
      %v7816 = vpop.permute.xlu0 %7815
      %7817 = vrot.lane.b32.xlu0 %v7634, 56
      %v7818 = vpop.permute.xlu0 %7817
      %7819 = vrot.lane.b32.xlu0 %v7648, 56
      %v7820 = vpop.permute.xlu0 %7819
      %7821 = vrot.lane.b32.xlu0 %v7658, 56
      %v7822 = vpop.permute.xlu0 %7821
      %7823 = vrot.lane.b32.xlu0 %v7672, 56
      %v7824 = vpop.permute.xlu0 %7823
      %7825 = vrot.lane.b32.xlu0 %v7682, 56
      %v7826 = vpop.permute.xlu0 %7825
      %7827 = vrot.lane.b32.xlu0 %v7696, 56
      %v7828 = vpop.permute.xlu0 %7827
      %7829 = vrot.lane.b32.xlu0 %v7706, 56
      %v7830 = vpop.permute.xlu0 %7829
      %7831 = vrot.lane.b32.xlu0 %v7720, 56
      %v7832 = vpop.permute.xlu0 %7831
      %7833 = vrot.lane.b32.xlu0 %v7730, 56
      %v7834 = vpop.permute.xlu0 %7833
      %7835 = vrot.lane.b32.xlu0 %v7744, 56
      %v7836 = vpop.permute.xlu0 %7835
      %7837 = vrot.lane.b32.xlu0 %v7754, 56
      %v7838 = vpop.permute.xlu0 %7837
      %7839 = vrot.lane.b32.xlu0 %v7768, 56
      %v7840 = vpop.permute.xlu0 %7839
      %7841 = vrot.lane.b32.xlu0 %v7778, 56
      %v7842 = vpop.permute.xlu0 %7841
      %vm7875 = vcmask 519616
      %7876 = vst.msk [vmem:[#allocation4] sm:$0xf] %vm7875, %v7780
      %7877 = vst.msk [vmem:[#allocation4 + $0x4] sm:$0xf] %vm7875, %v7782
      %7878 = vst.msk [vmem:[#allocation4 + $0x8] sm:$0xf] %vm7875, %v7784
      %7879 = vst.msk [vmem:[#allocation4 + $0xc] sm:$0xf] %vm7875, %v7786
      %7880 = vst.msk [vmem:[#allocation4 + $0x10] sm:$0xf] %vm7875, %v7788
      %7881 = vst.msk [vmem:[#allocation4 + $0x14] sm:$0xf] %vm7875, %v7790
      %7882 = vst.msk [vmem:[#allocation4 + $0x18] sm:$0xf] %vm7875, %v7792
      %7883 = vst.msk [vmem:[#allocation4 + $0x1c] sm:$0xf] %vm7875, %v7794
      %7884 = vst.msk [vmem:[#allocation4 + $0x20] sm:$0xf] %vm7875, %v7796
      %7885 = vst.msk [vmem:[#allocation4 + $0x24] sm:$0xf] %vm7875, %v7798
      %7886 = vst.msk [vmem:[#allocation4 + $0x28] sm:$0xf] %vm7875, %v7800
      %7887 = vst.msk [vmem:[#allocation4 + $0x2c] sm:$0xf] %vm7875, %v7802
      %7888 = vst.msk [vmem:[#allocation4 + $0x30] sm:$0xf] %vm7875, %v7804
      %7889 = vst.msk [vmem:[#allocation4 + $0x34] sm:$0xf] %vm7875, %v7806
      %7890 = vst.msk [vmem:[#allocation4 + $0x38] sm:$0xf] %vm7875, %v7808
      %7891 = vst.msk [vmem:[#allocation4 + $0x3c] sm:$0xf] %vm7875, %v7810
      %7892 = vst.msk [vmem:[#allocation4 + $0x40] sm:$0xf] %vm7875, %v7812
      %7893 = vst.msk [vmem:[#allocation4 + $0x44] sm:$0xf] %vm7875, %v7814
      %7894 = vst.msk [vmem:[#allocation4 + $0x48] sm:$0xf] %vm7875, %v7816
      %7895 = vst.msk [vmem:[#allocation4 + $0x4c] sm:$0xf] %vm7875, %v7818
      %7896 = vst.msk [vmem:[#allocation4 + $0x50] sm:$0xf] %vm7875, %v7820
      %7897 = vst.msk [vmem:[#allocation4 + $0x54] sm:$0xf] %vm7875, %v7822
      %7898 = vst.msk [vmem:[#allocation4 + $0x58] sm:$0xf] %vm7875, %v7824
      %7899 = vst.msk [vmem:[#allocation4 + $0x5c] sm:$0xf] %vm7875, %v7826
      %7900 = vst.msk [vmem:[#allocation4 + $0x60] sm:$0xf] %vm7875, %v7828
      %7901 = vst.msk [vmem:[#allocation4 + $0x64] sm:$0xf] %vm7875, %v7830
      %7902 = vst.msk [vmem:[#allocation4 + $0x68] sm:$0xf] %vm7875, %v7832
      %7903 = vst.msk [vmem:[#allocation4 + $0x6c] sm:$0xf] %vm7875, %v7834
      %7904 = vst.msk [vmem:[#allocation4 + $0x70] sm:$0xf] %vm7875, %v7836
      %7905 = vst.msk [vmem:[#allocation4 + $0x74] sm:$0xf] %vm7875, %v7838
      %7906 = vst.msk [vmem:[#allocation4 + $0x78] sm:$0xf] %vm7875, %v7840
      %7907 = vst.msk [vmem:[#allocation4 + $0x7c] sm:$0xf] %vm7875, %v7842
      %v7908 = vld [vmem:[%s7153] sm:$0xe]
      %v7909 = vld [vmem:[%s7153 + $0x4] sm:$0xf]
      %v7910 = vld [vmem:[%s7153 + $0x8] sm:$0x1]
      %v7911 = vld [vmem:[%s7153 + $0xc] sm:$0xe]
      %v7912 = vld [vmem:[%s7153 + $0x10] sm:$0xf]
      %v7913 = vld [vmem:[%s7153 + $0x14] sm:$0x1]
      %v7914 = vld [vmem:[%s7153 + $0x18] sm:$0xe]
      %v7915 = vld [vmem:[%s7153 + $0x1c] sm:$0xf]
      %v7916 = vld [vmem:[%s7153 + $0x20] sm:$0x1]
      %v7917 = vld [vmem:[%s7153 + $0x24] sm:$0xe]
      %v7918 = vld [vmem:[%s7153 + $0x28] sm:$0xf]
      %v7919 = vld [vmem:[%s7153 + $0x2c] sm:$0x1]
      %v7920 = vld [vmem:[%s7153 + $0x30] sm:$0xe]
      %v7921 = vld [vmem:[%s7153 + $0x34] sm:$0xf]
      %v7922 = vld [vmem:[%s7153 + $0x38] sm:$0x1]
      %v7923 = vld [vmem:[%s7153 + $0x3c] sm:$0xe]
      %v7924 = vld [vmem:[%s7153 + $0x40] sm:$0xf]
      %v7925 = vld [vmem:[%s7153 + $0x44] sm:$0x1]
      %v7926 = vld [vmem:[%s7153 + $0x48] sm:$0xe]
      %v7927 = vld [vmem:[%s7153 + $0x4c] sm:$0xf]
      %v7928 = vld [vmem:[%s7153 + $0x50] sm:$0x1]
      %v7929 = vld [vmem:[%s7153 + $0x54] sm:$0xe]
      %v7930 = vld [vmem:[%s7153 + $0x58] sm:$0xf]
      %v7931 = vld [vmem:[%s7153 + $0x5c] sm:$0x1]
      %v7932 = vld [vmem:[%s7153 + $0x60] sm:$0xe]
      %v7933 = vld [vmem:[%s7153 + $0x64] sm:$0xf]
      %v7934 = vld [vmem:[%s7153 + $0x68] sm:$0x1]
      %v7935 = vld [vmem:[%s7153 + $0x6c] sm:$0xe]
      %v7936 = vld [vmem:[%s7153 + $0x70] sm:$0xf]
      %v7937 = vld [vmem:[%s7153 + $0x74] sm:$0x1]
      %v7938 = vld [vmem:[%s7153 + $0x78] sm:$0xe]
      %v7939 = vld [vmem:[%s7153 + $0x7c] sm:$0xf]
      %v7940 = vld [vmem:[%s7153 + $0x80] sm:$0x1]
      %v7941 = vld [vmem:[%s7153 + $0x84] sm:$0xe]
      %v7942 = vld [vmem:[%s7153 + $0x88] sm:$0xf]
      %v7943 = vld [vmem:[%s7153 + $0x8c] sm:$0x1]
      %v7944 = vld [vmem:[%s7153 + $0x90] sm:$0xe]
      %v7945 = vld [vmem:[%s7153 + $0x94] sm:$0xf]
      %v7946 = vld [vmem:[%s7153 + $0x98] sm:$0x1]
      %v7947 = vld [vmem:[%s7153 + $0x9c] sm:$0xe]
      %v7948 = vld [vmem:[%s7153 + $0xa0] sm:$0xf]
      %v7949 = vld [vmem:[%s7153 + $0xa4] sm:$0x1]
      %v7950 = vld [vmem:[%s7153 + $0xa8] sm:$0xe]
      %v7951 = vld [vmem:[%s7153 + $0xac] sm:$0xf]
      %v7952 = vld [vmem:[%s7153 + $0xb0] sm:$0x1]
      %v7953 = vld [vmem:[%s7153 + $0xb4] sm:$0xe]
      %v7954 = vld [vmem:[%s7153 + $0xb8] sm:$0xf]
      %v7955 = vld [vmem:[%s7153 + $0xbc] sm:$0x1]
      %v8004 = vrot.slane %v7908, 5
      %v8005 = vrot.slane %v8004, 4
      %v8006 = vrot.slane %v7909, 5
      %v8007 = vsel %vm1759, %v8005, %v8006
      %v8008 = vrot.slane %v8006, 4
      %v8009 = vrot.slane %v7910, 5
      %v8010 = vsel %vm1759, %v8008, %v8009
      %v8011 = vrot.slane %v7911, 5
      %v8012 = vrot.slane %v8011, 4
      %v8013 = vrot.slane %v7912, 5
      %v8014 = vsel %vm1759, %v8012, %v8013
      %v8015 = vrot.slane %v8013, 4
      %v8016 = vrot.slane %v7913, 5
      %v8017 = vsel %vm1759, %v8015, %v8016
      %v8018 = vrot.slane %v7914, 5
      %v8019 = vrot.slane %v8018, 4
      %v8020 = vrot.slane %v7915, 5
      %v8021 = vsel %vm1759, %v8019, %v8020
      %v8022 = vrot.slane %v8020, 4
      %v8023 = vrot.slane %v7916, 5
      %v8024 = vsel %vm1759, %v8022, %v8023
      %v8025 = vrot.slane %v7917, 5
      %v8026 = vrot.slane %v8025, 4
      %v8027 = vrot.slane %v7918, 5
      %v8028 = vsel %vm1759, %v8026, %v8027
      %v8029 = vrot.slane %v8027, 4
      %v8030 = vrot.slane %v7919, 5
      %v8031 = vsel %vm1759, %v8029, %v8030
      %v8032 = vrot.slane %v7920, 5
      %v8033 = vrot.slane %v8032, 4
      %v8034 = vrot.slane %v7921, 5
      %v8035 = vsel %vm1759, %v8033, %v8034
      %v8036 = vrot.slane %v8034, 4
      %v8037 = vrot.slane %v7922, 5
      %v8038 = vsel %vm1759, %v8036, %v8037
      %v8039 = vrot.slane %v7923, 5
      %v8040 = vrot.slane %v8039, 4
      %v8041 = vrot.slane %v7924, 5
      %v8042 = vsel %vm1759, %v8040, %v8041
      %v8043 = vrot.slane %v8041, 4
      %v8044 = vrot.slane %v7925, 5
      %v8045 = vsel %vm1759, %v8043, %v8044
      %v8046 = vrot.slane %v7926, 5
      %v8047 = vrot.slane %v8046, 4
      %v8048 = vrot.slane %v7927, 5
      %v8049 = vsel %vm1759, %v8047, %v8048
      %v8050 = vrot.slane %v8048, 4
      %v8051 = vrot.slane %v7928, 5
      %v8052 = vsel %vm1759, %v8050, %v8051
      %v8053 = vrot.slane %v7929, 5
      %v8054 = vrot.slane %v8053, 4
      %v8055 = vrot.slane %v7930, 5
      %v8056 = vsel %vm1759, %v8054, %v8055
      %v8057 = vrot.slane %v8055, 4
      %v8058 = vrot.slane %v7931, 5
      %v8059 = vsel %vm1759, %v8057, %v8058
      %v8060 = vrot.slane %v7932, 5
      %v8061 = vrot.slane %v8060, 4
      %v8062 = vrot.slane %v7933, 5
      %v8063 = vsel %vm1759, %v8061, %v8062
      %v8064 = vrot.slane %v8062, 4
      %v8065 = vrot.slane %v7934, 5
      %v8066 = vsel %vm1759, %v8064, %v8065
      %v8067 = vrot.slane %v7935, 5
      %v8068 = vrot.slane %v8067, 4
      %v8069 = vrot.slane %v7936, 5
      %v8070 = vsel %vm1759, %v8068, %v8069
      %v8071 = vrot.slane %v8069, 4
      %v8072 = vrot.slane %v7937, 5
      %v8073 = vsel %vm1759, %v8071, %v8072
      %v8074 = vrot.slane %v7938, 5
      %v8075 = vrot.slane %v8074, 4
      %v8076 = vrot.slane %v7939, 5
      %v8077 = vsel %vm1759, %v8075, %v8076
      %v8078 = vrot.slane %v8076, 4
      %v8079 = vrot.slane %v7940, 5
      %v8080 = vsel %vm1759, %v8078, %v8079
      %v8081 = vrot.slane %v7941, 5
      %v8082 = vrot.slane %v8081, 4
      %v8083 = vrot.slane %v7942, 5
      %v8084 = vsel %vm1759, %v8082, %v8083
      %v8085 = vrot.slane %v8083, 4
      %v8086 = vrot.slane %v7943, 5
      %v8087 = vsel %vm1759, %v8085, %v8086
      %v8088 = vrot.slane %v7944, 5
      %v8089 = vrot.slane %v8088, 4
      %v8090 = vrot.slane %v7945, 5
      %v8091 = vsel %vm1759, %v8089, %v8090
      %v8092 = vrot.slane %v8090, 4
      %v8093 = vrot.slane %v7946, 5
      %v8094 = vsel %vm1759, %v8092, %v8093
      %v8095 = vrot.slane %v7947, 5
      %v8096 = vrot.slane %v8095, 4
      %v8097 = vrot.slane %v7948, 5
      %v8098 = vsel %vm1759, %v8096, %v8097
      %v8099 = vrot.slane %v8097, 4
      %v8100 = vrot.slane %v7949, 5
      %v8101 = vsel %vm1759, %v8099, %v8100
      %v8102 = vrot.slane %v7950, 5
      %v8103 = vrot.slane %v8102, 4
      %v8104 = vrot.slane %v7951, 5
      %v8105 = vsel %vm1759, %v8103, %v8104
      %v8106 = vrot.slane %v8104, 4
      %v8107 = vrot.slane %v7952, 5
      %v8108 = vsel %vm1759, %v8106, %v8107
      %v8109 = vrot.slane %v7953, 5
      %v8110 = vrot.slane %v8109, 4
      %v8111 = vrot.slane %v7954, 5
      %v8112 = vsel %vm1759, %v8110, %v8111
      %v8113 = vrot.slane %v8111, 4
      %v8114 = vrot.slane %v7955, 5
      %v8115 = vsel %vm1759, %v8113, %v8114
      %8116 = vrot.lane.b32.xlu0 %v8007, 64
      %v8117 = vpop.permute.xlu0 %8116
      %8118 = vrot.lane.b32.xlu0 %v8010, 64
      %v8119 = vpop.permute.xlu0 %8118
      %8120 = vrot.lane.b32.xlu0 %v8014, 64
      %v8121 = vpop.permute.xlu0 %8120
      %8122 = vrot.lane.b32.xlu0 %v8017, 64
      %v8123 = vpop.permute.xlu0 %8122
      %8124 = vrot.lane.b32.xlu0 %v8021, 64
      %v8125 = vpop.permute.xlu0 %8124
      %8126 = vrot.lane.b32.xlu0 %v8024, 64
      %v8127 = vpop.permute.xlu0 %8126
      %8128 = vrot.lane.b32.xlu0 %v8028, 64
      %v8129 = vpop.permute.xlu0 %8128
      %8130 = vrot.lane.b32.xlu0 %v8031, 64
      %v8131 = vpop.permute.xlu0 %8130
      %8132 = vrot.lane.b32.xlu0 %v8035, 64
      %v8133 = vpop.permute.xlu0 %8132
      %8134 = vrot.lane.b32.xlu0 %v8038, 64
      %v8135 = vpop.permute.xlu0 %8134
      %8136 = vrot.lane.b32.xlu0 %v8042, 64
      %v8137 = vpop.permute.xlu0 %8136
      %8138 = vrot.lane.b32.xlu0 %v8045, 64
      %v8139 = vpop.permute.xlu0 %8138
      %8140 = vrot.lane.b32.xlu0 %v8049, 64
      %v8141 = vpop.permute.xlu0 %8140
      %8142 = vrot.lane.b32.xlu0 %v8052, 64
      %v8143 = vpop.permute.xlu0 %8142
      %8144 = vrot.lane.b32.xlu0 %v8056, 64
      %v8145 = vpop.permute.xlu0 %8144
      %8146 = vrot.lane.b32.xlu0 %v8059, 64
      %v8147 = vpop.permute.xlu0 %8146
      %8148 = vrot.lane.b32.xlu0 %v8063, 64
      %v8149 = vpop.permute.xlu0 %8148
      %8150 = vrot.lane.b32.xlu0 %v8066, 64
      %v8151 = vpop.permute.xlu0 %8150
      %8152 = vrot.lane.b32.xlu0 %v8070, 64
      %v8153 = vpop.permute.xlu0 %8152
      %8154 = vrot.lane.b32.xlu0 %v8073, 64
      %v8155 = vpop.permute.xlu0 %8154
      %8156 = vrot.lane.b32.xlu0 %v8077, 64
      %v8157 = vpop.permute.xlu0 %8156
      %8158 = vrot.lane.b32.xlu0 %v8080, 64
      %v8159 = vpop.permute.xlu0 %8158
      %8160 = vrot.lane.b32.xlu0 %v8084, 64
      %v8161 = vpop.permute.xlu0 %8160
      %8162 = vrot.lane.b32.xlu0 %v8087, 64
      %v8163 = vpop.permute.xlu0 %8162
      %8164 = vrot.lane.b32.xlu0 %v8091, 64
      %v8165 = vpop.permute.xlu0 %8164
      %8166 = vrot.lane.b32.xlu0 %v8094, 64
      %v8167 = vpop.permute.xlu0 %8166
      %8168 = vrot.lane.b32.xlu0 %v8098, 64
      %v8169 = vpop.permute.xlu0 %8168
      %8170 = vrot.lane.b32.xlu0 %v8101, 64
      %v8171 = vpop.permute.xlu0 %8170
      %8172 = vrot.lane.b32.xlu0 %v8105, 64
      %v8173 = vpop.permute.xlu0 %8172
      %8174 = vrot.lane.b32.xlu0 %v8108, 64
      %v8175 = vpop.permute.xlu0 %8174
      %8176 = vrot.lane.b32.xlu0 %v8112, 64
      %v8177 = vpop.permute.xlu0 %8176
      %8178 = vrot.lane.b32.xlu0 %v8115, 64
      %v8179 = vpop.permute.xlu0 %8178
      %vm8212 = vcmask 585216
      %8213 = vst.msk [vmem:[#allocation4] sm:$0xf] %vm8212, %v8117
      %8214 = vst.msk [vmem:[#allocation4 + $0x4] sm:$0xf] %vm8212, %v8119
      %8215 = vst.msk [vmem:[#allocation4 + $0x8] sm:$0xf] %vm8212, %v8121
      %8216 = vst.msk [vmem:[#allocation4 + $0xc] sm:$0xf] %vm8212, %v8123
      %8217 = vst.msk [vmem:[#allocation4 + $0x10] sm:$0xf] %vm8212, %v8125
      %8218 = vst.msk [vmem:[#allocation4 + $0x14] sm:$0xf] %vm8212, %v8127
      %8219 = vst.msk [vmem:[#allocation4 + $0x18] sm:$0xf] %vm8212, %v8129
      %8220 = vst.msk [vmem:[#allocation4 + $0x1c] sm:$0xf] %vm8212, %v8131
      %8221 = vst.msk [vmem:[#allocation4 + $0x20] sm:$0xf] %vm8212, %v8133
      %8222 = vst.msk [vmem:[#allocation4 + $0x24] sm:$0xf] %vm8212, %v8135
      %8223 = vst.msk [vmem:[#allocation4 + $0x28] sm:$0xf] %vm8212, %v8137
      %8224 = vst.msk [vmem:[#allocation4 + $0x2c] sm:$0xf] %vm8212, %v8139
      %8225 = vst.msk [vmem:[#allocation4 + $0x30] sm:$0xf] %vm8212, %v8141
      %8226 = vst.msk [vmem:[#allocation4 + $0x34] sm:$0xf] %vm8212, %v8143
      %8227 = vst.msk [vmem:[#allocation4 + $0x38] sm:$0xf] %vm8212, %v8145
      %8228 = vst.msk [vmem:[#allocation4 + $0x3c] sm:$0xf] %vm8212, %v8147
      %8229 = vst.msk [vmem:[#allocation4 + $0x40] sm:$0xf] %vm8212, %v8149
      %8230 = vst.msk [vmem:[#allocation4 + $0x44] sm:$0xf] %vm8212, %v8151
      %8231 = vst.msk [vmem:[#allocation4 + $0x48] sm:$0xf] %vm8212, %v8153
      %8232 = vst.msk [vmem:[#allocation4 + $0x4c] sm:$0xf] %vm8212, %v8155
      %8233 = vst.msk [vmem:[#allocation4 + $0x50] sm:$0xf] %vm8212, %v8157
      %8234 = vst.msk [vmem:[#allocation4 + $0x54] sm:$0xf] %vm8212, %v8159
      %8235 = vst.msk [vmem:[#allocation4 + $0x58] sm:$0xf] %vm8212, %v8161
      %8236 = vst.msk [vmem:[#allocation4 + $0x5c] sm:$0xf] %vm8212, %v8163
      %8237 = vst.msk [vmem:[#allocation4 + $0x60] sm:$0xf] %vm8212, %v8165
      %8238 = vst.msk [vmem:[#allocation4 + $0x64] sm:$0xf] %vm8212, %v8167
      %8239 = vst.msk [vmem:[#allocation4 + $0x68] sm:$0xf] %vm8212, %v8169
      %8240 = vst.msk [vmem:[#allocation4 + $0x6c] sm:$0xf] %vm8212, %v8171
      %8241 = vst.msk [vmem:[#allocation4 + $0x70] sm:$0xf] %vm8212, %v8173
      %8242 = vst.msk [vmem:[#allocation4 + $0x74] sm:$0xf] %vm8212, %v8175
      %8243 = vst.msk [vmem:[#allocation4 + $0x78] sm:$0xf] %vm8212, %v8177
      %8244 = vst.msk [vmem:[#allocation4 + $0x7c] sm:$0xf] %vm8212, %v8179
      %v8245 = vld [vmem:[#allocation4] sm:$0xf]
      %v8246 = vld [vmem:[#allocation4 + $0x4] sm:$0xf]
      %v8247 = vld [vmem:[#allocation4 + $0x8] sm:$0xf]
      %v8248 = vld [vmem:[#allocation4 + $0xc] sm:$0xf]
      %v8249 = vld [vmem:[#allocation4 + $0x10] sm:$0xf]
      %v8250 = vld [vmem:[#allocation4 + $0x14] sm:$0xf]
      %v8251 = vld [vmem:[#allocation4 + $0x18] sm:$0xf]
      %v8252 = vld [vmem:[#allocation4 + $0x1c] sm:$0xf]
      %v8253 = vld [vmem:[#allocation4 + $0x20] sm:$0xf]
      %v8254 = vld [vmem:[#allocation4 + $0x24] sm:$0xf]
      %v8255 = vld [vmem:[#allocation4 + $0x28] sm:$0xf]
      %v8256 = vld [vmem:[#allocation4 + $0x2c] sm:$0xf]
      %v8257 = vld [vmem:[#allocation4 + $0x30] sm:$0xf]
      %v8258 = vld [vmem:[#allocation4 + $0x34] sm:$0xf]
      %v8259 = vld [vmem:[#allocation4 + $0x38] sm:$0xf]
      %v8260 = vld [vmem:[#allocation4 + $0x3c] sm:$0xf]
      %v8261 = vld [vmem:[#allocation4 + $0x40] sm:$0xf]
      %v8262 = vld [vmem:[#allocation4 + $0x44] sm:$0xf]
      %v8263 = vld [vmem:[#allocation4 + $0x48] sm:$0xf]
      %v8264 = vld [vmem:[#allocation4 + $0x4c] sm:$0xf]
      %v8265 = vld [vmem:[#allocation4 + $0x50] sm:$0xf]
      %v8266 = vld [vmem:[#allocation4 + $0x54] sm:$0xf]
      %v8267 = vld [vmem:[#allocation4 + $0x58] sm:$0xf]
      %v8268 = vld [vmem:[#allocation4 + $0x5c] sm:$0xf]
      %v8269 = vld [vmem:[#allocation4 + $0x60] sm:$0xf]
      %v8270 = vld [vmem:[#allocation4 + $0x64] sm:$0xf]
      %v8271 = vld [vmem:[#allocation4 + $0x68] sm:$0xf]
      %v8272 = vld [vmem:[#allocation4 + $0x6c] sm:$0xf]
      %v8273 = vld [vmem:[#allocation4 + $0x70] sm:$0xf]
      %v8274 = vld [vmem:[#allocation4 + $0x74] sm:$0xf]
      %v8275 = vld [vmem:[#allocation4 + $0x78] sm:$0xf]
      %v8276 = vld [vmem:[#allocation4 + $0x7c] sm:$0xf]
      %v8277 = vld [vmem:[%s3] sm:$0xf]
      %v8278 = vld [vmem:[%s3 + $0x4] sm:$0xf]
      %v8279 = vld [vmem:[%s3 + $0x8] sm:$0xf]
      %v8280 = vld [vmem:[%s3 + $0xc] sm:$0xf]
      %v8281 = vld [vmem:[%s3 + $0x10] sm:$0xf]
      %v8282 = vld [vmem:[%s3 + $0x14] sm:$0xf]
      %v8283 = vld [vmem:[%s3 + $0x18] sm:$0xf]
      %v8284 = vld [vmem:[%s3 + $0x1c] sm:$0xf]
      %v8285 = vld [vmem:[%s3 + $0x20] sm:$0xf]
      %v8286 = vld [vmem:[%s4] sm:$0x1]
      %v8288 = vlaneseq
      %v8289 = vshrl.u32 %v8288, 7
      %v8290 = vsub.s32 0, %v8289
      %v8291 = vrot.slane %v8286, %v8290
      %v8325 = vunpack.c.l.b16 %v8245
      %v8326 = vunpack.c.l.b16 %v8246
      %v8327 = vunpack.c.l.b16 %v8247
      %v8328 = vunpack.c.l.b16 %v8248
      %v8329 = vunpack.c.l.b16 %v8249
      %v8330 = vunpack.c.l.b16 %v8250
      %v8331 = vunpack.c.l.b16 %v8251
      %v8332 = vunpack.c.l.b16 %v8252
      %v8333 = vunpack.c.l.b16 %v8253
      %v8334 = vunpack.c.l.b16 %v8254
      %v8335 = vunpack.c.l.b16 %v8255
      %v8336 = vunpack.c.l.b16 %v8256
      %v8337 = vunpack.c.l.b16 %v8257
      %v8338 = vunpack.c.l.b16 %v8258
      %v8339 = vunpack.c.l.b16 %v8259
      %v8340 = vunpack.c.l.b16 %v8260
      %v8341 = vunpack.c.l.b16 %v8261
      %v8342 = vunpack.c.l.b16 %v8262
      %v8343 = vunpack.c.l.b16 %v8263
      %v8344 = vunpack.c.l.b16 %v8264
      %v8345 = vunpack.c.l.b16 %v8265
      %v8346 = vunpack.c.l.b16 %v8266
      %v8347 = vunpack.c.l.b16 %v8267
      %v8348 = vunpack.c.l.b16 %v8268
      %v8349 = vunpack.c.l.b16 %v8269
      %v8350 = vunpack.c.l.b16 %v8270
      %v8351 = vunpack.c.l.b16 %v8271
      %v8352 = vunpack.c.l.b16 %v8272
      %v8353 = vunpack.c.l.b16 %v8273
      %v8354 = vunpack.c.l.b16 %v8274
      %v8355 = vunpack.c.l.b16 %v8275
      %v8356 = vunpack.c.l.b16 %v8276
      %v8357 = vpack.c.b16 %v8326, %v8325
      %v8358 = vpack.c.b16 %v8328, %v8327
      %v8359 = vpack.c.b16 %v8330, %v8329
      %v8360 = vpack.c.b16 %v8332, %v8331
      %v8361 = vpack.c.b16 %v8334, %v8333
      %v8362 = vpack.c.b16 %v8336, %v8335
      %v8363 = vpack.c.b16 %v8338, %v8337
      %v8364 = vpack.c.b16 %v8340, %v8339
      %v8365 = vpack.c.b16 %v8342, %v8341
      %v8366 = vpack.c.b16 %v8344, %v8343
      %v8367 = vpack.c.b16 %v8346, %v8345
      %v8368 = vpack.c.b16 %v8348, %v8347
      %v8369 = vpack.c.b16 %v8350, %v8349
      %v8370 = vpack.c.b16 %v8352, %v8351
      %v8371 = vpack.c.b16 %v8354, %v8353
      %v8372 = vpack.c.b16 %v8356, %v8355
      %v8382 = vunpack.c.l.b16 %v8277
      %v8383 = vunpack.c.l.b16 %v8278
      %v8384 = vunpack.c.l.b16 %v8279
      %v8385 = vunpack.c.l.b16 %v8280
      %v8386 = vunpack.c.l.b16 %v8281
      %v8387 = vunpack.c.l.b16 %v8282
      %v8388 = vunpack.c.l.b16 %v8283
      %v8389 = vunpack.c.l.b16 %v8284
      %v8390 = vunpack.c.l.b16 %v8285
      %v8391 = vpack.c.b16 %v8383, %v8382
      %v8392 = vpack.c.b16 %v8385, %v8384
      %v8393 = vpack.c.b16 %v8387, %v8386
      %v8394 = vpack.c.b16 %v8389, %v8388
      %v8395 = vpack.c.b16 %v8390, %v8390
      %vm8400 = vcmask 588800
      %v8402 = vsel %vm8400, %v8357, 0
      %v8405 = vsel %vm8400, %v8358, 0
      %v8408 = vsel %vm8400, %v8359, 0
      %v8411 = vsel %vm8400, %v8360, 0
      %v8414 = vsel %vm8400, %v8361, 0
      %v8417 = vsel %vm8400, %v8362, 0
      %v8420 = vsel %vm8400, %v8363, 0
      %v8423 = vsel %vm8400, %v8364, 0
      %v8426 = vsel %vm8400, %v8365, 0
      %v8429 = vsel %vm8400, %v8366, 0
      %v8432 = vsel %vm8400, %v8367, 0
      %v8435 = vsel %vm8400, %v8368, 0
      %v8438 = vsel %vm8400, %v8369, 0
      %v8441 = vsel %vm8400, %v8370, 0
      %v8444 = vsel %vm8400, %v8371, 0
      %v8447 = vsel %vm8400, %v8372, 0
      %vm8449 = vcmask 1043456
      %v8451 = vsel %vm8449, %v8395, 0
      %8453 = vmatprep.subr.bf16.mxu0 0
      %8454 = vmatpush1.bf16.msra.mxu0 0
      %8455 = vmatprep.subr.bf16.mxu0 0
      %8456 = vmatpush1.bf16.msra.mxu0 0
      %8457 = vmatprep.subr.bf16.mxu0 0
      %8458 = vmatpush1.bf16.msra.mxu0 0
      %8459 = vmatprep.subr.bf16.mxu0 0
      %8460 = vmatpush1.bf16.msra.mxu0 %v8451
      %8461 = vmatprep.subr.bf16.mxu0 0
      %8462 = vmatpush1.bf16.msra.mxu0 %v8394
      %8463 = vmatprep.subr.bf16.mxu0 0
      %8464 = vmatpush1.bf16.msra.mxu0 %v8393
      %8465 = vmatprep.subr.bf16.mxu0 0
      %8466 = vmatpush1.bf16.msra.mxu0 %v8392
      %8467 = vmatprep.subr.bf16.mxu0 0
      %8468 = vmatpush1.bf16.msra.mxu0 %v8391
      %8469 = vmatprep.subr.bf16.mxu0 0
      %8470 = vmatpush2.bf16.msra.mxu0 0
      %8471 = vmatprep.subr.bf16.mxu0 0
      %8472 = vmatpush2.bf16.msra.mxu0 0
      %8473 = vmatprep.subr.bf16.mxu0 0
      %8474 = vmatpush2.bf16.msra.mxu0 0
      %8475 = vmatprep.subr.bf16.mxu0 0
      %8476 = vmatpush2.bf16.msra.mxu0 0
      %8477 = vmatprep.subr.bf16.mxu0 0
      %8478 = vmatpush2.bf16.msra.mxu0 0
      %8479 = vmatprep.subr.bf16.mxu0 0
      %8480 = vmatpush2.bf16.msra.mxu0 0
      %8481 = vmatprep.subr.bf16.mxu0 0
      %8482 = vmatpush2.bf16.msra.mxu0 0
      %8483 = vmatprep.subr.bf16.mxu0 0
      %8484 = vmatpush2.bf16.msra.mxu0 0
      %8485 = vmatprep.mubr.bf16.mxu0 0
      %8486 = vmatmul.mubr.bf16.gmra.mxu0 %v8402
      %v8487 = vpop.f32.mrf.mxu0
      %v8488 = vadd.f32 %v8291, %v8487
      %v8489 = vpop.f32.mrf.mxu0
      %v8490 = vpop.f32.mrf.mxu0
      %v8491 = vadd.f32 %v8291, %v8490
      %v8492 = vpop.f32.mrf.mxu0
      %8493 = vmatprep.mubr.bf16.mxu0 0
      %8494 = vmatmul.mubr.bf16.gmra.mxu0 %v8405
      %v8495 = vpop.f32.mrf.mxu0
      %v8496 = vadd.f32 %v8291, %v8495
      %v8497 = vpop.f32.mrf.mxu0
      %v8498 = vpop.f32.mrf.mxu0
      %v8499 = vadd.f32 %v8291, %v8498
      %v8500 = vpop.f32.mrf.mxu0
      %8501 = vmatprep.mubr.bf16.mxu0 0
      %8502 = vmatmul.mubr.bf16.gmra.mxu0 %v8408
      %v8503 = vpop.f32.mrf.mxu0
      %v8504 = vadd.f32 %v8291, %v8503
      %v8505 = vpop.f32.mrf.mxu0
      %v8506 = vpop.f32.mrf.mxu0
      %v8507 = vadd.f32 %v8291, %v8506
      %v8508 = vpop.f32.mrf.mxu0
      %8509 = vmatprep.mubr.bf16.mxu0 0
      %8510 = vmatmul.mubr.bf16.gmra.mxu0 %v8411
      %v8511 = vpop.f32.mrf.mxu0
      %v8512 = vadd.f32 %v8291, %v8511
      %v8513 = vpop.f32.mrf.mxu0
      %v8514 = vpop.f32.mrf.mxu0
      %v8515 = vadd.f32 %v8291, %v8514
      %v8516 = vpop.f32.mrf.mxu0
      %8517 = vmatprep.mubr.bf16.mxu0 0
      %8518 = vmatmul.mubr.bf16.gmra.mxu0 %v8414
      %v8519 = vpop.f32.mrf.mxu0
      %v8520 = vadd.f32 %v8291, %v8519
      %v8521 = vpop.f32.mrf.mxu0
      %v8522 = vpop.f32.mrf.mxu0
      %v8523 = vadd.f32 %v8291, %v8522
      %v8524 = vpop.f32.mrf.mxu0
      %8525 = vmatprep.mubr.bf16.mxu0 0
      %8526 = vmatmul.mubr.bf16.gmra.mxu0 %v8417
      %v8527 = vpop.f32.mrf.mxu0
      %v8528 = vadd.f32 %v8291, %v8527
      %v8529 = vpop.f32.mrf.mxu0
      %v8530 = vpop.f32.mrf.mxu0
      %v8531 = vadd.f32 %v8291, %v8530
      %v8532 = vpop.f32.mrf.mxu0
      %8533 = vmatprep.mubr.bf16.mxu0 0
      %8534 = vmatmul.mubr.bf16.gmra.mxu0 %v8420
      %v8535 = vpop.f32.mrf.mxu0
      %v8536 = vadd.f32 %v8291, %v8535
      %v8537 = vpop.f32.mrf.mxu0
      %v8538 = vpop.f32.mrf.mxu0
      %v8539 = vadd.f32 %v8291, %v8538
      %v8540 = vpop.f32.mrf.mxu0
      %8541 = vmatprep.mubr.bf16.mxu0 0
      %8542 = vmatmul.mubr.bf16.gmra.mxu0 %v8423
      %v8543 = vpop.f32.mrf.mxu0
      %v8544 = vadd.f32 %v8291, %v8543
      %v8545 = vpop.f32.mrf.mxu0
      %v8546 = vpop.f32.mrf.mxu0
      %v8547 = vadd.f32 %v8291, %v8546
      %v8548 = vpop.f32.mrf.mxu0
      %8549 = vmatprep.mubr.bf16.mxu0 0
      %8550 = vmatmul.mubr.bf16.gmra.mxu0 %v8426
      %v8551 = vpop.f32.mrf.mxu0
      %v8552 = vadd.f32 %v8291, %v8551
      %v8553 = vpop.f32.mrf.mxu0
      %v8554 = vpop.f32.mrf.mxu0
      %v8555 = vadd.f32 %v8291, %v8554
      %v8556 = vpop.f32.mrf.mxu0
      %8557 = vmatprep.mubr.bf16.mxu0 0
      %8558 = vmatmul.mubr.bf16.gmra.mxu0 %v8429
      %v8559 = vpop.f32.mrf.mxu0
      %v8560 = vadd.f32 %v8291, %v8559
      %v8561 = vpop.f32.mrf.mxu0
      %v8562 = vpop.f32.mrf.mxu0
      %v8563 = vadd.f32 %v8291, %v8562
      %v8564 = vpop.f32.mrf.mxu0
      %8565 = vmatprep.mubr.bf16.mxu0 0
      %8566 = vmatmul.mubr.bf16.gmra.mxu0 %v8432
      %v8567 = vpop.f32.mrf.mxu0
      %v8568 = vadd.f32 %v8291, %v8567
      %v8569 = vpop.f32.mrf.mxu0
      %v8570 = vpop.f32.mrf.mxu0
      %v8571 = vadd.f32 %v8291, %v8570
      %v8572 = vpop.f32.mrf.mxu0
      %8573 = vmatprep.mubr.bf16.mxu0 0
      %8574 = vmatmul.mubr.bf16.gmra.mxu0 %v8435
      %v8575 = vpop.f32.mrf.mxu0
      %v8576 = vadd.f32 %v8291, %v8575
      %v8577 = vpop.f32.mrf.mxu0
      %v8578 = vpop.f32.mrf.mxu0
      %v8579 = vadd.f32 %v8291, %v8578
      %v8580 = vpop.f32.mrf.mxu0
      %8581 = vmatprep.mubr.bf16.mxu0 0
      %8582 = vmatmul.mubr.bf16.gmra.mxu0 %v8438
      %v8583 = vpop.f32.mrf.mxu0
      %v8584 = vadd.f32 %v8291, %v8583
      %v8585 = vpop.f32.mrf.mxu0
      %v8586 = vpop.f32.mrf.mxu0
      %v8587 = vadd.f32 %v8291, %v8586
      %v8588 = vpop.f32.mrf.mxu0
      %8589 = vmatprep.mubr.bf16.mxu0 0
      %8590 = vmatmul.mubr.bf16.gmra.mxu0 %v8441
      %v8591 = vpop.f32.mrf.mxu0
      %v8592 = vadd.f32 %v8291, %v8591
      %v8593 = vpop.f32.mrf.mxu0
      %v8594 = vpop.f32.mrf.mxu0
      %v8595 = vadd.f32 %v8291, %v8594
      %v8596 = vpop.f32.mrf.mxu0
      %8597 = vmatprep.mubr.bf16.mxu0 0
      %8598 = vmatmul.mubr.bf16.gmra.mxu0 %v8444
      %v8599 = vpop.f32.mrf.mxu0
      %v8600 = vadd.f32 %v8291, %v8599
      %v8601 = vpop.f32.mrf.mxu0
      %v8602 = vpop.f32.mrf.mxu0
      %v8603 = vadd.f32 %v8291, %v8602
      %v8604 = vpop.f32.mrf.mxu0
      %8605 = vmatprep.mubr.bf16.mxu0 0
      %8606 = vmatmul.mubr.bf16.gmra.mxu0 %v8447
      %v8607 = vpop.f32.mrf.mxu0
      %v8608 = vadd.f32 %v8291, %v8607
      %v8609 = vpop.f32.mrf.mxu0
      %v8610 = vpop.f32.mrf.mxu0
      %v8611 = vadd.f32 %v8291, %v8610
      %v8612 = vpop.f32.mrf.mxu0
      %8613 = vdwg.mxu0
      %v8614 = vmax.f32 %v8488, 0.0
      %v8615 = vmax.f32 %v8491, 0.0
      %v8616 = vmax.f32 %v8496, 0.0
      %v8617 = vmax.f32 %v8499, 0.0
      %v8618 = vmax.f32 %v8504, 0.0
      %v8619 = vmax.f32 %v8507, 0.0
      %v8620 = vmax.f32 %v8512, 0.0
      %v8621 = vmax.f32 %v8515, 0.0
      %v8622 = vmax.f32 %v8520, 0.0
      %v8623 = vmax.f32 %v8523, 0.0
      %v8624 = vmax.f32 %v8528, 0.0
      %v8625 = vmax.f32 %v8531, 0.0
      %v8626 = vmax.f32 %v8536, 0.0
      %v8627 = vmax.f32 %v8539, 0.0
      %v8628 = vmax.f32 %v8544, 0.0
      %v8629 = vmax.f32 %v8547, 0.0
      %v8630 = vmax.f32 %v8552, 0.0
      %v8631 = vmax.f32 %v8555, 0.0
      %v8632 = vmax.f32 %v8560, 0.0
      %v8633 = vmax.f32 %v8563, 0.0
      %v8634 = vmax.f32 %v8568, 0.0
      %v8635 = vmax.f32 %v8571, 0.0
      %v8636 = vmax.f32 %v8576, 0.0
      %v8637 = vmax.f32 %v8579, 0.0
      %v8638 = vmax.f32 %v8584, 0.0
      %v8639 = vmax.f32 %v8587, 0.0
      %v8640 = vmax.f32 %v8592, 0.0
      %v8641 = vmax.f32 %v8595, 0.0
      %v8642 = vmax.f32 %v8600, 0.0
      %v8643 = vmax.f32 %v8603, 0.0
      %v8644 = vmax.f32 %v8608, 0.0
      %v8645 = vmax.f32 %v8611, 0.0
      %vm8646 = vcmask 64512
      %8647 = vst.msk [vmem:[%s224] sm:$0xff] %vm8646, %v8614
      %8648 = vst.msk [vmem:[%s224 + $0x8] sm:$0xff] %vm8646, %v8615
      %8649 = vst.msk [vmem:[%s224 + $0x10] sm:$0xff] %vm8646, %v8616
      %8650 = vst.msk [vmem:[%s224 + $0x18] sm:$0xff] %vm8646, %v8617
      %8651 = vst.msk [vmem:[%s224 + $0x20] sm:$0xff] %vm8646, %v8618
      %8652 = vst.msk [vmem:[%s224 + $0x28] sm:$0xff] %vm8646, %v8619
      %8653 = vst.msk [vmem:[%s224 + $0x30] sm:$0xff] %vm8646, %v8620
      %8654 = vst.msk [vmem:[%s224 + $0x38] sm:$0xff] %vm8646, %v8621
      %8655 = vst.msk [vmem:[%s224 + $0x40] sm:$0xff] %vm8646, %v8622
      %8656 = vst.msk [vmem:[%s224 + $0x48] sm:$0xff] %vm8646, %v8623
      %8657 = vst.msk [vmem:[%s224 + $0x50] sm:$0xff] %vm8646, %v8624
      %8658 = vst.msk [vmem:[%s224 + $0x58] sm:$0xff] %vm8646, %v8625
      %8659 = vst.msk [vmem:[%s224 + $0x60] sm:$0xff] %vm8646, %v8626
      %8660 = vst.msk [vmem:[%s224 + $0x68] sm:$0xff] %vm8646, %v8627
      %8661 = vst.msk [vmem:[%s224 + $0x70] sm:$0xff] %vm8646, %v8628
      %8662 = vst.msk [vmem:[%s224 + $0x78] sm:$0xff] %vm8646, %v8629
      %8663 = vst.msk [vmem:[%s224 + $0x80] sm:$0xff] %vm8646, %v8630
      %8664 = vst.msk [vmem:[%s224 + $0x88] sm:$0xff] %vm8646, %v8631
      %8665 = vst.msk [vmem:[%s224 + $0x90] sm:$0xff] %vm8646, %v8632
      %8666 = vst.msk [vmem:[%s224 + $0x98] sm:$0xff] %vm8646, %v8633
      %8667 = vst.msk [vmem:[%s224 + $0xa0] sm:$0xff] %vm8646, %v8634
      %8668 = vst.msk [vmem:[%s224 + $0xa8] sm:$0xff] %vm8646, %v8635
      %8669 = vst.msk [vmem:[%s224 + $0xb0] sm:$0xff] %vm8646, %v8636
      %8670 = vst.msk [vmem:[%s224 + $0xb8] sm:$0xff] %vm8646, %v8637
      %8671 = vst.msk [vmem:[%s224 + $0xc0] sm:$0xff] %vm8646, %v8638
      %8672 = vst.msk [vmem:[%s224 + $0xc8] sm:$0xff] %vm8646, %v8639
      %8673 = vst.msk [vmem:[%s224 + $0xd0] sm:$0xff] %vm8646, %v8640
      %8674 = vst.msk [vmem:[%s224 + $0xd8] sm:$0xff] %vm8646, %v8641
      %8675 = vst.msk [vmem:[%s224 + $0xe0] sm:$0xff] %vm8646, %v8642
      %8676 = vst.msk [vmem:[%s224 + $0xe8] sm:$0xff] %vm8646, %v8643
      %8677 = vst.msk [vmem:[%s224 + $0xf0] sm:$0xff] %vm8646, %v8644
      %8678 = vst.msk [vmem:[%s224 + $0xf8] sm:$0xff] %vm8646, %v8645
      %p8679 = scmp.lt.s32.totalorder %s16, 1
      %s8680 = scalar_select %p8679, %s16, 1
      %s8681 = smul.addr %s8680, 32
      %s8682 = smul.addr %s8681, 8
      %s8683 = scalar_lea.vmem %s5, %s8682
      // Predicated region
      $region41: #{double_conv.1} parent=39 // pred_check
        %p8684 = pneg %p144
      $region42: #{double_conv.1} parent=39 // pred_check_branch
        %8686 = sbr.rel (%p8684) target = $region44
      $region43: #{double_conv.1} parent=39 // pred_region
        _
      $region44: #{double_conv.1} parent=39 // pred_fallthru
        _
    $region40: #{double_conv.1} parent=5 // pred_fallthru
      _
    %p8687 = scmp.le.s32.totalorder 2, %s11
    // Predicated region
    $region45: #{double_conv.1} parent=5 // pred_check
      %p8688 = pneg %p8687
    $region46: #{double_conv.1} parent=5 // pred_check_branch
      %8690 = sbr.rel (%p8688) target = $region48
    $region47: #{double_conv.1} parent=5 // pred_region
      %s8691 = ssub.s32 %s11, 2
      // Predicated region
      $region49: #{double_conv.1} parent=47 // pred_check
        %p8692 = pneg %p150
      $region50: #{double_conv.1} parent=47 // pred_check_branch
        %8694 = sbr.rel (%p8692) target = $region52
      $region51: #{double_conv.1} parent=47 // pred_region
        %p8695 = scmp.lt.s32.totalorder %s17, 1
        %s8696 = scalar_select %p8695, %s17, 1
        %s8697 = smul.addr %s8696, 32
        %s8698 = smul.addr %s8697, 8
        %s8699 = scalar_lea.vmem %s5, %s8698
      $region52: #{double_conv.1} parent=47 // pred_fallthru
        _
    $region48: #{double_conv.1} parent=5 // pred_fallthru
      _
  $region6: #{double_conv.1} parent=0 // loop_footer
    %s15 = sadd.s32 1, %s11
  $region7: #{double_conv.1} parent=0 // loop_footer_branch
    %10 = sbr.rel target = $region3
  $region8: #{double_conv.1} parent=0 // loop_exit
    _

</llo_original>
